<compile_context>
chip_gen: v7x
topology: tpu7x:2x2x1
jax: 0.10.0
libtpu: 0.0.40
codegen_flags: <defaults>
</compile_context>

<pallas_src>
import functools

import numpy as np
import jax
import jax.numpy as jnp
from jax import lax
from jax.experimental import pallas as pl
from jax.experimental.pallas import tpu as pltpu


_LN_EPS = 1e-5  # nn.LayerNorm default


def _gelu_tanh(x):
    # TODO(synk): PyTorch nn.GELU() defaults to the exact erf form; the tanh approximation
    # (max abs err ~3e-4) is used for guaranteed Mosaic lowering.
    c = 0.7978845608028654  # sqrt(2/pi)
    return 0.5 * x * (1.0 + jnp.tanh(c * (x + 0.044715 * x * x * x)))


def _layernorm(x, gamma, beta):
    mu = jnp.mean(x, axis=-1, keepdims=True)
    xc = x - mu
    var = jnp.mean(xc * xc, axis=-1, keepdims=True)
    return xc * lax.rsqrt(var + _LN_EPS) * gamma + beta


# ----------------------------------------------------------------------------------
# Fused kernel: tokenize + n_layer transformer blocks + final LN + bilinear upsample
# ----------------------------------------------------------------------------------
def _gpt_fused_kernel(rgb_ref, ir_ref, pool_ref, pos_ref,
                      wkvq_ref, bkvq_ref, wo_ref, w1_ref, b1_ref, w2_ref, vec_ref,
                      lnf_ref, upm_ref,
                      rgb_o_ref, ir_o_ref,
                      *, num_heads, n_layer):
    f32 = jnp.float32
    dn_abT = (((1,), (1,)), ((), ()))   # contract last dims:  A @ B^T
    dn_aTb = (((0,), (0,)), ((), ()))   # contract first dims: A^T @ B

    # ---- tokenize: AdaptiveAvgPool2d as a matmul, RGB|IR token stack, + pos emb ----
    pool = pool_ref[...]                                                # (na, HW)
    na = pool.shape[0]
    tok_r = lax.dot_general(pool, rgb_ref[0].astype(f32), dn_abT,
                            preferred_element_type=f32)                 # (na, d)
    tok_i = lax.dot_general(pool, ir_ref[0].astype(f32), dn_abT,
                            preferred_element_type=f32)                 # (na, d)
    x = jnp.concatenate([tok_r, tok_i], axis=0) + pos_ref[0].astype(f32)  # (T, d)

    t, d = x.shape
    dk = d // num_heads
    scale = float(dk) ** -0.5

    # ---- n_layer fused transformer blocks; activation stays resident in VMEM/vregs ----
    def layer_body(l, x):
        wkvq = wkvq_ref[l]            # (d, 3d)  columns: [Wk | Wv | Wq]
        bkvq = bkvq_ref[l]            # (1, 3d)
        wo = wo_ref[l]                # (d, d)
        w1 = w1_ref[l]                # (d, dh)
        b1 = b1_ref[l]                # (1, dh)
        w2 = w2_ref[l]                # (dh, d)
        vec = vec_ref[l]              # (6, d): [ln1_g, ln1_b, bo, ln2_g, ln2_b, b2]

        # LayerNorm 1 + fused K/V/Q projection (single 192-lane MXU matmul).
        xn = _layernorm(x, vec[0:1], vec[1:2])
        kvq = jnp.dot(xn, wkvq, preferred_element_type=f32) + bkvq      # (T, 3d)
        # One transpose per layer; per-head K/V slices below are free sublane slices.
        kvT = jnp.transpose(kvq[:, :2 * d])                             # (2d, T)

        # Multi-head attention: lane-dense (T, T) scores; each head's output folded
        # straight into the residual through Wo's matching rows (no lane concat).
        y = x
        for hh in range(num_heads):
            qh = kvq[:, 2 * d + hh * dk:2 * d + (hh + 1) * dk]          # (T, dk)
            khT = kvT[hh * dk:(hh + 1) * dk, :]                         # (dk, T)
            vhT = kvT[d + hh * dk:d + (hh + 1) * dk, :]                 # (dk, T)
            att = jnp.dot(qh, khT, preferred_element_type=f32) * scale  # (T, T)
            att = att - jnp.max(att, axis=-1, keepdims=True)
            p = jnp.exp(att)
            p = p * pl.reciprocal(jnp.sum(p, axis=-1, keepdims=True), approx=True)
            oh = lax.dot_general(p, vhT, dn_abT,
                                 preferred_element_type=f32)            # (T, dk)
            y = y + jnp.dot(oh, wo[hh * dk:(hh + 1) * dk, :],
                            preferred_element_type=f32)
        y = y + vec[2:3]                                                # + bo

        # LayerNorm 2 + MLP(GELU).
        yn = _layernorm(y, vec[3:4], vec[4:5])
        h1 = _gelu_tanh(jnp.dot(yn, w1, preferred_element_type=f32) + b1)
        h2 = jnp.dot(h1, w2, preferred_element_type=f32) + vec[5:6]
        return y + h2

    x = lax.fori_loop(0, n_layer, layer_body, x)

    # ---- final LayerNorm + bilinear F.interpolate as one lane-dense matmul ----
    lnf = lnf_ref[...]
    yf = _layernorm(x, lnf[0:1], lnf[1:2])                              # (T, d)
    y2 = jnp.concatenate([yf[:na, :], yf[na:, :]], axis=1)              # (na, 2d)
    out = lax.dot_general(y2, upm_ref[...], dn_aTb,
                          preferred_element_type=f32)                   # (2d, HW)
    rgb_o_ref[0] = out[:d, :].astype(rgb_o_ref.dtype)
    ir_o_ref[0] = out[d:, :].astype(ir_o_ref.dtype)


# ----------------------------------------------------------------------------------
# Host-side constant matrices (exact PyTorch AdaptiveAvgPool2d / bilinear semantics)
# ----------------------------------------------------------------------------------
def _adaptive_pool_matrix(h, w, va, ha):
    """(va*ha, h*w) matrix implementing nn.AdaptiveAvgPool2d((va, ha)) on flat pixels."""
    def axis(n_in, n_out):
        m = np.zeros((n_out, n_in), np.float32)
        for o in range(n_out):
            s = (o * n_in) // n_out
            e = -((-(o + 1) * n_in) // n_out)  # ceil
            m[o, s:e] = 1.0 / (e - s)
        return m
    p = np.einsum('ph,qw->pqhw', axis(h, va), axis(w, ha)).reshape(va * ha, h * w)
    return jnp.asarray(p)


def _bilinear_axis(n_in, n_out):
    """(n_out, n_in) 1-D bilinear matrix, align_corners=False (F.interpolate default)."""
    m = np.zeros((n_out, n_in), np.float32)
    scale = n_in / n_out
    for o in range(n_out):
        src = max((o + 0.5) * scale - 0.5, 0.0)
        i0 = min(int(np.floor(src)), n_in - 1)
        i1 = min(i0 + 1, n_in - 1)
        lam = src - i0
        m[o, i0] += 1.0 - lam
        m[o, i1] += lam
    return m


def _bilinear_up_matrix(va, ha, h, w):
    """(va*ha, h*w): anchor token (p*ha+q) -> output pixel (i*w+j), bilinear upsample."""
    u = np.einsum('ip,jq->ijpq', _bilinear_axis(va, h), _bilinear_axis(ha, w))
    return jnp.asarray(u.reshape(h * w, va * ha).T.copy())


# ----------------------------------------------------------------------------------
# Parameter packing + pallas_call wrapper
# ----------------------------------------------------------------------------------
def _pack_params(params):
    """Stack per-layer weights as (n_layer, ...) slabs to minimize DMA streams."""
    layers = params['layers']
    wkvq = jnp.stack([jnp.concatenate([lp['wk'], lp['wv'], lp['wq']], axis=1)
                      for lp in layers])                                   # (L, d, 3d)
    bkvq = jnp.stack([jnp.concatenate([lp['bk'], lp['bv'], lp['bq']], axis=1)
                      for lp in layers])                                   # (L, 1, 3d)
    wo = jnp.stack([lp['wo'] for lp in layers])                            # (L, d, d)
    w1 = jnp.stack([lp['w1'] for lp in layers])                            # (L, d, dh)
    b1 = jnp.stack([lp['b1'] for lp in layers])                            # (L, 1, dh)
    w2 = jnp.stack([lp['w2'] for lp in layers])                            # (L, dh, d)
    vec = jnp.stack([jnp.concatenate([lp['ln1_g'], lp['ln1_b'], lp['bo'],
                                      lp['ln2_g'], lp['ln2_b'], lp['b2']], axis=0)
                     for lp in layers])                                    # (L, 6, d)
    lnf = jnp.concatenate([params['lnf_g'], params['lnf_b']], axis=0)      # (2, d)
    return wkvq, bkvq, wo, w1, b1, w2, vec, lnf


def gpt_forward(rgb_fea, ir_fea, params, *, num_heads, vert_anchors, horz_anchors):
    """Pallas forward of models.common.GPT (eval mode: dropouts are identity)."""
    bs, c, h, w = rgb_fea.shape
    hw = h * w
    na = vert_anchors * horz_anchors
    t = 2 * na
    n_layer = len(params['layers'])
    dh = params['layers'][0]['w1'].shape[1]

    pool = _adaptive_pool_matrix(h, w, vert_anchors, horz_anchors)   # (na, h*w)
    upm = _bilinear_up_matrix(vert_anchors, horz_anchors, h, w)      # (na, h*w)
    wkvq, bkvq, wo, w1, b1, w2, vec, lnf = _pack_params(params)

    rgb_flat = rgb_fea.reshape(bs, c, hw)   # contiguous reshape -> lane-dense DMA
    ir_flat = ir_fea.reshape(bs, c, hw)

    flops_layer = (2 * t * c * 3 * c          # fused KVQ projection
                   + 4 * t * t * c            # scores + p@v over all heads
                   + 2 * t * c * c            # output projection (split per head)
                   + 4 * t * c * dh)          # MLP
    cost = pl.CostEstimate(
        flops=bs * (4 * na * hw * c + n_layer * flops_layer + 4 * na * c * hw),
        transcendentals=bs * n_layer * t * (num_heads * t + dh),
        bytes_accessed=4 * (bs * 4 * c * hw + 2 * na * hw + t * c
                            + n_layer * (4 * c * c + 2 * c * dh + 9 * c + dh) + 2 * c))

    const3 = lambda shape: pl.BlockSpec(shape, lambda b: (0, 0, 0))
    const2 = lambda shape: pl.BlockSpec(shape, lambda b: (0, 0))

    rgb_o, ir_o = pl.pallas_call(
        functools.partial(_gpt_fused_kernel, num_heads=num_heads, n_layer=n_layer),
        out_shape=(jax.ShapeDtypeStruct((bs, c, hw), rgb_fea.dtype),
                   jax.ShapeDtypeStruct((bs, c, hw), ir_fea.dtype)),
        grid_spec=pltpu.PrefetchScalarGridSpec(
            num_scalar_prefetch=0,
            grid=(bs,),
            in_specs=[
                pl.BlockSpec((1, c, hw), lambda b: (b, 0, 0)),   # rgb
                pl.BlockSpec((1, c, hw), lambda b: (b, 0, 0)),   # ir
                const2((na, hw)),                                # pool matrix
                const3((1, t, c)),                               # pos_emb
                const3((n_layer, c, 3 * c)),                     # wkvq
                const3((n_layer, 1, 3 * c)),                     # bkvq
                const3((n_layer, c, c)),                         # wo
                const3((n_layer, c, dh)),                        # w1
                const3((n_layer, 1, dh)),                        # b1
                const3((n_layer, dh, c)),                        # w2
                const3((n_layer, 6, c)),                         # LN/bias vector slab
                const2((2, c)),                                  # final LN gamma/beta
                const2((na, hw)),                                # bilinear upsample matrix
            ],
            out_specs=(pl.BlockSpec((1, c, hw), lambda b: (b, 0, 0)),
                       pl.BlockSpec((1, c, hw), lambda b: (b, 0, 0))),
        ),
        compiler_params=pltpu.CompilerParams(
            dimension_semantics=("parallel",),       # >=2 grid steps -> both v7x TCs busy
            vmem_limit_bytes=32 * 1024 * 1024),
        cost_estimate=cost,
    )(rgb_flat, ir_flat, pool, params['pos_emb'], wkvq, bkvq, wo, w1, b1, w2, vec,
      lnf, upm)

    return rgb_o.reshape(bs, c, h, w), ir_o.reshape(bs, c, h, w)


# ----------------------------------------------------------------------------------
# Parameters and pure-JAX reference (for correctness check)
# ----------------------------------------------------------------------------------
def init_params(key, d_model, n_layer, block_exp, seq_len):
    keys = iter(jax.random.split(key, 6 * n_layer + 1))
    lin = lambda k, fi, fo: 0.02 * jax.random.normal(k, (fi, fo), jnp.float32)
    dh = block_exp * d_model
    params = {
        'pos_emb': 0.02 * jax.random.normal(next(keys), (1, seq_len, d_model), jnp.float32),
        'lnf_g': jnp.ones((1, d_model), jnp.float32),
        'lnf_b': jnp.zeros((1, d_model), jnp.float32),
        'layers': [],
    }
    for _ in range(n_layer):
        params['layers'].append({
            'ln1_g': jnp.ones((1, d_model), jnp.float32),
            'ln1_b': jnp.zeros((1, d_model), jnp.float32),
            'wq': lin(next(keys), d_model, d_model), 'bq': jnp.zeros((1, d_model), jnp.float32),
            'wk': lin(next(keys), d_model, d_model), 'bk': jnp.zeros((1, d_model), jnp.float32),
            'wv': lin(next(keys), d_model, d_model), 'bv': jnp.zeros((1, d_model), jnp.float32),
            'wo': lin(next(keys), d_model, d_model), 'bo': jnp.zeros((1, d_model), jnp.float32),
            'ln2_g': jnp.ones((1, d_model), jnp.float32),
            'ln2_b': jnp.zeros((1, d_model), jnp.float32),
            'w1': lin(next(keys), d_model, dh), 'b1': jnp.zeros((1, dh), jnp.float32),
            'w2': lin(next(keys), dh, d_model), 'b2': jnp.zeros((1, d_model), jnp.float32),
        })
    return params


def gpt_ref(rgb_fea, ir_fea, params, *, num_heads, vert_anchors, horz_anchors):
    bs, c, h, w = rgb_fea.shape
    na = vert_anchors * horz_anchors
    pool = _adaptive_pool_matrix(h, w, vert_anchors, horz_anchors)
    upm = _bilinear_up_matrix(vert_anchors, horz_anchors, h, w)
    tok_r = jnp.einsum('np,bcp->bnc', pool, rgb_fea.reshape(bs, c, h * w))
    tok_i = jnp.einsum('np,bcp->bnc', pool, ir_fea.reshape(bs, c, h * w))
    x = jnp.concatenate([tok_r, tok_i], axis=1) + params['pos_emb']
    dk = c // num_heads
    for lp in params['layers']:
        xn = _layernorm(x, lp['ln1_g'], lp['ln1_b'])
        q = (xn @ lp['wq'] + lp['bq']).reshape(bs, -1, num_heads, dk).transpose(0, 2, 1, 3)
        k = (xn @ lp['wk'] + lp['bk']).reshape(bs, -1, num_heads, dk).transpose(0, 2, 1, 3)
        v = (xn @ lp['wv'] + lp['bv']).reshape(bs, -1, num_heads, dk).transpose(0, 2, 1, 3)
        att = jnp.einsum('bhqd,bhkd->bhqk', q, k) * (float(dk) ** -0.5)
        att = jax.nn.softmax(att, axis=-1)
        out = jnp.einsum('bhqk,bhkd->bhqd', att, v).transpose(0, 2, 1, 3).reshape(bs, -1, c)
        x = x + out @ lp['wo'] + lp['bo']
        xn2 = _layernorm(x, lp['ln2_g'], lp['ln2_b'])
        x = x + _gelu_tanh(xn2 @ lp['w1'] + lp['b1']) @ lp['w2'] + lp['b2']
    y = _layernorm(x, params['lnf_g'], params['lnf_b'])
    rgb_o = jnp.einsum('bnc,np->bcp', y[:, :na], upm).reshape(bs, c, h, w)
    ir_o = jnp.einsum('bnc,np->bcp', y[:, na:], upm).reshape(bs, c, h, w)
    return rgb_o, ir_o


if __name__ == "__main__":
    bs, d_model, H, W = 2, 64, 16, 16
    num_heads, block_exp, n_layer = 8, 4, 2   # module default n_layer=8; 2 keeps the demo small
    vert_anchors = horz_anchors = 8
    seq_len = 2 * vert_anchors * horz_anchors

    root = jax.random.PRNGKey(0)
    k_rgb, k_ir, k_par = jax.random.split(root, 3)
    rgb = jax.random.normal(k_rgb, (bs, d_model, H, W), jnp.float32)
    ir = jax.random.normal(k_ir, (bs, d_model, H, W), jnp.float32)
    params = init_params(k_par, d_model, n_layer, block_exp, seq_len)

    fwd = jax.jit(functools.partial(gpt_forward, num_heads=num_heads,
                                    vert_anchors=vert_anchors, horz_anchors=horz_anchors))
    rgb_out, ir_out = fwd(rgb, ir, params)
    jax.block_until_ready((rgb_out, ir_out))

    assert rgb_out.shape == (bs, d_model, H, W), rgb_out.shape
    assert ir_out.shape == (bs, d_model, H, W), ir_out.shape

    # Correctness check vs. a pure-JAX reference (tolerance accounts for MXU pass
    # precision and the approximate softmax reciprocal).
    with jax.default_matmul_precision("highest"):
        rgb_ref, ir_ref = gpt_ref(rgb, ir, params, num_heads=num_heads,
                                  vert_anchors=vert_anchors, horz_anchors=horz_anchors)
    assert jnp.allclose(rgb_out, rgb_ref, atol=5e-2, rtol=5e-2), "rgb mismatch vs reference"
    assert jnp.allclose(ir_out, ir_ref, atol=5e-2, rtol=5e-2), "ir mismatch vs reference"

    print("KERNEL_OK")
</pallas_src>

<mosaic_0001>
module attributes {stable_mosaic.version = 11 : i64} {
  func.func @_gpt_fused_kernel(%arg0: i32, %arg1: memref<1x64x256xf32, #tpu.memory_space<vmem>>, %arg2: memref<1x64x256xf32, #tpu.memory_space<vmem>>, %arg3: memref<64x256xf32, #tpu.memory_space<vmem>>, %arg4: memref<1x128x64xf32, #tpu.memory_space<vmem>>, %arg5: memref<2x64x192xf32, #tpu.memory_space<vmem>>, %arg6: memref<2x1x192xf32, #tpu.memory_space<vmem>>, %arg7: memref<2x64x64xf32, #tpu.memory_space<vmem>>, %arg8: memref<2x64x256xf32, #tpu.memory_space<vmem>>, %arg9: memref<2x1x256xf32, #tpu.memory_space<vmem>>, %arg10: memref<2x256x64xf32, #tpu.memory_space<vmem>>, %arg11: memref<2x6x64xf32, #tpu.memory_space<vmem>>, %arg12: memref<2x64xf32, #tpu.memory_space<vmem>>, %arg13: memref<64x256xf32, #tpu.memory_space<vmem>>, %arg14: memref<1x64x256xf32, #tpu.memory_space<vmem>>, %arg15: memref<1x64x256xf32, #tpu.memory_space<vmem>>) attributes {dimension_semantics = [#tpu.dimension_semantics<parallel>], iteration_bounds = array<i64: 2>, scalar_prefetch = 0 : i64, scratch_operands = 0 : i64, tpu.core_type = #tpu.core_type<tc>, window_params = [{transform_indices = @transform_0, window_bounds = array<i64: 1, 64, 256>}, {transform_indices = @transform_1, window_bounds = array<i64: 1, 64, 256>}, {pipeline_mode = #tpu.pipeline_mode<synchronous>, transform_indices = @transform_2, window_bounds = array<i64: 64, 256>}, {pipeline_mode = #tpu.pipeline_mode<synchronous>, transform_indices = @transform_3, window_bounds = array<i64: 1, 128, 64>}, {pipeline_mode = #tpu.pipeline_mode<synchronous>, transform_indices = @transform_4, window_bounds = array<i64: 2, 64, 192>}, {pipeline_mode = #tpu.pipeline_mode<synchronous>, transform_indices = @transform_5, window_bounds = array<i64: 2, 1, 192>}, {pipeline_mode = #tpu.pipeline_mode<synchronous>, transform_indices = @transform_6, window_bounds = array<i64: 2, 64, 64>}, {pipeline_mode = #tpu.pipeline_mode<synchronous>, transform_indices = @transform_7, window_bounds = array<i64: 2, 64, 256>}, {pipeline_mode = #tpu.pipeline_mode<synchronous>, transform_indices = @transform_8, window_bounds = array<i64: 2, 1, 256>}, {pipeline_mode = #tpu.pipeline_mode<synchronous>, transform_indices = @transform_9, window_bounds = array<i64: 2, 256, 64>}, {pipeline_mode = #tpu.pipeline_mode<synchronous>, transform_indices = @transform_10, window_bounds = array<i64: 2, 6, 64>}, {pipeline_mode = #tpu.pipeline_mode<synchronous>, transform_indices = @transform_11, window_bounds = array<i64: 2, 64>}, {pipeline_mode = #tpu.pipeline_mode<synchronous>, transform_indices = @transform_12, window_bounds = array<i64: 64, 256>}, {transform_indices = @transform_13, window_bounds = array<i64: 1, 64, 256>}, {transform_indices = @transform_14, window_bounds = array<i64: 1, 64, 256>}]} {
    %c0 = arith.constant 0 : index
    %c0_0 = arith.constant 0 : index
    %0 = vector.load %arg3[%c0, %c0_0] : memref<64x256xf32, #tpu.memory_space<vmem>>, vector<64x256xf32>
    %c0_1 = arith.constant 0 : index
    %c0_2 = arith.constant 0 : index
    %c0_3 = arith.constant 0 : index
    %1 = vector.load %arg1[%c0_1, %c0_2, %c0_3] : memref<1x64x256xf32, #tpu.memory_space<vmem>>, vector<1x64x256xf32>
    %2 = vector.shape_cast %1 : vector<1x64x256xf32> to vector<64x256xf32>
    %cst = arith.constant dense<0.000000e+00> : vector<64x64xf32>
    %3 = tpu.matmul %0, %2, %cst {dimension_numbers = #tpu.dot_dimension_numbers<[1], [1], [0], [0], [0, 0, 1, 0], [], []>} : vector<64x256xf32>, vector<64x256xf32>, vector<64x64xf32> -> vector<64x64xf32>
    %c0_4 = arith.constant 0 : index
    %c0_5 = arith.constant 0 : index
    %c0_6 = arith.constant 0 : index
    %4 = vector.load %arg2[%c0_4, %c0_5, %c0_6] : memref<1x64x256xf32, #tpu.memory_space<vmem>>, vector<1x64x256xf32>
    %5 = vector.shape_cast %4 : vector<1x64x256xf32> to vector<64x256xf32>
    %cst_7 = arith.constant dense<0.000000e+00> : vector<64x64xf32>
    %6 = tpu.matmul %0, %5, %cst_7 {dimension_numbers = #tpu.dot_dimension_numbers<[1], [1], [0], [0], [0, 0, 1, 0], [], []>} : vector<64x256xf32>, vector<64x256xf32>, vector<64x64xf32> -> vector<64x64xf32>
    %7 = tpu.concatenate %3, %6 in 0 : vector<64x64xf32>, vector<64x64xf32> -> vector<128x64xf32>
    %c0_8 = arith.constant 0 : index
    %c0_9 = arith.constant 0 : index
    %c0_10 = arith.constant 0 : index
    %8 = vector.load %arg4[%c0_8, %c0_9, %c0_10] : memref<1x128x64xf32, #tpu.memory_space<vmem>>, vector<1x128x64xf32>
    %9 = vector.shape_cast %8 : vector<1x128x64xf32> to vector<128x64xf32>
    %10 = arith.addf %7, %9 : vector<128x64xf32>
    %c0_i32 = arith.constant 0 : i32
    %c2_i32 = arith.constant 2 : i32
    %11 = arith.addi %c0_i32, %c2_i32 : i32
    %c1_i32 = arith.constant 1 : i32
    %12 = scf.for %arg16 = %c0_i32 to %11 step %c1_i32 iter_args(%arg17 = %10) -> (vector<128x64xf32>)  : i32 {
      %49 = arith.index_cast %arg16 : i32 to index
      %c0_28 = arith.constant 0 : index
      %c0_29 = arith.constant 0 : index
      %50 = vector.load %arg5[%49, %c0_28, %c0_29] : memref<2x64x192xf32, #tpu.memory_space<vmem>>, vector<1x64x192xf32>
      %51 = vector.shape_cast %50 : vector<1x64x192xf32> to vector<64x192xf32>
      %52 = arith.index_cast %arg16 : i32 to index
      %c0_30 = arith.constant 0 : index
      %c0_31 = arith.constant 0 : index
      %53 = vector.load %arg6[%52, %c0_30, %c0_31] : memref<2x1x192xf32, #tpu.memory_space<vmem>>, vector<1x1x192xf32>
      %54 = vector.shape_cast %53 : vector<1x1x192xf32> to vector<1x192xf32>
      %55 = arith.index_cast %arg16 : i32 to index
      %c0_32 = arith.constant 0 : index
      %c0_33 = arith.constant 0 : index
      %56 = vector.load %arg7[%55, %c0_32, %c0_33] : memref<2x64x64xf32, #tpu.memory_space<vmem>>, vector<1x64x64xf32>
      %57 = vector.shape_cast %56 : vector<1x64x64xf32> to vector<64x64xf32>
      %58 = arith.index_cast %arg16 : i32 to index
      %c0_34 = arith.constant 0 : index
      %c0_35 = arith.constant 0 : index
      %59 = vector.load %arg8[%58, %c0_34, %c0_35] : memref<2x64x256xf32, #tpu.memory_space<vmem>>, vector<1x64x256xf32>
      %60 = vector.shape_cast %59 : vector<1x64x256xf32> to vector<64x256xf32>
      %61 = arith.index_cast %arg16 : i32 to index
      %c0_36 = arith.constant 0 : index
      %c0_37 = arith.constant 0 : index
      %62 = vector.load %arg9[%61, %c0_36, %c0_37] : memref<2x1x256xf32, #tpu.memory_space<vmem>>, vector<1x1x256xf32>
      %63 = vector.shape_cast %62 : vector<1x1x256xf32> to vector<1x256xf32>
      %64 = arith.index_cast %arg16 : i32 to index
      %c0_38 = arith.constant 0 : index
      %c0_39 = arith.constant 0 : index
      %65 = vector.load %arg10[%64, %c0_38, %c0_39] : memref<2x256x64xf32, #tpu.memory_space<vmem>>, vector<1x256x64xf32>
      %66 = vector.shape_cast %65 : vector<1x256x64xf32> to vector<256x64xf32>
      %67 = arith.index_cast %arg16 : i32 to index
      %c0_40 = arith.constant 0 : index
      %c0_41 = arith.constant 0 : index
      %68 = vector.load %arg11[%67, %c0_40, %c0_41] : memref<2x6x64xf32, #tpu.memory_space<vmem>>, vector<1x6x64xf32>
      %69 = vector.shape_cast %68 : vector<1x6x64xf32> to vector<6x64xf32>
      %70 = vector.extract_strided_slice %69 {offsets = [0, 0], sizes = [1, 64], strides = [1, 1]} : vector<6x64xf32> to vector<1x64xf32>
      %71 = vector.extract_strided_slice %69 {offsets = [1, 0], sizes = [1, 64], strides = [1, 1]} : vector<6x64xf32> to vector<1x64xf32>
      %cst_42 = arith.constant dense<0.000000e+00> : vector<128xf32>
      %72 = vector.multi_reduction <add>, %arg17, %cst_42 [1] : vector<128x64xf32> to vector<128xf32>
      %73 = vector.shape_cast %72 : vector<128xf32> to vector<128x1xf32>
      %cst_43 = arith.constant 6.400000e+01 : f32
      %74 = vector.broadcast %cst_43 : f32 to vector<128x1xf32>
      %75 = arith.divf %73, %74 : vector<128x1xf32>
      %76 = vector.broadcast %75 : vector<128x1xf32> to vector<128x64xf32>
      %77 = arith.subf %arg17, %76 : vector<128x64xf32>
      %78 = arith.mulf %77, %77 : vector<128x64xf32>
      %cst_44 = arith.constant dense<0.000000e+00> : vector<128xf32>
      %79 = vector.multi_reduction <add>, %78, %cst_44 [1] : vector<128x64xf32> to vector<128xf32>
      %80 = vector.shape_cast %79 : vector<128xf32> to vector<128x1xf32>
      %cst_45 = arith.constant 6.400000e+01 : f32
      %81 = vector.broadcast %cst_45 : f32 to vector<128x1xf32>
      %82 = arith.divf %80, %81 : vector<128x1xf32>
      %cst_46 = arith.constant 9.99999974E-6 : f32
      %83 = vector.broadcast %cst_46 : f32 to vector<128x1xf32>
      %84 = arith.addf %82, %83 : vector<128x1xf32>
      %85 = math.rsqrt %84 : vector<128x1xf32>
      %86 = vector.broadcast %85 : vector<128x1xf32> to vector<128x64xf32>
      %87 = arith.mulf %77, %86 : vector<128x64xf32>
      %88 = vector.broadcast %70 : vector<1x64xf32> to vector<128x64xf32>
      %89 = arith.mulf %87, %88 : vector<128x64xf32>
      %90 = vector.broadcast %71 : vector<1x64xf32> to vector<128x64xf32>
      %91 = arith.addf %89, %90 : vector<128x64xf32>
      %cst_47 = arith.constant dense<0.000000e+00> : vector<128x192xf32>
      %92 = tpu.matmul %91, %51, %cst_47 {dimension_numbers = #tpu.dot_dimension_numbers<[1], [0], [0], [1], [0, 0, 1, 1], [], []>} : vector<128x64xf32>, vector<64x192xf32>, vector<128x192xf32> -> vector<128x192xf32>
      %93 = vector.broadcast %54 : vector<1x192xf32> to vector<128x192xf32>
      %94 = arith.addf %92, %93 : vector<128x192xf32>
      %95 = vector.extract_strided_slice %94 {offsets = [0, 0], sizes = [128, 128], strides = [1, 1]} : vector<128x192xf32> to vector<128x128xf32>
      %96 = tpu.transpose %95, [1, 0] : vector<128x128xf32> -> vector<128x128xf32>
      %97 = vector.extract_strided_slice %94 {offsets = [0, 128], sizes = [128, 8], strides = [1, 1]} : vector<128x192xf32> to vector<128x8xf32>
      %98 = vector.extract_strided_slice %96 {offsets = [0, 0], sizes = [8, 128], strides = [1, 1]} : vector<128x128xf32> to vector<8x128xf32>
      %99 = vector.extract_strided_slice %96 {offsets = [64, 0], sizes = [8, 128], strides = [1, 1]} : vector<128x128xf32> to vector<8x128xf32>
      %cst_48 = arith.constant dense<0.000000e+00> : vector<128x128xf32>
      %100 = tpu.matmul %97, %98, %cst_48 {dimension_numbers = #tpu.dot_dimension_numbers<[1], [0], [0], [1], [0, 0, 1, 1], [], []>} : vector<128x8xf32>, vector<8x128xf32>, vector<128x128xf32> -> vector<128x128xf32>
      %cst_49 = arith.constant 0.353553385 : f32
      %101 = vector.broadcast %cst_49 : f32 to vector<128x128xf32>
      %102 = arith.mulf %100, %101 : vector<128x128xf32>
      %cst_50 = arith.constant dense<0xFF800000> : vector<128xf32>
      %103 = vector.multi_reduction <maximumf>, %102, %cst_50 [1] : vector<128x128xf32> to vector<128xf32>
      %104 = vector.shape_cast %103 : vector<128xf32> to vector<128x1xf32>
      %105 = vector.broadcast %104 : vector<128x1xf32> to vector<128x128xf32>
      %106 = arith.subf %102, %105 : vector<128x128xf32>
      %107 = math.exp %106 : vector<128x128xf32>
      %cst_51 = arith.constant dense<0.000000e+00> : vector<128xf32>
      %108 = vector.multi_reduction <add>, %107, %cst_51 [1] : vector<128x128xf32> to vector<128xf32>
      %109 = vector.shape_cast %108 : vector<128xf32> to vector<128x1xf32>
      %110 = tpu.reciprocal %109 {approx = true} : vector<128x1xf32> -> vector<128x1xf32>
      %111 = vector.broadcast %110 : vector<128x1xf32> to vector<128x128xf32>
      %112 = arith.mulf %107, %111 : vector<128x128xf32>
      %cst_52 = arith.constant dense<0.000000e+00> : vector<128x8xf32>
      %113 = tpu.matmul %112, %99, %cst_52 {dimension_numbers = #tpu.dot_dimension_numbers<[1], [1], [0], [0], [0, 0, 1, 0], [], []>} : vector<128x128xf32>, vector<8x128xf32>, vector<128x8xf32> -> vector<128x8xf32>
      %114 = vector.extract_strided_slice %57 {offsets = [0, 0], sizes = [8, 64], strides = [1, 1]} : vector<64x64xf32> to vector<8x64xf32>
      %cst_53 = arith.constant dense<0.000000e+00> : vector<128x64xf32>
      %115 = tpu.matmul %113, %114, %cst_53 {dimension_numbers = #tpu.dot_dimension_numbers<[1], [0], [0], [1], [0, 0, 1, 1], [], []>} : vector<128x8xf32>, vector<8x64xf32>, vector<128x64xf32> -> vector<128x64xf32>
      %116 = arith.addf %arg17, %115 : vector<128x64xf32>
      %117 = vector.extract_strided_slice %94 {offsets = [0, 136], sizes = [128, 8], strides = [1, 1]} : vector<128x192xf32> to vector<128x8xf32>
      %118 = vector.extract_strided_slice %96 {offsets = [8, 0], sizes = [8, 128], strides = [1, 1]} : vector<128x128xf32> to vector<8x128xf32>
      %119 = vector.extract_strided_slice %96 {offsets = [72, 0], sizes = [8, 128], strides = [1, 1]} : vector<128x128xf32> to vector<8x128xf32>
      %cst_54 = arith.constant dense<0.000000e+00> : vector<128x128xf32>
      %120 = tpu.matmul %117, %118, %cst_54 {dimension_numbers = #tpu.dot_dimension_numbers<[1], [0], [0], [1], [0, 0, 1, 1], [], []>} : vector<128x8xf32>, vector<8x128xf32>, vector<128x128xf32> -> vector<128x128xf32>
      %cst_55 = arith.constant 0.353553385 : f32
      %121 = vector.broadcast %cst_55 : f32 to vector<128x128xf32>
      %122 = arith.mulf %120, %121 : vector<128x128xf32>
      %cst_56 = arith.constant dense<0xFF800000> : vector<128xf32>
      %123 = vector.multi_reduction <maximumf>, %122, %cst_56 [1] : vector<128x128xf32> to vector<128xf32>
      %124 = vector.shape_cast %123 : vector<128xf32> to vector<128x1xf32>
      %125 = vector.broadcast %124 : vector<128x1xf32> to vector<128x128xf32>
      %126 = arith.subf %122, %125 : vector<128x128xf32>
      %127 = math.exp %126 : vector<128x128xf32>
      %cst_57 = arith.constant dense<0.000000e+00> : vector<128xf32>
      %128 = vector.multi_reduction <add>, %127, %cst_57 [1] : vector<128x128xf32> to vector<128xf32>
      %129 = vector.shape_cast %128 : vector<128xf32> to vector<128x1xf32>
      %130 = tpu.reciprocal %129 {approx = true} : vector<128x1xf32> -> vector<128x1xf32>
      %131 = vector.broadcast %130 : vector<128x1xf32> to vector<128x128xf32>
      %132 = arith.mulf %127, %131 : vector<128x128xf32>
      %cst_58 = arith.constant dense<0.000000e+00> : vector<128x8xf32>
      %133 = tpu.matmul %132, %119, %cst_58 {dimension_numbers = #tpu.dot_dimension_numbers<[1], [1], [0], [0], [0, 0, 1, 0], [], []>} : vector<128x128xf32>, vector<8x128xf32>, vector<128x8xf32> -> vector<128x8xf32>
      %134 = vector.extract_strided_slice %57 {offsets = [8, 0], sizes = [8, 64], strides = [1, 1]} : vector<64x64xf32> to vector<8x64xf32>
      %cst_59 = arith.constant dense<0.000000e+00> : vector<128x64xf32>
      %135 = tpu.matmul %133, %134, %cst_59 {dimension_numbers = #tpu.dot_dimension_numbers<[1], [0], [0], [1], [0, 0, 1, 1], [], []>} : vector<128x8xf32>, vector<8x64xf32>, vector<128x64xf32> -> vector<128x64xf32>
      %136 = arith.addf %116, %135 : vector<128x64xf32>
      %137 = vector.extract_strided_slice %94 {offsets = [0, 144], sizes = [128, 8], strides = [1, 1]} : vector<128x192xf32> to vector<128x8xf32>
      %138 = vector.extract_strided_slice %96 {offsets = [16, 0], sizes = [8, 128], strides = [1, 1]} : vector<128x128xf32> to vector<8x128xf32>
      %139 = vector.extract_strided_slice %96 {offsets = [80, 0], sizes = [8, 128], strides = [1, 1]} : vector<128x128xf32> to vector<8x128xf32>
      %cst_60 = arith.constant dense<0.000000e+00> : vector<128x128xf32>
      %140 = tpu.matmul %137, %138, %cst_60 {dimension_numbers = #tpu.dot_dimension_numbers<[1], [0], [0], [1], [0, 0, 1, 1], [], []>} : vector<128x8xf32>, vector<8x128xf32>, vector<128x128xf32> -> vector<128x128xf32>
      %cst_61 = arith.constant 0.353553385 : f32
      %141 = vector.broadcast %cst_61 : f32 to vector<128x128xf32>
      %142 = arith.mulf %140, %141 : vector<128x128xf32>
      %cst_62 = arith.constant dense<0xFF800000> : vector<128xf32>
      %143 = vector.multi_reduction <maximumf>, %142, %cst_62 [1] : vector<128x128xf32> to vector<128xf32>
      %144 = vector.shape_cast %143 : vector<128xf32> to vector<128x1xf32>
      %145 = vector.broadcast %144 : vector<128x1xf32> to vector<128x128xf32>
      %146 = arith.subf %142, %145 : vector<128x128xf32>
      %147 = math.exp %146 : vector<128x128xf32>
      %cst_63 = arith.constant dense<0.000000e+00> : vector<128xf32>
      %148 = vector.multi_reduction <add>, %147, %cst_63 [1] : vector<128x128xf32> to vector<128xf32>
      %149 = vector.shape_cast %148 : vector<128xf32> to vector<128x1xf32>
      %150 = tpu.reciprocal %149 {approx = true} : vector<128x1xf32> -> vector<128x1xf32>
      %151 = vector.broadcast %150 : vector<128x1xf32> to vector<128x128xf32>
      %152 = arith.mulf %147, %151 : vector<128x128xf32>
      %cst_64 = arith.constant dense<0.000000e+00> : vector<128x8xf32>
      %153 = tpu.matmul %152, %139, %cst_64 {dimension_numbers = #tpu.dot_dimension_numbers<[1], [1], [0], [0], [0, 0, 1, 0], [], []>} : vector<128x128xf32>, vector<8x128xf32>, vector<128x8xf32> -> vector<128x8xf32>
      %154 = vector.extract_strided_slice %57 {offsets = [16, 0], sizes = [8, 64], strides = [1, 1]} : vector<64x64xf32> to vector<8x64xf32>
      %cst_65 = arith.constant dense<0.000000e+00> : vector<128x64xf32>
      %155 = tpu.matmul %153, %154, %cst_65 {dimension_numbers = #tpu.dot_dimension_numbers<[1], [0], [0], [1], [0, 0, 1, 1], [], []>} : vector<128x8xf32>, vector<8x64xf32>, vector<128x64xf32> -> vector<128x64xf32>
      %156 = arith.addf %136, %155 : vector<128x64xf32>
      %157 = vector.extract_strided_slice %94 {offsets = [0, 152], sizes = [128, 8], strides = [1, 1]} : vector<128x192xf32> to vector<128x8xf32>
      %158 = vector.extract_strided_slice %96 {offsets = [24, 0], sizes = [8, 128], strides = [1, 1]} : vector<128x128xf32> to vector<8x128xf32>
      %159 = vector.extract_strided_slice %96 {offsets = [88, 0], sizes = [8, 128], strides = [1, 1]} : vector<128x128xf32> to vector<8x128xf32>
      %cst_66 = arith.constant dense<0.000000e+00> : vector<128x128xf32>
      %160 = tpu.matmul %157, %158, %cst_66 {dimension_numbers = #tpu.dot_dimension_numbers<[1], [0], [0], [1], [0, 0, 1, 1], [], []>} : vector<128x8xf32>, vector<8x128xf32>, vector<128x128xf32> -> vector<128x128xf32>
      %cst_67 = arith.constant 0.353553385 : f32
      %161 = vector.broadcast %cst_67 : f32 to vector<128x128xf32>
      %162 = arith.mulf %160, %161 : vector<128x128xf32>
      %cst_68 = arith.constant dense<0xFF800000> : vector<128xf32>
      %163 = vector.multi_reduction <maximumf>, %162, %cst_68 [1] : vector<128x128xf32> to vector<128xf32>
      %164 = vector.shape_cast %163 : vector<128xf32> to vector<128x1xf32>
      %165 = vector.broadcast %164 : vector<128x1xf32> to vector<128x128xf32>
      %166 = arith.subf %162, %165 : vector<128x128xf32>
      %167 = math.exp %166 : vector<128x128xf32>
      %cst_69 = arith.constant dense<0.000000e+00> : vector<128xf32>
      %168 = vector.multi_reduction <add>, %167, %cst_69 [1] : vector<128x128xf32> to vector<128xf32>
      %169 = vector.shape_cast %168 : vector<128xf32> to vector<128x1xf32>
      %170 = tpu.reciprocal %169 {approx = true} : vector<128x1xf32> -> vector<128x1xf32>
      %171 = vector.broadcast %170 : vector<128x1xf32> to vector<128x128xf32>
      %172 = arith.mulf %167, %171 : vector<128x128xf32>
      %cst_70 = arith.constant dense<0.000000e+00> : vector<128x8xf32>
      %173 = tpu.matmul %172, %159, %cst_70 {dimension_numbers = #tpu.dot_dimension_numbers<[1], [1], [0], [0], [0, 0, 1, 0], [], []>} : vector<128x128xf32>, vector<8x128xf32>, vector<128x8xf32> -> vector<128x8xf32>
      %174 = vector.extract_strided_slice %57 {offsets = [24, 0], sizes = [8, 64], strides = [1, 1]} : vector<64x64xf32> to vector<8x64xf32>
      %cst_71 = arith.constant dense<0.000000e+00> : vector<128x64xf32>
      %175 = tpu.matmul %173, %174, %cst_71 {dimension_numbers = #tpu.dot_dimension_numbers<[1], [0], [0], [1], [0, 0, 1, 1], [], []>} : vector<128x8xf32>, vector<8x64xf32>, vector<128x64xf32> -> vector<128x64xf32>
      %176 = arith.addf %156, %175 : vector<128x64xf32>
      %177 = vector.extract_strided_slice %94 {offsets = [0, 160], sizes = [128, 8], strides = [1, 1]} : vector<128x192xf32> to vector<128x8xf32>
      %178 = vector.extract_strided_slice %96 {offsets = [32, 0], sizes = [8, 128], strides = [1, 1]} : vector<128x128xf32> to vector<8x128xf32>
      %179 = vector.extract_strided_slice %96 {offsets = [96, 0], sizes = [8, 128], strides = [1, 1]} : vector<128x128xf32> to vector<8x128xf32>
      %cst_72 = arith.constant dense<0.000000e+00> : vector<128x128xf32>
      %180 = tpu.matmul %177, %178, %cst_72 {dimension_numbers = #tpu.dot_dimension_numbers<[1], [0], [0], [1], [0, 0, 1, 1], [], []>} : vector<128x8xf32>, vector<8x128xf32>, vector<128x128xf32> -> vector<128x128xf32>
      %cst_73 = arith.constant 0.353553385 : f32
      %181 = vector.broadcast %cst_73 : f32 to vector<128x128xf32>
      %182 = arith.mulf %180, %181 : vector<128x128xf32>
      %cst_74 = arith.constant dense<0xFF800000> : vector<128xf32>
      %183 = vector.multi_reduction <maximumf>, %182, %cst_74 [1] : vector<128x128xf32> to vector<128xf32>
      %184 = vector.shape_cast %183 : vector<128xf32> to vector<128x1xf32>
      %185 = vector.broadcast %184 : vector<128x1xf32> to vector<128x128xf32>
      %186 = arith.subf %182, %185 : vector<128x128xf32>
      %187 = math.exp %186 : vector<128x128xf32>
      %cst_75 = arith.constant dense<0.000000e+00> : vector<128xf32>
      %188 = vector.multi_reduction <add>, %187, %cst_75 [1] : vector<128x128xf32> to vector<128xf32>
      %189 = vector.shape_cast %188 : vector<128xf32> to vector<128x1xf32>
      %190 = tpu.reciprocal %189 {approx = true} : vector<128x1xf32> -> vector<128x1xf32>
      %191 = vector.broadcast %190 : vector<128x1xf32> to vector<128x128xf32>
      %192 = arith.mulf %187, %191 : vector<128x128xf32>
      %cst_76 = arith.constant dense<0.000000e+00> : vector<128x8xf32>
      %193 = tpu.matmul %192, %179, %cst_76 {dimension_numbers = #tpu.dot_dimension_numbers<[1], [1], [0], [0], [0, 0, 1, 0], [], []>} : vector<128x128xf32>, vector<8x128xf32>, vector<128x8xf32> -> vector<128x8xf32>
      %194 = vector.extract_strided_slice %57 {offsets = [32, 0], sizes = [8, 64], strides = [1, 1]} : vector<64x64xf32> to vector<8x64xf32>
      %cst_77 = arith.constant dense<0.000000e+00> : vector<128x64xf32>
      %195 = tpu.matmul %193, %194, %cst_77 {dimension_numbers = #tpu.dot_dimension_numbers<[1], [0], [0], [1], [0, 0, 1, 1], [], []>} : vector<128x8xf32>, vector<8x64xf32>, vector<128x64xf32> -> vector<128x64xf32>
      %196 = arith.addf %176, %195 : vector<128x64xf32>
      %197 = vector.extract_strided_slice %94 {offsets = [0, 168], sizes = [128, 8], strides = [1, 1]} : vector<128x192xf32> to vector<128x8xf32>
      %198 = vector.extract_strided_slice %96 {offsets = [40, 0], sizes = [8, 128], strides = [1, 1]} : vector<128x128xf32> to vector<8x128xf32>
      %199 = vector.extract_strided_slice %96 {offsets = [104, 0], sizes = [8, 128], strides = [1, 1]} : vector<128x128xf32> to vector<8x128xf32>
      %cst_78 = arith.constant dense<0.000000e+00> : vector<128x128xf32>
      %200 = tpu.matmul %197, %198, %cst_78 {dimension_numbers = #tpu.dot_dimension_numbers<[1], [0], [0], [1], [0, 0, 1, 1], [], []>} : vector<128x8xf32>, vector<8x128xf32>, vector<128x128xf32> -> vector<128x128xf32>
      %cst_79 = arith.constant 0.353553385 : f32
      %201 = vector.broadcast %cst_79 : f32 to vector<128x128xf32>
      %202 = arith.mulf %200, %201 : vector<128x128xf32>
      %cst_80 = arith.constant dense<0xFF800000> : vector<128xf32>
      %203 = vector.multi_reduction <maximumf>, %202, %cst_80 [1] : vector<128x128xf32> to vector<128xf32>
      %204 = vector.shape_cast %203 : vector<128xf32> to vector<128x1xf32>
      %205 = vector.broadcast %204 : vector<128x1xf32> to vector<128x128xf32>
      %206 = arith.subf %202, %205 : vector<128x128xf32>
      %207 = math.exp %206 : vector<128x128xf32>
      %cst_81 = arith.constant dense<0.000000e+00> : vector<128xf32>
      %208 = vector.multi_reduction <add>, %207, %cst_81 [1] : vector<128x128xf32> to vector<128xf32>
      %209 = vector.shape_cast %208 : vector<128xf32> to vector<128x1xf32>
      %210 = tpu.reciprocal %209 {approx = true} : vector<128x1xf32> -> vector<128x1xf32>
      %211 = vector.broadcast %210 : vector<128x1xf32> to vector<128x128xf32>
      %212 = arith.mulf %207, %211 : vector<128x128xf32>
      %cst_82 = arith.constant dense<0.000000e+00> : vector<128x8xf32>
      %213 = tpu.matmul %212, %199, %cst_82 {dimension_numbers = #tpu.dot_dimension_numbers<[1], [1], [0], [0], [0, 0, 1, 0], [], []>} : vector<128x128xf32>, vector<8x128xf32>, vector<128x8xf32> -> vector<128x8xf32>
      %214 = vector.extract_strided_slice %57 {offsets = [40, 0], sizes = [8, 64], strides = [1, 1]} : vector<64x64xf32> to vector<8x64xf32>
      %cst_83 = arith.constant dense<0.000000e+00> : vector<128x64xf32>
      %215 = tpu.matmul %213, %214, %cst_83 {dimension_numbers = #tpu.dot_dimension_numbers<[1], [0], [0], [1], [0, 0, 1, 1], [], []>} : vector<128x8xf32>, vector<8x64xf32>, vector<128x64xf32> -> vector<128x64xf32>
      %216 = arith.addf %196, %215 : vector<128x64xf32>
      %217 = vector.extract_strided_slice %94 {offsets = [0, 176], sizes = [128, 8], strides = [1, 1]} : vector<128x192xf32> to vector<128x8xf32>
      %218 = vector.extract_strided_slice %96 {offsets = [48, 0], sizes = [8, 128], strides = [1, 1]} : vector<128x128xf32> to vector<8x128xf32>
      %219 = vector.extract_strided_slice %96 {offsets = [112, 0], sizes = [8, 128], strides = [1, 1]} : vector<128x128xf32> to vector<8x128xf32>
      %cst_84 = arith.constant dense<0.000000e+00> : vector<128x128xf32>
      %220 = tpu.matmul %217, %218, %cst_84 {dimension_numbers = #tpu.dot_dimension_numbers<[1], [0], [0], [1], [0, 0, 1, 1], [], []>} : vector<128x8xf32>, vector<8x128xf32>, vector<128x128xf32> -> vector<128x128xf32>
      %cst_85 = arith.constant 0.353553385 : f32
      %221 = vector.broadcast %cst_85 : f32 to vector<128x128xf32>
      %222 = arith.mulf %220, %221 : vector<128x128xf32>
      %cst_86 = arith.constant dense<0xFF800000> : vector<128xf32>
      %223 = vector.multi_reduction <maximumf>, %222, %cst_86 [1] : vector<128x128xf32> to vector<128xf32>
      %224 = vector.shape_cast %223 : vector<128xf32> to vector<128x1xf32>
      %225 = vector.broadcast %224 : vector<128x1xf32> to vector<128x128xf32>
      %226 = arith.subf %222, %225 : vector<128x128xf32>
      %227 = math.exp %226 : vector<128x128xf32>
      %cst_87 = arith.constant dense<0.000000e+00> : vector<128xf32>
      %228 = vector.multi_reduction <add>, %227, %cst_87 [1] : vector<128x128xf32> to vector<128xf32>
      %229 = vector.shape_cast %228 : vector<128xf32> to vector<128x1xf32>
      %230 = tpu.reciprocal %229 {approx = true} : vector<128x1xf32> -> vector<128x1xf32>
      %231 = vector.broadcast %230 : vector<128x1xf32> to vector<128x128xf32>
      %232 = arith.mulf %227, %231 : vector<128x128xf32>
      %cst_88 = arith.constant dense<0.000000e+00> : vector<128x8xf32>
      %233 = tpu.matmul %232, %219, %cst_88 {dimension_numbers = #tpu.dot_dimension_numbers<[1], [1], [0], [0], [0, 0, 1, 0], [], []>} : vector<128x128xf32>, vector<8x128xf32>, vector<128x8xf32> -> vector<128x8xf32>
      %234 = vector.extract_strided_slice %57 {offsets = [48, 0], sizes = [8, 64], strides = [1, 1]} : vector<64x64xf32> to vector<8x64xf32>
      %cst_89 = arith.constant dense<0.000000e+00> : vector<128x64xf32>
      %235 = tpu.matmul %233, %234, %cst_89 {dimension_numbers = #tpu.dot_dimension_numbers<[1], [0], [0], [1], [0, 0, 1, 1], [], []>} : vector<128x8xf32>, vector<8x64xf32>, vector<128x64xf32> -> vector<128x64xf32>
      %236 = arith.addf %216, %235 : vector<128x64xf32>
      %237 = vector.extract_strided_slice %94 {offsets = [0, 184], sizes = [128, 8], strides = [1, 1]} : vector<128x192xf32> to vector<128x8xf32>
      %238 = vector.extract_strided_slice %96 {offsets = [56, 0], sizes = [8, 128], strides = [1, 1]} : vector<128x128xf32> to vector<8x128xf32>
      %239 = vector.extract_strided_slice %96 {offsets = [120, 0], sizes = [8, 128], strides = [1, 1]} : vector<128x128xf32> to vector<8x128xf32>
      %cst_90 = arith.constant dense<0.000000e+00> : vector<128x128xf32>
      %240 = tpu.matmul %237, %238, %cst_90 {dimension_numbers = #tpu.dot_dimension_numbers<[1], [0], [0], [1], [0, 0, 1, 1], [], []>} : vector<128x8xf32>, vector<8x128xf32>, vector<128x128xf32> -> vector<128x128xf32>
      %cst_91 = arith.constant 0.353553385 : f32
      %241 = vector.broadcast %cst_91 : f32 to vector<128x128xf32>
      %242 = arith.mulf %240, %241 : vector<128x128xf32>
      %cst_92 = arith.constant dense<0xFF800000> : vector<128xf32>
      %243 = vector.multi_reduction <maximumf>, %242, %cst_92 [1] : vector<128x128xf32> to vector<128xf32>
      %244 = vector.shape_cast %243 : vector<128xf32> to vector<128x1xf32>
      %245 = vector.broadcast %244 : vector<128x1xf32> to vector<128x128xf32>
      %246 = arith.subf %242, %245 : vector<128x128xf32>
      %247 = math.exp %246 : vector<128x128xf32>
      %cst_93 = arith.constant dense<0.000000e+00> : vector<128xf32>
      %248 = vector.multi_reduction <add>, %247, %cst_93 [1] : vector<128x128xf32> to vector<128xf32>
      %249 = vector.shape_cast %248 : vector<128xf32> to vector<128x1xf32>
      %250 = tpu.reciprocal %249 {approx = true} : vector<128x1xf32> -> vector<128x1xf32>
      %251 = vector.broadcast %250 : vector<128x1xf32> to vector<128x128xf32>
      %252 = arith.mulf %247, %251 : vector<128x128xf32>
      %cst_94 = arith.constant dense<0.000000e+00> : vector<128x8xf32>
      %253 = tpu.matmul %252, %239, %cst_94 {dimension_numbers = #tpu.dot_dimension_numbers<[1], [1], [0], [0], [0, 0, 1, 0], [], []>} : vector<128x128xf32>, vector<8x128xf32>, vector<128x8xf32> -> vector<128x8xf32>
      %254 = vector.extract_strided_slice %57 {offsets = [56, 0], sizes = [8, 64], strides = [1, 1]} : vector<64x64xf32> to vector<8x64xf32>
      %cst_95 = arith.constant dense<0.000000e+00> : vector<128x64xf32>
      %255 = tpu.matmul %253, %254, %cst_95 {dimension_numbers = #tpu.dot_dimension_numbers<[1], [0], [0], [1], [0, 0, 1, 1], [], []>} : vector<128x8xf32>, vector<8x64xf32>, vector<128x64xf32> -> vector<128x64xf32>
      %256 = arith.addf %236, %255 : vector<128x64xf32>
      %257 = vector.extract_strided_slice %69 {offsets = [2, 0], sizes = [1, 64], strides = [1, 1]} : vector<6x64xf32> to vector<1x64xf32>
      %258 = vector.broadcast %257 : vector<1x64xf32> to vector<128x64xf32>
      %259 = arith.addf %256, %258 : vector<128x64xf32>
      %260 = vector.extract_strided_slice %69 {offsets = [3, 0], sizes = [1, 64], strides = [1, 1]} : vector<6x64xf32> to vector<1x64xf32>
      %261 = vector.extract_strided_slice %69 {offsets = [4, 0], sizes = [1, 64], strides = [1, 1]} : vector<6x64xf32> to vector<1x64xf32>
      %cst_96 = arith.constant dense<0.000000e+00> : vector<128xf32>
      %262 = vector.multi_reduction <add>, %259, %cst_96 [1] : vector<128x64xf32> to vector<128xf32>
      %263 = vector.shape_cast %262 : vector<128xf32> to vector<128x1xf32>
      %cst_97 = arith.constant 6.400000e+01 : f32
      %264 = vector.broadcast %cst_97 : f32 to vector<128x1xf32>
      %265 = arith.divf %263, %264 : vector<128x1xf32>
      %266 = vector.broadcast %265 : vector<128x1xf32> to vector<128x64xf32>
      %267 = arith.subf %259, %266 : vector<128x64xf32>
      %268 = arith.mulf %267, %267 : vector<128x64xf32>
      %cst_98 = arith.constant dense<0.000000e+00> : vector<128xf32>
      %269 = vector.multi_reduction <add>, %268, %cst_98 [1] : vector<128x64xf32> to vector<128xf32>
      %270 = vector.shape_cast %269 : vector<128xf32> to vector<128x1xf32>
      %cst_99 = arith.constant 6.400000e+01 : f32
      %271 = vector.broadcast %cst_99 : f32 to vector<128x1xf32>
      %272 = arith.divf %270, %271 : vector<128x1xf32>
      %cst_100 = arith.constant 9.99999974E-6 : f32
      %273 = vector.broadcast %cst_100 : f32 to vector<128x1xf32>
      %274 = arith.addf %272, %273 : vector<128x1xf32>
      %275 = math.rsqrt %274 : vector<128x1xf32>
      %276 = vector.broadcast %275 : vector<128x1xf32> to vector<128x64xf32>
      %277 = arith.mulf %267, %276 : vector<128x64xf32>
      %278 = vector.broadcast %260 : vector<1x64xf32> to vector<128x64xf32>
      %279 = arith.mulf %277, %278 : vector<128x64xf32>
      %280 = vector.broadcast %261 : vector<1x64xf32> to vector<128x64xf32>
      %281 = arith.addf %279, %280 : vector<128x64xf32>
      %cst_101 = arith.constant dense<0.000000e+00> : vector<128x256xf32>
      %282 = tpu.matmul %281, %60, %cst_101 {dimension_numbers = #tpu.dot_dimension_numbers<[1], [0], [0], [1], [0, 0, 1, 1], [], []>} : vector<128x64xf32>, vector<64x256xf32>, vector<128x256xf32> -> vector<128x256xf32>
      %283 = vector.broadcast %63 : vector<1x256xf32> to vector<128x256xf32>
      %284 = arith.addf %282, %283 : vector<128x256xf32>
      %cst_102 = arith.constant 5.000000e-01 : f32
      %285 = vector.broadcast %cst_102 : f32 to vector<128x256xf32>
      %286 = arith.mulf %285, %284 : vector<128x256xf32>
      %cst_103 = arith.constant 4.471500e-02 : f32
      %287 = vector.broadcast %cst_103 : f32 to vector<128x256xf32>
      %288 = arith.mulf %287, %284 : vector<128x256xf32>
      %289 = arith.mulf %288, %284 : vector<128x256xf32>
      %290 = arith.mulf %289, %284 : vector<128x256xf32>
      %291 = arith.addf %284, %290 : vector<128x256xf32>
      %cst_104 = arith.constant 0.797884583 : f32
      %292 = vector.broadcast %cst_104 : f32 to vector<128x256xf32>
      %293 = arith.mulf %292, %291 : vector<128x256xf32>
      %294 = math.tanh %293 : vector<128x256xf32>
      %cst_105 = arith.constant 1.000000e+00 : f32
      %295 = vector.broadcast %cst_105 : f32 to vector<128x256xf32>
      %296 = arith.addf %295, %294 : vector<128x256xf32>
      %297 = arith.mulf %286, %296 : vector<128x256xf32>
      %cst_106 = arith.constant dense<0.000000e+00> : vector<128x64xf32>
      %298 = tpu.matmul %297, %66, %cst_106 {dimension_numbers = #tpu.dot_dimension_numbers<[1], [0], [0], [1], [0, 0, 1, 1], [], []>} : vector<128x256xf32>, vector<256x64xf32>, vector<128x64xf32> -> vector<128x64xf32>
      %299 = vector.extract_strided_slice %69 {offsets = [5, 0], sizes = [1, 64], strides = [1, 1]} : vector<6x64xf32> to vector<1x64xf32>
      %300 = vector.broadcast %299 : vector<1x64xf32> to vector<128x64xf32>
      %301 = arith.addf %298, %300 : vector<128x64xf32>
      %302 = arith.addf %259, %301 : vector<128x64xf32>
      scf.yield %302 : vector<128x64xf32>
    }
    %c2_i32_11 = arith.constant 2 : i32
    %c0_12 = arith.constant 0 : index
    %c0_13 = arith.constant 0 : index
    %13 = vector.load %arg12[%c0_12, %c0_13] : memref<2x64xf32, #tpu.memory_space<vmem>>, vector<2x64xf32>
    %14 = vector.extract_strided_slice %13 {offsets = [0, 0], sizes = [1, 64], strides = [1, 1]} : vector<2x64xf32> to vector<1x64xf32>
    %15 = vector.extract_strided_slice %13 {offsets = [1, 0], sizes = [1, 64], strides = [1, 1]} : vector<2x64xf32> to vector<1x64xf32>
    %cst_14 = arith.constant dense<0.000000e+00> : vector<128xf32>
    %16 = vector.multi_reduction <add>, %12, %cst_14 [1] : vector<128x64xf32> to vector<128xf32>
    %17 = vector.shape_cast %16 : vector<128xf32> to vector<128x1xf32>
    %cst_15 = arith.constant 6.400000e+01 : f32
    %18 = vector.broadcast %cst_15 : f32 to vector<128x1xf32>
    %19 = arith.divf %17, %18 : vector<128x1xf32>
    %20 = vector.broadcast %19 : vector<128x1xf32> to vector<128x64xf32>
    %21 = arith.subf %12, %20 : vector<128x64xf32>
    %22 = arith.mulf %21, %21 : vector<128x64xf32>
    %cst_16 = arith.constant dense<0.000000e+00> : vector<128xf32>
    %23 = vector.multi_reduction <add>, %22, %cst_16 [1] : vector<128x64xf32> to vector<128xf32>
    %24 = vector.shape_cast %23 : vector<128xf32> to vector<128x1xf32>
    %cst_17 = arith.constant 6.400000e+01 : f32
    %25 = vector.broadcast %cst_17 : f32 to vector<128x1xf32>
    %26 = arith.divf %24, %25 : vector<128x1xf32>
    %cst_18 = arith.constant 9.99999974E-6 : f32
    %27 = vector.broadcast %cst_18 : f32 to vector<128x1xf32>
    %28 = arith.addf %26, %27 : vector<128x1xf32>
    %29 = math.rsqrt %28 : vector<128x1xf32>
    %30 = vector.broadcast %29 : vector<128x1xf32> to vector<128x64xf32>
    %31 = arith.mulf %21, %30 : vector<128x64xf32>
    %32 = vector.broadcast %14 : vector<1x64xf32> to vector<128x64xf32>
    %33 = arith.mulf %31, %32 : vector<128x64xf32>
    %34 = vector.broadcast %15 : vector<1x64xf32> to vector<128x64xf32>
    %35 = arith.addf %33, %34 : vector<128x64xf32>
    %36 = vector.extract_strided_slice %35 {offsets = [0, 0], sizes = [64, 64], strides = [1, 1]} : vector<128x64xf32> to vector<64x64xf32>
    %37 = vector.extract_strided_slice %35 {offsets = [64, 0], sizes = [64, 64], strides = [1, 1]} : vector<128x64xf32> to vector<64x64xf32>
    %38 = tpu.concatenate %36, %37 in 1 : vector<64x64xf32>, vector<64x64xf32> -> vector<64x128xf32>
    %c0_19 = arith.constant 0 : index
    %c0_20 = arith.constant 0 : index
    %39 = vector.load %arg13[%c0_19, %c0_20] : memref<64x256xf32, #tpu.memory_space<vmem>>, vector<64x256xf32>
    %cst_21 = arith.constant dense<0.000000e+00> : vector<128x256xf32>
    %40 = tpu.matmul %38, %39, %cst_21 {dimension_numbers = #tpu.dot_dimension_numbers<[0], [0], [1], [1], [0, 1, 1, 1], [], []>} : vector<64x128xf32>, vector<64x256xf32>, vector<128x256xf32> -> vector<128x256xf32>
    %41 = vector.extract_strided_slice %40 {offsets = [0, 0], sizes = [64, 256], strides = [1, 1]} : vector<128x256xf32> to vector<64x256xf32>
    %c0_22 = arith.constant 0 : index
    %c0_23 = arith.constant 0 : index
    %c0_24 = arith.constant 0 : index
    %42 = vector.load %arg14[%c0_22, %c0_23, %c0_24] : memref<1x64x256xf32, #tpu.memory_space<vmem>>, vector<1x64x256xf32>
    %43 = vector.shape_cast %42 : vector<1x64x256xf32> to vector<64x256xf32>
    %44 = vector.shape_cast %41 : vector<64x256xf32> to vector<1x64x256xf32>
    tpu.vector_store %arg14[%c0_22, %c0_23, %c0_24], %44 {strides = array<i32>} : memref<1x64x256xf32, #tpu.memory_space<vmem>>, vector<1x64x256xf32>,
    %45 = vector.extract_strided_slice %40 {offsets = [64, 0], sizes = [64, 256], strides = [1, 1]} : vector<128x256xf32> to vector<64x256xf32>
    %c0_25 = arith.constant 0 : index
    %c0_26 = arith.constant 0 : index
    %c0_27 = arith.constant 0 : index
    %46 = vector.load %arg15[%c0_25, %c0_26, %c0_27] : memref<1x64x256xf32, #tpu.memory_space<vmem>>, vector<1x64x256xf32>
    %47 = vector.shape_cast %46 : vector<1x64x256xf32> to vector<64x256xf32>
    %48 = vector.shape_cast %45 : vector<64x256xf32> to vector<1x64x256xf32>
    tpu.vector_store %arg15[%c0_25, %c0_26, %c0_27], %48 {strides = array<i32>} : memref<1x64x256xf32, #tpu.memory_space<vmem>>, vector<1x64x256xf32>,
    return
  }
  func.func @transform_0(%arg0: i32) -> (i32, i32, i32) {
    %c0_i32 = arith.constant 0 : i32
    %c0_i32_0 = arith.constant 0 : i32
    %c0_i32_1 = arith.constant 0 : i32
    return %arg0, %c0_i32, %c0_i32_0 : i32, i32, i32
  }
  func.func @transform_1(%arg0: i32) -> (i32, i32, i32) {
    %c0_i32 = arith.constant 0 : i32
    %c0_i32_0 = arith.constant 0 : i32
    %c0_i32_1 = arith.constant 0 : i32
    return %arg0, %c0_i32, %c0_i32_0 : i32, i32, i32
  }
  func.func @transform_2(%arg0: i32) -> (i32, i32) {
    %c0_i32 = arith.constant 0 : i32
    %c0_i32_0 = arith.constant 0 : i32
    %c0_i32_1 = arith.constant 0 : i32
    return %c0_i32, %c0_i32_0 : i32, i32
  }
  func.func @transform_3(%arg0: i32) -> (i32, i32, i32) {
    %c0_i32 = arith.constant 0 : i32
    %c0_i32_0 = arith.constant 0 : i32
    %c0_i32_1 = arith.constant 0 : i32
    %c0_i32_2 = arith.constant 0 : i32
    return %c0_i32, %c0_i32_0, %c0_i32_1 : i32, i32, i32
  }
  func.func @transform_4(%arg0: i32) -> (i32, i32, i32) {
    %c0_i32 = arith.constant 0 : i32
    %c0_i32_0 = arith.constant 0 : i32
    %c0_i32_1 = arith.constant 0 : i32
    %c0_i32_2 = arith.constant 0 : i32
    return %c0_i32, %c0_i32_0, %c0_i32_1 : i32, i32, i32
  }
  func.func @transform_5(%arg0: i32) -> (i32, i32, i32) {
    %c0_i32 = arith.constant 0 : i32
    %c0_i32_0 = arith.constant 0 : i32
    %c0_i32_1 = arith.constant 0 : i32
    %c0_i32_2 = arith.constant 0 : i32
    return %c0_i32, %c0_i32_0, %c0_i32_1 : i32, i32, i32
  }
  func.func @transform_6(%arg0: i32) -> (i32, i32, i32) {
    %c0_i32 = arith.constant 0 : i32
    %c0_i32_0 = arith.constant 0 : i32
    %c0_i32_1 = arith.constant 0 : i32
    %c0_i32_2 = arith.constant 0 : i32
    return %c0_i32, %c0_i32_0, %c0_i32_1 : i32, i32, i32
  }
  func.func @transform_7(%arg0: i32) -> (i32, i32, i32) {
    %c0_i32 = arith.constant 0 : i32
    %c0_i32_0 = arith.constant 0 : i32
    %c0_i32_1 = arith.constant 0 : i32
    %c0_i32_2 = arith.constant 0 : i32
    return %c0_i32, %c0_i32_0, %c0_i32_1 : i32, i32, i32
  }
  func.func @transform_8(%arg0: i32) -> (i32, i32, i32) {
    %c0_i32 = arith.constant 0 : i32
    %c0_i32_0 = arith.constant 0 : i32
    %c0_i32_1 = arith.constant 0 : i32
    %c0_i32_2 = arith.constant 0 : i32
    return %c0_i32, %c0_i32_0, %c0_i32_1 : i32, i32, i32
  }
  func.func @transform_9(%arg0: i32) -> (i32, i32, i32) {
    %c0_i32 = arith.constant 0 : i32
    %c0_i32_0 = arith.constant 0 : i32
    %c0_i32_1 = arith.constant 0 : i32
    %c0_i32_2 = arith.constant 0 : i32
    return %c0_i32, %c0_i32_0, %c0_i32_1 : i32, i32, i32
  }
  func.func @transform_10(%arg0: i32) -> (i32, i32, i32) {
    %c0_i32 = arith.constant 0 : i32
    %c0_i32_0 = arith.constant 0 : i32
    %c0_i32_1 = arith.constant 0 : i32
    %c0_i32_2 = arith.constant 0 : i32
    return %c0_i32, %c0_i32_0, %c0_i32_1 : i32, i32, i32
  }
  func.func @transform_11(%arg0: i32) -> (i32, i32) {
    %c0_i32 = arith.constant 0 : i32
    %c0_i32_0 = arith.constant 0 : i32
    %c0_i32_1 = arith.constant 0 : i32
    return %c0_i32, %c0_i32_0 : i32, i32
  }
  func.func @transform_12(%arg0: i32) -> (i32, i32) {
    %c0_i32 = arith.constant 0 : i32
    %c0_i32_0 = arith.constant 0 : i32
    %c0_i32_1 = arith.constant 0 : i32
    return %c0_i32, %c0_i32_0 : i32, i32
  }
  func.func @transform_13(%arg0: i32) -> (i32, i32, i32) {
    %c0_i32 = arith.constant 0 : i32
    %c0_i32_0 = arith.constant 0 : i32
    %c0_i32_1 = arith.constant 0 : i32
    return %arg0, %c0_i32, %c0_i32_0 : i32, i32, i32
  }
  func.func @transform_14(%arg0: i32) -> (i32, i32, i32) {
    %c0_i32 = arith.constant 0 : i32
    %c0_i32_0 = arith.constant 0 : i32
    %c0_i32_1 = arith.constant 0 : i32
    return %arg0, %c0_i32, %c0_i32_0 : i32, i32, i32
  }
}

</mosaic_0001>

<llo_original>
// kernel: gpt_forward.1
$region0: #{gpt_forward.1}
  #allocation0 [shape = 'u32[]', space=smem, size = 0x4, offset = 0x4, fixed_abs, tag = 'smem constant byte address 0x4 - core index']
  #allocation1 [shape = 'u32[144,128]{1,0:T(1,128)}', space=vmem, size = 0x12000, scoped, tag = 'internal scratch']
  %s0 = inlined_call_operand.vmem [shape: f32[2,64,256], index: 0, kind: input, shape index: {}]
  %s1 = inlined_call_operand.vmem [shape: f32[2,64,256], index: 1, kind: input, shape index: {}]
  %s2 = inlined_call_operand.vmem [shape: f32[64,256], index: 2, kind: input, shape index: {}]
  %s3 = inlined_call_operand.vmem [shape: f32[1,128,64], index: 3, kind: input, shape index: {}]
  %s4 = inlined_call_operand.vmem [shape: f32[2,64,192], index: 4, kind: input, shape index: {}]
  %s5 = inlined_call_operand.vmem [shape: f32[2,1,192], index: 5, kind: input, shape index: {}]
  %s6 = inlined_call_operand.vmem [shape: f32[2,64,64], index: 6, kind: input, shape index: {}]
  %s7 = inlined_call_operand.vmem [shape: f32[2,64,256], index: 7, kind: input, shape index: {}]
  %s8 = inlined_call_operand.vmem [shape: f32[2,1,256], index: 8, kind: input, shape index: {}]
  %s9 = inlined_call_operand.vmem [shape: f32[2,256,64], index: 9, kind: input, shape index: {}]
  %s10 = inlined_call_operand.vmem [shape: f32[2,6,64], index: 10, kind: input, shape index: {}]
  %s11 = inlined_call_operand.vmem [shape: f32[2,64], index: 11, kind: input, shape index: {}]
  %s12 = inlined_call_operand.vmem [shape: f32[64,256], index: 12, kind: input, shape index: {}]
  %s13 = inlined_call_operand.vmem [shape: f32[2,64,256], index: 13, kind: output, shape index: {0}]
  %s14 = inlined_call_operand.vmem [shape: f32[2,64,256], index: 14, kind: output, shape index: {1}]
  %15 = xla_tuple %s13, %s14
  %s16 = sld [smem:[#allocation0]]
  $region100: #{gpt_forward.1} parent=0
    _
  %s18 = ssub.s32 1, %s16
  %s19 = scalar_select 0, %s18, %s16
  loop: start=0, step=1, limit=4
  $region2: #{gpt_forward.1} parent=0 // loop_pre_header
    _
  $region3: #{gpt_forward.1} parent=0 // loop_header
    %s21 = sphi 0, %s25
    %p22 = scmp.ge.s32.totalorder %s21, 4
    %s31 = sphi 0, %s33
    %s34 = sphi 0, %s31
    %s35 = sphi 0, %s34
    %s51 = sphi 0, %s35
    %s57 = sphi 0, %s59
    %s60 = sphi 0, %s57
    %s61 = sphi 0, %s60
    %s77 = sphi 0, %s61
    %s81 = sphi 0, %s81
    %s83 = sphi 0, %s81
    %s84 = sphi 0, %s83
    %s98 = sphi 0, %s84
    %s102 = sphi 0, %s102
    %s104 = sphi 0, %s102
    %s105 = sphi 0, %s104
    %s119 = sphi 0, %s105
    %s123 = sphi 0, %s123
    %s125 = sphi 0, %s123
    %s126 = sphi 0, %s125
    %s140 = sphi 0, %s126
    %s144 = sphi 0, %s144
    %s146 = sphi 0, %s144
    %s147 = sphi 0, %s146
    %s161 = sphi 0, %s147
    %s165 = sphi 0, %s165
    %s167 = sphi 0, %s165
    %s168 = sphi 0, %s167
    %s182 = sphi 0, %s168
    %s186 = sphi 0, %s186
    %s188 = sphi 0, %s186
    %s189 = sphi 0, %s188
    %s203 = sphi 0, %s189
    %s207 = sphi 0, %s207
    %s209 = sphi 0, %s207
    %s210 = sphi 0, %s209
    %s224 = sphi 0, %s210
    %s228 = sphi 0, %s228
    %s230 = sphi 0, %s228
    %s231 = sphi 0, %s230
    %s245 = sphi 0, %s231
    %s249 = sphi 0, %s249
    %s251 = sphi 0, %s249
    %s252 = sphi 0, %s251
    %s266 = sphi 0, %s252
    %s270 = sphi 0, %s270
    %s272 = sphi 0, %s270
    %s273 = sphi 0, %s272
    %s287 = sphi 0, %s273
    %s291 = sphi 0, %s291
    %s293 = sphi 0, %s291
    %s294 = sphi 0, %s293
    %s308 = sphi 0, %s294
    %s314 = sphi 0, %s316
    %s317 = sphi 0, %s314
    %s318 = sphi 0, %s317
    %s334 = sphi 0, %s318
    %s340 = sphi 0, %s342
    %s343 = sphi 0, %s340
    %s344 = sphi 0, %s343
    %s360 = sphi 0, %s344
  $region4: #{gpt_forward.1} parent=0 // loop_header_branch
    %24 = sbr.rel (%p22) target = $region8
  $region5: #{gpt_forward.1} parent=0 // loop_body
    %s26 = ssub.s32 %s21, 1
    %s27 = ssub.s32 %s21, 2
    %s28 = sadd.s32 %s21, 1
    %s29 = ssub.s32 %s21, %s28
    %p30 = scmp.eq.s32.totalorder %s29, 0
    %s32 = sadd.s32 %s31, 1
    %s33 = scalar_select %p30, %s31, %s32
    %p36 = pneg %p30
    %p37 = scmp.eq.s32.totalorder %s21, 1
    %p38 = por %p36, %p37
    %p39 = scmp.ne.s32.totalorder %s31, %s34
    %p40 = scmp.eq.s32.totalorder %s21, 0
    %p41 = por %p39, %p40
    %p42 = scmp.ne.s32.totalorder %s31, %s34
    %p43 = scmp.eq.s32.totalorder %s26, 1
    %p44 = por %p42, %p43
    %p45 = scmp.ne.s32.totalorder %s34, %s35
    %p46 = scmp.eq.s32.totalorder %s26, 0
    %p47 = por %p45, %p46
    %p48 = scmp.ne.s32.totalorder %s34, %s35
    %p49 = scmp.eq.s32.totalorder %s27, 1
    %p50 = por %p48, %p49
    %p52 = scmp.ne.s32.totalorder %s35, %s51
    %p53 = scmp.eq.s32.totalorder %s27, 0
    %p54 = por %p52, %p53
    %s55 = ssub.s32 %s21, %s28
    %p56 = scmp.eq.s32.totalorder %s55, 0
    %s58 = sadd.s32 %s57, 1
    %s59 = scalar_select %p56, %s57, %s58
    %p62 = pneg %p56
    %p63 = scmp.eq.s32.totalorder %s21, 1
    %p64 = por %p62, %p63
    %p65 = scmp.ne.s32.totalorder %s57, %s60
    %p66 = scmp.eq.s32.totalorder %s21, 0
    %p67 = por %p65, %p66
    %p68 = scmp.ne.s32.totalorder %s57, %s60
    %p69 = scmp.eq.s32.totalorder %s26, 1
    %p70 = por %p68, %p69
    %p71 = scmp.ne.s32.totalorder %s60, %s61
    %p72 = scmp.eq.s32.totalorder %s26, 0
    %p73 = por %p71, %p72
    %p74 = scmp.ne.s32.totalorder %s60, %s61
    %p75 = scmp.eq.s32.totalorder %s27, 1
    %p76 = por %p74, %p75
    %p78 = scmp.ne.s32.totalorder %s61, %s77
    %p79 = scmp.eq.s32.totalorder %s27, 0
    %p80 = por %p78, %p79
    %s82 = sadd.s32 %s81, 1
    %p85 = scmp.eq.s32.totalorder %s21, 1
    %p86 = scmp.ne.s32.totalorder %s81, %s83
    %p87 = scmp.eq.s32.totalorder %s21, 0
    %p88 = por %p86, %p87
    %p89 = scmp.ne.s32.totalorder %s81, %s83
    %p90 = scmp.eq.s32.totalorder %s26, 1
    %p91 = por %p89, %p90
    %p92 = scmp.ne.s32.totalorder %s83, %s84
    %p93 = scmp.eq.s32.totalorder %s26, 0
    %p94 = por %p92, %p93
    %p95 = scmp.ne.s32.totalorder %s83, %s84
    %p96 = scmp.eq.s32.totalorder %s27, 1
    %p97 = por %p95, %p96
    %p99 = scmp.ne.s32.totalorder %s84, %s98
    %p100 = scmp.eq.s32.totalorder %s27, 0
    %p101 = por %p99, %p100
    %s103 = sadd.s32 %s102, 1
    %p106 = scmp.eq.s32.totalorder %s21, 1
    %p107 = scmp.ne.s32.totalorder %s102, %s104
    %p108 = scmp.eq.s32.totalorder %s21, 0
    %p109 = por %p107, %p108
    %p110 = scmp.ne.s32.totalorder %s102, %s104
    %p111 = scmp.eq.s32.totalorder %s26, 1
    %p112 = por %p110, %p111
    %p113 = scmp.ne.s32.totalorder %s104, %s105
    %p114 = scmp.eq.s32.totalorder %s26, 0
    %p115 = por %p113, %p114
    %p116 = scmp.ne.s32.totalorder %s104, %s105
    %p117 = scmp.eq.s32.totalorder %s27, 1
    %p118 = por %p116, %p117
    %p120 = scmp.ne.s32.totalorder %s105, %s119
    %p121 = scmp.eq.s32.totalorder %s27, 0
    %p122 = por %p120, %p121
    %s124 = sadd.s32 %s123, 1
    %p127 = scmp.eq.s32.totalorder %s21, 1
    %p128 = scmp.ne.s32.totalorder %s123, %s125
    %p129 = scmp.eq.s32.totalorder %s21, 0
    %p130 = por %p128, %p129
    %p131 = scmp.ne.s32.totalorder %s123, %s125
    %p132 = scmp.eq.s32.totalorder %s26, 1
    %p133 = por %p131, %p132
    %p134 = scmp.ne.s32.totalorder %s125, %s126
    %p135 = scmp.eq.s32.totalorder %s26, 0
    %p136 = por %p134, %p135
    %p137 = scmp.ne.s32.totalorder %s125, %s126
    %p138 = scmp.eq.s32.totalorder %s27, 1
    %p139 = por %p137, %p138
    %p141 = scmp.ne.s32.totalorder %s126, %s140
    %p142 = scmp.eq.s32.totalorder %s27, 0
    %p143 = por %p141, %p142
    %s145 = sadd.s32 %s144, 1
    %p148 = scmp.eq.s32.totalorder %s21, 1
    %p149 = scmp.ne.s32.totalorder %s144, %s146
    %p150 = scmp.eq.s32.totalorder %s21, 0
    %p151 = por %p149, %p150
    %p152 = scmp.ne.s32.totalorder %s144, %s146
    %p153 = scmp.eq.s32.totalorder %s26, 1
    %p154 = por %p152, %p153
    %p155 = scmp.ne.s32.totalorder %s146, %s147
    %p156 = scmp.eq.s32.totalorder %s26, 0
    %p157 = por %p155, %p156
    %p158 = scmp.ne.s32.totalorder %s146, %s147
    %p159 = scmp.eq.s32.totalorder %s27, 1
    %p160 = por %p158, %p159
    %p162 = scmp.ne.s32.totalorder %s147, %s161
    %p163 = scmp.eq.s32.totalorder %s27, 0
    %p164 = por %p162, %p163
    %s166 = sadd.s32 %s165, 1
    %p169 = scmp.eq.s32.totalorder %s21, 1
    %p170 = scmp.ne.s32.totalorder %s165, %s167
    %p171 = scmp.eq.s32.totalorder %s21, 0
    %p172 = por %p170, %p171
    %p173 = scmp.ne.s32.totalorder %s165, %s167
    %p174 = scmp.eq.s32.totalorder %s26, 1
    %p175 = por %p173, %p174
    %p176 = scmp.ne.s32.totalorder %s167, %s168
    %p177 = scmp.eq.s32.totalorder %s26, 0
    %p178 = por %p176, %p177
    %p179 = scmp.ne.s32.totalorder %s167, %s168
    %p180 = scmp.eq.s32.totalorder %s27, 1
    %p181 = por %p179, %p180
    %p183 = scmp.ne.s32.totalorder %s168, %s182
    %p184 = scmp.eq.s32.totalorder %s27, 0
    %p185 = por %p183, %p184
    %s187 = sadd.s32 %s186, 1
    %p190 = scmp.eq.s32.totalorder %s21, 1
    %p191 = scmp.ne.s32.totalorder %s186, %s188
    %p192 = scmp.eq.s32.totalorder %s21, 0
    %p193 = por %p191, %p192
    %p194 = scmp.ne.s32.totalorder %s186, %s188
    %p195 = scmp.eq.s32.totalorder %s26, 1
    %p196 = por %p194, %p195
    %p197 = scmp.ne.s32.totalorder %s188, %s189
    %p198 = scmp.eq.s32.totalorder %s26, 0
    %p199 = por %p197, %p198
    %p200 = scmp.ne.s32.totalorder %s188, %s189
    %p201 = scmp.eq.s32.totalorder %s27, 1
    %p202 = por %p200, %p201
    %p204 = scmp.ne.s32.totalorder %s189, %s203
    %p205 = scmp.eq.s32.totalorder %s27, 0
    %p206 = por %p204, %p205
    %s208 = sadd.s32 %s207, 1
    %p211 = scmp.eq.s32.totalorder %s21, 1
    %p212 = scmp.ne.s32.totalorder %s207, %s209
    %p213 = scmp.eq.s32.totalorder %s21, 0
    %p214 = por %p212, %p213
    %p215 = scmp.ne.s32.totalorder %s207, %s209
    %p216 = scmp.eq.s32.totalorder %s26, 1
    %p217 = por %p215, %p216
    %p218 = scmp.ne.s32.totalorder %s209, %s210
    %p219 = scmp.eq.s32.totalorder %s26, 0
    %p220 = por %p218, %p219
    %p221 = scmp.ne.s32.totalorder %s209, %s210
    %p222 = scmp.eq.s32.totalorder %s27, 1
    %p223 = por %p221, %p222
    %p225 = scmp.ne.s32.totalorder %s210, %s224
    %p226 = scmp.eq.s32.totalorder %s27, 0
    %p227 = por %p225, %p226
    %s229 = sadd.s32 %s228, 1
    %p232 = scmp.eq.s32.totalorder %s21, 1
    %p233 = scmp.ne.s32.totalorder %s228, %s230
    %p234 = scmp.eq.s32.totalorder %s21, 0
    %p235 = por %p233, %p234
    %p236 = scmp.ne.s32.totalorder %s228, %s230
    %p237 = scmp.eq.s32.totalorder %s26, 1
    %p238 = por %p236, %p237
    %p239 = scmp.ne.s32.totalorder %s230, %s231
    %p240 = scmp.eq.s32.totalorder %s26, 0
    %p241 = por %p239, %p240
    %p242 = scmp.ne.s32.totalorder %s230, %s231
    %p243 = scmp.eq.s32.totalorder %s27, 1
    %p244 = por %p242, %p243
    %p246 = scmp.ne.s32.totalorder %s231, %s245
    %p247 = scmp.eq.s32.totalorder %s27, 0
    %p248 = por %p246, %p247
    %s250 = sadd.s32 %s249, 1
    %p253 = scmp.eq.s32.totalorder %s21, 1
    %p254 = scmp.ne.s32.totalorder %s249, %s251
    %p255 = scmp.eq.s32.totalorder %s21, 0
    %p256 = por %p254, %p255
    %p257 = scmp.ne.s32.totalorder %s249, %s251
    %p258 = scmp.eq.s32.totalorder %s26, 1
    %p259 = por %p257, %p258
    %p260 = scmp.ne.s32.totalorder %s251, %s252
    %p261 = scmp.eq.s32.totalorder %s26, 0
    %p262 = por %p260, %p261
    %p263 = scmp.ne.s32.totalorder %s251, %s252
    %p264 = scmp.eq.s32.totalorder %s27, 1
    %p265 = por %p263, %p264
    %p267 = scmp.ne.s32.totalorder %s252, %s266
    %p268 = scmp.eq.s32.totalorder %s27, 0
    %p269 = por %p267, %p268
    %s271 = sadd.s32 %s270, 1
    %p274 = scmp.eq.s32.totalorder %s21, 1
    %p275 = scmp.ne.s32.totalorder %s270, %s272
    %p276 = scmp.eq.s32.totalorder %s21, 0
    %p277 = por %p275, %p276
    %p278 = scmp.ne.s32.totalorder %s270, %s272
    %p279 = scmp.eq.s32.totalorder %s26, 1
    %p280 = por %p278, %p279
    %p281 = scmp.ne.s32.totalorder %s272, %s273
    %p282 = scmp.eq.s32.totalorder %s26, 0
    %p283 = por %p281, %p282
    %p284 = scmp.ne.s32.totalorder %s272, %s273
    %p285 = scmp.eq.s32.totalorder %s27, 1
    %p286 = por %p284, %p285
    %p288 = scmp.ne.s32.totalorder %s273, %s287
    %p289 = scmp.eq.s32.totalorder %s27, 0
    %p290 = por %p288, %p289
    %s292 = sadd.s32 %s291, 1
    %p295 = scmp.eq.s32.totalorder %s21, 1
    %p296 = scmp.ne.s32.totalorder %s291, %s293
    %p297 = scmp.eq.s32.totalorder %s21, 0
    %p298 = por %p296, %p297
    %p299 = scmp.ne.s32.totalorder %s291, %s293
    %p300 = scmp.eq.s32.totalorder %s26, 1
    %p301 = por %p299, %p300
    %p302 = scmp.ne.s32.totalorder %s293, %s294
    %p303 = scmp.eq.s32.totalorder %s26, 0
    %p304 = por %p302, %p303
    %p305 = scmp.ne.s32.totalorder %s293, %s294
    %p306 = scmp.eq.s32.totalorder %s27, 1
    %p307 = por %p305, %p306
    %p309 = scmp.ne.s32.totalorder %s294, %s308
    %p310 = scmp.eq.s32.totalorder %s27, 0
    %p311 = por %p309, %p310
    %s312 = ssub.s32 %s21, %s28
    %p313 = scmp.eq.s32.totalorder %s312, 0
    %s315 = sadd.s32 %s314, 1
    %s316 = scalar_select %p313, %s314, %s315
    %p319 = pneg %p313
    %p320 = scmp.eq.s32.totalorder %s21, 1
    %p321 = por %p319, %p320
    %p322 = scmp.ne.s32.totalorder %s314, %s317
    %p323 = scmp.eq.s32.totalorder %s21, 0
    %p324 = por %p322, %p323
    %p325 = scmp.ne.s32.totalorder %s314, %s317
    %p326 = scmp.eq.s32.totalorder %s26, 1
    %p327 = por %p325, %p326
    %p328 = scmp.ne.s32.totalorder %s317, %s318
    %p329 = scmp.eq.s32.totalorder %s26, 0
    %p330 = por %p328, %p329
    %p331 = scmp.ne.s32.totalorder %s317, %s318
    %p332 = scmp.eq.s32.totalorder %s27, 1
    %p333 = por %p331, %p332
    %p335 = scmp.ne.s32.totalorder %s318, %s334
    %p336 = scmp.eq.s32.totalorder %s27, 0
    %p337 = por %p335, %p336
    %s338 = ssub.s32 %s21, %s28
    %p339 = scmp.eq.s32.totalorder %s338, 0
    %s341 = sadd.s32 %s340, 1
    %s342 = scalar_select %p339, %s340, %s341
    %p345 = pneg %p339
    %p346 = scmp.eq.s32.totalorder %s21, 1
    %p347 = por %p345, %p346
    %p348 = scmp.ne.s32.totalorder %s340, %s343
    %p349 = scmp.eq.s32.totalorder %s21, 0
    %p350 = por %p348, %p349
    %p351 = scmp.ne.s32.totalorder %s340, %s343
    %p352 = scmp.eq.s32.totalorder %s26, 1
    %p353 = por %p351, %p352
    %p354 = scmp.ne.s32.totalorder %s343, %s344
    %p355 = scmp.eq.s32.totalorder %s26, 0
    %p356 = por %p354, %p355
    %p357 = scmp.ne.s32.totalorder %s343, %s344
    %p358 = scmp.eq.s32.totalorder %s27, 1
    %p359 = por %p357, %p358
    %p361 = scmp.ne.s32.totalorder %s344, %s360
    %p362 = scmp.eq.s32.totalorder %s27, 0
    %p363 = por %p361, %p362
    %p364 = scmp.le.s32.totalorder 1, %s21
    %p365 = scmp.lt.s32.totalorder %s21, 3
    %p366 = pnand %p364, %p365
    %p367 = pneg %p366
    // Predicated region
    $region9: #{gpt_forward.1} parent=5 // pred_check
      _
    $region10: #{gpt_forward.1} parent=5 // pred_check_branch
      %369 = sbr.rel (%p366) target = $region12
    $region11: #{gpt_forward.1} parent=5 // pred_region
      %s370 = ssub.s32 %s21, 1
      // Predicated region
      $region13: #{gpt_forward.1} parent=11 // pred_check
        %p371 = pneg %p94
      $region14: #{gpt_forward.1} parent=11 // pred_check_branch
        %373 = sbr.rel (%p371) target = $region16
      $region15: #{gpt_forward.1} parent=11 // pred_region
        _
      $region16: #{gpt_forward.1} parent=11 // pred_fallthru
        _
      // Predicated region
      $region17: #{gpt_forward.1} parent=11 // pred_check
        %p374 = pneg %p115
      $region18: #{gpt_forward.1} parent=11 // pred_check_branch
        %376 = sbr.rel (%p374) target = $region20
      $region19: #{gpt_forward.1} parent=11 // pred_region
        _
      $region20: #{gpt_forward.1} parent=11 // pred_fallthru
        _
      // Predicated region
      $region21: #{gpt_forward.1} parent=11 // pred_check
        %p377 = pneg %p136
      $region22: #{gpt_forward.1} parent=11 // pred_check_branch
        %379 = sbr.rel (%p377) target = $region24
      $region23: #{gpt_forward.1} parent=11 // pred_region
        _
      $region24: #{gpt_forward.1} parent=11 // pred_fallthru
        _
      // Predicated region
      $region25: #{gpt_forward.1} parent=11 // pred_check
        %p380 = pneg %p157
      $region26: #{gpt_forward.1} parent=11 // pred_check_branch
        %382 = sbr.rel (%p380) target = $region28
      $region27: #{gpt_forward.1} parent=11 // pred_region
        _
      $region28: #{gpt_forward.1} parent=11 // pred_fallthru
        _
      // Predicated region
      $region29: #{gpt_forward.1} parent=11 // pred_check
        %p383 = pneg %p178
      $region30: #{gpt_forward.1} parent=11 // pred_check_branch
        %385 = sbr.rel (%p383) target = $region32
      $region31: #{gpt_forward.1} parent=11 // pred_region
        _
      $region32: #{gpt_forward.1} parent=11 // pred_fallthru
        _
      // Predicated region
      $region33: #{gpt_forward.1} parent=11 // pred_check
        %p386 = pneg %p199
      $region34: #{gpt_forward.1} parent=11 // pred_check_branch
        %388 = sbr.rel (%p386) target = $region36
      $region35: #{gpt_forward.1} parent=11 // pred_region
        _
      $region36: #{gpt_forward.1} parent=11 // pred_fallthru
        _
      // Predicated region
      $region37: #{gpt_forward.1} parent=11 // pred_check
        %p389 = pneg %p220
      $region38: #{gpt_forward.1} parent=11 // pred_check_branch
        %391 = sbr.rel (%p389) target = $region40
      $region39: #{gpt_forward.1} parent=11 // pred_region
        _
      $region40: #{gpt_forward.1} parent=11 // pred_fallthru
        _
      // Predicated region
      $region41: #{gpt_forward.1} parent=11 // pred_check
        %p392 = pneg %p241
      $region42: #{gpt_forward.1} parent=11 // pred_check_branch
        %394 = sbr.rel (%p392) target = $region44
      $region43: #{gpt_forward.1} parent=11 // pred_region
        _
      $region44: #{gpt_forward.1} parent=11 // pred_fallthru
        _
      // Predicated region
      $region45: #{gpt_forward.1} parent=11 // pred_check
        %p395 = pneg %p262
      $region46: #{gpt_forward.1} parent=11 // pred_check_branch
        %397 = sbr.rel (%p395) target = $region48
      $region47: #{gpt_forward.1} parent=11 // pred_region
        _
      $region48: #{gpt_forward.1} parent=11 // pred_fallthru
        _
      // Predicated region
      $region49: #{gpt_forward.1} parent=11 // pred_check
        %p398 = pneg %p283
      $region50: #{gpt_forward.1} parent=11 // pred_check_branch
        %400 = sbr.rel (%p398) target = $region52
      $region51: #{gpt_forward.1} parent=11 // pred_region
        _
      $region52: #{gpt_forward.1} parent=11 // pred_fallthru
        _
      // Predicated region
      $region53: #{gpt_forward.1} parent=11 // pred_check
        %p401 = pneg %p304
      $region54: #{gpt_forward.1} parent=11 // pred_check_branch
        %403 = sbr.rel (%p401) target = $region56
      $region55: #{gpt_forward.1} parent=11 // pred_region
        _
      $region56: #{gpt_forward.1} parent=11 // pred_fallthru
        _
    $region12: #{gpt_forward.1} parent=5 // pred_fallthru
      _
    %p404 = scmp.lt.s32.totalorder %s21, 2
    // Predicated region
    $region57: #{gpt_forward.1} parent=5 // pred_check
      %p405 = pneg %p404
    $region58: #{gpt_forward.1} parent=5 // pred_check_branch
      %407 = sbr.rel (%p405) target = $region60
    $region59: #{gpt_forward.1} parent=5 // pred_region
      // Predicated region
      $region61: #{gpt_forward.1} parent=59 // pred_check
        %p408 = pneg %p41
      $region62: #{gpt_forward.1} parent=59 // pred_check_branch
        %410 = sbr.rel (%p408) target = $region64
      $region63: #{gpt_forward.1} parent=59 // pred_region
        %p411 = scmp.lt.s32.totalorder %s21, 1
        %s412 = scalar_select %p411, %s21, 1
        %s413 = smul.addr %s412, 16
        %s414 = smul.addr %s413, 8
        %s415 = scalar_lea.vmem %s0, %s414
      $region64: #{gpt_forward.1} parent=59 // pred_fallthru
        _
      // Predicated region
      $region65: #{gpt_forward.1} parent=59 // pred_check
        %p416 = pneg %p67
      $region66: #{gpt_forward.1} parent=59 // pred_check_branch
        %418 = sbr.rel (%p416) target = $region68
      $region67: #{gpt_forward.1} parent=59 // pred_region
        %p419 = scmp.lt.s32.totalorder %s21, 1
        %s420 = scalar_select %p419, %s21, 1
        %s421 = smul.addr %s420, 16
        %s422 = smul.addr %s421, 8
        %s423 = scalar_lea.vmem %s1, %s422
      $region68: #{gpt_forward.1} parent=59 // pred_fallthru
        _
    $region60: #{gpt_forward.1} parent=5 // pred_fallthru
      _
    %p424 = scmp.le.s32.totalorder 1, %s21
    %p425 = scmp.lt.s32.totalorder %s21, 3
    %p426 = pnand %p424, %p425
    %p427 = pneg %p426
    // Predicated region
    $region69: #{gpt_forward.1} parent=5 // pred_check
      _
    $region70: #{gpt_forward.1} parent=5 // pred_check_branch
      %429 = sbr.rel (%p426) target = $region72
    $region71: #{gpt_forward.1} parent=5 // pred_region
      %s430 = ssub.s32 %s21, 1
      %p431 = scmp.lt.s32.totalorder %s26, 1
      %s432 = scalar_select %p431, %s26, 1
      %s433 = smul.addr %s432, 16
      %s434 = smul.addr %s433, 8
      %s435 = scalar_lea.vmem %s0, %s434
      %p436 = pneg %p47
      %p437 = pneg %p44
      %p438 = scmp.lt.s32.totalorder %s26, 1
      %s439 = scalar_select %p438, %s26, 1
      %s440 = smul.addr %s439, 16
      %s441 = smul.addr %s440, 8
      %s442 = scalar_lea.vmem %s1, %s441
      %p443 = pneg %p73
      %p444 = pneg %p70
      %p445 = pneg %p94
      %p446 = pneg %p91
      %p447 = pneg %p115
      %p448 = pneg %p112
      %p449 = pneg %p136
      %p450 = pneg %p133
      %p451 = pneg %p157
      %p452 = pneg %p154
      %p453 = pneg %p178
      %p454 = pneg %p175
      %p455 = pneg %p199
      %p456 = pneg %p196
      %p457 = pneg %p220
      %p458 = pneg %p217
      %p459 = pneg %p241
      %p460 = pneg %p238
      %p461 = pneg %p262
      %p462 = pneg %p259
      %p463 = pneg %p283
      %p464 = pneg %p280
      %p465 = pneg %p304
      %p466 = pneg %p301
      %p467 = pneg %p330
      %p468 = pneg %p327
      %p469 = scmp.lt.s32.totalorder %s26, 1
      %s470 = scalar_select %p469, %s26, 1
      %s471 = smul.addr %s470, 16
      %s472 = smul.addr %s471, 8
      %s473 = scalar_lea.vmem %s13, %s472
      %p474 = pneg %p356
      %p475 = pneg %p353
      %p476 = scmp.lt.s32.totalorder %s26, 1
      %s477 = scalar_select %p476, %s26, 1
      %s478 = smul.addr %s477, 16
      %s479 = smul.addr %s478, 8
      %s480 = scalar_lea.vmem %s14, %s479
      %p481 = scmp.lt.s32.totalorder %s26, 1
      %s482 = scalar_select %p481, %s26, 1
      %s483 = smul.addr %s482, 16
      %s484 = smul.addr %s483, 8
      %s485 = scalar_lea.vmem %s0, %s484
      %p486 = scmp.lt.s32.totalorder %s26, 1
      %s487 = scalar_select %p486, %s26, 1
      %s488 = smul.addr %s487, 16
      %s489 = smul.addr %s488, 8
      %s490 = scalar_lea.vmem %s1, %s489
      %p491 = scmp.lt.s32.totalorder %s26, 1
      %s492 = scalar_select %p491, %s26, 1
      %s493 = smul.addr %s492, 16
      %s494 = smul.addr %s493, 8
      %s495 = scalar_lea.vmem %s13, %s494
      %p496 = scmp.lt.s32.totalorder %s26, 1
      %s497 = scalar_select %p496, %s26, 1
      %s498 = smul.addr %s497, 16
      %s499 = smul.addr %s498, 8
      %s500 = scalar_lea.vmem %s14, %s499
      %v501 = vld [vmem:[%s2] sm:$0xff]
      %v502 = vld [vmem:[%s2 + $0x8] sm:$0xff]
      %v503 = vld [vmem:[%s2 + $0x10] sm:$0xff]
      %v504 = vld [vmem:[%s2 + $0x18] sm:$0xff]
      %v505 = vld [vmem:[%s2 + $0x20] sm:$0xff]
      %v506 = vld [vmem:[%s2 + $0x28] sm:$0xff]
      %v507 = vld [vmem:[%s2 + $0x30] sm:$0xff]
      %v508 = vld [vmem:[%s2 + $0x38] sm:$0xff]
      %v509 = vld [vmem:[%s2 + $0x40] sm:$0xff]
      %v510 = vld [vmem:[%s2 + $0x48] sm:$0xff]
      %v511 = vld [vmem:[%s2 + $0x50] sm:$0xff]
      %v512 = vld [vmem:[%s2 + $0x58] sm:$0xff]
      %v513 = vld [vmem:[%s2 + $0x60] sm:$0xff]
      %v514 = vld [vmem:[%s2 + $0x68] sm:$0xff]
      %v515 = vld [vmem:[%s2 + $0x70] sm:$0xff]
      %v516 = vld [vmem:[%s2 + $0x78] sm:$0xff]
      %v517 = vld [vmem:[%s485] sm:$0xff]
      %v518 = vld [vmem:[%s485 + $0x8] sm:$0xff]
      %v519 = vld [vmem:[%s485 + $0x10] sm:$0xff]
      %v520 = vld [vmem:[%s485 + $0x18] sm:$0xff]
      %v521 = vld [vmem:[%s485 + $0x20] sm:$0xff]
      %v522 = vld [vmem:[%s485 + $0x28] sm:$0xff]
      %v523 = vld [vmem:[%s485 + $0x30] sm:$0xff]
      %v524 = vld [vmem:[%s485 + $0x38] sm:$0xff]
      %v525 = vld [vmem:[%s485 + $0x40] sm:$0xff]
      %v526 = vld [vmem:[%s485 + $0x48] sm:$0xff]
      %v527 = vld [vmem:[%s485 + $0x50] sm:$0xff]
      %v528 = vld [vmem:[%s485 + $0x58] sm:$0xff]
      %v529 = vld [vmem:[%s485 + $0x60] sm:$0xff]
      %v530 = vld [vmem:[%s485 + $0x68] sm:$0xff]
      %v531 = vld [vmem:[%s485 + $0x70] sm:$0xff]
      %v532 = vld [vmem:[%s485 + $0x78] sm:$0xff]
      %533 = vmatprep.subr.mxu0 %v518
      %534 = vmatpush1.xpose.msra.mxu0 %v517
      %535 = vmatprep.subr.mxu0 %v520
      %536 = vmatpush1.xpose.msra.mxu0 %v519
      %537 = vmatprep.subr.mxu0 %v522
      %538 = vmatpush1.xpose.msra.mxu0 %v521
      %539 = vmatprep.subr.mxu0 %v524
      %540 = vmatpush1.xpose.msra.mxu0 %v523
      %541 = vmatprep.subr.mxu0 %v526
      %542 = vmatpush1.xpose.msra.mxu0 %v525
      %543 = vmatprep.subr.mxu0 %v528
      %544 = vmatpush1.xpose.msra.mxu0 %v527
      %545 = vmatprep.subr.mxu0 %v530
      %546 = vmatpush1.xpose.msra.mxu0 %v529
      %547 = vmatprep.subr.mxu0 %v532
      %548 = vmatpush1.xpose.msra.mxu0 %v531
      %549 = vmatprep.subr.mxu0 0.0
      %550 = vmatpush1.xpose.msra.mxu0 0.0
      %551 = vmatprep.subr.mxu0 0.0
      %552 = vmatpush1.xpose.msra.mxu0 0.0
      %553 = vmatprep.subr.mxu0 0.0
      %554 = vmatpush1.xpose.msra.mxu0 0.0
      %555 = vmatprep.subr.mxu0 0.0
      %556 = vmatpush1.xpose.msra.mxu0 0.0
      %557 = vmatprep.subr.mxu0 0.0
      %558 = vmatpush1.xpose.msra.mxu0 0.0
      %559 = vmatprep.subr.mxu0 0.0
      %560 = vmatpush1.xpose.msra.mxu0 0.0
      %561 = vmatprep.subr.mxu0 0.0
      %562 = vmatpush1.xpose.msra.mxu0 0.0
      %563 = vmatprep.subr.mxu0 0.0
      %564 = vmatpush1.xpose.msra.mxu0 0.0
      %565 = vmatprep.subr.mxu0 0.0
      %566 = vmatpush1.xpose.msra.mxu0 0.0
      %567 = vmatprep.subr.mxu0 0.0
      %568 = vmatpush1.xpose.msra.mxu0 0.0
      %569 = vmatprep.subr.mxu0 0.0
      %570 = vmatpush1.xpose.msra.mxu0 0.0
      %571 = vmatprep.subr.mxu0 0.0
      %572 = vmatpush1.xpose.msra.mxu0 0.0
      %573 = vmatprep.subr.mxu0 0.0
      %574 = vmatpush1.xpose.msra.mxu0 0.0
      %575 = vmatprep.subr.mxu0 0.0
      %576 = vmatpush1.xpose.msra.mxu0 0.0
      %577 = vmatprep.subr.mxu0 0.0
      %578 = vmatpush1.xpose.msra.mxu0 0.0
      %579 = vmatprep.subr.mxu0 0.0
      %580 = vmatpush1.xpose.msra.mxu0 0.0
      %581 = vmatprep.subr.mxu0 0.0
      %582 = vmatpush1.xpose.msra.mxu0 0.0
      %583 = vmatprep.subr.mxu0 0.0
      %584 = vmatpush1.xpose.msra.mxu0 0.0
      %585 = vmatprep.subr.mxu0 0.0
      %586 = vmatpush1.xpose.msra.mxu0 0.0
      %587 = vmatprep.subr.mxu0 0.0
      %588 = vmatpush1.xpose.msra.mxu0 0.0
      %589 = vmatprep.subr.mxu0 0.0
      %590 = vmatpush1.xpose.msra.mxu0 0.0
      %591 = vmatprep.subr.mxu0 0.0
      %592 = vmatpush1.xpose.msra.mxu0 0.0
      %593 = vmatprep.subr.mxu0 0.0
      %594 = vmatpush1.xpose.msra.mxu0 0.0
      %595 = vmatprep.subr.mxu0 0.0
      %596 = vmatpush1.xpose.msra.mxu0 0.0
      %597 = vmatprep.mubr.f32.mxu0 %v502
      %598 = vmatmul.mubr.f32.gmra.mrb[0].mxu0 %v501
      %v599 = vpop.f32.mrb[0].mxu0
      %v600 = vadd.f32 0.0, %v599
      %v601 = vpop.f32.mrb[0].mxu0
      %602 = vmatprep.mubr.f32.mxu0 %v504
      %603 = vmatmul.mubr.f32.gmra.mrb[0].mxu0 %v503
      %v604 = vpop.f32.mrb[0].mxu0
      %v605 = vadd.f32 0.0, %v604
      %v606 = vpop.f32.mrb[0].mxu0
      %607 = vmatprep.mubr.f32.mxu0 %v506
      %608 = vmatmul.mubr.f32.gmra.mrb[0].mxu0 %v505
      %v609 = vpop.f32.mrb[0].mxu0
      %v610 = vadd.f32 0.0, %v609
      %v611 = vpop.f32.mrb[0].mxu0
      %612 = vmatprep.mubr.f32.mxu0 %v508
      %613 = vmatmul.mubr.f32.gmra.mrb[0].mxu0 %v507
      %v614 = vpop.f32.mrb[0].mxu0
      %v615 = vadd.f32 0.0, %v614
      %v616 = vpop.f32.mrb[0].mxu0
      %617 = vmatprep.mubr.f32.mxu0 %v510
      %618 = vmatmul.mubr.f32.gmra.mrb[0].mxu0 %v509
      %v619 = vpop.f32.mrb[0].mxu0
      %v620 = vadd.f32 0.0, %v619
      %v621 = vpop.f32.mrb[0].mxu0
      %622 = vmatprep.mubr.f32.mxu0 %v512
      %623 = vmatmul.mubr.f32.gmra.mrb[0].mxu0 %v511
      %v624 = vpop.f32.mrb[0].mxu0
      %v625 = vadd.f32 0.0, %v624
      %v626 = vpop.f32.mrb[0].mxu0
      %627 = vmatprep.mubr.f32.mxu0 %v514
      %628 = vmatmul.mubr.f32.gmra.mrb[0].mxu0 %v513
      %v629 = vpop.f32.mrb[0].mxu0
      %v630 = vadd.f32 0.0, %v629
      %v631 = vpop.f32.mrb[0].mxu0
      %632 = vmatprep.mubr.f32.mxu0 %v516
      %633 = vmatmul.mubr.f32.gmra.mrb[0].mxu0 %v515
      %v634 = vpop.f32.mrb[0].mxu0
      %v635 = vadd.f32 0.0, %v634
      %v636 = vpop.f32.mrb[0].mxu0
      %637 = vdwg.mxu0
      %v638 = vld [vmem:[%s490] sm:$0xff]
      %v639 = vld [vmem:[%s490 + $0x8] sm:$0xff]
      %v640 = vld [vmem:[%s490 + $0x10] sm:$0xff]
      %v641 = vld [vmem:[%s490 + $0x18] sm:$0xff]
      %v642 = vld [vmem:[%s490 + $0x20] sm:$0xff]
      %v643 = vld [vmem:[%s490 + $0x28] sm:$0xff]
      %v644 = vld [vmem:[%s490 + $0x30] sm:$0xff]
      %v645 = vld [vmem:[%s490 + $0x38] sm:$0xff]
      %v646 = vld [vmem:[%s490 + $0x40] sm:$0xff]
      %v647 = vld [vmem:[%s490 + $0x48] sm:$0xff]
      %v648 = vld [vmem:[%s490 + $0x50] sm:$0xff]
      %v649 = vld [vmem:[%s490 + $0x58] sm:$0xff]
      %v650 = vld [vmem:[%s490 + $0x60] sm:$0xff]
      %v651 = vld [vmem:[%s490 + $0x68] sm:$0xff]
      %v652 = vld [vmem:[%s490 + $0x70] sm:$0xff]
      %v653 = vld [vmem:[%s490 + $0x78] sm:$0xff]
      %654 = vmatprep.subr.mxu0 %v639
      %655 = vmatpush1.xpose.msra.mxu0 %v638
      %656 = vmatprep.subr.mxu0 %v641
      %657 = vmatpush1.xpose.msra.mxu0 %v640
      %658 = vmatprep.subr.mxu0 %v643
      %659 = vmatpush1.xpose.msra.mxu0 %v642
      %660 = vmatprep.subr.mxu0 %v645
      %661 = vmatpush1.xpose.msra.mxu0 %v644
      %662 = vmatprep.subr.mxu0 %v647
      %663 = vmatpush1.xpose.msra.mxu0 %v646
      %664 = vmatprep.subr.mxu0 %v649
      %665 = vmatpush1.xpose.msra.mxu0 %v648
      %666 = vmatprep.subr.mxu0 %v651
      %667 = vmatpush1.xpose.msra.mxu0 %v650
      %668 = vmatprep.subr.mxu0 %v653
      %669 = vmatpush1.xpose.msra.mxu0 %v652
      %670 = vmatprep.subr.mxu0 0.0
      %671 = vmatpush1.xpose.msra.mxu0 0.0
      %672 = vmatprep.subr.mxu0 0.0
      %673 = vmatpush1.xpose.msra.mxu0 0.0
      %674 = vmatprep.subr.mxu0 0.0
      %675 = vmatpush1.xpose.msra.mxu0 0.0
      %676 = vmatprep.subr.mxu0 0.0
      %677 = vmatpush1.xpose.msra.mxu0 0.0
      %678 = vmatprep.subr.mxu0 0.0
      %679 = vmatpush1.xpose.msra.mxu0 0.0
      %680 = vmatprep.subr.mxu0 0.0
      %681 = vmatpush1.xpose.msra.mxu0 0.0
      %682 = vmatprep.subr.mxu0 0.0
      %683 = vmatpush1.xpose.msra.mxu0 0.0
      %684 = vmatprep.subr.mxu0 0.0
      %685 = vmatpush1.xpose.msra.mxu0 0.0
      %686 = vmatprep.subr.mxu0 0.0
      %687 = vmatpush1.xpose.msra.mxu0 0.0
      %688 = vmatprep.subr.mxu0 0.0
      %689 = vmatpush1.xpose.msra.mxu0 0.0
      %690 = vmatprep.subr.mxu0 0.0
      %691 = vmatpush1.xpose.msra.mxu0 0.0
      %692 = vmatprep.subr.mxu0 0.0
      %693 = vmatpush1.xpose.msra.mxu0 0.0
      %694 = vmatprep.subr.mxu0 0.0
      %695 = vmatpush1.xpose.msra.mxu0 0.0
      %696 = vmatprep.subr.mxu0 0.0
      %697 = vmatpush1.xpose.msra.mxu0 0.0
      %698 = vmatprep.subr.mxu0 0.0
      %699 = vmatpush1.xpose.msra.mxu0 0.0
      %700 = vmatprep.subr.mxu0 0.0
      %701 = vmatpush1.xpose.msra.mxu0 0.0
      %702 = vmatprep.subr.mxu0 0.0
      %703 = vmatpush1.xpose.msra.mxu0 0.0
      %704 = vmatprep.subr.mxu0 0.0
      %705 = vmatpush1.xpose.msra.mxu0 0.0
      %706 = vmatprep.subr.mxu0 0.0
      %707 = vmatpush1.xpose.msra.mxu0 0.0
      %708 = vmatprep.subr.mxu0 0.0
      %709 = vmatpush1.xpose.msra.mxu0 0.0
      %710 = vmatprep.subr.mxu0 0.0
      %711 = vmatpush1.xpose.msra.mxu0 0.0
      %712 = vmatprep.subr.mxu0 0.0
      %713 = vmatpush1.xpose.msra.mxu0 0.0
      %714 = vmatprep.subr.mxu0 0.0
      %715 = vmatpush1.xpose.msra.mxu0 0.0
      %716 = vmatprep.subr.mxu0 0.0
      %717 = vmatpush1.xpose.msra.mxu0 0.0
      %718 = vmatprep.mubr.f32.mxu0 %v502
      %719 = vmatmul.mubr.f32.gmra.mrb[0].mxu0 %v501
      %v720 = vpop.f32.mrb[0].mxu0
      %v721 = vadd.f32 0.0, %v720
      %v722 = vpop.f32.mrb[0].mxu0
      %723 = vmatprep.mubr.f32.mxu0 %v504
      %724 = vmatmul.mubr.f32.gmra.mrb[0].mxu0 %v503
      %v725 = vpop.f32.mrb[0].mxu0
      %v726 = vadd.f32 0.0, %v725
      %v727 = vpop.f32.mrb[0].mxu0
      %728 = vmatprep.mubr.f32.mxu0 %v506
      %729 = vmatmul.mubr.f32.gmra.mrb[0].mxu0 %v505
      %v730 = vpop.f32.mrb[0].mxu0
      %v731 = vadd.f32 0.0, %v730
      %v732 = vpop.f32.mrb[0].mxu0
      %733 = vmatprep.mubr.f32.mxu0 %v508
      %734 = vmatmul.mubr.f32.gmra.mrb[0].mxu0 %v507
      %v735 = vpop.f32.mrb[0].mxu0
      %v736 = vadd.f32 0.0, %v735
      %v737 = vpop.f32.mrb[0].mxu0
      %738 = vmatprep.mubr.f32.mxu0 %v510
      %739 = vmatmul.mubr.f32.gmra.mrb[0].mxu0 %v509
      %v740 = vpop.f32.mrb[0].mxu0
      %v741 = vadd.f32 0.0, %v740
      %v742 = vpop.f32.mrb[0].mxu0
      %743 = vmatprep.mubr.f32.mxu0 %v512
      %744 = vmatmul.mubr.f32.gmra.mrb[0].mxu0 %v511
      %v745 = vpop.f32.mrb[0].mxu0
      %v746 = vadd.f32 0.0, %v745
      %v747 = vpop.f32.mrb[0].mxu0
      %748 = vmatprep.mubr.f32.mxu0 %v514
      %749 = vmatmul.mubr.f32.gmra.mrb[0].mxu0 %v513
      %v750 = vpop.f32.mrb[0].mxu0
      %v751 = vadd.f32 0.0, %v750
      %v752 = vpop.f32.mrb[0].mxu0
      %753 = vmatprep.mubr.f32.mxu0 %v516
      %754 = vmatmul.mubr.f32.gmra.mrb[0].mxu0 %v515
      %v755 = vpop.f32.mrb[0].mxu0
      %v756 = vadd.f32 0.0, %v755
      %v757 = vpop.f32.mrb[0].mxu0
      %758 = vdwg.mxu0
      %v759 = vld [vmem:[%s3] sm:$0xff]
      %v760 = vld [vmem:[%s3 + $0x8] sm:$0xff]
      %v761 = vld [vmem:[%s3 + $0x10] sm:$0xff]
      %v762 = vld [vmem:[%s3 + $0x18] sm:$0xff]
      %v763 = vld [vmem:[%s3 + $0x20] sm:$0xff]
      %v764 = vld [vmem:[%s3 + $0x28] sm:$0xff]
      %v765 = vld [vmem:[%s3 + $0x30] sm:$0xff]
      %v766 = vld [vmem:[%s3 + $0x38] sm:$0xff]
      %v767 = vld [vmem:[%s3 + $0x40] sm:$0xff]
      %v768 = vld [vmem:[%s3 + $0x48] sm:$0xff]
      %v769 = vld [vmem:[%s3 + $0x50] sm:$0xff]
      %v770 = vld [vmem:[%s3 + $0x58] sm:$0xff]
      %v771 = vld [vmem:[%s3 + $0x60] sm:$0xff]
      %v772 = vld [vmem:[%s3 + $0x68] sm:$0xff]
      %v773 = vld [vmem:[%s3 + $0x70] sm:$0xff]
      %v774 = vld [vmem:[%s3 + $0x78] sm:$0xff]
      %v775 = vadd.f32 %v600, %v759
      %v776 = vadd.f32 %v605, %v760
      %v777 = vadd.f32 %v610, %v761
      %v778 = vadd.f32 %v615, %v762
      %v779 = vadd.f32 %v620, %v763
      %v780 = vadd.f32 %v625, %v764
      %v781 = vadd.f32 %v630, %v765
      %v782 = vadd.f32 %v635, %v766
      %v783 = vadd.f32 %v721, %v767
      %v784 = vadd.f32 %v726, %v768
      %v785 = vadd.f32 %v731, %v769
      %v786 = vadd.f32 %v736, %v770
      %v787 = vadd.f32 %v741, %v771
      %v788 = vadd.f32 %v746, %v772
      %v789 = vadd.f32 %v751, %v773
      %v790 = vadd.f32 %v756, %v774
      loop: start=0, step=1, limit=2
      $region73: #{gpt_forward.1} parent=71 // loop_pre_header
        _
      $region74: #{gpt_forward.1} parent=71 // loop_header
        %s792 = sphi 0, %s796
        %p793 = scmp.ge.s32.totalorder %s792, 2
        %v797 = vphi %v775, %v8946
        %v798 = vphi %v776, %v8947
        %v799 = vphi %v777, %v8948
        %v800 = vphi %v778, %v8949
        %v801 = vphi %v779, %v8950
        %v802 = vphi %v780, %v8951
        %v803 = vphi %v781, %v8952
        %v804 = vphi %v782, %v8953
        %v805 = vphi %v783, %v8954
        %v806 = vphi %v784, %v8955
        %v807 = vphi %v785, %v8956
        %v808 = vphi %v786, %v8957
        %v809 = vphi %v787, %v8958
        %v810 = vphi %v788, %v8959
        %v811 = vphi %v789, %v8960
        %v812 = vphi %v790, %v8961
      $region75: #{gpt_forward.1} parent=71 // loop_header_branch
        %795 = sbr.rel (%p793) target = $region79
      $region76: #{gpt_forward.1} parent=71 // loop_body
        %s813 = smul.u32 %s792, 16
        %s814 = smul.addr %s813, 8
        %s815 = scalar_lea.vmem %s4, %s814
        %v816 = vld [vmem:[%s815] sm:$0xff]
        %v817 = vld [vmem:[%s815 + $0x8] sm:$0xff]
        %v818 = vld [vmem:[%s815 + $0x10] sm:$0xff]
        %v819 = vld [vmem:[%s815 + $0x18] sm:$0xff]
        %v820 = vld [vmem:[%s815 + $0x20] sm:$0xff]
        %v821 = vld [vmem:[%s815 + $0x28] sm:$0xff]
        %v822 = vld [vmem:[%s815 + $0x30] sm:$0xff]
        %v823 = vld [vmem:[%s815 + $0x38] sm:$0xff]
        %v824 = vld [vmem:[%s815 + $0x40] sm:$0xff]
        %v825 = vld [vmem:[%s815 + $0x48] sm:$0xff]
        %v826 = vld [vmem:[%s815 + $0x50] sm:$0xff]
        %v827 = vld [vmem:[%s815 + $0x58] sm:$0xff]
        %v828 = vld [vmem:[%s815 + $0x60] sm:$0xff]
        %v829 = vld [vmem:[%s815 + $0x68] sm:$0xff]
        %v830 = vld [vmem:[%s815 + $0x70] sm:$0xff]
        %v831 = vld [vmem:[%s815 + $0x78] sm:$0xff]
        %s832 = smul.u32 %s792, 2
        %s833 = scalar_lea.vmem %s5, %s832
        %v834 = vld [vmem:[%s833] sm:$0x3]
        %s835 = smul.u32 %s792, 64
        %s836 = scalar_lea.vmem %s6, %s835
        %v837 = vld [vmem:[%s836] sm:$0xff]
        %v838 = vld [vmem:[%s836 + $0x8] sm:$0xff]
        %v839 = vld [vmem:[%s836 + $0x10] sm:$0xff]
        %v840 = vld [vmem:[%s836 + $0x18] sm:$0xff]
        %v841 = vld [vmem:[%s836 + $0x20] sm:$0xff]
        %v842 = vld [vmem:[%s836 + $0x28] sm:$0xff]
        %v843 = vld [vmem:[%s836 + $0x30] sm:$0xff]
        %v844 = vld [vmem:[%s836 + $0x38] sm:$0xff]
        %s845 = smul.addr %s813, 8
        %s846 = scalar_lea.vmem %s7, %s845
        %v847 = vld [vmem:[%s846] sm:$0xff]
        %v848 = vld [vmem:[%s846 + $0x8] sm:$0xff]
        %v849 = vld [vmem:[%s846 + $0x10] sm:$0xff]
        %v850 = vld [vmem:[%s846 + $0x18] sm:$0xff]
        %v851 = vld [vmem:[%s846 + $0x20] sm:$0xff]
        %v852 = vld [vmem:[%s846 + $0x28] sm:$0xff]
        %v853 = vld [vmem:[%s846 + $0x30] sm:$0xff]
        %v854 = vld [vmem:[%s846 + $0x38] sm:$0xff]
        %v855 = vld [vmem:[%s846 + $0x40] sm:$0xff]
        %v856 = vld [vmem:[%s846 + $0x48] sm:$0xff]
        %v857 = vld [vmem:[%s846 + $0x50] sm:$0xff]
        %v858 = vld [vmem:[%s846 + $0x58] sm:$0xff]
        %v859 = vld [vmem:[%s846 + $0x60] sm:$0xff]
        %v860 = vld [vmem:[%s846 + $0x68] sm:$0xff]
        %v861 = vld [vmem:[%s846 + $0x70] sm:$0xff]
        %v862 = vld [vmem:[%s846 + $0x78] sm:$0xff]
        %s863 = scalar_lea.vmem %s8, %s832
        %v864 = vld [vmem:[%s863] sm:$0x3]
        %s865 = smul.u32 %s792, 256
        %s866 = scalar_lea.vmem %s9, %s865
        %v867 = vld [vmem:[%s866] sm:$0xff]
        %v868 = vld [vmem:[%s866 + $0x8] sm:$0xff]
        %v869 = vld [vmem:[%s866 + $0x10] sm:$0xff]
        %v870 = vld [vmem:[%s866 + $0x18] sm:$0xff]
        %v871 = vld [vmem:[%s866 + $0x20] sm:$0xff]
        %v872 = vld [vmem:[%s866 + $0x28] sm:$0xff]
        %v873 = vld [vmem:[%s866 + $0x30] sm:$0xff]
        %v874 = vld [vmem:[%s866 + $0x38] sm:$0xff]
        %v875 = vld [vmem:[%s866 + $0x40] sm:$0xff]
        %v876 = vld [vmem:[%s866 + $0x48] sm:$0xff]
        %v877 = vld [vmem:[%s866 + $0x50] sm:$0xff]
        %v878 = vld [vmem:[%s866 + $0x58] sm:$0xff]
        %v879 = vld [vmem:[%s866 + $0x60] sm:$0xff]
        %v880 = vld [vmem:[%s866 + $0x68] sm:$0xff]
        %v881 = vld [vmem:[%s866 + $0x70] sm:$0xff]
        %v882 = vld [vmem:[%s866 + $0x78] sm:$0xff]
        %v883 = vld [vmem:[%s866 + $0x80] sm:$0xff]
        %v884 = vld [vmem:[%s866 + $0x88] sm:$0xff]
        %v885 = vld [vmem:[%s866 + $0x90] sm:$0xff]
        %v886 = vld [vmem:[%s866 + $0x98] sm:$0xff]
        %v887 = vld [vmem:[%s866 + $0xa0] sm:$0xff]
        %v888 = vld [vmem:[%s866 + $0xa8] sm:$0xff]
        %v889 = vld [vmem:[%s866 + $0xb0] sm:$0xff]
        %v890 = vld [vmem:[%s866 + $0xb8] sm:$0xff]
        %v891 = vld [vmem:[%s866 + $0xc0] sm:$0xff]
        %v892 = vld [vmem:[%s866 + $0xc8] sm:$0xff]
        %v893 = vld [vmem:[%s866 + $0xd0] sm:$0xff]
        %v894 = vld [vmem:[%s866 + $0xd8] sm:$0xff]
        %v895 = vld [vmem:[%s866 + $0xe0] sm:$0xff]
        %v896 = vld [vmem:[%s866 + $0xe8] sm:$0xff]
        %v897 = vld [vmem:[%s866 + $0xf0] sm:$0xff]
        %v898 = vld [vmem:[%s866 + $0xf8] sm:$0xff]
        %s899 = smul.u32 %s792, 8
        %s900 = scalar_lea.vmem %s10, %s899
        %v901 = vld [vmem:[%s900] sm:$0x3f]
        %vm902 = vcmask 523264
        %v903 = vsel %vm902, %v797, 0.0
        %904 = vadd.xlane.f32.xlu0 %v903
        %v905 = vpop.xlane.xlu0 %904
        %v906 = vsel %vm902, %v798, 0.0
        %907 = vadd.xlane.f32.xlu0 %v906
        %v908 = vpop.xlane.xlu0 %907
        %v909 = vsel %vm902, %v799, 0.0
        %910 = vadd.xlane.f32.xlu0 %v909
        %v911 = vpop.xlane.xlu0 %910
        %v912 = vsel %vm902, %v800, 0.0
        %913 = vadd.xlane.f32.xlu0 %v912
        %v914 = vpop.xlane.xlu0 %913
        %v915 = vsel %vm902, %v801, 0.0
        %916 = vadd.xlane.f32.xlu0 %v915
        %v917 = vpop.xlane.xlu0 %916
        %v918 = vsel %vm902, %v802, 0.0
        %919 = vadd.xlane.f32.xlu0 %v918
        %v920 = vpop.xlane.xlu0 %919
        %v921 = vsel %vm902, %v803, 0.0
        %922 = vadd.xlane.f32.xlu0 %v921
        %v923 = vpop.xlane.xlu0 %922
        %v924 = vsel %vm902, %v804, 0.0
        %925 = vadd.xlane.f32.xlu0 %v924
        %v926 = vpop.xlane.xlu0 %925
        %v927 = vsel %vm902, %v805, 0.0
        %928 = vadd.xlane.f32.xlu0 %v927
        %v929 = vpop.xlane.xlu0 %928
        %v930 = vsel %vm902, %v806, 0.0
        %931 = vadd.xlane.f32.xlu0 %v930
        %v932 = vpop.xlane.xlu0 %931
        %v933 = vsel %vm902, %v807, 0.0
        %934 = vadd.xlane.f32.xlu0 %v933
        %v935 = vpop.xlane.xlu0 %934
        %v936 = vsel %vm902, %v808, 0.0
        %937 = vadd.xlane.f32.xlu0 %v936
        %v938 = vpop.xlane.xlu0 %937
        %v939 = vsel %vm902, %v809, 0.0
        %940 = vadd.xlane.f32.xlu0 %v939
        %v941 = vpop.xlane.xlu0 %940
        %v942 = vsel %vm902, %v810, 0.0
        %943 = vadd.xlane.f32.xlu0 %v942
        %v944 = vpop.xlane.xlu0 %943
        %v945 = vsel %vm902, %v811, 0.0
        %946 = vadd.xlane.f32.xlu0 %v945
        %v947 = vpop.xlane.xlu0 %946
        %v948 = vsel %vm902, %v812, 0.0
        %949 = vadd.xlane.f32.xlu0 %v948
        %v950 = vpop.xlane.xlu0 %949
        %v951 = vrcp.pop 64.0
        %v952 = vmul.f32 %v905, %v951
        %v953 = vmul.f32 %v908, %v951
        %v954 = vmul.f32 %v911, %v951
        %v955 = vmul.f32 %v914, %v951
        %v956 = vmul.f32 %v917, %v951
        %v957 = vmul.f32 %v920, %v951
        %v958 = vmul.f32 %v923, %v951
        %v959 = vmul.f32 %v926, %v951
        %v960 = vmul.f32 %v929, %v951
        %v961 = vmul.f32 %v932, %v951
        %v962 = vmul.f32 %v935, %v951
        %v963 = vmul.f32 %v938, %v951
        %v964 = vmul.f32 %v941, %v951
        %v965 = vmul.f32 %v944, %v951
        %v966 = vmul.f32 %v947, %v951
        %v967 = vmul.f32 %v950, %v951
        %v968 = vsub.f32 %v797, %v952
        %v969 = vsub.f32 %v798, %v953
        %v970 = vsub.f32 %v799, %v954
        %v971 = vsub.f32 %v800, %v955
        %v972 = vsub.f32 %v801, %v956
        %v973 = vsub.f32 %v802, %v957
        %v974 = vsub.f32 %v803, %v958
        %v975 = vsub.f32 %v804, %v959
        %v976 = vsub.f32 %v805, %v960
        %v977 = vsub.f32 %v806, %v961
        %v978 = vsub.f32 %v807, %v962
        %v979 = vsub.f32 %v808, %v963
        %v980 = vsub.f32 %v809, %v964
        %v981 = vsub.f32 %v810, %v965
        %v982 = vsub.f32 %v811, %v966
        %v983 = vsub.f32 %v812, %v967
        %v984 = vmul.f32 %v968, %v968
        %v985 = vmul.f32 %v969, %v969
        %v986 = vmul.f32 %v970, %v970
        %v987 = vmul.f32 %v971, %v971
        %v988 = vmul.f32 %v972, %v972
        %v989 = vmul.f32 %v973, %v973
        %v990 = vmul.f32 %v974, %v974
        %v991 = vmul.f32 %v975, %v975
        %v992 = vmul.f32 %v976, %v976
        %v993 = vmul.f32 %v977, %v977
        %v994 = vmul.f32 %v978, %v978
        %v995 = vmul.f32 %v979, %v979
        %v996 = vmul.f32 %v980, %v980
        %v997 = vmul.f32 %v981, %v981
        %v998 = vmul.f32 %v982, %v982
        %v999 = vmul.f32 %v983, %v983
        %v1000 = vsel %vm902, %v984, 0.0
        %1001 = vadd.xlane.f32.xlu0 %v1000
        %v1002 = vpop.xlane.xlu0 %1001
        %v1003 = vsel %vm902, %v985, 0.0
        %1004 = vadd.xlane.f32.xlu0 %v1003
        %v1005 = vpop.xlane.xlu0 %1004
        %v1006 = vsel %vm902, %v986, 0.0
        %1007 = vadd.xlane.f32.xlu0 %v1006
        %v1008 = vpop.xlane.xlu0 %1007
        %v1009 = vsel %vm902, %v987, 0.0
        %1010 = vadd.xlane.f32.xlu0 %v1009
        %v1011 = vpop.xlane.xlu0 %1010
        %v1012 = vsel %vm902, %v988, 0.0
        %1013 = vadd.xlane.f32.xlu0 %v1012
        %v1014 = vpop.xlane.xlu0 %1013
        %v1015 = vsel %vm902, %v989, 0.0
        %1016 = vadd.xlane.f32.xlu0 %v1015
        %v1017 = vpop.xlane.xlu0 %1016
        %v1018 = vsel %vm902, %v990, 0.0
        %1019 = vadd.xlane.f32.xlu0 %v1018
        %v1020 = vpop.xlane.xlu0 %1019
        %v1021 = vsel %vm902, %v991, 0.0
        %1022 = vadd.xlane.f32.xlu0 %v1021
        %v1023 = vpop.xlane.xlu0 %1022
        %v1024 = vsel %vm902, %v992, 0.0
        %1025 = vadd.xlane.f32.xlu0 %v1024
        %v1026 = vpop.xlane.xlu0 %1025
        %v1027 = vsel %vm902, %v993, 0.0
        %1028 = vadd.xlane.f32.xlu0 %v1027
        %v1029 = vpop.xlane.xlu0 %1028
        %v1030 = vsel %vm902, %v994, 0.0
        %1031 = vadd.xlane.f32.xlu0 %v1030
        %v1032 = vpop.xlane.xlu0 %1031
        %v1033 = vsel %vm902, %v995, 0.0
        %1034 = vadd.xlane.f32.xlu0 %v1033
        %v1035 = vpop.xlane.xlu0 %1034
        %v1036 = vsel %vm902, %v996, 0.0
        %1037 = vadd.xlane.f32.xlu0 %v1036
        %v1038 = vpop.xlane.xlu0 %1037
        %v1039 = vsel %vm902, %v997, 0.0
        %1040 = vadd.xlane.f32.xlu0 %v1039
        %v1041 = vpop.xlane.xlu0 %1040
        %v1042 = vsel %vm902, %v998, 0.0
        %1043 = vadd.xlane.f32.xlu0 %v1042
        %v1044 = vpop.xlane.xlu0 %1043
        %v1045 = vsel %vm902, %v999, 0.0
        %1046 = vadd.xlane.f32.xlu0 %v1045
        %v1047 = vpop.xlane.xlu0 %1046
        %v1048 = vmul.f32 %v1002, %v951
        %v1049 = vmul.f32 %v1005, %v951
        %v1050 = vmul.f32 %v1008, %v951
        %v1051 = vmul.f32 %v1011, %v951
        %v1052 = vmul.f32 %v1014, %v951
        %v1053 = vmul.f32 %v1017, %v951
        %v1054 = vmul.f32 %v1020, %v951
        %v1055 = vmul.f32 %v1023, %v951
        %v1056 = vmul.f32 %v1026, %v951
        %v1057 = vmul.f32 %v1029, %v951
        %v1058 = vmul.f32 %v1032, %v951
        %v1059 = vmul.f32 %v1035, %v951
        %v1060 = vmul.f32 %v1038, %v951
        %v1061 = vmul.f32 %v1041, %v951
        %v1062 = vmul.f32 %v1044, %v951
        %v1063 = vmul.f32 %v1047, %v951
        %v1064 = vadd.f32 %v1048, 1e-05
        %v1065 = vadd.f32 %v1049, 1e-05
        %v1066 = vadd.f32 %v1050, 1e-05
        %v1067 = vadd.f32 %v1051, 1e-05
        %v1068 = vadd.f32 %v1052, 1e-05
        %v1069 = vadd.f32 %v1053, 1e-05
        %v1070 = vadd.f32 %v1054, 1e-05
        %v1071 = vadd.f32 %v1055, 1e-05
        %v1072 = vadd.f32 %v1056, 1e-05
        %v1073 = vadd.f32 %v1057, 1e-05
        %v1074 = vadd.f32 %v1058, 1e-05
        %v1075 = vadd.f32 %v1059, 1e-05
        %v1076 = vadd.f32 %v1060, 1e-05
        %v1077 = vadd.f32 %v1061, 1e-05
        %v1078 = vadd.f32 %v1062, 1e-05
        %v1079 = vadd.f32 %v1063, 1e-05
        %v1080 = vrsqrt.pop %v1064
        %v1081 = vrsqrt.pop %v1065
        %v1082 = vrsqrt.pop %v1066
        %v1083 = vrsqrt.pop %v1067
        %v1084 = vrsqrt.pop %v1068
        %v1085 = vrsqrt.pop %v1069
        %v1086 = vrsqrt.pop %v1070
        %v1087 = vrsqrt.pop %v1071
        %v1088 = vrsqrt.pop %v1072
        %v1089 = vrsqrt.pop %v1073
        %v1090 = vrsqrt.pop %v1074
        %v1091 = vrsqrt.pop %v1075
        %v1092 = vrsqrt.pop %v1076
        %v1093 = vrsqrt.pop %v1077
        %v1094 = vrsqrt.pop %v1078
        %v1095 = vrsqrt.pop %v1079
        %v1096 = vmul.f32 %v968, %v1080
        %v1097 = vmul.f32 %v969, %v1081
        %v1098 = vmul.f32 %v970, %v1082
        %v1099 = vmul.f32 %v971, %v1083
        %v1100 = vmul.f32 %v972, %v1084
        %v1101 = vmul.f32 %v973, %v1085
        %v1102 = vmul.f32 %v974, %v1086
        %v1103 = vmul.f32 %v975, %v1087
        %v1104 = vmul.f32 %v976, %v1088
        %v1105 = vmul.f32 %v977, %v1089
        %v1106 = vmul.f32 %v978, %v1090
        %v1107 = vmul.f32 %v979, %v1091
        %v1108 = vmul.f32 %v980, %v1092
        %v1109 = vmul.f32 %v981, %v1093
        %v1110 = vmul.f32 %v982, %v1094
        %v1111 = vmul.f32 %v983, %v1095
        %v1112 = vlaneseq
        %v1113 = vshrl.u32 %v1112, 7
        %v1114 = vsub.s32 0, %v1113
        %v1115 = vrot.slane %v901, %v1114
        %v1116 = vmul.f32 %v1096, %v1115
        %v1117 = vmul.f32 %v1097, %v1115
        %v1118 = vmul.f32 %v1098, %v1115
        %v1119 = vmul.f32 %v1099, %v1115
        %v1120 = vmul.f32 %v1100, %v1115
        %v1121 = vmul.f32 %v1101, %v1115
        %v1122 = vmul.f32 %v1102, %v1115
        %v1123 = vmul.f32 %v1103, %v1115
        %v1124 = vmul.f32 %v1104, %v1115
        %v1125 = vmul.f32 %v1105, %v1115
        %v1126 = vmul.f32 %v1106, %v1115
        %v1127 = vmul.f32 %v1107, %v1115
        %v1128 = vmul.f32 %v1108, %v1115
        %v1129 = vmul.f32 %v1109, %v1115
        %v1130 = vmul.f32 %v1110, %v1115
        %v1131 = vmul.f32 %v1111, %v1115
        %v1132 = vlaneseq
        %v1133 = vshrl.u32 %v1132, 7
        %v1134 = vsub.s32 1, %v1133
        %v1135 = vrot.slane %v901, %v1134
        %v1136 = vadd.f32 %v1116, %v1135
        %v1137 = vadd.f32 %v1117, %v1135
        %v1138 = vadd.f32 %v1118, %v1135
        %v1139 = vadd.f32 %v1119, %v1135
        %v1140 = vadd.f32 %v1120, %v1135
        %v1141 = vadd.f32 %v1121, %v1135
        %v1142 = vadd.f32 %v1122, %v1135
        %v1143 = vadd.f32 %v1123, %v1135
        %v1144 = vadd.f32 %v1124, %v1135
        %v1145 = vadd.f32 %v1125, %v1135
        %v1146 = vadd.f32 %v1126, %v1135
        %v1147 = vadd.f32 %v1127, %v1135
        %v1148 = vadd.f32 %v1128, %v1135
        %v1149 = vadd.f32 %v1129, %v1135
        %v1150 = vadd.f32 %v1130, %v1135
        %v1151 = vadd.f32 %v1131, %v1135
        %v1153 = vlaneseq
        %v1154 = vshrl.u32 %v1153, 7
        %v1155 = vsub.s32 0, %v1154
        %v1156 = vrot.slane %v834, %v1155
        %v1157 = vlaneseq
        %v1158 = vshrl.u32 %v1157, 7
        %v1159 = vsub.s32 1, %v1158
        %v1160 = vrot.slane %v834, %v1159
        %v1164 = vsel %vm902, %v1136, 0
        %v1167 = vsel %vm902, %v1137, 0
        %v1170 = vsel %vm902, %v1138, 0
        %v1173 = vsel %vm902, %v1139, 0
        %v1176 = vsel %vm902, %v1140, 0
        %v1179 = vsel %vm902, %v1141, 0
        %v1182 = vsel %vm902, %v1142, 0
        %v1185 = vsel %vm902, %v1143, 0
        %v1188 = vsel %vm902, %v1144, 0
        %v1191 = vsel %vm902, %v1145, 0
        %v1194 = vsel %vm902, %v1146, 0
        %v1197 = vsel %vm902, %v1147, 0
        %v1200 = vsel %vm902, %v1148, 0
        %v1203 = vsel %vm902, %v1149, 0
        %v1206 = vsel %vm902, %v1150, 0
        %v1209 = vsel %vm902, %v1151, 0
        %1211 = vmatprep.subr.mxu0 %v817
        %1212 = vmatpush1.msra.mxu0 %v816
        %1213 = vmatprep.subr.mxu0 %v819
        %1214 = vmatpush1.msra.mxu0 %v818
        %1215 = vmatprep.subr.mxu0 %v821
        %1216 = vmatpush1.msra.mxu0 %v820
        %1217 = vmatprep.subr.mxu0 %v823
        %1218 = vmatpush1.msra.mxu0 %v822
        %1219 = vmatprep.subr.mxu0 %v825
        %1220 = vmatpush1.msra.mxu0 %v824
        %1221 = vmatprep.subr.mxu0 %v827
        %1222 = vmatpush1.msra.mxu0 %v826
        %1223 = vmatprep.subr.mxu0 %v829
        %1224 = vmatpush1.msra.mxu0 %v828
        %1225 = vmatprep.subr.mxu0 %v831
        %1226 = vmatpush1.msra.mxu0 %v830
        %1227 = vmatprep.subr.mxu0 0.0
        %1228 = vmatpush1.msra.mxu0 0.0
        %1229 = vmatprep.subr.mxu0 0.0
        %1230 = vmatpush1.msra.mxu0 0.0
        %1231 = vmatprep.subr.mxu0 0.0
        %1232 = vmatpush1.msra.mxu0 0.0
        %1233 = vmatprep.subr.mxu0 0.0
        %1234 = vmatpush1.msra.mxu0 0.0
        %1235 = vmatprep.subr.mxu0 0.0
        %1236 = vmatpush1.msra.mxu0 0.0
        %1237 = vmatprep.subr.mxu0 0.0
        %1238 = vmatpush1.msra.mxu0 0.0
        %1239 = vmatprep.subr.mxu0 0.0
        %1240 = vmatpush1.msra.mxu0 0.0
        %1241 = vmatprep.subr.mxu0 0.0
        %1242 = vmatpush1.msra.mxu0 0.0
        %1243 = vmatprep.subr.mxu0 0.0
        %1244 = vmatpush1.msra.mxu0 0.0
        %1245 = vmatprep.subr.mxu0 0.0
        %1246 = vmatpush1.msra.mxu0 0.0
        %1247 = vmatprep.subr.mxu0 0.0
        %1248 = vmatpush1.msra.mxu0 0.0
        %1249 = vmatprep.subr.mxu0 0.0
        %1250 = vmatpush1.msra.mxu0 0.0
        %1251 = vmatprep.subr.mxu0 0.0
        %1252 = vmatpush1.msra.mxu0 0.0
        %1253 = vmatprep.subr.mxu0 0.0
        %1254 = vmatpush1.msra.mxu0 0.0
        %1255 = vmatprep.subr.mxu0 0.0
        %1256 = vmatpush1.msra.mxu0 0.0
        %1257 = vmatprep.subr.mxu0 0.0
        %1258 = vmatpush1.msra.mxu0 0.0
        %1259 = vmatprep.subr.mxu0 0.0
        %1260 = vmatpush1.msra.mxu0 0.0
        %1261 = vmatprep.subr.mxu0 0.0
        %1262 = vmatpush1.msra.mxu0 0.0
        %1263 = vmatprep.subr.mxu0 0.0
        %1264 = vmatpush1.msra.mxu0 0.0
        %1265 = vmatprep.subr.mxu0 0.0
        %1266 = vmatpush1.msra.mxu0 0.0
        %1267 = vmatprep.subr.mxu0 0.0
        %1268 = vmatpush1.msra.mxu0 0.0
        %1269 = vmatprep.subr.mxu0 0.0
        %1270 = vmatpush1.msra.mxu0 0.0
        %1271 = vmatprep.subr.mxu0 0.0
        %1272 = vmatpush1.msra.mxu0 0.0
        %1273 = vmatprep.subr.mxu0 0.0
        %1274 = vmatpush1.msra.mxu0 0.0
        %1275 = vmatprep.mubr.f32.mxu0 0.0
        %1276 = vmatmul.mubr.f32.gmra.mrb[0].mxu0 %v1164
        %v1277 = vpop.f32.mrb[0].mxu0
        %v1278 = vadd.f32 %v1156, %v1277
        %v1279 = vpop.f32.mrb[0].mxu0
        %v1280 = vadd.f32 %v1160, %v1279
        %1281 = vmatprep.mubr.f32.mxu0 0.0
        %1282 = vmatmul.mubr.f32.gmra.mrb[0].mxu0 %v1167
        %v1283 = vpop.f32.mrb[0].mxu0
        %v1284 = vadd.f32 %v1156, %v1283
        %v1285 = vpop.f32.mrb[0].mxu0
        %v1286 = vadd.f32 %v1160, %v1285
        %1287 = vmatprep.mubr.f32.mxu0 0.0
        %1288 = vmatmul.mubr.f32.gmra.mrb[0].mxu0 %v1170
        %v1289 = vpop.f32.mrb[0].mxu0
        %v1290 = vadd.f32 %v1156, %v1289
        %v1291 = vpop.f32.mrb[0].mxu0
        %v1292 = vadd.f32 %v1160, %v1291
        %1293 = vmatprep.mubr.f32.mxu0 0.0
        %1294 = vmatmul.mubr.f32.gmra.mrb[0].mxu0 %v1173
        %v1295 = vpop.f32.mrb[0].mxu0
        %v1296 = vadd.f32 %v1156, %v1295
        %v1297 = vpop.f32.mrb[0].mxu0
        %v1298 = vadd.f32 %v1160, %v1297
        %1299 = vmatprep.mubr.f32.mxu0 0.0
        %1300 = vmatmul.mubr.f32.gmra.mrb[0].mxu0 %v1176
        %v1301 = vpop.f32.mrb[0].mxu0
        %v1302 = vadd.f32 %v1156, %v1301
        %v1303 = vpop.f32.mrb[0].mxu0
        %v1304 = vadd.f32 %v1160, %v1303
        %1305 = vmatprep.mubr.f32.mxu0 0.0
        %1306 = vmatmul.mubr.f32.gmra.mrb[0].mxu0 %v1179
        %v1307 = vpop.f32.mrb[0].mxu0
        %v1308 = vadd.f32 %v1156, %v1307
        %v1309 = vpop.f32.mrb[0].mxu0
        %v1310 = vadd.f32 %v1160, %v1309
        %1311 = vmatprep.mubr.f32.mxu0 0.0
        %1312 = vmatmul.mubr.f32.gmra.mrb[0].mxu0 %v1182
        %v1313 = vpop.f32.mrb[0].mxu0
        %v1314 = vadd.f32 %v1156, %v1313
        %v1315 = vpop.f32.mrb[0].mxu0
        %v1316 = vadd.f32 %v1160, %v1315
        %1317 = vmatprep.mubr.f32.mxu0 0.0
        %1318 = vmatmul.mubr.f32.gmra.mrb[0].mxu0 %v1185
        %v1319 = vpop.f32.mrb[0].mxu0
        %v1320 = vadd.f32 %v1156, %v1319
        %v1321 = vpop.f32.mrb[0].mxu0
        %v1322 = vadd.f32 %v1160, %v1321
        %1323 = vmatprep.mubr.f32.mxu0 0.0
        %1324 = vmatmul.mubr.f32.gmra.mrb[0].mxu0 %v1188
        %v1325 = vpop.f32.mrb[0].mxu0
        %v1326 = vadd.f32 %v1156, %v1325
        %v1327 = vpop.f32.mrb[0].mxu0
        %v1328 = vadd.f32 %v1160, %v1327
        %1329 = vmatprep.mubr.f32.mxu0 0.0
        %1330 = vmatmul.mubr.f32.gmra.mrb[0].mxu0 %v1191
        %v1331 = vpop.f32.mrb[0].mxu0
        %v1332 = vadd.f32 %v1156, %v1331
        %v1333 = vpop.f32.mrb[0].mxu0
        %v1334 = vadd.f32 %v1160, %v1333
        %1335 = vmatprep.mubr.f32.mxu0 0.0
        %1336 = vmatmul.mubr.f32.gmra.mrb[0].mxu0 %v1194
        %v1337 = vpop.f32.mrb[0].mxu0
        %v1338 = vadd.f32 %v1156, %v1337
        %v1339 = vpop.f32.mrb[0].mxu0
        %v1340 = vadd.f32 %v1160, %v1339
        %1341 = vmatprep.mubr.f32.mxu0 0.0
        %1342 = vmatmul.mubr.f32.gmra.mrb[0].mxu0 %v1197
        %v1343 = vpop.f32.mrb[0].mxu0
        %v1344 = vadd.f32 %v1156, %v1343
        %v1345 = vpop.f32.mrb[0].mxu0
        %v1346 = vadd.f32 %v1160, %v1345
        %1347 = vmatprep.mubr.f32.mxu0 0.0
        %1348 = vmatmul.mubr.f32.gmra.mrb[0].mxu0 %v1200
        %v1349 = vpop.f32.mrb[0].mxu0
        %v1350 = vadd.f32 %v1156, %v1349
        %v1351 = vpop.f32.mrb[0].mxu0
        %v1352 = vadd.f32 %v1160, %v1351
        %1353 = vmatprep.mubr.f32.mxu0 0.0
        %1354 = vmatmul.mubr.f32.gmra.mrb[0].mxu0 %v1203
        %v1355 = vpop.f32.mrb[0].mxu0
        %v1356 = vadd.f32 %v1156, %v1355
        %v1357 = vpop.f32.mrb[0].mxu0
        %v1358 = vadd.f32 %v1160, %v1357
        %1359 = vmatprep.mubr.f32.mxu0 0.0
        %1360 = vmatmul.mubr.f32.gmra.mrb[0].mxu0 %v1206
        %v1361 = vpop.f32.mrb[0].mxu0
        %v1362 = vadd.f32 %v1156, %v1361
        %v1363 = vpop.f32.mrb[0].mxu0
        %v1364 = vadd.f32 %v1160, %v1363
        %1365 = vmatprep.mubr.f32.mxu0 0.0
        %1366 = vmatmul.mubr.f32.gmra.mrb[0].mxu0 %v1209
        %v1367 = vpop.f32.mrb[0].mxu0
        %v1368 = vadd.f32 %v1156, %v1367
        %v1369 = vpop.f32.mrb[0].mxu0
        %v1370 = vadd.f32 %v1160, %v1369
        %1371 = vdwg.mxu0
        %vm1372 = vcmask 64512
        %v1374 = vsel %vm1372, %v1280, 0
        %v1377 = vsel %vm1372, %v1286, 0
        %v1380 = vsel %vm1372, %v1292, 0
        %v1383 = vsel %vm1372, %v1298, 0
        %v1386 = vsel %vm1372, %v1304, 0
        %v1389 = vsel %vm1372, %v1310, 0
        %v1392 = vsel %vm1372, %v1316, 0
        %v1395 = vsel %vm1372, %v1322, 0
        %v1398 = vsel %vm1372, %v1328, 0
        %v1401 = vsel %vm1372, %v1334, 0
        %v1404 = vsel %vm1372, %v1340, 0
        %v1407 = vsel %vm1372, %v1346, 0
        %v1410 = vsel %vm1372, %v1352, 0
        %v1413 = vsel %vm1372, %v1358, 0
        %v1416 = vsel %vm1372, %v1364, 0
        %v1419 = vsel %vm1372, %v1370, 0
        %v1422 = vsel %vm1372, %v1278, 0
        %v1425 = vsel %vm1372, %v1284, 0
        %v1428 = vsel %vm1372, %v1290, 0
        %v1431 = vsel %vm1372, %v1296, 0
        %v1434 = vsel %vm1372, %v1302, 0
        %v1437 = vsel %vm1372, %v1308, 0
        %v1440 = vsel %vm1372, %v1314, 0
        %v1443 = vsel %vm1372, %v1320, 0
        %v1446 = vsel %vm1372, %v1326, 0
        %v1449 = vsel %vm1372, %v1332, 0
        %v1452 = vsel %vm1372, %v1338, 0
        %v1455 = vsel %vm1372, %v1344, 0
        %v1458 = vsel %vm1372, %v1350, 0
        %v1461 = vsel %vm1372, %v1356, 0
        %v1464 = vsel %vm1372, %v1362, 0
        %v1467 = vsel %vm1372, %v1368, 0
        %1469 = vmatprep.subr.mxu0 0.0
        %1470 = vmatpush1.xpose.msra.mxu0 %v1422
        %1471 = vmatprep.subr.mxu0 0.0
        %1472 = vmatpush1.xpose.msra.mxu0 %v1425
        %1473 = vmatprep.subr.mxu0 0.0
        %1474 = vmatpush1.xpose.msra.mxu0 %v1428
        %1475 = vmatprep.subr.mxu0 0.0
        %1476 = vmatpush1.xpose.msra.mxu0 %v1431
        %1477 = vmatprep.subr.mxu0 0.0
        %1478 = vmatpush1.xpose.msra.mxu0 %v1434
        %1479 = vmatprep.subr.mxu0 0.0
        %1480 = vmatpush1.xpose.msra.mxu0 %v1437
        %1481 = vmatprep.subr.mxu0 0.0
        %1482 = vmatpush1.xpose.msra.mxu0 %v1440
        %1483 = vmatprep.subr.mxu0 0.0
        %1484 = vmatpush1.xpose.msra.mxu0 %v1443
        %1485 = vmatprep.subr.mxu0 0.0
        %1486 = vmatpush1.xpose.msra.mxu0 %v1446
        %1487 = vmatprep.subr.mxu0 0.0
        %1488 = vmatpush1.xpose.msra.mxu0 %v1449
        %1489 = vmatprep.subr.mxu0 0.0
        %1490 = vmatpush1.xpose.msra.mxu0 %v1452
        %1491 = vmatprep.subr.mxu0 0.0
        %1492 = vmatpush1.xpose.msra.mxu0 %v1455
        %1493 = vmatprep.subr.mxu0 0.0
        %1494 = vmatpush1.xpose.msra.mxu0 %v1458
        %1495 = vmatprep.subr.mxu0 0.0
        %1496 = vmatpush1.xpose.msra.mxu0 %v1461
        %1497 = vmatprep.subr.mxu0 0.0
        %1498 = vmatpush1.xpose.msra.mxu0 %v1464
        %1499 = vmatprep.subr.mxu0 0.0
        %1500 = vmatpush1.xpose.msra.mxu0 %v1467
        %1501 = vmatprep.subr.mxu0 0.0
        %1502 = vmatpush1.xpose.msra.mxu0 0.0
        %1503 = vmatprep.subr.mxu0 0.0
        %1504 = vmatpush1.xpose.msra.mxu0 0.0
        %1505 = vmatprep.subr.mxu0 0.0
        %1506 = vmatpush1.xpose.msra.mxu0 0.0
        %1507 = vmatprep.subr.mxu0 0.0
        %1508 = vmatpush1.xpose.msra.mxu0 0.0
        %1509 = vmatprep.subr.mxu0 0.0
        %1510 = vmatpush1.xpose.msra.mxu0 0.0
        %1511 = vmatprep.subr.mxu0 0.0
        %1512 = vmatpush1.xpose.msra.mxu0 0.0
        %1513 = vmatprep.subr.mxu0 0.0
        %1514 = vmatpush1.xpose.msra.mxu0 0.0
        %1515 = vmatprep.subr.mxu0 0.0
        %1516 = vmatpush1.xpose.msra.mxu0 0.0
        %1517 = vmatprep.subr.mxu0 0.0
        %1518 = vmatpush1.xpose.msra.mxu0 0.0
        %1519 = vmatprep.subr.mxu0 0.0
        %1520 = vmatpush1.xpose.msra.mxu0 0.0
        %1521 = vmatprep.subr.mxu0 0.0
        %1522 = vmatpush1.xpose.msra.mxu0 0.0
        %1523 = vmatprep.subr.mxu0 0.0
        %1524 = vmatpush1.xpose.msra.mxu0 0.0
        %1525 = vmatprep.subr.mxu0 0.0
        %1526 = vmatpush1.xpose.msra.mxu0 0.0
        %1527 = vmatprep.subr.mxu0 0.0
        %1528 = vmatpush1.xpose.msra.mxu0 0.0
        %1529 = vmatprep.subr.mxu0 0.0
        %1530 = vmatpush1.xpose.msra.mxu0 0.0
        %1531 = vmatprep.subr.mxu0 0.0
        %1532 = vmatpush1.xpose.msra.mxu0 0.0
        %1533 = vmatprep.mubr.f32.mxu0 0.0
        %1534 = vmatmul.mubr.f32.gmra.mrb[0].mxu0 %v1374
        %v1535 = vpop.f32.mrb[0].mxu0
        %v1536 = vadd.f32 0.0, %v1535
        %v1537 = vpop.f32.mrb[0].mxu0
        %1538 = vmatprep.mubr.f32.mxu0 0.0
        %1539 = vmatmul.mubr.f32.gmra.mrb[0].mxu0 %v1377
        %v1540 = vpop.f32.mrb[0].mxu0
        %v1541 = vadd.f32 0.0, %v1540
        %v1542 = vpop.f32.mrb[0].mxu0
        %1543 = vmatprep.mubr.f32.mxu0 0.0
        %1544 = vmatmul.mubr.f32.gmra.mrb[0].mxu0 %v1380
        %v1545 = vpop.f32.mrb[0].mxu0
        %v1546 = vadd.f32 0.0, %v1545
        %v1547 = vpop.f32.mrb[0].mxu0
        %1548 = vmatprep.mubr.f32.mxu0 0.0
        %1549 = vmatmul.mubr.f32.gmra.mrb[0].mxu0 %v1383
        %v1550 = vpop.f32.mrb[0].mxu0
        %v1551 = vadd.f32 0.0, %v1550
        %v1552 = vpop.f32.mrb[0].mxu0
        %1553 = vmatprep.mubr.f32.mxu0 0.0
        %1554 = vmatmul.mubr.f32.gmra.mrb[0].mxu0 %v1386
        %v1555 = vpop.f32.mrb[0].mxu0
        %v1556 = vadd.f32 0.0, %v1555
        %v1557 = vpop.f32.mrb[0].mxu0
        %1558 = vmatprep.mubr.f32.mxu0 0.0
        %1559 = vmatmul.mubr.f32.gmra.mrb[0].mxu0 %v1389
        %v1560 = vpop.f32.mrb[0].mxu0
        %v1561 = vadd.f32 0.0, %v1560
        %v1562 = vpop.f32.mrb[0].mxu0
        %1563 = vmatprep.mubr.f32.mxu0 0.0
        %1564 = vmatmul.mubr.f32.gmra.mrb[0].mxu0 %v1392
        %v1565 = vpop.f32.mrb[0].mxu0
        %v1566 = vadd.f32 0.0, %v1565
        %v1567 = vpop.f32.mrb[0].mxu0
        %1568 = vmatprep.mubr.f32.mxu0 0.0
        %1569 = vmatmul.mubr.f32.gmra.mrb[0].mxu0 %v1395
        %v1570 = vpop.f32.mrb[0].mxu0
        %v1571 = vadd.f32 0.0, %v1570
        %v1572 = vpop.f32.mrb[0].mxu0
        %1573 = vmatprep.mubr.f32.mxu0 0.0
        %1574 = vmatmul.mubr.f32.gmra.mrb[0].mxu0 %v1398
        %v1575 = vpop.f32.mrb[0].mxu0
        %v1576 = vadd.f32 0.0, %v1575
        %v1577 = vpop.f32.mrb[0].mxu0
        %1578 = vmatprep.mubr.f32.mxu0 0.0
        %1579 = vmatmul.mubr.f32.gmra.mrb[0].mxu0 %v1401
        %v1580 = vpop.f32.mrb[0].mxu0
        %v1581 = vadd.f32 0.0, %v1580
        %v1582 = vpop.f32.mrb[0].mxu0
        %1583 = vmatprep.mubr.f32.mxu0 0.0
        %1584 = vmatmul.mubr.f32.gmra.mrb[0].mxu0 %v1404
        %v1585 = vpop.f32.mrb[0].mxu0
        %v1586 = vadd.f32 0.0, %v1585
        %v1587 = vpop.f32.mrb[0].mxu0
        %1588 = vmatprep.mubr.f32.mxu0 0.0
        %1589 = vmatmul.mubr.f32.gmra.mrb[0].mxu0 %v1407
        %v1590 = vpop.f32.mrb[0].mxu0
        %v1591 = vadd.f32 0.0, %v1590
        %v1592 = vpop.f32.mrb[0].mxu0
        %1593 = vmatprep.mubr.f32.mxu0 0.0
        %1594 = vmatmul.mubr.f32.gmra.mrb[0].mxu0 %v1410
        %v1595 = vpop.f32.mrb[0].mxu0
        %v1596 = vadd.f32 0.0, %v1595
        %v1597 = vpop.f32.mrb[0].mxu0
        %1598 = vmatprep.mubr.f32.mxu0 0.0
        %1599 = vmatmul.mubr.f32.gmra.mrb[0].mxu0 %v1413
        %v1600 = vpop.f32.mrb[0].mxu0
        %v1601 = vadd.f32 0.0, %v1600
        %v1602 = vpop.f32.mrb[0].mxu0
        %1603 = vmatprep.mubr.f32.mxu0 0.0
        %1604 = vmatmul.mubr.f32.gmra.mrb[0].mxu0 %v1416
        %v1605 = vpop.f32.mrb[0].mxu0
        %v1606 = vadd.f32 0.0, %v1605
        %v1607 = vpop.f32.mrb[0].mxu0
        %1608 = vmatprep.mubr.f32.mxu0 0.0
        %1609 = vmatmul.mubr.f32.gmra.mrb[0].mxu0 %v1419
        %v1610 = vpop.f32.mrb[0].mxu0
        %v1611 = vadd.f32 0.0, %v1610
        %v1612 = vpop.f32.mrb[0].mxu0
        %1613 = vdwg.mxu0
        %v1614 = vmul.f32 %v1536, 0.35355338
        %v1615 = vmul.f32 %v1541, 0.35355338
        %v1616 = vmul.f32 %v1546, 0.35355338
        %v1617 = vmul.f32 %v1551, 0.35355338
        %v1618 = vmul.f32 %v1556, 0.35355338
        %v1619 = vmul.f32 %v1561, 0.35355338
        %v1620 = vmul.f32 %v1566, 0.35355338
        %v1621 = vmul.f32 %v1571, 0.35355338
        %v1622 = vmul.f32 %v1576, 0.35355338
        %v1623 = vmul.f32 %v1581, 0.35355338
        %v1624 = vmul.f32 %v1586, 0.35355338
        %v1625 = vmul.f32 %v1591, 0.35355338
        %v1626 = vmul.f32 %v1596, 0.35355338
        %v1627 = vmul.f32 %v1601, 0.35355338
        %v1628 = vmul.f32 %v1606, 0.35355338
        %v1629 = vmul.f32 %v1611, 0.35355338
        %1630 = vmax.xlane.f32.xlu0 %v1614
        %v1631 = vpop.xlane.xlu0 %1630
        %1632 = vmax.xlane.f32.xlu0 %v1615
        %v1633 = vpop.xlane.xlu0 %1632
        %1634 = vmax.xlane.f32.xlu0 %v1616
        %v1635 = vpop.xlane.xlu0 %1634
        %1636 = vmax.xlane.f32.xlu0 %v1617
        %v1637 = vpop.xlane.xlu0 %1636
        %1638 = vmax.xlane.f32.xlu0 %v1618
        %v1639 = vpop.xlane.xlu0 %1638
        %1640 = vmax.xlane.f32.xlu0 %v1619
        %v1641 = vpop.xlane.xlu0 %1640
        %1642 = vmax.xlane.f32.xlu0 %v1620
        %v1643 = vpop.xlane.xlu0 %1642
        %1644 = vmax.xlane.f32.xlu0 %v1621
        %v1645 = vpop.xlane.xlu0 %1644
        %1646 = vmax.xlane.f32.xlu0 %v1622
        %v1647 = vpop.xlane.xlu0 %1646
        %1648 = vmax.xlane.f32.xlu0 %v1623
        %v1649 = vpop.xlane.xlu0 %1648
        %1650 = vmax.xlane.f32.xlu0 %v1624
        %v1651 = vpop.xlane.xlu0 %1650
        %1652 = vmax.xlane.f32.xlu0 %v1625
        %v1653 = vpop.xlane.xlu0 %1652
        %1654 = vmax.xlane.f32.xlu0 %v1626
        %v1655 = vpop.xlane.xlu0 %1654
        %1656 = vmax.xlane.f32.xlu0 %v1627
        %v1657 = vpop.xlane.xlu0 %1656
        %1658 = vmax.xlane.f32.xlu0 %v1628
        %v1659 = vpop.xlane.xlu0 %1658
        %1660 = vmax.xlane.f32.xlu0 %v1629
        %v1661 = vpop.xlane.xlu0 %1660
        %v1662 = vsub.f32 %v1614, %v1631
        %v1663 = vsub.f32 %v1615, %v1633
        %v1664 = vsub.f32 %v1616, %v1635
        %v1665 = vsub.f32 %v1617, %v1637
        %v1666 = vsub.f32 %v1618, %v1639
        %v1667 = vsub.f32 %v1619, %v1641
        %v1668 = vsub.f32 %v1620, %v1643
        %v1669 = vsub.f32 %v1621, %v1645
        %v1670 = vsub.f32 %v1622, %v1647
        %v1671 = vsub.f32 %v1623, %v1649
        %v1672 = vsub.f32 %v1624, %v1651
        %v1673 = vsub.f32 %v1625, %v1653
        %v1674 = vsub.f32 %v1626, %v1655
        %v1675 = vsub.f32 %v1627, %v1657
        %v1676 = vsub.f32 %v1628, %v1659
        %v1677 = vsub.f32 %v1629, %v1661
        %v1678 = vmul.f32 %v1662, 1.442695
        %v1679 = vpow.pop %v1678
        %v1680 = vmul.f32 %v1663, 1.442695
        %v1681 = vpow.pop %v1680
        %v1682 = vmul.f32 %v1664, 1.442695
        %v1683 = vpow.pop %v1682
        %v1684 = vmul.f32 %v1665, 1.442695
        %v1685 = vpow.pop %v1684
        %v1686 = vmul.f32 %v1666, 1.442695
        %v1687 = vpow.pop %v1686
        %v1688 = vmul.f32 %v1667, 1.442695
        %v1689 = vpow.pop %v1688
        %v1690 = vmul.f32 %v1668, 1.442695
        %v1691 = vpow.pop %v1690
        %v1692 = vmul.f32 %v1669, 1.442695
        %v1693 = vpow.pop %v1692
        %v1694 = vmul.f32 %v1670, 1.442695
        %v1695 = vpow.pop %v1694
        %v1696 = vmul.f32 %v1671, 1.442695
        %v1697 = vpow.pop %v1696
        %v1698 = vmul.f32 %v1672, 1.442695
        %v1699 = vpow.pop %v1698
        %v1700 = vmul.f32 %v1673, 1.442695
        %v1701 = vpow.pop %v1700
        %v1702 = vmul.f32 %v1674, 1.442695
        %v1703 = vpow.pop %v1702
        %v1704 = vmul.f32 %v1675, 1.442695
        %v1705 = vpow.pop %v1704
        %v1706 = vmul.f32 %v1676, 1.442695
        %v1707 = vpow.pop %v1706
        %v1708 = vmul.f32 %v1677, 1.442695
        %v1709 = vpow.pop %v1708
        %1710 = vadd.xlane.f32.xlu0 %v1679
        %v1711 = vpop.xlane.xlu0 %1710
        %1712 = vadd.xlane.f32.xlu0 %v1681
        %v1713 = vpop.xlane.xlu0 %1712
        %1714 = vadd.xlane.f32.xlu0 %v1683
        %v1715 = vpop.xlane.xlu0 %1714
        %1716 = vadd.xlane.f32.xlu0 %v1685
        %v1717 = vpop.xlane.xlu0 %1716
        %1718 = vadd.xlane.f32.xlu0 %v1687
        %v1719 = vpop.xlane.xlu0 %1718
        %1720 = vadd.xlane.f32.xlu0 %v1689
        %v1721 = vpop.xlane.xlu0 %1720
        %1722 = vadd.xlane.f32.xlu0 %v1691
        %v1723 = vpop.xlane.xlu0 %1722
        %1724 = vadd.xlane.f32.xlu0 %v1693
        %v1725 = vpop.xlane.xlu0 %1724
        %1726 = vadd.xlane.f32.xlu0 %v1695
        %v1727 = vpop.xlane.xlu0 %1726
        %1728 = vadd.xlane.f32.xlu0 %v1697
        %v1729 = vpop.xlane.xlu0 %1728
        %1730 = vadd.xlane.f32.xlu0 %v1699
        %v1731 = vpop.xlane.xlu0 %1730
        %1732 = vadd.xlane.f32.xlu0 %v1701
        %v1733 = vpop.xlane.xlu0 %1732
        %1734 = vadd.xlane.f32.xlu0 %v1703
        %v1735 = vpop.xlane.xlu0 %1734
        %1736 = vadd.xlane.f32.xlu0 %v1705
        %v1737 = vpop.xlane.xlu0 %1736
        %1738 = vadd.xlane.f32.xlu0 %v1707
        %v1739 = vpop.xlane.xlu0 %1738
        %1740 = vadd.xlane.f32.xlu0 %v1709
        %v1741 = vpop.xlane.xlu0 %1740
        %v1742 = vrcp.pop %v1711
        %v1743 = vrcp.pop %v1713
        %v1744 = vrcp.pop %v1715
        %v1745 = vrcp.pop %v1717
        %v1746 = vrcp.pop %v1719
        %v1747 = vrcp.pop %v1721
        %v1748 = vrcp.pop %v1723
        %v1749 = vrcp.pop %v1725
        %v1750 = vrcp.pop %v1727
        %v1751 = vrcp.pop %v1729
        %v1752 = vrcp.pop %v1731
        %v1753 = vrcp.pop %v1733
        %v1754 = vrcp.pop %v1735
        %v1755 = vrcp.pop %v1737
        %v1756 = vrcp.pop %v1739
        %v1757 = vrcp.pop %v1741
        %v1758 = vmul.f32 %v1679, %v1742
        %v1759 = vmul.f32 %v1681, %v1743
        %v1760 = vmul.f32 %v1683, %v1744
        %v1761 = vmul.f32 %v1685, %v1745
        %v1762 = vmul.f32 %v1687, %v1746
        %v1763 = vmul.f32 %v1689, %v1747
        %v1764 = vmul.f32 %v1691, %v1748
        %v1765 = vmul.f32 %v1693, %v1749
        %v1766 = vmul.f32 %v1695, %v1750
        %v1767 = vmul.f32 %v1697, %v1751
        %v1768 = vmul.f32 %v1699, %v1752
        %v1769 = vmul.f32 %v1701, %v1753
        %v1770 = vmul.f32 %v1703, %v1754
        %v1771 = vmul.f32 %v1705, %v1755
        %v1772 = vmul.f32 %v1707, %v1756
        %v1773 = vmul.f32 %v1709, %v1757
        %1774 = vrot.lane.b32.xlu0 %v1278, 64
        %v1775 = vpop.permute.xlu0 %1774
        %1776 = vrot.lane.b32.xlu0 %v1284, 64
        %v1777 = vpop.permute.xlu0 %1776
        %1778 = vrot.lane.b32.xlu0 %v1290, 64
        %v1779 = vpop.permute.xlu0 %1778
        %1780 = vrot.lane.b32.xlu0 %v1296, 64
        %v1781 = vpop.permute.xlu0 %1780
        %1782 = vrot.lane.b32.xlu0 %v1302, 64
        %v1783 = vpop.permute.xlu0 %1782
        %1784 = vrot.lane.b32.xlu0 %v1308, 64
        %v1785 = vpop.permute.xlu0 %1784
        %1786 = vrot.lane.b32.xlu0 %v1314, 64
        %v1787 = vpop.permute.xlu0 %1786
        %1788 = vrot.lane.b32.xlu0 %v1320, 64
        %v1789 = vpop.permute.xlu0 %1788
        %1790 = vrot.lane.b32.xlu0 %v1326, 64
        %v1791 = vpop.permute.xlu0 %1790
        %1792 = vrot.lane.b32.xlu0 %v1332, 64
        %v1793 = vpop.permute.xlu0 %1792
        %1794 = vrot.lane.b32.xlu0 %v1338, 64
        %v1795 = vpop.permute.xlu0 %1794
        %1796 = vrot.lane.b32.xlu0 %v1344, 64
        %v1797 = vpop.permute.xlu0 %1796
        %1798 = vrot.lane.b32.xlu0 %v1350, 64
        %v1799 = vpop.permute.xlu0 %1798
        %1800 = vrot.lane.b32.xlu0 %v1356, 64
        %v1801 = vpop.permute.xlu0 %1800
        %1802 = vrot.lane.b32.xlu0 %v1362, 64
        %v1803 = vpop.permute.xlu0 %1802
        %1804 = vrot.lane.b32.xlu0 %v1368, 64
        %v1805 = vpop.permute.xlu0 %1804
        %1822 = vmatprep.subr.mxu0 0.0
        %1823 = vmatpush1.msra.mxu0 %v1775
        %1824 = vmatprep.subr.mxu0 0.0
        %1825 = vmatpush1.msra.mxu0 %v1777
        %1826 = vmatprep.subr.mxu0 0.0
        %1827 = vmatpush1.msra.mxu0 %v1779
        %1828 = vmatprep.subr.mxu0 0.0
        %1829 = vmatpush1.msra.mxu0 %v1781
        %1830 = vmatprep.subr.mxu0 0.0
        %1831 = vmatpush1.msra.mxu0 %v1783
        %1832 = vmatprep.subr.mxu0 0.0
        %1833 = vmatpush1.msra.mxu0 %v1785
        %1834 = vmatprep.subr.mxu0 0.0
        %1835 = vmatpush1.msra.mxu0 %v1787
        %1836 = vmatprep.subr.mxu0 0.0
        %1837 = vmatpush1.msra.mxu0 %v1789
        %1838 = vmatprep.subr.mxu0 0.0
        %1839 = vmatpush1.msra.mxu0 %v1791
        %1840 = vmatprep.subr.mxu0 0.0
        %1841 = vmatpush1.msra.mxu0 %v1793
        %1842 = vmatprep.subr.mxu0 0.0
        %1843 = vmatpush1.msra.mxu0 %v1795
        %1844 = vmatprep.subr.mxu0 0.0
        %1845 = vmatpush1.msra.mxu0 %v1797
        %1846 = vmatprep.subr.mxu0 0.0
        %1847 = vmatpush1.msra.mxu0 %v1799
        %1848 = vmatprep.subr.mxu0 0.0
        %1849 = vmatpush1.msra.mxu0 %v1801
        %1850 = vmatprep.subr.mxu0 0.0
        %1851 = vmatpush1.msra.mxu0 %v1803
        %1852 = vmatprep.subr.mxu0 0.0
        %1853 = vmatpush1.msra.mxu0 %v1805
        %1854 = vmatprep.subr.mxu0 0.0
        %1855 = vmatpush1.msra.mxu0 0.0
        %1856 = vmatprep.subr.mxu0 0.0
        %1857 = vmatpush1.msra.mxu0 0.0
        %1858 = vmatprep.subr.mxu0 0.0
        %1859 = vmatpush1.msra.mxu0 0.0
        %1860 = vmatprep.subr.mxu0 0.0
        %1861 = vmatpush1.msra.mxu0 0.0
        %1862 = vmatprep.subr.mxu0 0.0
        %1863 = vmatpush1.msra.mxu0 0.0
        %1864 = vmatprep.subr.mxu0 0.0
        %1865 = vmatpush1.msra.mxu0 0.0
        %1866 = vmatprep.subr.mxu0 0.0
        %1867 = vmatpush1.msra.mxu0 0.0
        %1868 = vmatprep.subr.mxu0 0.0
        %1869 = vmatpush1.msra.mxu0 0.0
        %1870 = vmatprep.subr.mxu0 0.0
        %1871 = vmatpush1.msra.mxu0 0.0
        %1872 = vmatprep.subr.mxu0 0.0
        %1873 = vmatpush1.msra.mxu0 0.0
        %1874 = vmatprep.subr.mxu0 0.0
        %1875 = vmatpush1.msra.mxu0 0.0
        %1876 = vmatprep.subr.mxu0 0.0
        %1877 = vmatpush1.msra.mxu0 0.0
        %1878 = vmatprep.subr.mxu0 0.0
        %1879 = vmatpush1.msra.mxu0 0.0
        %1880 = vmatprep.subr.mxu0 0.0
        %1881 = vmatpush1.msra.mxu0 0.0
        %1882 = vmatprep.subr.mxu0 0.0
        %1883 = vmatpush1.msra.mxu0 0.0
        %1884 = vmatprep.subr.mxu0 0.0
        %1885 = vmatpush1.msra.mxu0 0.0
        %1886 = vmatprep.mubr.f32.mxu0 0.0
        %1887 = vmatmul.mubr.f32.gmra.mrb[0].mxu0 %v1758
        %v1888 = vpop.f32.mrb[0].mxu0
        %v1889 = vadd.f32 0.0, %v1888
        %v1890 = vpop.f32.mrb[0].mxu0
        %1891 = vmatprep.mubr.f32.mxu0 0.0
        %1892 = vmatmul.mubr.f32.gmra.mrb[0].mxu0 %v1759
        %v1893 = vpop.f32.mrb[0].mxu0
        %v1894 = vadd.f32 0.0, %v1893
        %v1895 = vpop.f32.mrb[0].mxu0
        %1896 = vmatprep.mubr.f32.mxu0 0.0
        %1897 = vmatmul.mubr.f32.gmra.mrb[0].mxu0 %v1760
        %v1898 = vpop.f32.mrb[0].mxu0
        %v1899 = vadd.f32 0.0, %v1898
        %v1900 = vpop.f32.mrb[0].mxu0
        %1901 = vmatprep.mubr.f32.mxu0 0.0
        %1902 = vmatmul.mubr.f32.gmra.mrb[0].mxu0 %v1761
        %v1903 = vpop.f32.mrb[0].mxu0
        %v1904 = vadd.f32 0.0, %v1903
        %v1905 = vpop.f32.mrb[0].mxu0
        %1906 = vmatprep.mubr.f32.mxu0 0.0
        %1907 = vmatmul.mubr.f32.gmra.mrb[0].mxu0 %v1762
        %v1908 = vpop.f32.mrb[0].mxu0
        %v1909 = vadd.f32 0.0, %v1908
        %v1910 = vpop.f32.mrb[0].mxu0
        %1911 = vmatprep.mubr.f32.mxu0 0.0
        %1912 = vmatmul.mubr.f32.gmra.mrb[0].mxu0 %v1763
        %v1913 = vpop.f32.mrb[0].mxu0
        %v1914 = vadd.f32 0.0, %v1913
        %v1915 = vpop.f32.mrb[0].mxu0
        %1916 = vmatprep.mubr.f32.mxu0 0.0
        %1917 = vmatmul.mubr.f32.gmra.mrb[0].mxu0 %v1764
        %v1918 = vpop.f32.mrb[0].mxu0
        %v1919 = vadd.f32 0.0, %v1918
        %v1920 = vpop.f32.mrb[0].mxu0
        %1921 = vmatprep.mubr.f32.mxu0 0.0
        %1922 = vmatmul.mubr.f32.gmra.mrb[0].mxu0 %v1765
        %v1923 = vpop.f32.mrb[0].mxu0
        %v1924 = vadd.f32 0.0, %v1923
        %v1925 = vpop.f32.mrb[0].mxu0
        %1926 = vmatprep.mubr.f32.mxu0 0.0
        %1927 = vmatmul.mubr.f32.gmra.mrb[0].mxu0 %v1766
        %v1928 = vpop.f32.mrb[0].mxu0
        %v1929 = vadd.f32 0.0, %v1928
        %v1930 = vpop.f32.mrb[0].mxu0
        %1931 = vmatprep.mubr.f32.mxu0 0.0
        %1932 = vmatmul.mubr.f32.gmra.mrb[0].mxu0 %v1767
        %v1933 = vpop.f32.mrb[0].mxu0
        %v1934 = vadd.f32 0.0, %v1933
        %v1935 = vpop.f32.mrb[0].mxu0
        %1936 = vmatprep.mubr.f32.mxu0 0.0
        %1937 = vmatmul.mubr.f32.gmra.mrb[0].mxu0 %v1768
        %v1938 = vpop.f32.mrb[0].mxu0
        %v1939 = vadd.f32 0.0, %v1938
        %v1940 = vpop.f32.mrb[0].mxu0
        %1941 = vmatprep.mubr.f32.mxu0 0.0
        %1942 = vmatmul.mubr.f32.gmra.mrb[0].mxu0 %v1769
        %v1943 = vpop.f32.mrb[0].mxu0
        %v1944 = vadd.f32 0.0, %v1943
        %v1945 = vpop.f32.mrb[0].mxu0
        %1946 = vmatprep.mubr.f32.mxu0 0.0
        %1947 = vmatmul.mubr.f32.gmra.mrb[0].mxu0 %v1770
        %v1948 = vpop.f32.mrb[0].mxu0
        %v1949 = vadd.f32 0.0, %v1948
        %v1950 = vpop.f32.mrb[0].mxu0
        %1951 = vmatprep.mubr.f32.mxu0 0.0
        %1952 = vmatmul.mubr.f32.gmra.mrb[0].mxu0 %v1771
        %v1953 = vpop.f32.mrb[0].mxu0
        %v1954 = vadd.f32 0.0, %v1953
        %v1955 = vpop.f32.mrb[0].mxu0
        %1956 = vmatprep.mubr.f32.mxu0 0.0
        %1957 = vmatmul.mubr.f32.gmra.mrb[0].mxu0 %v1772
        %v1958 = vpop.f32.mrb[0].mxu0
        %v1959 = vadd.f32 0.0, %v1958
        %v1960 = vpop.f32.mrb[0].mxu0
        %1961 = vmatprep.mubr.f32.mxu0 0.0
        %1962 = vmatmul.mubr.f32.gmra.mrb[0].mxu0 %v1773
        %v1963 = vpop.f32.mrb[0].mxu0
        %v1964 = vadd.f32 0.0, %v1963
        %v1965 = vpop.f32.mrb[0].mxu0
        %1966 = vdwg.mxu0
        %v1968 = vsel %vm1372, %v1889, 0
        %v1971 = vsel %vm1372, %v1894, 0
        %v1974 = vsel %vm1372, %v1899, 0
        %v1977 = vsel %vm1372, %v1904, 0
        %v1980 = vsel %vm1372, %v1909, 0
        %v1983 = vsel %vm1372, %v1914, 0
        %v1986 = vsel %vm1372, %v1919, 0
        %v1989 = vsel %vm1372, %v1924, 0
        %v1992 = vsel %vm1372, %v1929, 0
        %v1995 = vsel %vm1372, %v1934, 0
        %v1998 = vsel %vm1372, %v1939, 0
        %v2001 = vsel %vm1372, %v1944, 0
        %v2004 = vsel %vm1372, %v1949, 0
        %v2007 = vsel %vm1372, %v1954, 0
        %v2010 = vsel %vm1372, %v1959, 0
        %v2013 = vsel %vm1372, %v1964, 0
        %2015 = vmatprep.subr.mxu0 0.0
        %2016 = vmatpush1.msra.mxu0 %v837
        %2017 = vmatprep.subr.mxu0 0.0
        %2018 = vmatpush1.msra.mxu0 0.0
        %2019 = vmatprep.subr.mxu0 0.0
        %2020 = vmatpush1.msra.mxu0 0.0
        %2021 = vmatprep.subr.mxu0 0.0
        %2022 = vmatpush1.msra.mxu0 0.0
        %2023 = vmatprep.subr.mxu0 0.0
        %2024 = vmatpush1.msra.mxu0 0.0
        %2025 = vmatprep.subr.mxu0 0.0
        %2026 = vmatpush1.msra.mxu0 0.0
        %2027 = vmatprep.subr.mxu0 0.0
        %2028 = vmatpush1.msra.mxu0 0.0
        %2029 = vmatprep.subr.mxu0 0.0
        %2030 = vmatpush1.msra.mxu0 0.0
        %2031 = vmatprep.subr.mxu0 0.0
        %2032 = vmatpush1.msra.mxu0 0.0
        %2033 = vmatprep.subr.mxu0 0.0
        %2034 = vmatpush1.msra.mxu0 0.0
        %2035 = vmatprep.subr.mxu0 0.0
        %2036 = vmatpush1.msra.mxu0 0.0
        %2037 = vmatprep.subr.mxu0 0.0
        %2038 = vmatpush1.msra.mxu0 0.0
        %2039 = vmatprep.subr.mxu0 0.0
        %2040 = vmatpush1.msra.mxu0 0.0
        %2041 = vmatprep.subr.mxu0 0.0
        %2042 = vmatpush1.msra.mxu0 0.0
        %2043 = vmatprep.subr.mxu0 0.0
        %2044 = vmatpush1.msra.mxu0 0.0
        %2045 = vmatprep.subr.mxu0 0.0
        %2046 = vmatpush1.msra.mxu0 0.0
        %2047 = vmatprep.subr.mxu0 0.0
        %2048 = vmatpush1.msra.mxu0 0.0
        %2049 = vmatprep.subr.mxu0 0.0
        %2050 = vmatpush1.msra.mxu0 0.0
        %2051 = vmatprep.subr.mxu0 0.0
        %2052 = vmatpush1.msra.mxu0 0.0
        %2053 = vmatprep.subr.mxu0 0.0
        %2054 = vmatpush1.msra.mxu0 0.0
        %2055 = vmatprep.subr.mxu0 0.0
        %2056 = vmatpush1.msra.mxu0 0.0
        %2057 = vmatprep.subr.mxu0 0.0
        %2058 = vmatpush1.msra.mxu0 0.0
        %2059 = vmatprep.subr.mxu0 0.0
        %2060 = vmatpush1.msra.mxu0 0.0
        %2061 = vmatprep.subr.mxu0 0.0
        %2062 = vmatpush1.msra.mxu0 0.0
        %2063 = vmatprep.subr.mxu0 0.0
        %2064 = vmatpush1.msra.mxu0 0.0
        %2065 = vmatprep.subr.mxu0 0.0
        %2066 = vmatpush1.msra.mxu0 0.0
        %2067 = vmatprep.subr.mxu0 0.0
        %2068 = vmatpush1.msra.mxu0 0.0
        %2069 = vmatprep.subr.mxu0 0.0
        %2070 = vmatpush1.msra.mxu0 0.0
        %2071 = vmatprep.subr.mxu0 0.0
        %2072 = vmatpush1.msra.mxu0 0.0
        %2073 = vmatprep.subr.mxu0 0.0
        %2074 = vmatpush1.msra.mxu0 0.0
        %2075 = vmatprep.subr.mxu0 0.0
        %2076 = vmatpush1.msra.mxu0 0.0
        %2077 = vmatprep.subr.mxu0 0.0
        %2078 = vmatpush1.msra.mxu0 0.0
        %2079 = vmatprep.mubr.f32.mxu0 0.0
        %2080 = vmatmul.mubr.f32.gmra.mrb[0].mxu0 %v1968
        %v2081 = vpop.f32.mrb[0].mxu0
        %v2082 = vadd.f32 0.0, %v2081
        %v2083 = vpop.f32.mrb[0].mxu0
        %2084 = vmatprep.mubr.f32.mxu0 0.0
        %2085 = vmatmul.mubr.f32.gmra.mrb[0].mxu0 %v1971
        %v2086 = vpop.f32.mrb[0].mxu0
        %v2087 = vadd.f32 0.0, %v2086
        %v2088 = vpop.f32.mrb[0].mxu0
        %2089 = vmatprep.mubr.f32.mxu0 0.0
        %2090 = vmatmul.mubr.f32.gmra.mrb[0].mxu0 %v1974
        %v2091 = vpop.f32.mrb[0].mxu0
        %v2092 = vadd.f32 0.0, %v2091
        %v2093 = vpop.f32.mrb[0].mxu0
        %2094 = vmatprep.mubr.f32.mxu0 0.0
        %2095 = vmatmul.mubr.f32.gmra.mrb[0].mxu0 %v1977
        %v2096 = vpop.f32.mrb[0].mxu0
        %v2097 = vadd.f32 0.0, %v2096
        %v2098 = vpop.f32.mrb[0].mxu0
        %2099 = vmatprep.mubr.f32.mxu0 0.0
        %2100 = vmatmul.mubr.f32.gmra.mrb[0].mxu0 %v1980
        %v2101 = vpop.f32.mrb[0].mxu0
        %v2102 = vadd.f32 0.0, %v2101
        %v2103 = vpop.f32.mrb[0].mxu0
        %2104 = vmatprep.mubr.f32.mxu0 0.0
        %2105 = vmatmul.mubr.f32.gmra.mrb[0].mxu0 %v1983
        %v2106 = vpop.f32.mrb[0].mxu0
        %v2107 = vadd.f32 0.0, %v2106
        %v2108 = vpop.f32.mrb[0].mxu0
        %2109 = vmatprep.mubr.f32.mxu0 0.0
        %2110 = vmatmul.mubr.f32.gmra.mrb[0].mxu0 %v1986
        %v2111 = vpop.f32.mrb[0].mxu0
        %v2112 = vadd.f32 0.0, %v2111
        %v2113 = vpop.f32.mrb[0].mxu0
        %2114 = vmatprep.mubr.f32.mxu0 0.0
        %2115 = vmatmul.mubr.f32.gmra.mrb[0].mxu0 %v1989
        %v2116 = vpop.f32.mrb[0].mxu0
        %v2117 = vadd.f32 0.0, %v2116
        %v2118 = vpop.f32.mrb[0].mxu0
        %2119 = vmatprep.mubr.f32.mxu0 0.0
        %2120 = vmatmul.mubr.f32.gmra.mrb[0].mxu0 %v1992
        %v2121 = vpop.f32.mrb[0].mxu0
        %v2122 = vadd.f32 0.0, %v2121
        %v2123 = vpop.f32.mrb[0].mxu0
        %2124 = vmatprep.mubr.f32.mxu0 0.0
        %2125 = vmatmul.mubr.f32.gmra.mrb[0].mxu0 %v1995
        %v2126 = vpop.f32.mrb[0].mxu0
        %v2127 = vadd.f32 0.0, %v2126
        %v2128 = vpop.f32.mrb[0].mxu0
        %2129 = vmatprep.mubr.f32.mxu0 0.0
        %2130 = vmatmul.mubr.f32.gmra.mrb[0].mxu0 %v1998
        %v2131 = vpop.f32.mrb[0].mxu0
        %v2132 = vadd.f32 0.0, %v2131
        %v2133 = vpop.f32.mrb[0].mxu0
        %2134 = vmatprep.mubr.f32.mxu0 0.0
        %2135 = vmatmul.mubr.f32.gmra.mrb[0].mxu0 %v2001
        %v2136 = vpop.f32.mrb[0].mxu0
        %v2137 = vadd.f32 0.0, %v2136
        %v2138 = vpop.f32.mrb[0].mxu0
        %2139 = vmatprep.mubr.f32.mxu0 0.0
        %2140 = vmatmul.mubr.f32.gmra.mrb[0].mxu0 %v2004
        %v2141 = vpop.f32.mrb[0].mxu0
        %v2142 = vadd.f32 0.0, %v2141
        %v2143 = vpop.f32.mrb[0].mxu0
        %2144 = vmatprep.mubr.f32.mxu0 0.0
        %2145 = vmatmul.mubr.f32.gmra.mrb[0].mxu0 %v2007
        %v2146 = vpop.f32.mrb[0].mxu0
        %v2147 = vadd.f32 0.0, %v2146
        %v2148 = vpop.f32.mrb[0].mxu0
        %2149 = vmatprep.mubr.f32.mxu0 0.0
        %2150 = vmatmul.mubr.f32.gmra.mrb[0].mxu0 %v2010
        %v2151 = vpop.f32.mrb[0].mxu0
        %v2152 = vadd.f32 0.0, %v2151
        %v2153 = vpop.f32.mrb[0].mxu0
        %2154 = vmatprep.mubr.f32.mxu0 0.0
        %2155 = vmatmul.mubr.f32.gmra.mrb[0].mxu0 %v2013
        %v2156 = vpop.f32.mrb[0].mxu0
        %v2157 = vadd.f32 0.0, %v2156
        %v2158 = vpop.f32.mrb[0].mxu0
        %2159 = vdwg.mxu0
        %v2160 = vadd.f32 %v797, %v2082
        %v2161 = vadd.f32 %v798, %v2087
        %v2162 = vadd.f32 %v799, %v2092
        %v2163 = vadd.f32 %v800, %v2097
        %v2164 = vadd.f32 %v801, %v2102
        %v2165 = vadd.f32 %v802, %v2107
        %v2166 = vadd.f32 %v803, %v2112
        %v2167 = vadd.f32 %v804, %v2117
        %v2168 = vadd.f32 %v805, %v2122
        %v2169 = vadd.f32 %v806, %v2127
        %v2170 = vadd.f32 %v807, %v2132
        %v2171 = vadd.f32 %v808, %v2137
        %v2172 = vadd.f32 %v809, %v2142
        %v2173 = vadd.f32 %v810, %v2147
        %v2174 = vadd.f32 %v811, %v2152
        %v2175 = vadd.f32 %v812, %v2157
        %2176 = vrot.lane.b32.xlu0 %v1280, 120
        %v2177 = vpop.permute.xlu0 %2176
        %2178 = vrot.lane.b32.xlu0 %v1286, 120
        %v2179 = vpop.permute.xlu0 %2178
        %2180 = vrot.lane.b32.xlu0 %v1292, 120
        %v2181 = vpop.permute.xlu0 %2180
        %2182 = vrot.lane.b32.xlu0 %v1298, 120
        %v2183 = vpop.permute.xlu0 %2182
        %2184 = vrot.lane.b32.xlu0 %v1304, 120
        %v2185 = vpop.permute.xlu0 %2184
        %2186 = vrot.lane.b32.xlu0 %v1310, 120
        %v2187 = vpop.permute.xlu0 %2186
        %2188 = vrot.lane.b32.xlu0 %v1316, 120
        %v2189 = vpop.permute.xlu0 %2188
        %2190 = vrot.lane.b32.xlu0 %v1322, 120
        %v2191 = vpop.permute.xlu0 %2190
        %2192 = vrot.lane.b32.xlu0 %v1328, 120
        %v2193 = vpop.permute.xlu0 %2192
        %2194 = vrot.lane.b32.xlu0 %v1334, 120
        %v2195 = vpop.permute.xlu0 %2194
        %2196 = vrot.lane.b32.xlu0 %v1340, 120
        %v2197 = vpop.permute.xlu0 %2196
        %2198 = vrot.lane.b32.xlu0 %v1346, 120
        %v2199 = vpop.permute.xlu0 %2198
        %2200 = vrot.lane.b32.xlu0 %v1352, 120
        %v2201 = vpop.permute.xlu0 %2200
        %2202 = vrot.lane.b32.xlu0 %v1358, 120
        %v2203 = vpop.permute.xlu0 %2202
        %2204 = vrot.lane.b32.xlu0 %v1364, 120
        %v2205 = vpop.permute.xlu0 %2204
        %2206 = vrot.lane.b32.xlu0 %v1370, 120
        %v2207 = vpop.permute.xlu0 %2206
        %2208 = vrot.lane.b32.xlu0 %v1278, 120
        %v2209 = vpop.permute.xlu0 %2208
        %2210 = vrot.lane.b32.xlu0 %v1284, 120
        %v2211 = vpop.permute.xlu0 %2210
        %2212 = vrot.lane.b32.xlu0 %v1290, 120
        %v2213 = vpop.permute.xlu0 %2212
        %2214 = vrot.lane.b32.xlu0 %v1296, 120
        %v2215 = vpop.permute.xlu0 %2214
        %2216 = vrot.lane.b32.xlu0 %v1302, 120
        %v2217 = vpop.permute.xlu0 %2216
        %2218 = vrot.lane.b32.xlu0 %v1308, 120
        %v2219 = vpop.permute.xlu0 %2218
        %2220 = vrot.lane.b32.xlu0 %v1314, 120
        %v2221 = vpop.permute.xlu0 %2220
        %2222 = vrot.lane.b32.xlu0 %v1320, 120
        %v2223 = vpop.permute.xlu0 %2222
        %2224 = vrot.lane.b32.xlu0 %v1326, 120
        %v2225 = vpop.permute.xlu0 %2224
        %2226 = vrot.lane.b32.xlu0 %v1332, 120
        %v2227 = vpop.permute.xlu0 %2226
        %2228 = vrot.lane.b32.xlu0 %v1338, 120
        %v2229 = vpop.permute.xlu0 %2228
        %2230 = vrot.lane.b32.xlu0 %v1344, 120
        %v2231 = vpop.permute.xlu0 %2230
        %2232 = vrot.lane.b32.xlu0 %v1350, 120
        %v2233 = vpop.permute.xlu0 %2232
        %2234 = vrot.lane.b32.xlu0 %v1356, 120
        %v2235 = vpop.permute.xlu0 %2234
        %2236 = vrot.lane.b32.xlu0 %v1362, 120
        %v2237 = vpop.permute.xlu0 %2236
        %2238 = vrot.lane.b32.xlu0 %v1368, 120
        %v2239 = vpop.permute.xlu0 %2238
        %v2240 = vsel %vm1372, %v2177, 0
        %v2242 = vsel %vm1372, %v2179, 0
        %v2244 = vsel %vm1372, %v2181, 0
        %v2246 = vsel %vm1372, %v2183, 0
        %v2248 = vsel %vm1372, %v2185, 0
        %v2250 = vsel %vm1372, %v2187, 0
        %v2252 = vsel %vm1372, %v2189, 0
        %v2254 = vsel %vm1372, %v2191, 0
        %v2256 = vsel %vm1372, %v2193, 0
        %v2258 = vsel %vm1372, %v2195, 0
        %v2260 = vsel %vm1372, %v2197, 0
        %v2262 = vsel %vm1372, %v2199, 0
        %v2264 = vsel %vm1372, %v2201, 0
        %v2266 = vsel %vm1372, %v2203, 0
        %v2268 = vsel %vm1372, %v2205, 0
        %v2270 = vsel %vm1372, %v2207, 0
        %v2272 = vsel %vm1372, %v2209, 0
        %v2274 = vsel %vm1372, %v2211, 0
        %v2276 = vsel %vm1372, %v2213, 0
        %v2278 = vsel %vm1372, %v2215, 0
        %v2280 = vsel %vm1372, %v2217, 0
        %v2282 = vsel %vm1372, %v2219, 0
        %v2284 = vsel %vm1372, %v2221, 0
        %v2286 = vsel %vm1372, %v2223, 0
        %v2288 = vsel %vm1372, %v2225, 0
        %v2290 = vsel %vm1372, %v2227, 0
        %v2292 = vsel %vm1372, %v2229, 0
        %v2294 = vsel %vm1372, %v2231, 0
        %v2296 = vsel %vm1372, %v2233, 0
        %v2298 = vsel %vm1372, %v2235, 0
        %v2300 = vsel %vm1372, %v2237, 0
        %v2302 = vsel %vm1372, %v2239, 0
        %2304 = vmatprep.subr.mxu0 0.0
        %2305 = vmatpush1.xpose.msra.mxu0 %v2272
        %2306 = vmatprep.subr.mxu0 0.0
        %2307 = vmatpush1.xpose.msra.mxu0 %v2274
        %2308 = vmatprep.subr.mxu0 0.0
        %2309 = vmatpush1.xpose.msra.mxu0 %v2276
        %2310 = vmatprep.subr.mxu0 0.0
        %2311 = vmatpush1.xpose.msra.mxu0 %v2278
        %2312 = vmatprep.subr.mxu0 0.0
        %2313 = vmatpush1.xpose.msra.mxu0 %v2280
        %2314 = vmatprep.subr.mxu0 0.0
        %2315 = vmatpush1.xpose.msra.mxu0 %v2282
        %2316 = vmatprep.subr.mxu0 0.0
        %2317 = vmatpush1.xpose.msra.mxu0 %v2284
        %2318 = vmatprep.subr.mxu0 0.0
        %2319 = vmatpush1.xpose.msra.mxu0 %v2286
        %2320 = vmatprep.subr.mxu0 0.0
        %2321 = vmatpush1.xpose.msra.mxu0 %v2288
        %2322 = vmatprep.subr.mxu0 0.0
        %2323 = vmatpush1.xpose.msra.mxu0 %v2290
        %2324 = vmatprep.subr.mxu0 0.0
        %2325 = vmatpush1.xpose.msra.mxu0 %v2292
        %2326 = vmatprep.subr.mxu0 0.0
        %2327 = vmatpush1.xpose.msra.mxu0 %v2294
        %2328 = vmatprep.subr.mxu0 0.0
        %2329 = vmatpush1.xpose.msra.mxu0 %v2296
        %2330 = vmatprep.subr.mxu0 0.0
        %2331 = vmatpush1.xpose.msra.mxu0 %v2298
        %2332 = vmatprep.subr.mxu0 0.0
        %2333 = vmatpush1.xpose.msra.mxu0 %v2300
        %2334 = vmatprep.subr.mxu0 0.0
        %2335 = vmatpush1.xpose.msra.mxu0 %v2302
        %2336 = vmatprep.subr.mxu0 0.0
        %2337 = vmatpush1.xpose.msra.mxu0 0.0
        %2338 = vmatprep.subr.mxu0 0.0
        %2339 = vmatpush1.xpose.msra.mxu0 0.0
        %2340 = vmatprep.subr.mxu0 0.0
        %2341 = vmatpush1.xpose.msra.mxu0 0.0
        %2342 = vmatprep.subr.mxu0 0.0
        %2343 = vmatpush1.xpose.msra.mxu0 0.0
        %2344 = vmatprep.subr.mxu0 0.0
        %2345 = vmatpush1.xpose.msra.mxu0 0.0
        %2346 = vmatprep.subr.mxu0 0.0
        %2347 = vmatpush1.xpose.msra.mxu0 0.0
        %2348 = vmatprep.subr.mxu0 0.0
        %2349 = vmatpush1.xpose.msra.mxu0 0.0
        %2350 = vmatprep.subr.mxu0 0.0
        %2351 = vmatpush1.xpose.msra.mxu0 0.0
        %2352 = vmatprep.subr.mxu0 0.0
        %2353 = vmatpush1.xpose.msra.mxu0 0.0
        %2354 = vmatprep.subr.mxu0 0.0
        %2355 = vmatpush1.xpose.msra.mxu0 0.0
        %2356 = vmatprep.subr.mxu0 0.0
        %2357 = vmatpush1.xpose.msra.mxu0 0.0
        %2358 = vmatprep.subr.mxu0 0.0
        %2359 = vmatpush1.xpose.msra.mxu0 0.0
        %2360 = vmatprep.subr.mxu0 0.0
        %2361 = vmatpush1.xpose.msra.mxu0 0.0
        %2362 = vmatprep.subr.mxu0 0.0
        %2363 = vmatpush1.xpose.msra.mxu0 0.0
        %2364 = vmatprep.subr.mxu0 0.0
        %2365 = vmatpush1.xpose.msra.mxu0 0.0
        %2366 = vmatprep.subr.mxu0 0.0
        %2367 = vmatpush1.xpose.msra.mxu0 0.0
        %2368 = vmatprep.mubr.f32.mxu0 0.0
        %2369 = vmatmul.mubr.f32.gmra.mrb[0].mxu0 %v2240
        %v2370 = vpop.f32.mrb[0].mxu0
        %v2371 = vadd.f32 0.0, %v2370
        %v2372 = vpop.f32.mrb[0].mxu0
        %2373 = vmatprep.mubr.f32.mxu0 0.0
        %2374 = vmatmul.mubr.f32.gmra.mrb[0].mxu0 %v2242
        %v2375 = vpop.f32.mrb[0].mxu0
        %v2376 = vadd.f32 0.0, %v2375
        %v2377 = vpop.f32.mrb[0].mxu0
        %2378 = vmatprep.mubr.f32.mxu0 0.0
        %2379 = vmatmul.mubr.f32.gmra.mrb[0].mxu0 %v2244
        %v2380 = vpop.f32.mrb[0].mxu0
        %v2381 = vadd.f32 0.0, %v2380
        %v2382 = vpop.f32.mrb[0].mxu0
        %2383 = vmatprep.mubr.f32.mxu0 0.0
        %2384 = vmatmul.mubr.f32.gmra.mrb[0].mxu0 %v2246
        %v2385 = vpop.f32.mrb[0].mxu0
        %v2386 = vadd.f32 0.0, %v2385
        %v2387 = vpop.f32.mrb[0].mxu0
        %2388 = vmatprep.mubr.f32.mxu0 0.0
        %2389 = vmatmul.mubr.f32.gmra.mrb[0].mxu0 %v2248
        %v2390 = vpop.f32.mrb[0].mxu0
        %v2391 = vadd.f32 0.0, %v2390
        %v2392 = vpop.f32.mrb[0].mxu0
        %2393 = vmatprep.mubr.f32.mxu0 0.0
        %2394 = vmatmul.mubr.f32.gmra.mrb[0].mxu0 %v2250
        %v2395 = vpop.f32.mrb[0].mxu0
        %v2396 = vadd.f32 0.0, %v2395
        %v2397 = vpop.f32.mrb[0].mxu0
        %2398 = vmatprep.mubr.f32.mxu0 0.0
        %2399 = vmatmul.mubr.f32.gmra.mrb[0].mxu0 %v2252
        %v2400 = vpop.f32.mrb[0].mxu0
        %v2401 = vadd.f32 0.0, %v2400
        %v2402 = vpop.f32.mrb[0].mxu0
        %2403 = vmatprep.mubr.f32.mxu0 0.0
        %2404 = vmatmul.mubr.f32.gmra.mrb[0].mxu0 %v2254
        %v2405 = vpop.f32.mrb[0].mxu0
        %v2406 = vadd.f32 0.0, %v2405
        %v2407 = vpop.f32.mrb[0].mxu0
        %2408 = vmatprep.mubr.f32.mxu0 0.0
        %2409 = vmatmul.mubr.f32.gmra.mrb[0].mxu0 %v2256
        %v2410 = vpop.f32.mrb[0].mxu0
        %v2411 = vadd.f32 0.0, %v2410
        %v2412 = vpop.f32.mrb[0].mxu0
        %2413 = vmatprep.mubr.f32.mxu0 0.0
        %2414 = vmatmul.mubr.f32.gmra.mrb[0].mxu0 %v2258
        %v2415 = vpop.f32.mrb[0].mxu0
        %v2416 = vadd.f32 0.0, %v2415
        %v2417 = vpop.f32.mrb[0].mxu0
        %2418 = vmatprep.mubr.f32.mxu0 0.0
        %2419 = vmatmul.mubr.f32.gmra.mrb[0].mxu0 %v2260
        %v2420 = vpop.f32.mrb[0].mxu0
        %v2421 = vadd.f32 0.0, %v2420
        %v2422 = vpop.f32.mrb[0].mxu0
        %2423 = vmatprep.mubr.f32.mxu0 0.0
        %2424 = vmatmul.mubr.f32.gmra.mrb[0].mxu0 %v2262
        %v2425 = vpop.f32.mrb[0].mxu0
        %v2426 = vadd.f32 0.0, %v2425
        %v2427 = vpop.f32.mrb[0].mxu0
        %2428 = vmatprep.mubr.f32.mxu0 0.0
        %2429 = vmatmul.mubr.f32.gmra.mrb[0].mxu0 %v2264
        %v2430 = vpop.f32.mrb[0].mxu0
        %v2431 = vadd.f32 0.0, %v2430
        %v2432 = vpop.f32.mrb[0].mxu0
        %2433 = vmatprep.mubr.f32.mxu0 0.0
        %2434 = vmatmul.mubr.f32.gmra.mrb[0].mxu0 %v2266
        %v2435 = vpop.f32.mrb[0].mxu0
        %v2436 = vadd.f32 0.0, %v2435
        %v2437 = vpop.f32.mrb[0].mxu0
        %2438 = vmatprep.mubr.f32.mxu0 0.0
        %2439 = vmatmul.mubr.f32.gmra.mrb[0].mxu0 %v2268
        %v2440 = vpop.f32.mrb[0].mxu0
        %v2441 = vadd.f32 0.0, %v2440
        %v2442 = vpop.f32.mrb[0].mxu0
        %2443 = vmatprep.mubr.f32.mxu0 0.0
        %2444 = vmatmul.mubr.f32.gmra.mrb[0].mxu0 %v2270
        %v2445 = vpop.f32.mrb[0].mxu0
        %v2446 = vadd.f32 0.0, %v2445
        %v2447 = vpop.f32.mrb[0].mxu0
        %2448 = vdwg.mxu0
        %v2449 = vmul.f32 %v2371, 0.35355338
        %v2450 = vmul.f32 %v2376, 0.35355338
        %v2451 = vmul.f32 %v2381, 0.35355338
        %v2452 = vmul.f32 %v2386, 0.35355338
        %v2453 = vmul.f32 %v2391, 0.35355338
        %v2454 = vmul.f32 %v2396, 0.35355338
        %v2455 = vmul.f32 %v2401, 0.35355338
        %v2456 = vmul.f32 %v2406, 0.35355338
        %v2457 = vmul.f32 %v2411, 0.35355338
        %v2458 = vmul.f32 %v2416, 0.35355338
        %v2459 = vmul.f32 %v2421, 0.35355338
        %v2460 = vmul.f32 %v2426, 0.35355338
        %v2461 = vmul.f32 %v2431, 0.35355338
        %v2462 = vmul.f32 %v2436, 0.35355338
        %v2463 = vmul.f32 %v2441, 0.35355338
        %v2464 = vmul.f32 %v2446, 0.35355338
        %2465 = vmax.xlane.f32.xlu0 %v2449
        %v2466 = vpop.xlane.xlu0 %2465
        %2467 = vmax.xlane.f32.xlu0 %v2450
        %v2468 = vpop.xlane.xlu0 %2467
        %2469 = vmax.xlane.f32.xlu0 %v2451
        %v2470 = vpop.xlane.xlu0 %2469
        %2471 = vmax.xlane.f32.xlu0 %v2452
        %v2472 = vpop.xlane.xlu0 %2471
        %2473 = vmax.xlane.f32.xlu0 %v2453
        %v2474 = vpop.xlane.xlu0 %2473
        %2475 = vmax.xlane.f32.xlu0 %v2454
        %v2476 = vpop.xlane.xlu0 %2475
        %2477 = vmax.xlane.f32.xlu0 %v2455
        %v2478 = vpop.xlane.xlu0 %2477
        %2479 = vmax.xlane.f32.xlu0 %v2456
        %v2480 = vpop.xlane.xlu0 %2479
        %2481 = vmax.xlane.f32.xlu0 %v2457
        %v2482 = vpop.xlane.xlu0 %2481
        %2483 = vmax.xlane.f32.xlu0 %v2458
        %v2484 = vpop.xlane.xlu0 %2483
        %2485 = vmax.xlane.f32.xlu0 %v2459
        %v2486 = vpop.xlane.xlu0 %2485
        %2487 = vmax.xlane.f32.xlu0 %v2460
        %v2488 = vpop.xlane.xlu0 %2487
        %2489 = vmax.xlane.f32.xlu0 %v2461
        %v2490 = vpop.xlane.xlu0 %2489
        %2491 = vmax.xlane.f32.xlu0 %v2462
        %v2492 = vpop.xlane.xlu0 %2491
        %2493 = vmax.xlane.f32.xlu0 %v2463
        %v2494 = vpop.xlane.xlu0 %2493
        %2495 = vmax.xlane.f32.xlu0 %v2464
        %v2496 = vpop.xlane.xlu0 %2495
        %v2497 = vsub.f32 %v2449, %v2466
        %v2498 = vsub.f32 %v2450, %v2468
        %v2499 = vsub.f32 %v2451, %v2470
        %v2500 = vsub.f32 %v2452, %v2472
        %v2501 = vsub.f32 %v2453, %v2474
        %v2502 = vsub.f32 %v2454, %v2476
        %v2503 = vsub.f32 %v2455, %v2478
        %v2504 = vsub.f32 %v2456, %v2480
        %v2505 = vsub.f32 %v2457, %v2482
        %v2506 = vsub.f32 %v2458, %v2484
        %v2507 = vsub.f32 %v2459, %v2486
        %v2508 = vsub.f32 %v2460, %v2488
        %v2509 = vsub.f32 %v2461, %v2490
        %v2510 = vsub.f32 %v2462, %v2492
        %v2511 = vsub.f32 %v2463, %v2494
        %v2512 = vsub.f32 %v2464, %v2496
        %v2513 = vmul.f32 %v2497, 1.442695
        %v2514 = vpow.pop %v2513
        %v2515 = vmul.f32 %v2498, 1.442695
        %v2516 = vpow.pop %v2515
        %v2517 = vmul.f32 %v2499, 1.442695
        %v2518 = vpow.pop %v2517
        %v2519 = vmul.f32 %v2500, 1.442695
        %v2520 = vpow.pop %v2519
        %v2521 = vmul.f32 %v2501, 1.442695
        %v2522 = vpow.pop %v2521
        %v2523 = vmul.f32 %v2502, 1.442695
        %v2524 = vpow.pop %v2523
        %v2525 = vmul.f32 %v2503, 1.442695
        %v2526 = vpow.pop %v2525
        %v2527 = vmul.f32 %v2504, 1.442695
        %v2528 = vpow.pop %v2527
        %v2529 = vmul.f32 %v2505, 1.442695
        %v2530 = vpow.pop %v2529
        %v2531 = vmul.f32 %v2506, 1.442695
        %v2532 = vpow.pop %v2531
        %v2533 = vmul.f32 %v2507, 1.442695
        %v2534 = vpow.pop %v2533
        %v2535 = vmul.f32 %v2508, 1.442695
        %v2536 = vpow.pop %v2535
        %v2537 = vmul.f32 %v2509, 1.442695
        %v2538 = vpow.pop %v2537
        %v2539 = vmul.f32 %v2510, 1.442695
        %v2540 = vpow.pop %v2539
        %v2541 = vmul.f32 %v2511, 1.442695
        %v2542 = vpow.pop %v2541
        %v2543 = vmul.f32 %v2512, 1.442695
        %v2544 = vpow.pop %v2543
        %2545 = vadd.xlane.f32.xlu0 %v2514
        %v2546 = vpop.xlane.xlu0 %2545
        %2547 = vadd.xlane.f32.xlu0 %v2516
        %v2548 = vpop.xlane.xlu0 %2547
        %2549 = vadd.xlane.f32.xlu0 %v2518
        %v2550 = vpop.xlane.xlu0 %2549
        %2551 = vadd.xlane.f32.xlu0 %v2520
        %v2552 = vpop.xlane.xlu0 %2551
        %2553 = vadd.xlane.f32.xlu0 %v2522
        %v2554 = vpop.xlane.xlu0 %2553
        %2555 = vadd.xlane.f32.xlu0 %v2524
        %v2556 = vpop.xlane.xlu0 %2555
        %2557 = vadd.xlane.f32.xlu0 %v2526
        %v2558 = vpop.xlane.xlu0 %2557
        %2559 = vadd.xlane.f32.xlu0 %v2528
        %v2560 = vpop.xlane.xlu0 %2559
        %2561 = vadd.xlane.f32.xlu0 %v2530
        %v2562 = vpop.xlane.xlu0 %2561
        %2563 = vadd.xlane.f32.xlu0 %v2532
        %v2564 = vpop.xlane.xlu0 %2563
        %2565 = vadd.xlane.f32.xlu0 %v2534
        %v2566 = vpop.xlane.xlu0 %2565
        %2567 = vadd.xlane.f32.xlu0 %v2536
        %v2568 = vpop.xlane.xlu0 %2567
        %2569 = vadd.xlane.f32.xlu0 %v2538
        %v2570 = vpop.xlane.xlu0 %2569
        %2571 = vadd.xlane.f32.xlu0 %v2540
        %v2572 = vpop.xlane.xlu0 %2571
        %2573 = vadd.xlane.f32.xlu0 %v2542
        %v2574 = vpop.xlane.xlu0 %2573
        %2575 = vadd.xlane.f32.xlu0 %v2544
        %v2576 = vpop.xlane.xlu0 %2575
        %v2577 = vrcp.pop %v2546
        %v2578 = vrcp.pop %v2548
        %v2579 = vrcp.pop %v2550
        %v2580 = vrcp.pop %v2552
        %v2581 = vrcp.pop %v2554
        %v2582 = vrcp.pop %v2556
        %v2583 = vrcp.pop %v2558
        %v2584 = vrcp.pop %v2560
        %v2585 = vrcp.pop %v2562
        %v2586 = vrcp.pop %v2564
        %v2587 = vrcp.pop %v2566
        %v2588 = vrcp.pop %v2568
        %v2589 = vrcp.pop %v2570
        %v2590 = vrcp.pop %v2572
        %v2591 = vrcp.pop %v2574
        %v2592 = vrcp.pop %v2576
        %v2593 = vmul.f32 %v2514, %v2577
        %v2594 = vmul.f32 %v2516, %v2578
        %v2595 = vmul.f32 %v2518, %v2579
        %v2596 = vmul.f32 %v2520, %v2580
        %v2597 = vmul.f32 %v2522, %v2581
        %v2598 = vmul.f32 %v2524, %v2582
        %v2599 = vmul.f32 %v2526, %v2583
        %v2600 = vmul.f32 %v2528, %v2584
        %v2601 = vmul.f32 %v2530, %v2585
        %v2602 = vmul.f32 %v2532, %v2586
        %v2603 = vmul.f32 %v2534, %v2587
        %v2604 = vmul.f32 %v2536, %v2588
        %v2605 = vmul.f32 %v2538, %v2589
        %v2606 = vmul.f32 %v2540, %v2590
        %v2607 = vmul.f32 %v2542, %v2591
        %v2608 = vmul.f32 %v2544, %v2592
        %2609 = vrot.lane.b32.xlu0 %v1278, 56
        %v2610 = vpop.permute.xlu0 %2609
        %2611 = vrot.lane.b32.xlu0 %v1284, 56
        %v2612 = vpop.permute.xlu0 %2611
        %2613 = vrot.lane.b32.xlu0 %v1290, 56
        %v2614 = vpop.permute.xlu0 %2613
        %2615 = vrot.lane.b32.xlu0 %v1296, 56
        %v2616 = vpop.permute.xlu0 %2615
        %2617 = vrot.lane.b32.xlu0 %v1302, 56
        %v2618 = vpop.permute.xlu0 %2617
        %2619 = vrot.lane.b32.xlu0 %v1308, 56
        %v2620 = vpop.permute.xlu0 %2619
        %2621 = vrot.lane.b32.xlu0 %v1314, 56
        %v2622 = vpop.permute.xlu0 %2621
        %2623 = vrot.lane.b32.xlu0 %v1320, 56
        %v2624 = vpop.permute.xlu0 %2623
        %2625 = vrot.lane.b32.xlu0 %v1326, 56
        %v2626 = vpop.permute.xlu0 %2625
        %2627 = vrot.lane.b32.xlu0 %v1332, 56
        %v2628 = vpop.permute.xlu0 %2627
        %2629 = vrot.lane.b32.xlu0 %v1338, 56
        %v2630 = vpop.permute.xlu0 %2629
        %2631 = vrot.lane.b32.xlu0 %v1344, 56
        %v2632 = vpop.permute.xlu0 %2631
        %2633 = vrot.lane.b32.xlu0 %v1350, 56
        %v2634 = vpop.permute.xlu0 %2633
        %2635 = vrot.lane.b32.xlu0 %v1356, 56
        %v2636 = vpop.permute.xlu0 %2635
        %2637 = vrot.lane.b32.xlu0 %v1362, 56
        %v2638 = vpop.permute.xlu0 %2637
        %2639 = vrot.lane.b32.xlu0 %v1368, 56
        %v2640 = vpop.permute.xlu0 %2639
        %2657 = vmatprep.subr.mxu0 0.0
        %2658 = vmatpush1.msra.mxu0 %v2610
        %2659 = vmatprep.subr.mxu0 0.0
        %2660 = vmatpush1.msra.mxu0 %v2612
        %2661 = vmatprep.subr.mxu0 0.0
        %2662 = vmatpush1.msra.mxu0 %v2614
        %2663 = vmatprep.subr.mxu0 0.0
        %2664 = vmatpush1.msra.mxu0 %v2616
        %2665 = vmatprep.subr.mxu0 0.0
        %2666 = vmatpush1.msra.mxu0 %v2618
        %2667 = vmatprep.subr.mxu0 0.0
        %2668 = vmatpush1.msra.mxu0 %v2620
        %2669 = vmatprep.subr.mxu0 0.0
        %2670 = vmatpush1.msra.mxu0 %v2622
        %2671 = vmatprep.subr.mxu0 0.0
        %2672 = vmatpush1.msra.mxu0 %v2624
        %2673 = vmatprep.subr.mxu0 0.0
        %2674 = vmatpush1.msra.mxu0 %v2626
        %2675 = vmatprep.subr.mxu0 0.0
        %2676 = vmatpush1.msra.mxu0 %v2628
        %2677 = vmatprep.subr.mxu0 0.0
        %2678 = vmatpush1.msra.mxu0 %v2630
        %2679 = vmatprep.subr.mxu0 0.0
        %2680 = vmatpush1.msra.mxu0 %v2632
        %2681 = vmatprep.subr.mxu0 0.0
        %2682 = vmatpush1.msra.mxu0 %v2634
        %2683 = vmatprep.subr.mxu0 0.0
        %2684 = vmatpush1.msra.mxu0 %v2636
        %2685 = vmatprep.subr.mxu0 0.0
        %2686 = vmatpush1.msra.mxu0 %v2638
        %2687 = vmatprep.subr.mxu0 0.0
        %2688 = vmatpush1.msra.mxu0 %v2640
        %2689 = vmatprep.subr.mxu0 0.0
        %2690 = vmatpush1.msra.mxu0 0.0
        %2691 = vmatprep.subr.mxu0 0.0
        %2692 = vmatpush1.msra.mxu0 0.0
        %2693 = vmatprep.subr.mxu0 0.0
        %2694 = vmatpush1.msra.mxu0 0.0
        %2695 = vmatprep.subr.mxu0 0.0
        %2696 = vmatpush1.msra.mxu0 0.0
        %2697 = vmatprep.subr.mxu0 0.0
        %2698 = vmatpush1.msra.mxu0 0.0
        %2699 = vmatprep.subr.mxu0 0.0
        %2700 = vmatpush1.msra.mxu0 0.0
        %2701 = vmatprep.subr.mxu0 0.0
        %2702 = vmatpush1.msra.mxu0 0.0
        %2703 = vmatprep.subr.mxu0 0.0
        %2704 = vmatpush1.msra.mxu0 0.0
        %2705 = vmatprep.subr.mxu0 0.0
        %2706 = vmatpush1.msra.mxu0 0.0
        %2707 = vmatprep.subr.mxu0 0.0
        %2708 = vmatpush1.msra.mxu0 0.0
        %2709 = vmatprep.subr.mxu0 0.0
        %2710 = vmatpush1.msra.mxu0 0.0
        %2711 = vmatprep.subr.mxu0 0.0
        %2712 = vmatpush1.msra.mxu0 0.0
        %2713 = vmatprep.subr.mxu0 0.0
        %2714 = vmatpush1.msra.mxu0 0.0
        %2715 = vmatprep.subr.mxu0 0.0
        %2716 = vmatpush1.msra.mxu0 0.0
        %2717 = vmatprep.subr.mxu0 0.0
        %2718 = vmatpush1.msra.mxu0 0.0
        %2719 = vmatprep.subr.mxu0 0.0
        %2720 = vmatpush1.msra.mxu0 0.0
        %2721 = vmatprep.mubr.f32.mxu0 0.0
        %2722 = vmatmul.mubr.f32.gmra.mrb[0].mxu0 %v2593
        %v2723 = vpop.f32.mrb[0].mxu0
        %v2724 = vadd.f32 0.0, %v2723
        %v2725 = vpop.f32.mrb[0].mxu0
        %2726 = vmatprep.mubr.f32.mxu0 0.0
        %2727 = vmatmul.mubr.f32.gmra.mrb[0].mxu0 %v2594
        %v2728 = vpop.f32.mrb[0].mxu0
        %v2729 = vadd.f32 0.0, %v2728
        %v2730 = vpop.f32.mrb[0].mxu0
        %2731 = vmatprep.mubr.f32.mxu0 0.0
        %2732 = vmatmul.mubr.f32.gmra.mrb[0].mxu0 %v2595
        %v2733 = vpop.f32.mrb[0].mxu0
        %v2734 = vadd.f32 0.0, %v2733
        %v2735 = vpop.f32.mrb[0].mxu0
        %2736 = vmatprep.mubr.f32.mxu0 0.0
        %2737 = vmatmul.mubr.f32.gmra.mrb[0].mxu0 %v2596
        %v2738 = vpop.f32.mrb[0].mxu0
        %v2739 = vadd.f32 0.0, %v2738
        %v2740 = vpop.f32.mrb[0].mxu0
        %2741 = vmatprep.mubr.f32.mxu0 0.0
        %2742 = vmatmul.mubr.f32.gmra.mrb[0].mxu0 %v2597
        %v2743 = vpop.f32.mrb[0].mxu0
        %v2744 = vadd.f32 0.0, %v2743
        %v2745 = vpop.f32.mrb[0].mxu0
        %2746 = vmatprep.mubr.f32.mxu0 0.0
        %2747 = vmatmul.mubr.f32.gmra.mrb[0].mxu0 %v2598
        %v2748 = vpop.f32.mrb[0].mxu0
        %v2749 = vadd.f32 0.0, %v2748
        %v2750 = vpop.f32.mrb[0].mxu0
        %2751 = vmatprep.mubr.f32.mxu0 0.0
        %2752 = vmatmul.mubr.f32.gmra.mrb[0].mxu0 %v2599
        %v2753 = vpop.f32.mrb[0].mxu0
        %v2754 = vadd.f32 0.0, %v2753
        %v2755 = vpop.f32.mrb[0].mxu0
        %2756 = vmatprep.mubr.f32.mxu0 0.0
        %2757 = vmatmul.mubr.f32.gmra.mrb[0].mxu0 %v2600
        %v2758 = vpop.f32.mrb[0].mxu0
        %v2759 = vadd.f32 0.0, %v2758
        %v2760 = vpop.f32.mrb[0].mxu0
        %2761 = vmatprep.mubr.f32.mxu0 0.0
        %2762 = vmatmul.mubr.f32.gmra.mrb[0].mxu0 %v2601
        %v2763 = vpop.f32.mrb[0].mxu0
        %v2764 = vadd.f32 0.0, %v2763
        %v2765 = vpop.f32.mrb[0].mxu0
        %2766 = vmatprep.mubr.f32.mxu0 0.0
        %2767 = vmatmul.mubr.f32.gmra.mrb[0].mxu0 %v2602
        %v2768 = vpop.f32.mrb[0].mxu0
        %v2769 = vadd.f32 0.0, %v2768
        %v2770 = vpop.f32.mrb[0].mxu0
        %2771 = vmatprep.mubr.f32.mxu0 0.0
        %2772 = vmatmul.mubr.f32.gmra.mrb[0].mxu0 %v2603
        %v2773 = vpop.f32.mrb[0].mxu0
        %v2774 = vadd.f32 0.0, %v2773
        %v2775 = vpop.f32.mrb[0].mxu0
        %2776 = vmatprep.mubr.f32.mxu0 0.0
        %2777 = vmatmul.mubr.f32.gmra.mrb[0].mxu0 %v2604
        %v2778 = vpop.f32.mrb[0].mxu0
        %v2779 = vadd.f32 0.0, %v2778
        %v2780 = vpop.f32.mrb[0].mxu0
        %2781 = vmatprep.mubr.f32.mxu0 0.0
        %2782 = vmatmul.mubr.f32.gmra.mrb[0].mxu0 %v2605
        %v2783 = vpop.f32.mrb[0].mxu0
        %v2784 = vadd.f32 0.0, %v2783
        %v2785 = vpop.f32.mrb[0].mxu0
        %2786 = vmatprep.mubr.f32.mxu0 0.0
        %2787 = vmatmul.mubr.f32.gmra.mrb[0].mxu0 %v2606
        %v2788 = vpop.f32.mrb[0].mxu0
        %v2789 = vadd.f32 0.0, %v2788
        %v2790 = vpop.f32.mrb[0].mxu0
        %2791 = vmatprep.mubr.f32.mxu0 0.0
        %2792 = vmatmul.mubr.f32.gmra.mrb[0].mxu0 %v2607
        %v2793 = vpop.f32.mrb[0].mxu0
        %v2794 = vadd.f32 0.0, %v2793
        %v2795 = vpop.f32.mrb[0].mxu0
        %2796 = vmatprep.mubr.f32.mxu0 0.0
        %2797 = vmatmul.mubr.f32.gmra.mrb[0].mxu0 %v2608
        %v2798 = vpop.f32.mrb[0].mxu0
        %v2799 = vadd.f32 0.0, %v2798
        %v2800 = vpop.f32.mrb[0].mxu0
        %2801 = vdwg.mxu0
        %v2803 = vsel %vm1372, %v2724, 0
        %v2806 = vsel %vm1372, %v2729, 0
        %v2809 = vsel %vm1372, %v2734, 0
        %v2812 = vsel %vm1372, %v2739, 0
        %v2815 = vsel %vm1372, %v2744, 0
        %v2818 = vsel %vm1372, %v2749, 0
        %v2821 = vsel %vm1372, %v2754, 0
        %v2824 = vsel %vm1372, %v2759, 0
        %v2827 = vsel %vm1372, %v2764, 0
        %v2830 = vsel %vm1372, %v2769, 0
        %v2833 = vsel %vm1372, %v2774, 0
        %v2836 = vsel %vm1372, %v2779, 0
        %v2839 = vsel %vm1372, %v2784, 0
        %v2842 = vsel %vm1372, %v2789, 0
        %v2845 = vsel %vm1372, %v2794, 0
        %v2848 = vsel %vm1372, %v2799, 0
        %2850 = vmatprep.subr.mxu0 0.0
        %2851 = vmatpush1.msra.mxu0 %v838
        %2852 = vmatprep.subr.mxu0 0.0
        %2853 = vmatpush1.msra.mxu0 0.0
        %2854 = vmatprep.subr.mxu0 0.0
        %2855 = vmatpush1.msra.mxu0 0.0
        %2856 = vmatprep.subr.mxu0 0.0
        %2857 = vmatpush1.msra.mxu0 0.0
        %2858 = vmatprep.subr.mxu0 0.0
        %2859 = vmatpush1.msra.mxu0 0.0
        %2860 = vmatprep.subr.mxu0 0.0
        %2861 = vmatpush1.msra.mxu0 0.0
        %2862 = vmatprep.subr.mxu0 0.0
        %2863 = vmatpush1.msra.mxu0 0.0
        %2864 = vmatprep.subr.mxu0 0.0
        %2865 = vmatpush1.msra.mxu0 0.0
        %2866 = vmatprep.subr.mxu0 0.0
        %2867 = vmatpush1.msra.mxu0 0.0
        %2868 = vmatprep.subr.mxu0 0.0
        %2869 = vmatpush1.msra.mxu0 0.0
        %2870 = vmatprep.subr.mxu0 0.0
        %2871 = vmatpush1.msra.mxu0 0.0
        %2872 = vmatprep.subr.mxu0 0.0
        %2873 = vmatpush1.msra.mxu0 0.0
        %2874 = vmatprep.subr.mxu0 0.0
        %2875 = vmatpush1.msra.mxu0 0.0
        %2876 = vmatprep.subr.mxu0 0.0
        %2877 = vmatpush1.msra.mxu0 0.0
        %2878 = vmatprep.subr.mxu0 0.0
        %2879 = vmatpush1.msra.mxu0 0.0
        %2880 = vmatprep.subr.mxu0 0.0
        %2881 = vmatpush1.msra.mxu0 0.0
        %2882 = vmatprep.subr.mxu0 0.0
        %2883 = vmatpush1.msra.mxu0 0.0
        %2884 = vmatprep.subr.mxu0 0.0
        %2885 = vmatpush1.msra.mxu0 0.0
        %2886 = vmatprep.subr.mxu0 0.0
        %2887 = vmatpush1.msra.mxu0 0.0
        %2888 = vmatprep.subr.mxu0 0.0
        %2889 = vmatpush1.msra.mxu0 0.0
        %2890 = vmatprep.subr.mxu0 0.0
        %2891 = vmatpush1.msra.mxu0 0.0
        %2892 = vmatprep.subr.mxu0 0.0
        %2893 = vmatpush1.msra.mxu0 0.0
        %2894 = vmatprep.subr.mxu0 0.0
        %2895 = vmatpush1.msra.mxu0 0.0
        %2896 = vmatprep.subr.mxu0 0.0
        %2897 = vmatpush1.msra.mxu0 0.0
        %2898 = vmatprep.subr.mxu0 0.0
        %2899 = vmatpush1.msra.mxu0 0.0
        %2900 = vmatprep.subr.mxu0 0.0
        %2901 = vmatpush1.msra.mxu0 0.0
        %2902 = vmatprep.subr.mxu0 0.0
        %2903 = vmatpush1.msra.mxu0 0.0
        %2904 = vmatprep.subr.mxu0 0.0
        %2905 = vmatpush1.msra.mxu0 0.0
        %2906 = vmatprep.subr.mxu0 0.0
        %2907 = vmatpush1.msra.mxu0 0.0
        %2908 = vmatprep.subr.mxu0 0.0
        %2909 = vmatpush1.msra.mxu0 0.0
        %2910 = vmatprep.subr.mxu0 0.0
        %2911 = vmatpush1.msra.mxu0 0.0
        %2912 = vmatprep.subr.mxu0 0.0
        %2913 = vmatpush1.msra.mxu0 0.0
        %2914 = vmatprep.mubr.f32.mxu0 0.0
        %2915 = vmatmul.mubr.f32.gmra.mrb[0].mxu0 %v2803
        %v2916 = vpop.f32.mrb[0].mxu0
        %v2917 = vadd.f32 0.0, %v2916
        %v2918 = vpop.f32.mrb[0].mxu0
        %2919 = vmatprep.mubr.f32.mxu0 0.0
        %2920 = vmatmul.mubr.f32.gmra.mrb[0].mxu0 %v2806
        %v2921 = vpop.f32.mrb[0].mxu0
        %v2922 = vadd.f32 0.0, %v2921
        %v2923 = vpop.f32.mrb[0].mxu0
        %2924 = vmatprep.mubr.f32.mxu0 0.0
        %2925 = vmatmul.mubr.f32.gmra.mrb[0].mxu0 %v2809
        %v2926 = vpop.f32.mrb[0].mxu0
        %v2927 = vadd.f32 0.0, %v2926
        %v2928 = vpop.f32.mrb[0].mxu0
        %2929 = vmatprep.mubr.f32.mxu0 0.0
        %2930 = vmatmul.mubr.f32.gmra.mrb[0].mxu0 %v2812
        %v2931 = vpop.f32.mrb[0].mxu0
        %v2932 = vadd.f32 0.0, %v2931
        %v2933 = vpop.f32.mrb[0].mxu0
        %2934 = vmatprep.mubr.f32.mxu0 0.0
        %2935 = vmatmul.mubr.f32.gmra.mrb[0].mxu0 %v2815
        %v2936 = vpop.f32.mrb[0].mxu0
        %v2937 = vadd.f32 0.0, %v2936
        %v2938 = vpop.f32.mrb[0].mxu0
        %2939 = vmatprep.mubr.f32.mxu0 0.0
        %2940 = vmatmul.mubr.f32.gmra.mrb[0].mxu0 %v2818
        %v2941 = vpop.f32.mrb[0].mxu0
        %v2942 = vadd.f32 0.0, %v2941
        %v2943 = vpop.f32.mrb[0].mxu0
        %2944 = vmatprep.mubr.f32.mxu0 0.0
        %2945 = vmatmul.mubr.f32.gmra.mrb[0].mxu0 %v2821
        %v2946 = vpop.f32.mrb[0].mxu0
        %v2947 = vadd.f32 0.0, %v2946
        %v2948 = vpop.f32.mrb[0].mxu0
        %2949 = vmatprep.mubr.f32.mxu0 0.0
        %2950 = vmatmul.mubr.f32.gmra.mrb[0].mxu0 %v2824
        %v2951 = vpop.f32.mrb[0].mxu0
        %v2952 = vadd.f32 0.0, %v2951
        %v2953 = vpop.f32.mrb[0].mxu0
        %2954 = vmatprep.mubr.f32.mxu0 0.0
        %2955 = vmatmul.mubr.f32.gmra.mrb[0].mxu0 %v2827
        %v2956 = vpop.f32.mrb[0].mxu0
        %v2957 = vadd.f32 0.0, %v2956
        %v2958 = vpop.f32.mrb[0].mxu0
        %2959 = vmatprep.mubr.f32.mxu0 0.0
        %2960 = vmatmul.mubr.f32.gmra.mrb[0].mxu0 %v2830
        %v2961 = vpop.f32.mrb[0].mxu0
        %v2962 = vadd.f32 0.0, %v2961
        %v2963 = vpop.f32.mrb[0].mxu0
        %2964 = vmatprep.mubr.f32.mxu0 0.0
        %2965 = vmatmul.mubr.f32.gmra.mrb[0].mxu0 %v2833
        %v2966 = vpop.f32.mrb[0].mxu0
        %v2967 = vadd.f32 0.0, %v2966
        %v2968 = vpop.f32.mrb[0].mxu0
        %2969 = vmatprep.mubr.f32.mxu0 0.0
        %2970 = vmatmul.mubr.f32.gmra.mrb[0].mxu0 %v2836
        %v2971 = vpop.f32.mrb[0].mxu0
        %v2972 = vadd.f32 0.0, %v2971
        %v2973 = vpop.f32.mrb[0].mxu0
        %2974 = vmatprep.mubr.f32.mxu0 0.0
        %2975 = vmatmul.mubr.f32.gmra.mrb[0].mxu0 %v2839
        %v2976 = vpop.f32.mrb[0].mxu0
        %v2977 = vadd.f32 0.0, %v2976
        %v2978 = vpop.f32.mrb[0].mxu0
        %2979 = vmatprep.mubr.f32.mxu0 0.0
        %2980 = vmatmul.mubr.f32.gmra.mrb[0].mxu0 %v2842
        %v2981 = vpop.f32.mrb[0].mxu0
        %v2982 = vadd.f32 0.0, %v2981
        %v2983 = vpop.f32.mrb[0].mxu0
        %2984 = vmatprep.mubr.f32.mxu0 0.0
        %2985 = vmatmul.mubr.f32.gmra.mrb[0].mxu0 %v2845
        %v2986 = vpop.f32.mrb[0].mxu0
        %v2987 = vadd.f32 0.0, %v2986
        %v2988 = vpop.f32.mrb[0].mxu0
        %2989 = vmatprep.mubr.f32.mxu0 0.0
        %2990 = vmatmul.mubr.f32.gmra.mrb[0].mxu0 %v2848
        %v2991 = vpop.f32.mrb[0].mxu0
        %v2992 = vadd.f32 0.0, %v2991
        %v2993 = vpop.f32.mrb[0].mxu0
        %2994 = vdwg.mxu0
        %v2995 = vadd.f32 %v2160, %v2917
        %v2996 = vadd.f32 %v2161, %v2922
        %v2997 = vadd.f32 %v2162, %v2927
        %v2998 = vadd.f32 %v2163, %v2932
        %v2999 = vadd.f32 %v2164, %v2937
        %v3000 = vadd.f32 %v2165, %v2942
        %v3001 = vadd.f32 %v2166, %v2947
        %v3002 = vadd.f32 %v2167, %v2952
        %v3003 = vadd.f32 %v2168, %v2957
        %v3004 = vadd.f32 %v2169, %v2962
        %v3005 = vadd.f32 %v2170, %v2967
        %v3006 = vadd.f32 %v2171, %v2972
        %v3007 = vadd.f32 %v2172, %v2977
        %v3008 = vadd.f32 %v2173, %v2982
        %v3009 = vadd.f32 %v2174, %v2987
        %v3010 = vadd.f32 %v2175, %v2992
        %3011 = vrot.lane.b32.xlu0 %v1280, 112
        %v3012 = vpop.permute.xlu0 %3011
        %3013 = vrot.lane.b32.xlu0 %v1286, 112
        %v3014 = vpop.permute.xlu0 %3013
        %3015 = vrot.lane.b32.xlu0 %v1292, 112
        %v3016 = vpop.permute.xlu0 %3015
        %3017 = vrot.lane.b32.xlu0 %v1298, 112
        %v3018 = vpop.permute.xlu0 %3017
        %3019 = vrot.lane.b32.xlu0 %v1304, 112
        %v3020 = vpop.permute.xlu0 %3019
        %3021 = vrot.lane.b32.xlu0 %v1310, 112
        %v3022 = vpop.permute.xlu0 %3021
        %3023 = vrot.lane.b32.xlu0 %v1316, 112
        %v3024 = vpop.permute.xlu0 %3023
        %3025 = vrot.lane.b32.xlu0 %v1322, 112
        %v3026 = vpop.permute.xlu0 %3025
        %3027 = vrot.lane.b32.xlu0 %v1328, 112
        %v3028 = vpop.permute.xlu0 %3027
        %3029 = vrot.lane.b32.xlu0 %v1334, 112
        %v3030 = vpop.permute.xlu0 %3029
        %3031 = vrot.lane.b32.xlu0 %v1340, 112
        %v3032 = vpop.permute.xlu0 %3031
        %3033 = vrot.lane.b32.xlu0 %v1346, 112
        %v3034 = vpop.permute.xlu0 %3033
        %3035 = vrot.lane.b32.xlu0 %v1352, 112
        %v3036 = vpop.permute.xlu0 %3035
        %3037 = vrot.lane.b32.xlu0 %v1358, 112
        %v3038 = vpop.permute.xlu0 %3037
        %3039 = vrot.lane.b32.xlu0 %v1364, 112
        %v3040 = vpop.permute.xlu0 %3039
        %3041 = vrot.lane.b32.xlu0 %v1370, 112
        %v3042 = vpop.permute.xlu0 %3041
        %3043 = vrot.lane.b32.xlu0 %v1278, 112
        %v3044 = vpop.permute.xlu0 %3043
        %3045 = vrot.lane.b32.xlu0 %v1284, 112
        %v3046 = vpop.permute.xlu0 %3045
        %3047 = vrot.lane.b32.xlu0 %v1290, 112
        %v3048 = vpop.permute.xlu0 %3047
        %3049 = vrot.lane.b32.xlu0 %v1296, 112
        %v3050 = vpop.permute.xlu0 %3049
        %3051 = vrot.lane.b32.xlu0 %v1302, 112
        %v3052 = vpop.permute.xlu0 %3051
        %3053 = vrot.lane.b32.xlu0 %v1308, 112
        %v3054 = vpop.permute.xlu0 %3053
        %3055 = vrot.lane.b32.xlu0 %v1314, 112
        %v3056 = vpop.permute.xlu0 %3055
        %3057 = vrot.lane.b32.xlu0 %v1320, 112
        %v3058 = vpop.permute.xlu0 %3057
        %3059 = vrot.lane.b32.xlu0 %v1326, 112
        %v3060 = vpop.permute.xlu0 %3059
        %3061 = vrot.lane.b32.xlu0 %v1332, 112
        %v3062 = vpop.permute.xlu0 %3061
        %3063 = vrot.lane.b32.xlu0 %v1338, 112
        %v3064 = vpop.permute.xlu0 %3063
        %3065 = vrot.lane.b32.xlu0 %v1344, 112
        %v3066 = vpop.permute.xlu0 %3065
        %3067 = vrot.lane.b32.xlu0 %v1350, 112
        %v3068 = vpop.permute.xlu0 %3067
        %3069 = vrot.lane.b32.xlu0 %v1356, 112
        %v3070 = vpop.permute.xlu0 %3069
        %3071 = vrot.lane.b32.xlu0 %v1362, 112
        %v3072 = vpop.permute.xlu0 %3071
        %3073 = vrot.lane.b32.xlu0 %v1368, 112
        %v3074 = vpop.permute.xlu0 %3073
        %v3075 = vsel %vm1372, %v3012, 0
        %v3077 = vsel %vm1372, %v3014, 0
        %v3079 = vsel %vm1372, %v3016, 0
        %v3081 = vsel %vm1372, %v3018, 0
        %v3083 = vsel %vm1372, %v3020, 0
        %v3085 = vsel %vm1372, %v3022, 0
        %v3087 = vsel %vm1372, %v3024, 0
        %v3089 = vsel %vm1372, %v3026, 0
        %v3091 = vsel %vm1372, %v3028, 0
        %v3093 = vsel %vm1372, %v3030, 0
        %v3095 = vsel %vm1372, %v3032, 0
        %v3097 = vsel %vm1372, %v3034, 0
        %v3099 = vsel %vm1372, %v3036, 0
        %v3101 = vsel %vm1372, %v3038, 0
        %v3103 = vsel %vm1372, %v3040, 0
        %v3105 = vsel %vm1372, %v3042, 0
        %v3107 = vsel %vm1372, %v3044, 0
        %v3109 = vsel %vm1372, %v3046, 0
        %v3111 = vsel %vm1372, %v3048, 0
        %v3113 = vsel %vm1372, %v3050, 0
        %v3115 = vsel %vm1372, %v3052, 0
        %v3117 = vsel %vm1372, %v3054, 0
        %v3119 = vsel %vm1372, %v3056, 0
        %v3121 = vsel %vm1372, %v3058, 0
        %v3123 = vsel %vm1372, %v3060, 0
        %v3125 = vsel %vm1372, %v3062, 0
        %v3127 = vsel %vm1372, %v3064, 0
        %v3129 = vsel %vm1372, %v3066, 0
        %v3131 = vsel %vm1372, %v3068, 0
        %v3133 = vsel %vm1372, %v3070, 0
        %v3135 = vsel %vm1372, %v3072, 0
        %v3137 = vsel %vm1372, %v3074, 0
        %3139 = vmatprep.subr.mxu0 0.0
        %3140 = vmatpush1.xpose.msra.mxu0 %v3107
        %3141 = vmatprep.subr.mxu0 0.0
        %3142 = vmatpush1.xpose.msra.mxu0 %v3109
        %3143 = vmatprep.subr.mxu0 0.0
        %3144 = vmatpush1.xpose.msra.mxu0 %v3111
        %3145 = vmatprep.subr.mxu0 0.0
        %3146 = vmatpush1.xpose.msra.mxu0 %v3113
        %3147 = vmatprep.subr.mxu0 0.0
        %3148 = vmatpush1.xpose.msra.mxu0 %v3115
        %3149 = vmatprep.subr.mxu0 0.0
        %3150 = vmatpush1.xpose.msra.mxu0 %v3117
        %3151 = vmatprep.subr.mxu0 0.0
        %3152 = vmatpush1.xpose.msra.mxu0 %v3119
        %3153 = vmatprep.subr.mxu0 0.0
        %3154 = vmatpush1.xpose.msra.mxu0 %v3121
        %3155 = vmatprep.subr.mxu0 0.0
        %3156 = vmatpush1.xpose.msra.mxu0 %v3123
        %3157 = vmatprep.subr.mxu0 0.0
        %3158 = vmatpush1.xpose.msra.mxu0 %v3125
        %3159 = vmatprep.subr.mxu0 0.0
        %3160 = vmatpush1.xpose.msra.mxu0 %v3127
        %3161 = vmatprep.subr.mxu0 0.0
        %3162 = vmatpush1.xpose.msra.mxu0 %v3129
        %3163 = vmatprep.subr.mxu0 0.0
        %3164 = vmatpush1.xpose.msra.mxu0 %v3131
        %3165 = vmatprep.subr.mxu0 0.0
        %3166 = vmatpush1.xpose.msra.mxu0 %v3133
        %3167 = vmatprep.subr.mxu0 0.0
        %3168 = vmatpush1.xpose.msra.mxu0 %v3135
        %3169 = vmatprep.subr.mxu0 0.0
        %3170 = vmatpush1.xpose.msra.mxu0 %v3137
        %3171 = vmatprep.subr.mxu0 0.0
        %3172 = vmatpush1.xpose.msra.mxu0 0.0
        %3173 = vmatprep.subr.mxu0 0.0
        %3174 = vmatpush1.xpose.msra.mxu0 0.0
        %3175 = vmatprep.subr.mxu0 0.0
        %3176 = vmatpush1.xpose.msra.mxu0 0.0
        %3177 = vmatprep.subr.mxu0 0.0
        %3178 = vmatpush1.xpose.msra.mxu0 0.0
        %3179 = vmatprep.subr.mxu0 0.0
        %3180 = vmatpush1.xpose.msra.mxu0 0.0
        %3181 = vmatprep.subr.mxu0 0.0
        %3182 = vmatpush1.xpose.msra.mxu0 0.0
        %3183 = vmatprep.subr.mxu0 0.0
        %3184 = vmatpush1.xpose.msra.mxu0 0.0
        %3185 = vmatprep.subr.mxu0 0.0
        %3186 = vmatpush1.xpose.msra.mxu0 0.0
        %3187 = vmatprep.subr.mxu0 0.0
        %3188 = vmatpush1.xpose.msra.mxu0 0.0
        %3189 = vmatprep.subr.mxu0 0.0
        %3190 = vmatpush1.xpose.msra.mxu0 0.0
        %3191 = vmatprep.subr.mxu0 0.0
        %3192 = vmatpush1.xpose.msra.mxu0 0.0
        %3193 = vmatprep.subr.mxu0 0.0
        %3194 = vmatpush1.xpose.msra.mxu0 0.0
        %3195 = vmatprep.subr.mxu0 0.0
        %3196 = vmatpush1.xpose.msra.mxu0 0.0
        %3197 = vmatprep.subr.mxu0 0.0
        %3198 = vmatpush1.xpose.msra.mxu0 0.0
        %3199 = vmatprep.subr.mxu0 0.0
        %3200 = vmatpush1.xpose.msra.mxu0 0.0
        %3201 = vmatprep.subr.mxu0 0.0
        %3202 = vmatpush1.xpose.msra.mxu0 0.0
        %3203 = vmatprep.mubr.f32.mxu0 0.0
        %3204 = vmatmul.mubr.f32.gmra.mrb[0].mxu0 %v3075
        %v3205 = vpop.f32.mrb[0].mxu0
        %v3206 = vadd.f32 0.0, %v3205
        %v3207 = vpop.f32.mrb[0].mxu0
        %3208 = vmatprep.mubr.f32.mxu0 0.0
        %3209 = vmatmul.mubr.f32.gmra.mrb[0].mxu0 %v3077
        %v3210 = vpop.f32.mrb[0].mxu0
        %v3211 = vadd.f32 0.0, %v3210
        %v3212 = vpop.f32.mrb[0].mxu0
        %3213 = vmatprep.mubr.f32.mxu0 0.0
        %3214 = vmatmul.mubr.f32.gmra.mrb[0].mxu0 %v3079
        %v3215 = vpop.f32.mrb[0].mxu0
        %v3216 = vadd.f32 0.0, %v3215
        %v3217 = vpop.f32.mrb[0].mxu0
        %3218 = vmatprep.mubr.f32.mxu0 0.0
        %3219 = vmatmul.mubr.f32.gmra.mrb[0].mxu0 %v3081
        %v3220 = vpop.f32.mrb[0].mxu0
        %v3221 = vadd.f32 0.0, %v3220
        %v3222 = vpop.f32.mrb[0].mxu0
        %3223 = vmatprep.mubr.f32.mxu0 0.0
        %3224 = vmatmul.mubr.f32.gmra.mrb[0].mxu0 %v3083
        %v3225 = vpop.f32.mrb[0].mxu0
        %v3226 = vadd.f32 0.0, %v3225
        %v3227 = vpop.f32.mrb[0].mxu0
        %3228 = vmatprep.mubr.f32.mxu0 0.0
        %3229 = vmatmul.mubr.f32.gmra.mrb[0].mxu0 %v3085
        %v3230 = vpop.f32.mrb[0].mxu0
        %v3231 = vadd.f32 0.0, %v3230
        %v3232 = vpop.f32.mrb[0].mxu0
        %3233 = vmatprep.mubr.f32.mxu0 0.0
        %3234 = vmatmul.mubr.f32.gmra.mrb[0].mxu0 %v3087
        %v3235 = vpop.f32.mrb[0].mxu0
        %v3236 = vadd.f32 0.0, %v3235
        %v3237 = vpop.f32.mrb[0].mxu0
        %3238 = vmatprep.mubr.f32.mxu0 0.0
        %3239 = vmatmul.mubr.f32.gmra.mrb[0].mxu0 %v3089
        %v3240 = vpop.f32.mrb[0].mxu0
        %v3241 = vadd.f32 0.0, %v3240
        %v3242 = vpop.f32.mrb[0].mxu0
        %3243 = vmatprep.mubr.f32.mxu0 0.0
        %3244 = vmatmul.mubr.f32.gmra.mrb[0].mxu0 %v3091
        %v3245 = vpop.f32.mrb[0].mxu0
        %v3246 = vadd.f32 0.0, %v3245
        %v3247 = vpop.f32.mrb[0].mxu0
        %3248 = vmatprep.mubr.f32.mxu0 0.0
        %3249 = vmatmul.mubr.f32.gmra.mrb[0].mxu0 %v3093
        %v3250 = vpop.f32.mrb[0].mxu0
        %v3251 = vadd.f32 0.0, %v3250
        %v3252 = vpop.f32.mrb[0].mxu0
        %3253 = vmatprep.mubr.f32.mxu0 0.0
        %3254 = vmatmul.mubr.f32.gmra.mrb[0].mxu0 %v3095
        %v3255 = vpop.f32.mrb[0].mxu0
        %v3256 = vadd.f32 0.0, %v3255
        %v3257 = vpop.f32.mrb[0].mxu0
        %3258 = vmatprep.mubr.f32.mxu0 0.0
        %3259 = vmatmul.mubr.f32.gmra.mrb[0].mxu0 %v3097
        %v3260 = vpop.f32.mrb[0].mxu0
        %v3261 = vadd.f32 0.0, %v3260
        %v3262 = vpop.f32.mrb[0].mxu0
        %3263 = vmatprep.mubr.f32.mxu0 0.0
        %3264 = vmatmul.mubr.f32.gmra.mrb[0].mxu0 %v3099
        %v3265 = vpop.f32.mrb[0].mxu0
        %v3266 = vadd.f32 0.0, %v3265
        %v3267 = vpop.f32.mrb[0].mxu0
        %3268 = vmatprep.mubr.f32.mxu0 0.0
        %3269 = vmatmul.mubr.f32.gmra.mrb[0].mxu0 %v3101
        %v3270 = vpop.f32.mrb[0].mxu0
        %v3271 = vadd.f32 0.0, %v3270
        %v3272 = vpop.f32.mrb[0].mxu0
        %3273 = vmatprep.mubr.f32.mxu0 0.0
        %3274 = vmatmul.mubr.f32.gmra.mrb[0].mxu0 %v3103
        %v3275 = vpop.f32.mrb[0].mxu0
        %v3276 = vadd.f32 0.0, %v3275
        %v3277 = vpop.f32.mrb[0].mxu0
        %3278 = vmatprep.mubr.f32.mxu0 0.0
        %3279 = vmatmul.mubr.f32.gmra.mrb[0].mxu0 %v3105
        %v3280 = vpop.f32.mrb[0].mxu0
        %v3281 = vadd.f32 0.0, %v3280
        %v3282 = vpop.f32.mrb[0].mxu0
        %3283 = vdwg.mxu0
        %v3284 = vmul.f32 %v3206, 0.35355338
        %v3285 = vmul.f32 %v3211, 0.35355338
        %v3286 = vmul.f32 %v3216, 0.35355338
        %v3287 = vmul.f32 %v3221, 0.35355338
        %v3288 = vmul.f32 %v3226, 0.35355338
        %v3289 = vmul.f32 %v3231, 0.35355338
        %v3290 = vmul.f32 %v3236, 0.35355338
        %v3291 = vmul.f32 %v3241, 0.35355338
        %v3292 = vmul.f32 %v3246, 0.35355338
        %v3293 = vmul.f32 %v3251, 0.35355338
        %v3294 = vmul.f32 %v3256, 0.35355338
        %v3295 = vmul.f32 %v3261, 0.35355338
        %v3296 = vmul.f32 %v3266, 0.35355338
        %v3297 = vmul.f32 %v3271, 0.35355338
        %v3298 = vmul.f32 %v3276, 0.35355338
        %v3299 = vmul.f32 %v3281, 0.35355338
        %3300 = vmax.xlane.f32.xlu0 %v3284
        %v3301 = vpop.xlane.xlu0 %3300
        %3302 = vmax.xlane.f32.xlu0 %v3285
        %v3303 = vpop.xlane.xlu0 %3302
        %3304 = vmax.xlane.f32.xlu0 %v3286
        %v3305 = vpop.xlane.xlu0 %3304
        %3306 = vmax.xlane.f32.xlu0 %v3287
        %v3307 = vpop.xlane.xlu0 %3306
        %3308 = vmax.xlane.f32.xlu0 %v3288
        %v3309 = vpop.xlane.xlu0 %3308
        %3310 = vmax.xlane.f32.xlu0 %v3289
        %v3311 = vpop.xlane.xlu0 %3310
        %3312 = vmax.xlane.f32.xlu0 %v3290
        %v3313 = vpop.xlane.xlu0 %3312
        %3314 = vmax.xlane.f32.xlu0 %v3291
        %v3315 = vpop.xlane.xlu0 %3314
        %3316 = vmax.xlane.f32.xlu0 %v3292
        %v3317 = vpop.xlane.xlu0 %3316
        %3318 = vmax.xlane.f32.xlu0 %v3293
        %v3319 = vpop.xlane.xlu0 %3318
        %3320 = vmax.xlane.f32.xlu0 %v3294
        %v3321 = vpop.xlane.xlu0 %3320
        %3322 = vmax.xlane.f32.xlu0 %v3295
        %v3323 = vpop.xlane.xlu0 %3322
        %3324 = vmax.xlane.f32.xlu0 %v3296
        %v3325 = vpop.xlane.xlu0 %3324
        %3326 = vmax.xlane.f32.xlu0 %v3297
        %v3327 = vpop.xlane.xlu0 %3326
        %3328 = vmax.xlane.f32.xlu0 %v3298
        %v3329 = vpop.xlane.xlu0 %3328
        %3330 = vmax.xlane.f32.xlu0 %v3299
        %v3331 = vpop.xlane.xlu0 %3330
        %v3332 = vsub.f32 %v3284, %v3301
        %v3333 = vsub.f32 %v3285, %v3303
        %v3334 = vsub.f32 %v3286, %v3305
        %v3335 = vsub.f32 %v3287, %v3307
        %v3336 = vsub.f32 %v3288, %v3309
        %v3337 = vsub.f32 %v3289, %v3311
        %v3338 = vsub.f32 %v3290, %v3313
        %v3339 = vsub.f32 %v3291, %v3315
        %v3340 = vsub.f32 %v3292, %v3317
        %v3341 = vsub.f32 %v3293, %v3319
        %v3342 = vsub.f32 %v3294, %v3321
        %v3343 = vsub.f32 %v3295, %v3323
        %v3344 = vsub.f32 %v3296, %v3325
        %v3345 = vsub.f32 %v3297, %v3327
        %v3346 = vsub.f32 %v3298, %v3329
        %v3347 = vsub.f32 %v3299, %v3331
        %v3348 = vmul.f32 %v3332, 1.442695
        %v3349 = vpow.pop %v3348
        %v3350 = vmul.f32 %v3333, 1.442695
        %v3351 = vpow.pop %v3350
        %v3352 = vmul.f32 %v3334, 1.442695
        %v3353 = vpow.pop %v3352
        %v3354 = vmul.f32 %v3335, 1.442695
        %v3355 = vpow.pop %v3354
        %v3356 = vmul.f32 %v3336, 1.442695
        %v3357 = vpow.pop %v3356
        %v3358 = vmul.f32 %v3337, 1.442695
        %v3359 = vpow.pop %v3358
        %v3360 = vmul.f32 %v3338, 1.442695
        %v3361 = vpow.pop %v3360
        %v3362 = vmul.f32 %v3339, 1.442695
        %v3363 = vpow.pop %v3362
        %v3364 = vmul.f32 %v3340, 1.442695
        %v3365 = vpow.pop %v3364
        %v3366 = vmul.f32 %v3341, 1.442695
        %v3367 = vpow.pop %v3366
        %v3368 = vmul.f32 %v3342, 1.442695
        %v3369 = vpow.pop %v3368
        %v3370 = vmul.f32 %v3343, 1.442695
        %v3371 = vpow.pop %v3370
        %v3372 = vmul.f32 %v3344, 1.442695
        %v3373 = vpow.pop %v3372
        %v3374 = vmul.f32 %v3345, 1.442695
        %v3375 = vpow.pop %v3374
        %v3376 = vmul.f32 %v3346, 1.442695
        %v3377 = vpow.pop %v3376
        %v3378 = vmul.f32 %v3347, 1.442695
        %v3379 = vpow.pop %v3378
        %3380 = vadd.xlane.f32.xlu0 %v3349
        %v3381 = vpop.xlane.xlu0 %3380
        %3382 = vadd.xlane.f32.xlu0 %v3351
        %v3383 = vpop.xlane.xlu0 %3382
        %3384 = vadd.xlane.f32.xlu0 %v3353
        %v3385 = vpop.xlane.xlu0 %3384
        %3386 = vadd.xlane.f32.xlu0 %v3355
        %v3387 = vpop.xlane.xlu0 %3386
        %3388 = vadd.xlane.f32.xlu0 %v3357
        %v3389 = vpop.xlane.xlu0 %3388
        %3390 = vadd.xlane.f32.xlu0 %v3359
        %v3391 = vpop.xlane.xlu0 %3390
        %3392 = vadd.xlane.f32.xlu0 %v3361
        %v3393 = vpop.xlane.xlu0 %3392
        %3394 = vadd.xlane.f32.xlu0 %v3363
        %v3395 = vpop.xlane.xlu0 %3394
        %3396 = vadd.xlane.f32.xlu0 %v3365
        %v3397 = vpop.xlane.xlu0 %3396
        %3398 = vadd.xlane.f32.xlu0 %v3367
        %v3399 = vpop.xlane.xlu0 %3398
        %3400 = vadd.xlane.f32.xlu0 %v3369
        %v3401 = vpop.xlane.xlu0 %3400
        %3402 = vadd.xlane.f32.xlu0 %v3371
        %v3403 = vpop.xlane.xlu0 %3402
        %3404 = vadd.xlane.f32.xlu0 %v3373
        %v3405 = vpop.xlane.xlu0 %3404
        %3406 = vadd.xlane.f32.xlu0 %v3375
        %v3407 = vpop.xlane.xlu0 %3406
        %3408 = vadd.xlane.f32.xlu0 %v3377
        %v3409 = vpop.xlane.xlu0 %3408
        %3410 = vadd.xlane.f32.xlu0 %v3379
        %v3411 = vpop.xlane.xlu0 %3410
        %v3412 = vrcp.pop %v3381
        %v3413 = vrcp.pop %v3383
        %v3414 = vrcp.pop %v3385
        %v3415 = vrcp.pop %v3387
        %v3416 = vrcp.pop %v3389
        %v3417 = vrcp.pop %v3391
        %v3418 = vrcp.pop %v3393
        %v3419 = vrcp.pop %v3395
        %v3420 = vrcp.pop %v3397
        %v3421 = vrcp.pop %v3399
        %v3422 = vrcp.pop %v3401
        %v3423 = vrcp.pop %v3403
        %v3424 = vrcp.pop %v3405
        %v3425 = vrcp.pop %v3407
        %v3426 = vrcp.pop %v3409
        %v3427 = vrcp.pop %v3411
        %v3428 = vmul.f32 %v3349, %v3412
        %v3429 = vmul.f32 %v3351, %v3413
        %v3430 = vmul.f32 %v3353, %v3414
        %v3431 = vmul.f32 %v3355, %v3415
        %v3432 = vmul.f32 %v3357, %v3416
        %v3433 = vmul.f32 %v3359, %v3417
        %v3434 = vmul.f32 %v3361, %v3418
        %v3435 = vmul.f32 %v3363, %v3419
        %v3436 = vmul.f32 %v3365, %v3420
        %v3437 = vmul.f32 %v3367, %v3421
        %v3438 = vmul.f32 %v3369, %v3422
        %v3439 = vmul.f32 %v3371, %v3423
        %v3440 = vmul.f32 %v3373, %v3424
        %v3441 = vmul.f32 %v3375, %v3425
        %v3442 = vmul.f32 %v3377, %v3426
        %v3443 = vmul.f32 %v3379, %v3427
        %3444 = vrot.lane.b32.xlu0 %v1278, 48
        %v3445 = vpop.permute.xlu0 %3444
        %3446 = vrot.lane.b32.xlu0 %v1284, 48
        %v3447 = vpop.permute.xlu0 %3446
        %3448 = vrot.lane.b32.xlu0 %v1290, 48
        %v3449 = vpop.permute.xlu0 %3448
        %3450 = vrot.lane.b32.xlu0 %v1296, 48
        %v3451 = vpop.permute.xlu0 %3450
        %3452 = vrot.lane.b32.xlu0 %v1302, 48
        %v3453 = vpop.permute.xlu0 %3452
        %3454 = vrot.lane.b32.xlu0 %v1308, 48
        %v3455 = vpop.permute.xlu0 %3454
        %3456 = vrot.lane.b32.xlu0 %v1314, 48
        %v3457 = vpop.permute.xlu0 %3456
        %3458 = vrot.lane.b32.xlu0 %v1320, 48
        %v3459 = vpop.permute.xlu0 %3458
        %3460 = vrot.lane.b32.xlu0 %v1326, 48
        %v3461 = vpop.permute.xlu0 %3460
        %3462 = vrot.lane.b32.xlu0 %v1332, 48
        %v3463 = vpop.permute.xlu0 %3462
        %3464 = vrot.lane.b32.xlu0 %v1338, 48
        %v3465 = vpop.permute.xlu0 %3464
        %3466 = vrot.lane.b32.xlu0 %v1344, 48
        %v3467 = vpop.permute.xlu0 %3466
        %3468 = vrot.lane.b32.xlu0 %v1350, 48
        %v3469 = vpop.permute.xlu0 %3468
        %3470 = vrot.lane.b32.xlu0 %v1356, 48
        %v3471 = vpop.permute.xlu0 %3470
        %3472 = vrot.lane.b32.xlu0 %v1362, 48
        %v3473 = vpop.permute.xlu0 %3472
        %3474 = vrot.lane.b32.xlu0 %v1368, 48
        %v3475 = vpop.permute.xlu0 %3474
        %3492 = vmatprep.subr.mxu0 0.0
        %3493 = vmatpush1.msra.mxu0 %v3445
        %3494 = vmatprep.subr.mxu0 0.0
        %3495 = vmatpush1.msra.mxu0 %v3447
        %3496 = vmatprep.subr.mxu0 0.0
        %3497 = vmatpush1.msra.mxu0 %v3449
        %3498 = vmatprep.subr.mxu0 0.0
        %3499 = vmatpush1.msra.mxu0 %v3451
        %3500 = vmatprep.subr.mxu0 0.0
        %3501 = vmatpush1.msra.mxu0 %v3453
        %3502 = vmatprep.subr.mxu0 0.0
        %3503 = vmatpush1.msra.mxu0 %v3455
        %3504 = vmatprep.subr.mxu0 0.0
        %3505 = vmatpush1.msra.mxu0 %v3457
        %3506 = vmatprep.subr.mxu0 0.0
        %3507 = vmatpush1.msra.mxu0 %v3459
        %3508 = vmatprep.subr.mxu0 0.0
        %3509 = vmatpush1.msra.mxu0 %v3461
        %3510 = vmatprep.subr.mxu0 0.0
        %3511 = vmatpush1.msra.mxu0 %v3463
        %3512 = vmatprep.subr.mxu0 0.0
        %3513 = vmatpush1.msra.mxu0 %v3465
        %3514 = vmatprep.subr.mxu0 0.0
        %3515 = vmatpush1.msra.mxu0 %v3467
        %3516 = vmatprep.subr.mxu0 0.0
        %3517 = vmatpush1.msra.mxu0 %v3469
        %3518 = vmatprep.subr.mxu0 0.0
        %3519 = vmatpush1.msra.mxu0 %v3471
        %3520 = vmatprep.subr.mxu0 0.0
        %3521 = vmatpush1.msra.mxu0 %v3473
        %3522 = vmatprep.subr.mxu0 0.0
        %3523 = vmatpush1.msra.mxu0 %v3475
        %3524 = vmatprep.subr.mxu0 0.0
        %3525 = vmatpush1.msra.mxu0 0.0
        %3526 = vmatprep.subr.mxu0 0.0
        %3527 = vmatpush1.msra.mxu0 0.0
        %3528 = vmatprep.subr.mxu0 0.0
        %3529 = vmatpush1.msra.mxu0 0.0
        %3530 = vmatprep.subr.mxu0 0.0
        %3531 = vmatpush1.msra.mxu0 0.0
        %3532 = vmatprep.subr.mxu0 0.0
        %3533 = vmatpush1.msra.mxu0 0.0
        %3534 = vmatprep.subr.mxu0 0.0
        %3535 = vmatpush1.msra.mxu0 0.0
        %3536 = vmatprep.subr.mxu0 0.0
        %3537 = vmatpush1.msra.mxu0 0.0
        %3538 = vmatprep.subr.mxu0 0.0
        %3539 = vmatpush1.msra.mxu0 0.0
        %3540 = vmatprep.subr.mxu0 0.0
        %3541 = vmatpush1.msra.mxu0 0.0
        %3542 = vmatprep.subr.mxu0 0.0
        %3543 = vmatpush1.msra.mxu0 0.0
        %3544 = vmatprep.subr.mxu0 0.0
        %3545 = vmatpush1.msra.mxu0 0.0
        %3546 = vmatprep.subr.mxu0 0.0
        %3547 = vmatpush1.msra.mxu0 0.0
        %3548 = vmatprep.subr.mxu0 0.0
        %3549 = vmatpush1.msra.mxu0 0.0
        %3550 = vmatprep.subr.mxu0 0.0
        %3551 = vmatpush1.msra.mxu0 0.0
        %3552 = vmatprep.subr.mxu0 0.0
        %3553 = vmatpush1.msra.mxu0 0.0
        %3554 = vmatprep.subr.mxu0 0.0
        %3555 = vmatpush1.msra.mxu0 0.0
        %3556 = vmatprep.mubr.f32.mxu0 0.0
        %3557 = vmatmul.mubr.f32.gmra.mrb[0].mxu0 %v3428
        %v3558 = vpop.f32.mrb[0].mxu0
        %v3559 = vadd.f32 0.0, %v3558
        %v3560 = vpop.f32.mrb[0].mxu0
        %3561 = vmatprep.mubr.f32.mxu0 0.0
        %3562 = vmatmul.mubr.f32.gmra.mrb[0].mxu0 %v3429
        %v3563 = vpop.f32.mrb[0].mxu0
        %v3564 = vadd.f32 0.0, %v3563
        %v3565 = vpop.f32.mrb[0].mxu0
        %3566 = vmatprep.mubr.f32.mxu0 0.0
        %3567 = vmatmul.mubr.f32.gmra.mrb[0].mxu0 %v3430
        %v3568 = vpop.f32.mrb[0].mxu0
        %v3569 = vadd.f32 0.0, %v3568
        %v3570 = vpop.f32.mrb[0].mxu0
        %3571 = vmatprep.mubr.f32.mxu0 0.0
        %3572 = vmatmul.mubr.f32.gmra.mrb[0].mxu0 %v3431
        %v3573 = vpop.f32.mrb[0].mxu0
        %v3574 = vadd.f32 0.0, %v3573
        %v3575 = vpop.f32.mrb[0].mxu0
        %3576 = vmatprep.mubr.f32.mxu0 0.0
        %3577 = vmatmul.mubr.f32.gmra.mrb[0].mxu0 %v3432
        %v3578 = vpop.f32.mrb[0].mxu0
        %v3579 = vadd.f32 0.0, %v3578
        %v3580 = vpop.f32.mrb[0].mxu0
        %3581 = vmatprep.mubr.f32.mxu0 0.0
        %3582 = vmatmul.mubr.f32.gmra.mrb[0].mxu0 %v3433
        %v3583 = vpop.f32.mrb[0].mxu0
        %v3584 = vadd.f32 0.0, %v3583
        %v3585 = vpop.f32.mrb[0].mxu0
        %3586 = vmatprep.mubr.f32.mxu0 0.0
        %3587 = vmatmul.mubr.f32.gmra.mrb[0].mxu0 %v3434
        %v3588 = vpop.f32.mrb[0].mxu0
        %v3589 = vadd.f32 0.0, %v3588
        %v3590 = vpop.f32.mrb[0].mxu0
        %3591 = vmatprep.mubr.f32.mxu0 0.0
        %3592 = vmatmul.mubr.f32.gmra.mrb[0].mxu0 %v3435
        %v3593 = vpop.f32.mrb[0].mxu0
        %v3594 = vadd.f32 0.0, %v3593
        %v3595 = vpop.f32.mrb[0].mxu0
        %3596 = vmatprep.mubr.f32.mxu0 0.0
        %3597 = vmatmul.mubr.f32.gmra.mrb[0].mxu0 %v3436
        %v3598 = vpop.f32.mrb[0].mxu0
        %v3599 = vadd.f32 0.0, %v3598
        %v3600 = vpop.f32.mrb[0].mxu0
        %3601 = vmatprep.mubr.f32.mxu0 0.0
        %3602 = vmatmul.mubr.f32.gmra.mrb[0].mxu0 %v3437
        %v3603 = vpop.f32.mrb[0].mxu0
        %v3604 = vadd.f32 0.0, %v3603
        %v3605 = vpop.f32.mrb[0].mxu0
        %3606 = vmatprep.mubr.f32.mxu0 0.0
        %3607 = vmatmul.mubr.f32.gmra.mrb[0].mxu0 %v3438
        %v3608 = vpop.f32.mrb[0].mxu0
        %v3609 = vadd.f32 0.0, %v3608
        %v3610 = vpop.f32.mrb[0].mxu0
        %3611 = vmatprep.mubr.f32.mxu0 0.0
        %3612 = vmatmul.mubr.f32.gmra.mrb[0].mxu0 %v3439
        %v3613 = vpop.f32.mrb[0].mxu0
        %v3614 = vadd.f32 0.0, %v3613
        %v3615 = vpop.f32.mrb[0].mxu0
        %3616 = vmatprep.mubr.f32.mxu0 0.0
        %3617 = vmatmul.mubr.f32.gmra.mrb[0].mxu0 %v3440
        %v3618 = vpop.f32.mrb[0].mxu0
        %v3619 = vadd.f32 0.0, %v3618
        %v3620 = vpop.f32.mrb[0].mxu0
        %3621 = vmatprep.mubr.f32.mxu0 0.0
        %3622 = vmatmul.mubr.f32.gmra.mrb[0].mxu0 %v3441
        %v3623 = vpop.f32.mrb[0].mxu0
        %v3624 = vadd.f32 0.0, %v3623
        %v3625 = vpop.f32.mrb[0].mxu0
        %3626 = vmatprep.mubr.f32.mxu0 0.0
        %3627 = vmatmul.mubr.f32.gmra.mrb[0].mxu0 %v3442
        %v3628 = vpop.f32.mrb[0].mxu0
        %v3629 = vadd.f32 0.0, %v3628
        %v3630 = vpop.f32.mrb[0].mxu0
        %3631 = vmatprep.mubr.f32.mxu0 0.0
        %3632 = vmatmul.mubr.f32.gmra.mrb[0].mxu0 %v3443
        %v3633 = vpop.f32.mrb[0].mxu0
        %v3634 = vadd.f32 0.0, %v3633
        %v3635 = vpop.f32.mrb[0].mxu0
        %3636 = vdwg.mxu0
        %v3638 = vsel %vm1372, %v3559, 0
        %v3641 = vsel %vm1372, %v3564, 0
        %v3644 = vsel %vm1372, %v3569, 0
        %v3647 = vsel %vm1372, %v3574, 0
        %v3650 = vsel %vm1372, %v3579, 0
        %v3653 = vsel %vm1372, %v3584, 0
        %v3656 = vsel %vm1372, %v3589, 0
        %v3659 = vsel %vm1372, %v3594, 0
        %v3662 = vsel %vm1372, %v3599, 0
        %v3665 = vsel %vm1372, %v3604, 0
        %v3668 = vsel %vm1372, %v3609, 0
        %v3671 = vsel %vm1372, %v3614, 0
        %v3674 = vsel %vm1372, %v3619, 0
        %v3677 = vsel %vm1372, %v3624, 0
        %v3680 = vsel %vm1372, %v3629, 0
        %v3683 = vsel %vm1372, %v3634, 0
        %3685 = vmatprep.subr.mxu0 0.0
        %3686 = vmatpush1.msra.mxu0 %v839
        %3687 = vmatprep.subr.mxu0 0.0
        %3688 = vmatpush1.msra.mxu0 0.0
        %3689 = vmatprep.subr.mxu0 0.0
        %3690 = vmatpush1.msra.mxu0 0.0
        %3691 = vmatprep.subr.mxu0 0.0
        %3692 = vmatpush1.msra.mxu0 0.0
        %3693 = vmatprep.subr.mxu0 0.0
        %3694 = vmatpush1.msra.mxu0 0.0
        %3695 = vmatprep.subr.mxu0 0.0
        %3696 = vmatpush1.msra.mxu0 0.0
        %3697 = vmatprep.subr.mxu0 0.0
        %3698 = vmatpush1.msra.mxu0 0.0
        %3699 = vmatprep.subr.mxu0 0.0
        %3700 = vmatpush1.msra.mxu0 0.0
        %3701 = vmatprep.subr.mxu0 0.0
        %3702 = vmatpush1.msra.mxu0 0.0
        %3703 = vmatprep.subr.mxu0 0.0
        %3704 = vmatpush1.msra.mxu0 0.0
        %3705 = vmatprep.subr.mxu0 0.0
        %3706 = vmatpush1.msra.mxu0 0.0
        %3707 = vmatprep.subr.mxu0 0.0
        %3708 = vmatpush1.msra.mxu0 0.0
        %3709 = vmatprep.subr.mxu0 0.0
        %3710 = vmatpush1.msra.mxu0 0.0
        %3711 = vmatprep.subr.mxu0 0.0
        %3712 = vmatpush1.msra.mxu0 0.0
        %3713 = vmatprep.subr.mxu0 0.0
        %3714 = vmatpush1.msra.mxu0 0.0
        %3715 = vmatprep.subr.mxu0 0.0
        %3716 = vmatpush1.msra.mxu0 0.0
        %3717 = vmatprep.subr.mxu0 0.0
        %3718 = vmatpush1.msra.mxu0 0.0
        %3719 = vmatprep.subr.mxu0 0.0
        %3720 = vmatpush1.msra.mxu0 0.0
        %3721 = vmatprep.subr.mxu0 0.0
        %3722 = vmatpush1.msra.mxu0 0.0
        %3723 = vmatprep.subr.mxu0 0.0
        %3724 = vmatpush1.msra.mxu0 0.0
        %3725 = vmatprep.subr.mxu0 0.0
        %3726 = vmatpush1.msra.mxu0 0.0
        %3727 = vmatprep.subr.mxu0 0.0
        %3728 = vmatpush1.msra.mxu0 0.0
        %3729 = vmatprep.subr.mxu0 0.0
        %3730 = vmatpush1.msra.mxu0 0.0
        %3731 = vmatprep.subr.mxu0 0.0
        %3732 = vmatpush1.msra.mxu0 0.0
        %3733 = vmatprep.subr.mxu0 0.0
        %3734 = vmatpush1.msra.mxu0 0.0
        %3735 = vmatprep.subr.mxu0 0.0
        %3736 = vmatpush1.msra.mxu0 0.0
        %3737 = vmatprep.subr.mxu0 0.0
        %3738 = vmatpush1.msra.mxu0 0.0
        %3739 = vmatprep.subr.mxu0 0.0
        %3740 = vmatpush1.msra.mxu0 0.0
        %3741 = vmatprep.subr.mxu0 0.0
        %3742 = vmatpush1.msra.mxu0 0.0
        %3743 = vmatprep.subr.mxu0 0.0
        %3744 = vmatpush1.msra.mxu0 0.0
        %3745 = vmatprep.subr.mxu0 0.0
        %3746 = vmatpush1.msra.mxu0 0.0
        %3747 = vmatprep.subr.mxu0 0.0
        %3748 = vmatpush1.msra.mxu0 0.0
        %3749 = vmatprep.mubr.f32.mxu0 0.0
        %3750 = vmatmul.mubr.f32.gmra.mrb[0].mxu0 %v3638
        %v3751 = vpop.f32.mrb[0].mxu0
        %v3752 = vadd.f32 0.0, %v3751
        %v3753 = vpop.f32.mrb[0].mxu0
        %3754 = vmatprep.mubr.f32.mxu0 0.0
        %3755 = vmatmul.mubr.f32.gmra.mrb[0].mxu0 %v3641
        %v3756 = vpop.f32.mrb[0].mxu0
        %v3757 = vadd.f32 0.0, %v3756
        %v3758 = vpop.f32.mrb[0].mxu0
        %3759 = vmatprep.mubr.f32.mxu0 0.0
        %3760 = vmatmul.mubr.f32.gmra.mrb[0].mxu0 %v3644
        %v3761 = vpop.f32.mrb[0].mxu0
        %v3762 = vadd.f32 0.0, %v3761
        %v3763 = vpop.f32.mrb[0].mxu0
        %3764 = vmatprep.mubr.f32.mxu0 0.0
        %3765 = vmatmul.mubr.f32.gmra.mrb[0].mxu0 %v3647
        %v3766 = vpop.f32.mrb[0].mxu0
        %v3767 = vadd.f32 0.0, %v3766
        %v3768 = vpop.f32.mrb[0].mxu0
        %3769 = vmatprep.mubr.f32.mxu0 0.0
        %3770 = vmatmul.mubr.f32.gmra.mrb[0].mxu0 %v3650
        %v3771 = vpop.f32.mrb[0].mxu0
        %v3772 = vadd.f32 0.0, %v3771
        %v3773 = vpop.f32.mrb[0].mxu0
        %3774 = vmatprep.mubr.f32.mxu0 0.0
        %3775 = vmatmul.mubr.f32.gmra.mrb[0].mxu0 %v3653
        %v3776 = vpop.f32.mrb[0].mxu0
        %v3777 = vadd.f32 0.0, %v3776
        %v3778 = vpop.f32.mrb[0].mxu0
        %3779 = vmatprep.mubr.f32.mxu0 0.0
        %3780 = vmatmul.mubr.f32.gmra.mrb[0].mxu0 %v3656
        %v3781 = vpop.f32.mrb[0].mxu0
        %v3782 = vadd.f32 0.0, %v3781
        %v3783 = vpop.f32.mrb[0].mxu0
        %3784 = vmatprep.mubr.f32.mxu0 0.0
        %3785 = vmatmul.mubr.f32.gmra.mrb[0].mxu0 %v3659
        %v3786 = vpop.f32.mrb[0].mxu0
        %v3787 = vadd.f32 0.0, %v3786
        %v3788 = vpop.f32.mrb[0].mxu0
        %3789 = vmatprep.mubr.f32.mxu0 0.0
        %3790 = vmatmul.mubr.f32.gmra.mrb[0].mxu0 %v3662
        %v3791 = vpop.f32.mrb[0].mxu0
        %v3792 = vadd.f32 0.0, %v3791
        %v3793 = vpop.f32.mrb[0].mxu0
        %3794 = vmatprep.mubr.f32.mxu0 0.0
        %3795 = vmatmul.mubr.f32.gmra.mrb[0].mxu0 %v3665
        %v3796 = vpop.f32.mrb[0].mxu0
        %v3797 = vadd.f32 0.0, %v3796
        %v3798 = vpop.f32.mrb[0].mxu0
        %3799 = vmatprep.mubr.f32.mxu0 0.0
        %3800 = vmatmul.mubr.f32.gmra.mrb[0].mxu0 %v3668
        %v3801 = vpop.f32.mrb[0].mxu0
        %v3802 = vadd.f32 0.0, %v3801
        %v3803 = vpop.f32.mrb[0].mxu0
        %3804 = vmatprep.mubr.f32.mxu0 0.0
        %3805 = vmatmul.mubr.f32.gmra.mrb[0].mxu0 %v3671
        %v3806 = vpop.f32.mrb[0].mxu0
        %v3807 = vadd.f32 0.0, %v3806
        %v3808 = vpop.f32.mrb[0].mxu0
        %3809 = vmatprep.mubr.f32.mxu0 0.0
        %3810 = vmatmul.mubr.f32.gmra.mrb[0].mxu0 %v3674
        %v3811 = vpop.f32.mrb[0].mxu0
        %v3812 = vadd.f32 0.0, %v3811
        %v3813 = vpop.f32.mrb[0].mxu0
        %3814 = vmatprep.mubr.f32.mxu0 0.0
        %3815 = vmatmul.mubr.f32.gmra.mrb[0].mxu0 %v3677
        %v3816 = vpop.f32.mrb[0].mxu0
        %v3817 = vadd.f32 0.0, %v3816
        %v3818 = vpop.f32.mrb[0].mxu0
        %3819 = vmatprep.mubr.f32.mxu0 0.0
        %3820 = vmatmul.mubr.f32.gmra.mrb[0].mxu0 %v3680
        %v3821 = vpop.f32.mrb[0].mxu0
        %v3822 = vadd.f32 0.0, %v3821
        %v3823 = vpop.f32.mrb[0].mxu0
        %3824 = vmatprep.mubr.f32.mxu0 0.0
        %3825 = vmatmul.mubr.f32.gmra.mrb[0].mxu0 %v3683
        %v3826 = vpop.f32.mrb[0].mxu0
        %v3827 = vadd.f32 0.0, %v3826
        %v3828 = vpop.f32.mrb[0].mxu0
        %3829 = vdwg.mxu0
        %v3830 = vadd.f32 %v2995, %v3752
        %v3831 = vadd.f32 %v2996, %v3757
        %v3832 = vadd.f32 %v2997, %v3762
        %v3833 = vadd.f32 %v2998, %v3767
        %v3834 = vadd.f32 %v2999, %v3772
        %v3835 = vadd.f32 %v3000, %v3777
        %v3836 = vadd.f32 %v3001, %v3782
        %v3837 = vadd.f32 %v3002, %v3787
        %v3838 = vadd.f32 %v3003, %v3792
        %v3839 = vadd.f32 %v3004, %v3797
        %v3840 = vadd.f32 %v3005, %v3802
        %v3841 = vadd.f32 %v3006, %v3807
        %v3842 = vadd.f32 %v3007, %v3812
        %v3843 = vadd.f32 %v3008, %v3817
        %v3844 = vadd.f32 %v3009, %v3822
        %v3845 = vadd.f32 %v3010, %v3827
        %3846 = vrot.lane.b32.xlu0 %v1280, 104
        %v3847 = vpop.permute.xlu0 %3846
        %3848 = vrot.lane.b32.xlu0 %v1286, 104
        %v3849 = vpop.permute.xlu0 %3848
        %3850 = vrot.lane.b32.xlu0 %v1292, 104
        %v3851 = vpop.permute.xlu0 %3850
        %3852 = vrot.lane.b32.xlu0 %v1298, 104
        %v3853 = vpop.permute.xlu0 %3852
        %3854 = vrot.lane.b32.xlu0 %v1304, 104
        %v3855 = vpop.permute.xlu0 %3854
        %3856 = vrot.lane.b32.xlu0 %v1310, 104
        %v3857 = vpop.permute.xlu0 %3856
        %3858 = vrot.lane.b32.xlu0 %v1316, 104
        %v3859 = vpop.permute.xlu0 %3858
        %3860 = vrot.lane.b32.xlu0 %v1322, 104
        %v3861 = vpop.permute.xlu0 %3860
        %3862 = vrot.lane.b32.xlu0 %v1328, 104
        %v3863 = vpop.permute.xlu0 %3862
        %3864 = vrot.lane.b32.xlu0 %v1334, 104
        %v3865 = vpop.permute.xlu0 %3864
        %3866 = vrot.lane.b32.xlu0 %v1340, 104
        %v3867 = vpop.permute.xlu0 %3866
        %3868 = vrot.lane.b32.xlu0 %v1346, 104
        %v3869 = vpop.permute.xlu0 %3868
        %3870 = vrot.lane.b32.xlu0 %v1352, 104
        %v3871 = vpop.permute.xlu0 %3870
        %3872 = vrot.lane.b32.xlu0 %v1358, 104
        %v3873 = vpop.permute.xlu0 %3872
        %3874 = vrot.lane.b32.xlu0 %v1364, 104
        %v3875 = vpop.permute.xlu0 %3874
        %3876 = vrot.lane.b32.xlu0 %v1370, 104
        %v3877 = vpop.permute.xlu0 %3876
        %3878 = vrot.lane.b32.xlu0 %v1278, 104
        %v3879 = vpop.permute.xlu0 %3878
        %3880 = vrot.lane.b32.xlu0 %v1284, 104
        %v3881 = vpop.permute.xlu0 %3880
        %3882 = vrot.lane.b32.xlu0 %v1290, 104
        %v3883 = vpop.permute.xlu0 %3882
        %3884 = vrot.lane.b32.xlu0 %v1296, 104
        %v3885 = vpop.permute.xlu0 %3884
        %3886 = vrot.lane.b32.xlu0 %v1302, 104
        %v3887 = vpop.permute.xlu0 %3886
        %3888 = vrot.lane.b32.xlu0 %v1308, 104
        %v3889 = vpop.permute.xlu0 %3888
        %3890 = vrot.lane.b32.xlu0 %v1314, 104
        %v3891 = vpop.permute.xlu0 %3890
        %3892 = vrot.lane.b32.xlu0 %v1320, 104
        %v3893 = vpop.permute.xlu0 %3892
        %3894 = vrot.lane.b32.xlu0 %v1326, 104
        %v3895 = vpop.permute.xlu0 %3894
        %3896 = vrot.lane.b32.xlu0 %v1332, 104
        %v3897 = vpop.permute.xlu0 %3896
        %3898 = vrot.lane.b32.xlu0 %v1338, 104
        %v3899 = vpop.permute.xlu0 %3898
        %3900 = vrot.lane.b32.xlu0 %v1344, 104
        %v3901 = vpop.permute.xlu0 %3900
        %3902 = vrot.lane.b32.xlu0 %v1350, 104
        %v3903 = vpop.permute.xlu0 %3902
        %3904 = vrot.lane.b32.xlu0 %v1356, 104
        %v3905 = vpop.permute.xlu0 %3904
        %3906 = vrot.lane.b32.xlu0 %v1362, 104
        %v3907 = vpop.permute.xlu0 %3906
        %3908 = vrot.lane.b32.xlu0 %v1368, 104
        %v3909 = vpop.permute.xlu0 %3908
        %v3910 = vsel %vm1372, %v3847, 0
        %v3912 = vsel %vm1372, %v3849, 0
        %v3914 = vsel %vm1372, %v3851, 0
        %v3916 = vsel %vm1372, %v3853, 0
        %v3918 = vsel %vm1372, %v3855, 0
        %v3920 = vsel %vm1372, %v3857, 0
        %v3922 = vsel %vm1372, %v3859, 0
        %v3924 = vsel %vm1372, %v3861, 0
        %v3926 = vsel %vm1372, %v3863, 0
        %v3928 = vsel %vm1372, %v3865, 0
        %v3930 = vsel %vm1372, %v3867, 0
        %v3932 = vsel %vm1372, %v3869, 0
        %v3934 = vsel %vm1372, %v3871, 0
        %v3936 = vsel %vm1372, %v3873, 0
        %v3938 = vsel %vm1372, %v3875, 0
        %v3940 = vsel %vm1372, %v3877, 0
        %v3942 = vsel %vm1372, %v3879, 0
        %v3944 = vsel %vm1372, %v3881, 0
        %v3946 = vsel %vm1372, %v3883, 0
        %v3948 = vsel %vm1372, %v3885, 0
        %v3950 = vsel %vm1372, %v3887, 0
        %v3952 = vsel %vm1372, %v3889, 0
        %v3954 = vsel %vm1372, %v3891, 0
        %v3956 = vsel %vm1372, %v3893, 0
        %v3958 = vsel %vm1372, %v3895, 0
        %v3960 = vsel %vm1372, %v3897, 0
        %v3962 = vsel %vm1372, %v3899, 0
        %v3964 = vsel %vm1372, %v3901, 0
        %v3966 = vsel %vm1372, %v3903, 0
        %v3968 = vsel %vm1372, %v3905, 0
        %v3970 = vsel %vm1372, %v3907, 0
        %v3972 = vsel %vm1372, %v3909, 0
        %3974 = vmatprep.subr.mxu0 0.0
        %3975 = vmatpush1.xpose.msra.mxu0 %v3942
        %3976 = vmatprep.subr.mxu0 0.0
        %3977 = vmatpush1.xpose.msra.mxu0 %v3944
        %3978 = vmatprep.subr.mxu0 0.0
        %3979 = vmatpush1.xpose.msra.mxu0 %v3946
        %3980 = vmatprep.subr.mxu0 0.0
        %3981 = vmatpush1.xpose.msra.mxu0 %v3948
        %3982 = vmatprep.subr.mxu0 0.0
        %3983 = vmatpush1.xpose.msra.mxu0 %v3950
        %3984 = vmatprep.subr.mxu0 0.0
        %3985 = vmatpush1.xpose.msra.mxu0 %v3952
        %3986 = vmatprep.subr.mxu0 0.0
        %3987 = vmatpush1.xpose.msra.mxu0 %v3954
        %3988 = vmatprep.subr.mxu0 0.0
        %3989 = vmatpush1.xpose.msra.mxu0 %v3956
        %3990 = vmatprep.subr.mxu0 0.0
        %3991 = vmatpush1.xpose.msra.mxu0 %v3958
        %3992 = vmatprep.subr.mxu0 0.0
        %3993 = vmatpush1.xpose.msra.mxu0 %v3960
        %3994 = vmatprep.subr.mxu0 0.0
        %3995 = vmatpush1.xpose.msra.mxu0 %v3962
        %3996 = vmatprep.subr.mxu0 0.0
        %3997 = vmatpush1.xpose.msra.mxu0 %v3964
        %3998 = vmatprep.subr.mxu0 0.0
        %3999 = vmatpush1.xpose.msra.mxu0 %v3966
        %4000 = vmatprep.subr.mxu0 0.0
        %4001 = vmatpush1.xpose.msra.mxu0 %v3968
        %4002 = vmatprep.subr.mxu0 0.0
        %4003 = vmatpush1.xpose.msra.mxu0 %v3970
        %4004 = vmatprep.subr.mxu0 0.0
        %4005 = vmatpush1.xpose.msra.mxu0 %v3972
        %4006 = vmatprep.subr.mxu0 0.0
        %4007 = vmatpush1.xpose.msra.mxu0 0.0
        %4008 = vmatprep.subr.mxu0 0.0
        %4009 = vmatpush1.xpose.msra.mxu0 0.0
        %4010 = vmatprep.subr.mxu0 0.0
        %4011 = vmatpush1.xpose.msra.mxu0 0.0
        %4012 = vmatprep.subr.mxu0 0.0
        %4013 = vmatpush1.xpose.msra.mxu0 0.0
        %4014 = vmatprep.subr.mxu0 0.0
        %4015 = vmatpush1.xpose.msra.mxu0 0.0
        %4016 = vmatprep.subr.mxu0 0.0
        %4017 = vmatpush1.xpose.msra.mxu0 0.0
        %4018 = vmatprep.subr.mxu0 0.0
        %4019 = vmatpush1.xpose.msra.mxu0 0.0
        %4020 = vmatprep.subr.mxu0 0.0
        %4021 = vmatpush1.xpose.msra.mxu0 0.0
        %4022 = vmatprep.subr.mxu0 0.0
        %4023 = vmatpush1.xpose.msra.mxu0 0.0
        %4024 = vmatprep.subr.mxu0 0.0
        %4025 = vmatpush1.xpose.msra.mxu0 0.0
        %4026 = vmatprep.subr.mxu0 0.0
        %4027 = vmatpush1.xpose.msra.mxu0 0.0
        %4028 = vmatprep.subr.mxu0 0.0
        %4029 = vmatpush1.xpose.msra.mxu0 0.0
        %4030 = vmatprep.subr.mxu0 0.0
        %4031 = vmatpush1.xpose.msra.mxu0 0.0
        %4032 = vmatprep.subr.mxu0 0.0
        %4033 = vmatpush1.xpose.msra.mxu0 0.0
        %4034 = vmatprep.subr.mxu0 0.0
        %4035 = vmatpush1.xpose.msra.mxu0 0.0
        %4036 = vmatprep.subr.mxu0 0.0
        %4037 = vmatpush1.xpose.msra.mxu0 0.0
        %4038 = vmatprep.mubr.f32.mxu0 0.0
        %4039 = vmatmul.mubr.f32.gmra.mrb[0].mxu0 %v3910
        %v4040 = vpop.f32.mrb[0].mxu0
        %v4041 = vadd.f32 0.0, %v4040
        %v4042 = vpop.f32.mrb[0].mxu0
        %4043 = vmatprep.mubr.f32.mxu0 0.0
        %4044 = vmatmul.mubr.f32.gmra.mrb[0].mxu0 %v3912
        %v4045 = vpop.f32.mrb[0].mxu0
        %v4046 = vadd.f32 0.0, %v4045
        %v4047 = vpop.f32.mrb[0].mxu0
        %4048 = vmatprep.mubr.f32.mxu0 0.0
        %4049 = vmatmul.mubr.f32.gmra.mrb[0].mxu0 %v3914
        %v4050 = vpop.f32.mrb[0].mxu0
        %v4051 = vadd.f32 0.0, %v4050
        %v4052 = vpop.f32.mrb[0].mxu0
        %4053 = vmatprep.mubr.f32.mxu0 0.0
        %4054 = vmatmul.mubr.f32.gmra.mrb[0].mxu0 %v3916
        %v4055 = vpop.f32.mrb[0].mxu0
        %v4056 = vadd.f32 0.0, %v4055
        %v4057 = vpop.f32.mrb[0].mxu0
        %4058 = vmatprep.mubr.f32.mxu0 0.0
        %4059 = vmatmul.mubr.f32.gmra.mrb[0].mxu0 %v3918
        %v4060 = vpop.f32.mrb[0].mxu0
        %v4061 = vadd.f32 0.0, %v4060
        %v4062 = vpop.f32.mrb[0].mxu0
        %4063 = vmatprep.mubr.f32.mxu0 0.0
        %4064 = vmatmul.mubr.f32.gmra.mrb[0].mxu0 %v3920
        %v4065 = vpop.f32.mrb[0].mxu0
        %v4066 = vadd.f32 0.0, %v4065
        %v4067 = vpop.f32.mrb[0].mxu0
        %4068 = vmatprep.mubr.f32.mxu0 0.0
        %4069 = vmatmul.mubr.f32.gmra.mrb[0].mxu0 %v3922
        %v4070 = vpop.f32.mrb[0].mxu0
        %v4071 = vadd.f32 0.0, %v4070
        %v4072 = vpop.f32.mrb[0].mxu0
        %4073 = vmatprep.mubr.f32.mxu0 0.0
        %4074 = vmatmul.mubr.f32.gmra.mrb[0].mxu0 %v3924
        %v4075 = vpop.f32.mrb[0].mxu0
        %v4076 = vadd.f32 0.0, %v4075
        %v4077 = vpop.f32.mrb[0].mxu0
        %4078 = vmatprep.mubr.f32.mxu0 0.0
        %4079 = vmatmul.mubr.f32.gmra.mrb[0].mxu0 %v3926
        %v4080 = vpop.f32.mrb[0].mxu0
        %v4081 = vadd.f32 0.0, %v4080
        %v4082 = vpop.f32.mrb[0].mxu0
        %4083 = vmatprep.mubr.f32.mxu0 0.0
        %4084 = vmatmul.mubr.f32.gmra.mrb[0].mxu0 %v3928
        %v4085 = vpop.f32.mrb[0].mxu0
        %v4086 = vadd.f32 0.0, %v4085
        %v4087 = vpop.f32.mrb[0].mxu0
        %4088 = vmatprep.mubr.f32.mxu0 0.0
        %4089 = vmatmul.mubr.f32.gmra.mrb[0].mxu0 %v3930
        %v4090 = vpop.f32.mrb[0].mxu0
        %v4091 = vadd.f32 0.0, %v4090
        %v4092 = vpop.f32.mrb[0].mxu0
        %4093 = vmatprep.mubr.f32.mxu0 0.0
        %4094 = vmatmul.mubr.f32.gmra.mrb[0].mxu0 %v3932
        %v4095 = vpop.f32.mrb[0].mxu0
        %v4096 = vadd.f32 0.0, %v4095
        %v4097 = vpop.f32.mrb[0].mxu0
        %4098 = vmatprep.mubr.f32.mxu0 0.0
        %4099 = vmatmul.mubr.f32.gmra.mrb[0].mxu0 %v3934
        %v4100 = vpop.f32.mrb[0].mxu0
        %v4101 = vadd.f32 0.0, %v4100
        %v4102 = vpop.f32.mrb[0].mxu0
        %4103 = vmatprep.mubr.f32.mxu0 0.0
        %4104 = vmatmul.mubr.f32.gmra.mrb[0].mxu0 %v3936
        %v4105 = vpop.f32.mrb[0].mxu0
        %v4106 = vadd.f32 0.0, %v4105
        %v4107 = vpop.f32.mrb[0].mxu0
        %4108 = vmatprep.mubr.f32.mxu0 0.0
        %4109 = vmatmul.mubr.f32.gmra.mrb[0].mxu0 %v3938
        %v4110 = vpop.f32.mrb[0].mxu0
        %v4111 = vadd.f32 0.0, %v4110
        %v4112 = vpop.f32.mrb[0].mxu0
        %4113 = vmatprep.mubr.f32.mxu0 0.0
        %4114 = vmatmul.mubr.f32.gmra.mrb[0].mxu0 %v3940
        %v4115 = vpop.f32.mrb[0].mxu0
        %v4116 = vadd.f32 0.0, %v4115
        %v4117 = vpop.f32.mrb[0].mxu0
        %4118 = vdwg.mxu0
        %v4119 = vmul.f32 %v4041, 0.35355338
        %v4120 = vmul.f32 %v4046, 0.35355338
        %v4121 = vmul.f32 %v4051, 0.35355338
        %v4122 = vmul.f32 %v4056, 0.35355338
        %v4123 = vmul.f32 %v4061, 0.35355338
        %v4124 = vmul.f32 %v4066, 0.35355338
        %v4125 = vmul.f32 %v4071, 0.35355338
        %v4126 = vmul.f32 %v4076, 0.35355338
        %v4127 = vmul.f32 %v4081, 0.35355338
        %v4128 = vmul.f32 %v4086, 0.35355338
        %v4129 = vmul.f32 %v4091, 0.35355338
        %v4130 = vmul.f32 %v4096, 0.35355338
        %v4131 = vmul.f32 %v4101, 0.35355338
        %v4132 = vmul.f32 %v4106, 0.35355338
        %v4133 = vmul.f32 %v4111, 0.35355338
        %v4134 = vmul.f32 %v4116, 0.35355338
        %4135 = vmax.xlane.f32.xlu0 %v4119
        %v4136 = vpop.xlane.xlu0 %4135
        %4137 = vmax.xlane.f32.xlu0 %v4120
        %v4138 = vpop.xlane.xlu0 %4137
        %4139 = vmax.xlane.f32.xlu0 %v4121
        %v4140 = vpop.xlane.xlu0 %4139
        %4141 = vmax.xlane.f32.xlu0 %v4122
        %v4142 = vpop.xlane.xlu0 %4141
        %4143 = vmax.xlane.f32.xlu0 %v4123
        %v4144 = vpop.xlane.xlu0 %4143
        %4145 = vmax.xlane.f32.xlu0 %v4124
        %v4146 = vpop.xlane.xlu0 %4145
        %4147 = vmax.xlane.f32.xlu0 %v4125
        %v4148 = vpop.xlane.xlu0 %4147
        %4149 = vmax.xlane.f32.xlu0 %v4126
        %v4150 = vpop.xlane.xlu0 %4149
        %4151 = vmax.xlane.f32.xlu0 %v4127
        %v4152 = vpop.xlane.xlu0 %4151
        %4153 = vmax.xlane.f32.xlu0 %v4128
        %v4154 = vpop.xlane.xlu0 %4153
        %4155 = vmax.xlane.f32.xlu0 %v4129
        %v4156 = vpop.xlane.xlu0 %4155
        %4157 = vmax.xlane.f32.xlu0 %v4130
        %v4158 = vpop.xlane.xlu0 %4157
        %4159 = vmax.xlane.f32.xlu0 %v4131
        %v4160 = vpop.xlane.xlu0 %4159
        %4161 = vmax.xlane.f32.xlu0 %v4132
        %v4162 = vpop.xlane.xlu0 %4161
        %4163 = vmax.xlane.f32.xlu0 %v4133
        %v4164 = vpop.xlane.xlu0 %4163
        %4165 = vmax.xlane.f32.xlu0 %v4134
        %v4166 = vpop.xlane.xlu0 %4165
        %v4167 = vsub.f32 %v4119, %v4136
        %v4168 = vsub.f32 %v4120, %v4138
        %v4169 = vsub.f32 %v4121, %v4140
        %v4170 = vsub.f32 %v4122, %v4142
        %v4171 = vsub.f32 %v4123, %v4144
        %v4172 = vsub.f32 %v4124, %v4146
        %v4173 = vsub.f32 %v4125, %v4148
        %v4174 = vsub.f32 %v4126, %v4150
        %v4175 = vsub.f32 %v4127, %v4152
        %v4176 = vsub.f32 %v4128, %v4154
        %v4177 = vsub.f32 %v4129, %v4156
        %v4178 = vsub.f32 %v4130, %v4158
        %v4179 = vsub.f32 %v4131, %v4160
        %v4180 = vsub.f32 %v4132, %v4162
        %v4181 = vsub.f32 %v4133, %v4164
        %v4182 = vsub.f32 %v4134, %v4166
        %v4183 = vmul.f32 %v4167, 1.442695
        %v4184 = vpow.pop %v4183
        %v4185 = vmul.f32 %v4168, 1.442695
        %v4186 = vpow.pop %v4185
        %v4187 = vmul.f32 %v4169, 1.442695
        %v4188 = vpow.pop %v4187
        %v4189 = vmul.f32 %v4170, 1.442695
        %v4190 = vpow.pop %v4189
        %v4191 = vmul.f32 %v4171, 1.442695
        %v4192 = vpow.pop %v4191
        %v4193 = vmul.f32 %v4172, 1.442695
        %v4194 = vpow.pop %v4193
        %v4195 = vmul.f32 %v4173, 1.442695
        %v4196 = vpow.pop %v4195
        %v4197 = vmul.f32 %v4174, 1.442695
        %v4198 = vpow.pop %v4197
        %v4199 = vmul.f32 %v4175, 1.442695
        %v4200 = vpow.pop %v4199
        %v4201 = vmul.f32 %v4176, 1.442695
        %v4202 = vpow.pop %v4201
        %v4203 = vmul.f32 %v4177, 1.442695
        %v4204 = vpow.pop %v4203
        %v4205 = vmul.f32 %v4178, 1.442695
        %v4206 = vpow.pop %v4205
        %v4207 = vmul.f32 %v4179, 1.442695
        %v4208 = vpow.pop %v4207
        %v4209 = vmul.f32 %v4180, 1.442695
        %v4210 = vpow.pop %v4209
        %v4211 = vmul.f32 %v4181, 1.442695
        %v4212 = vpow.pop %v4211
        %v4213 = vmul.f32 %v4182, 1.442695
        %v4214 = vpow.pop %v4213
        %4215 = vadd.xlane.f32.xlu0 %v4184
        %v4216 = vpop.xlane.xlu0 %4215
        %4217 = vadd.xlane.f32.xlu0 %v4186
        %v4218 = vpop.xlane.xlu0 %4217
        %4219 = vadd.xlane.f32.xlu0 %v4188
        %v4220 = vpop.xlane.xlu0 %4219
        %4221 = vadd.xlane.f32.xlu0 %v4190
        %v4222 = vpop.xlane.xlu0 %4221
        %4223 = vadd.xlane.f32.xlu0 %v4192
        %v4224 = vpop.xlane.xlu0 %4223
        %4225 = vadd.xlane.f32.xlu0 %v4194
        %v4226 = vpop.xlane.xlu0 %4225
        %4227 = vadd.xlane.f32.xlu0 %v4196
        %v4228 = vpop.xlane.xlu0 %4227
        %4229 = vadd.xlane.f32.xlu0 %v4198
        %v4230 = vpop.xlane.xlu0 %4229
        %4231 = vadd.xlane.f32.xlu0 %v4200
        %v4232 = vpop.xlane.xlu0 %4231
        %4233 = vadd.xlane.f32.xlu0 %v4202
        %v4234 = vpop.xlane.xlu0 %4233
        %4235 = vadd.xlane.f32.xlu0 %v4204
        %v4236 = vpop.xlane.xlu0 %4235
        %4237 = vadd.xlane.f32.xlu0 %v4206
        %v4238 = vpop.xlane.xlu0 %4237
        %4239 = vadd.xlane.f32.xlu0 %v4208
        %v4240 = vpop.xlane.xlu0 %4239
        %4241 = vadd.xlane.f32.xlu0 %v4210
        %v4242 = vpop.xlane.xlu0 %4241
        %4243 = vadd.xlane.f32.xlu0 %v4212
        %v4244 = vpop.xlane.xlu0 %4243
        %4245 = vadd.xlane.f32.xlu0 %v4214
        %v4246 = vpop.xlane.xlu0 %4245
        %v4247 = vrcp.pop %v4216
        %v4248 = vrcp.pop %v4218
        %v4249 = vrcp.pop %v4220
        %v4250 = vrcp.pop %v4222
        %v4251 = vrcp.pop %v4224
        %v4252 = vrcp.pop %v4226
        %v4253 = vrcp.pop %v4228
        %v4254 = vrcp.pop %v4230
        %v4255 = vrcp.pop %v4232
        %v4256 = vrcp.pop %v4234
        %v4257 = vrcp.pop %v4236
        %v4258 = vrcp.pop %v4238
        %v4259 = vrcp.pop %v4240
        %v4260 = vrcp.pop %v4242
        %v4261 = vrcp.pop %v4244
        %v4262 = vrcp.pop %v4246
        %v4263 = vmul.f32 %v4184, %v4247
        %v4264 = vmul.f32 %v4186, %v4248
        %v4265 = vmul.f32 %v4188, %v4249
        %v4266 = vmul.f32 %v4190, %v4250
        %v4267 = vmul.f32 %v4192, %v4251
        %v4268 = vmul.f32 %v4194, %v4252
        %v4269 = vmul.f32 %v4196, %v4253
        %v4270 = vmul.f32 %v4198, %v4254
        %v4271 = vmul.f32 %v4200, %v4255
        %v4272 = vmul.f32 %v4202, %v4256
        %v4273 = vmul.f32 %v4204, %v4257
        %v4274 = vmul.f32 %v4206, %v4258
        %v4275 = vmul.f32 %v4208, %v4259
        %v4276 = vmul.f32 %v4210, %v4260
        %v4277 = vmul.f32 %v4212, %v4261
        %v4278 = vmul.f32 %v4214, %v4262
        %4279 = vrot.lane.b32.xlu0 %v1278, 40
        %v4280 = vpop.permute.xlu0 %4279
        %4281 = vrot.lane.b32.xlu0 %v1284, 40
        %v4282 = vpop.permute.xlu0 %4281
        %4283 = vrot.lane.b32.xlu0 %v1290, 40
        %v4284 = vpop.permute.xlu0 %4283
        %4285 = vrot.lane.b32.xlu0 %v1296, 40
        %v4286 = vpop.permute.xlu0 %4285
        %4287 = vrot.lane.b32.xlu0 %v1302, 40
        %v4288 = vpop.permute.xlu0 %4287
        %4289 = vrot.lane.b32.xlu0 %v1308, 40
        %v4290 = vpop.permute.xlu0 %4289
        %4291 = vrot.lane.b32.xlu0 %v1314, 40
        %v4292 = vpop.permute.xlu0 %4291
        %4293 = vrot.lane.b32.xlu0 %v1320, 40
        %v4294 = vpop.permute.xlu0 %4293
        %4295 = vrot.lane.b32.xlu0 %v1326, 40
        %v4296 = vpop.permute.xlu0 %4295
        %4297 = vrot.lane.b32.xlu0 %v1332, 40
        %v4298 = vpop.permute.xlu0 %4297
        %4299 = vrot.lane.b32.xlu0 %v1338, 40
        %v4300 = vpop.permute.xlu0 %4299
        %4301 = vrot.lane.b32.xlu0 %v1344, 40
        %v4302 = vpop.permute.xlu0 %4301
        %4303 = vrot.lane.b32.xlu0 %v1350, 40
        %v4304 = vpop.permute.xlu0 %4303
        %4305 = vrot.lane.b32.xlu0 %v1356, 40
        %v4306 = vpop.permute.xlu0 %4305
        %4307 = vrot.lane.b32.xlu0 %v1362, 40
        %v4308 = vpop.permute.xlu0 %4307
        %4309 = vrot.lane.b32.xlu0 %v1368, 40
        %v4310 = vpop.permute.xlu0 %4309
        %4327 = vmatprep.subr.mxu0 0.0
        %4328 = vmatpush1.msra.mxu0 %v4280
        %4329 = vmatprep.subr.mxu0 0.0
        %4330 = vmatpush1.msra.mxu0 %v4282
        %4331 = vmatprep.subr.mxu0 0.0
        %4332 = vmatpush1.msra.mxu0 %v4284
        %4333 = vmatprep.subr.mxu0 0.0
        %4334 = vmatpush1.msra.mxu0 %v4286
        %4335 = vmatprep.subr.mxu0 0.0
        %4336 = vmatpush1.msra.mxu0 %v4288
        %4337 = vmatprep.subr.mxu0 0.0
        %4338 = vmatpush1.msra.mxu0 %v4290
        %4339 = vmatprep.subr.mxu0 0.0
        %4340 = vmatpush1.msra.mxu0 %v4292
        %4341 = vmatprep.subr.mxu0 0.0
        %4342 = vmatpush1.msra.mxu0 %v4294
        %4343 = vmatprep.subr.mxu0 0.0
        %4344 = vmatpush1.msra.mxu0 %v4296
        %4345 = vmatprep.subr.mxu0 0.0
        %4346 = vmatpush1.msra.mxu0 %v4298
        %4347 = vmatprep.subr.mxu0 0.0
        %4348 = vmatpush1.msra.mxu0 %v4300
        %4349 = vmatprep.subr.mxu0 0.0
        %4350 = vmatpush1.msra.mxu0 %v4302
        %4351 = vmatprep.subr.mxu0 0.0
        %4352 = vmatpush1.msra.mxu0 %v4304
        %4353 = vmatprep.subr.mxu0 0.0
        %4354 = vmatpush1.msra.mxu0 %v4306
        %4355 = vmatprep.subr.mxu0 0.0
        %4356 = vmatpush1.msra.mxu0 %v4308
        %4357 = vmatprep.subr.mxu0 0.0
        %4358 = vmatpush1.msra.mxu0 %v4310
        %4359 = vmatprep.subr.mxu0 0.0
        %4360 = vmatpush1.msra.mxu0 0.0
        %4361 = vmatprep.subr.mxu0 0.0
        %4362 = vmatpush1.msra.mxu0 0.0
        %4363 = vmatprep.subr.mxu0 0.0
        %4364 = vmatpush1.msra.mxu0 0.0
        %4365 = vmatprep.subr.mxu0 0.0
        %4366 = vmatpush1.msra.mxu0 0.0
        %4367 = vmatprep.subr.mxu0 0.0
        %4368 = vmatpush1.msra.mxu0 0.0
        %4369 = vmatprep.subr.mxu0 0.0
        %4370 = vmatpush1.msra.mxu0 0.0
        %4371 = vmatprep.subr.mxu0 0.0
        %4372 = vmatpush1.msra.mxu0 0.0
        %4373 = vmatprep.subr.mxu0 0.0
        %4374 = vmatpush1.msra.mxu0 0.0
        %4375 = vmatprep.subr.mxu0 0.0
        %4376 = vmatpush1.msra.mxu0 0.0
        %4377 = vmatprep.subr.mxu0 0.0
        %4378 = vmatpush1.msra.mxu0 0.0
        %4379 = vmatprep.subr.mxu0 0.0
        %4380 = vmatpush1.msra.mxu0 0.0
        %4381 = vmatprep.subr.mxu0 0.0
        %4382 = vmatpush1.msra.mxu0 0.0
        %4383 = vmatprep.subr.mxu0 0.0
        %4384 = vmatpush1.msra.mxu0 0.0
        %4385 = vmatprep.subr.mxu0 0.0
        %4386 = vmatpush1.msra.mxu0 0.0
        %4387 = vmatprep.subr.mxu0 0.0
        %4388 = vmatpush1.msra.mxu0 0.0
        %4389 = vmatprep.subr.mxu0 0.0
        %4390 = vmatpush1.msra.mxu0 0.0
        %4391 = vmatprep.mubr.f32.mxu0 0.0
        %4392 = vmatmul.mubr.f32.gmra.mrb[0].mxu0 %v4263
        %v4393 = vpop.f32.mrb[0].mxu0
        %v4394 = vadd.f32 0.0, %v4393
        %v4395 = vpop.f32.mrb[0].mxu0
        %4396 = vmatprep.mubr.f32.mxu0 0.0
        %4397 = vmatmul.mubr.f32.gmra.mrb[0].mxu0 %v4264
        %v4398 = vpop.f32.mrb[0].mxu0
        %v4399 = vadd.f32 0.0, %v4398
        %v4400 = vpop.f32.mrb[0].mxu0
        %4401 = vmatprep.mubr.f32.mxu0 0.0
        %4402 = vmatmul.mubr.f32.gmra.mrb[0].mxu0 %v4265
        %v4403 = vpop.f32.mrb[0].mxu0
        %v4404 = vadd.f32 0.0, %v4403
        %v4405 = vpop.f32.mrb[0].mxu0
        %4406 = vmatprep.mubr.f32.mxu0 0.0
        %4407 = vmatmul.mubr.f32.gmra.mrb[0].mxu0 %v4266
        %v4408 = vpop.f32.mrb[0].mxu0
        %v4409 = vadd.f32 0.0, %v4408
        %v4410 = vpop.f32.mrb[0].mxu0
        %4411 = vmatprep.mubr.f32.mxu0 0.0
        %4412 = vmatmul.mubr.f32.gmra.mrb[0].mxu0 %v4267
        %v4413 = vpop.f32.mrb[0].mxu0
        %v4414 = vadd.f32 0.0, %v4413
        %v4415 = vpop.f32.mrb[0].mxu0
        %4416 = vmatprep.mubr.f32.mxu0 0.0
        %4417 = vmatmul.mubr.f32.gmra.mrb[0].mxu0 %v4268
        %v4418 = vpop.f32.mrb[0].mxu0
        %v4419 = vadd.f32 0.0, %v4418
        %v4420 = vpop.f32.mrb[0].mxu0
        %4421 = vmatprep.mubr.f32.mxu0 0.0
        %4422 = vmatmul.mubr.f32.gmra.mrb[0].mxu0 %v4269
        %v4423 = vpop.f32.mrb[0].mxu0
        %v4424 = vadd.f32 0.0, %v4423
        %v4425 = vpop.f32.mrb[0].mxu0
        %4426 = vmatprep.mubr.f32.mxu0 0.0
        %4427 = vmatmul.mubr.f32.gmra.mrb[0].mxu0 %v4270
        %v4428 = vpop.f32.mrb[0].mxu0
        %v4429 = vadd.f32 0.0, %v4428
        %v4430 = vpop.f32.mrb[0].mxu0
        %4431 = vmatprep.mubr.f32.mxu0 0.0
        %4432 = vmatmul.mubr.f32.gmra.mrb[0].mxu0 %v4271
        %v4433 = vpop.f32.mrb[0].mxu0
        %v4434 = vadd.f32 0.0, %v4433
        %v4435 = vpop.f32.mrb[0].mxu0
        %4436 = vmatprep.mubr.f32.mxu0 0.0
        %4437 = vmatmul.mubr.f32.gmra.mrb[0].mxu0 %v4272
        %v4438 = vpop.f32.mrb[0].mxu0
        %v4439 = vadd.f32 0.0, %v4438
        %v4440 = vpop.f32.mrb[0].mxu0
        %4441 = vmatprep.mubr.f32.mxu0 0.0
        %4442 = vmatmul.mubr.f32.gmra.mrb[0].mxu0 %v4273
        %v4443 = vpop.f32.mrb[0].mxu0
        %v4444 = vadd.f32 0.0, %v4443
        %v4445 = vpop.f32.mrb[0].mxu0
        %4446 = vmatprep.mubr.f32.mxu0 0.0
        %4447 = vmatmul.mubr.f32.gmra.mrb[0].mxu0 %v4274
        %v4448 = vpop.f32.mrb[0].mxu0
        %v4449 = vadd.f32 0.0, %v4448
        %v4450 = vpop.f32.mrb[0].mxu0
        %4451 = vmatprep.mubr.f32.mxu0 0.0
        %4452 = vmatmul.mubr.f32.gmra.mrb[0].mxu0 %v4275
        %v4453 = vpop.f32.mrb[0].mxu0
        %v4454 = vadd.f32 0.0, %v4453
        %v4455 = vpop.f32.mrb[0].mxu0
        %4456 = vmatprep.mubr.f32.mxu0 0.0
        %4457 = vmatmul.mubr.f32.gmra.mrb[0].mxu0 %v4276
        %v4458 = vpop.f32.mrb[0].mxu0
        %v4459 = vadd.f32 0.0, %v4458
        %v4460 = vpop.f32.mrb[0].mxu0
        %4461 = vmatprep.mubr.f32.mxu0 0.0
        %4462 = vmatmul.mubr.f32.gmra.mrb[0].mxu0 %v4277
        %v4463 = vpop.f32.mrb[0].mxu0
        %v4464 = vadd.f32 0.0, %v4463
        %v4465 = vpop.f32.mrb[0].mxu0
        %4466 = vmatprep.mubr.f32.mxu0 0.0
        %4467 = vmatmul.mubr.f32.gmra.mrb[0].mxu0 %v4278
        %v4468 = vpop.f32.mrb[0].mxu0
        %v4469 = vadd.f32 0.0, %v4468
        %v4470 = vpop.f32.mrb[0].mxu0
        %4471 = vdwg.mxu0
        %v4473 = vsel %vm1372, %v4394, 0
        %v4476 = vsel %vm1372, %v4399, 0
        %v4479 = vsel %vm1372, %v4404, 0
        %v4482 = vsel %vm1372, %v4409, 0
        %v4485 = vsel %vm1372, %v4414, 0
        %v4488 = vsel %vm1372, %v4419, 0
        %v4491 = vsel %vm1372, %v4424, 0
        %v4494 = vsel %vm1372, %v4429, 0
        %v4497 = vsel %vm1372, %v4434, 0
        %v4500 = vsel %vm1372, %v4439, 0
        %v4503 = vsel %vm1372, %v4444, 0
        %v4506 = vsel %vm1372, %v4449, 0
        %v4509 = vsel %vm1372, %v4454, 0
        %v4512 = vsel %vm1372, %v4459, 0
        %v4515 = vsel %vm1372, %v4464, 0
        %v4518 = vsel %vm1372, %v4469, 0
        %4520 = vmatprep.subr.mxu0 0.0
        %4521 = vmatpush1.msra.mxu0 %v840
        %4522 = vmatprep.subr.mxu0 0.0
        %4523 = vmatpush1.msra.mxu0 0.0
        %4524 = vmatprep.subr.mxu0 0.0
        %4525 = vmatpush1.msra.mxu0 0.0
        %4526 = vmatprep.subr.mxu0 0.0
        %4527 = vmatpush1.msra.mxu0 0.0
        %4528 = vmatprep.subr.mxu0 0.0
        %4529 = vmatpush1.msra.mxu0 0.0
        %4530 = vmatprep.subr.mxu0 0.0
        %4531 = vmatpush1.msra.mxu0 0.0
        %4532 = vmatprep.subr.mxu0 0.0
        %4533 = vmatpush1.msra.mxu0 0.0
        %4534 = vmatprep.subr.mxu0 0.0
        %4535 = vmatpush1.msra.mxu0 0.0
        %4536 = vmatprep.subr.mxu0 0.0
        %4537 = vmatpush1.msra.mxu0 0.0
        %4538 = vmatprep.subr.mxu0 0.0
        %4539 = vmatpush1.msra.mxu0 0.0
        %4540 = vmatprep.subr.mxu0 0.0
        %4541 = vmatpush1.msra.mxu0 0.0
        %4542 = vmatprep.subr.mxu0 0.0
        %4543 = vmatpush1.msra.mxu0 0.0
        %4544 = vmatprep.subr.mxu0 0.0
        %4545 = vmatpush1.msra.mxu0 0.0
        %4546 = vmatprep.subr.mxu0 0.0
        %4547 = vmatpush1.msra.mxu0 0.0
        %4548 = vmatprep.subr.mxu0 0.0
        %4549 = vmatpush1.msra.mxu0 0.0
        %4550 = vmatprep.subr.mxu0 0.0
        %4551 = vmatpush1.msra.mxu0 0.0
        %4552 = vmatprep.subr.mxu0 0.0
        %4553 = vmatpush1.msra.mxu0 0.0
        %4554 = vmatprep.subr.mxu0 0.0
        %4555 = vmatpush1.msra.mxu0 0.0
        %4556 = vmatprep.subr.mxu0 0.0
        %4557 = vmatpush1.msra.mxu0 0.0
        %4558 = vmatprep.subr.mxu0 0.0
        %4559 = vmatpush1.msra.mxu0 0.0
        %4560 = vmatprep.subr.mxu0 0.0
        %4561 = vmatpush1.msra.mxu0 0.0
        %4562 = vmatprep.subr.mxu0 0.0
        %4563 = vmatpush1.msra.mxu0 0.0
        %4564 = vmatprep.subr.mxu0 0.0
        %4565 = vmatpush1.msra.mxu0 0.0
        %4566 = vmatprep.subr.mxu0 0.0
        %4567 = vmatpush1.msra.mxu0 0.0
        %4568 = vmatprep.subr.mxu0 0.0
        %4569 = vmatpush1.msra.mxu0 0.0
        %4570 = vmatprep.subr.mxu0 0.0
        %4571 = vmatpush1.msra.mxu0 0.0
        %4572 = vmatprep.subr.mxu0 0.0
        %4573 = vmatpush1.msra.mxu0 0.0
        %4574 = vmatprep.subr.mxu0 0.0
        %4575 = vmatpush1.msra.mxu0 0.0
        %4576 = vmatprep.subr.mxu0 0.0
        %4577 = vmatpush1.msra.mxu0 0.0
        %4578 = vmatprep.subr.mxu0 0.0
        %4579 = vmatpush1.msra.mxu0 0.0
        %4580 = vmatprep.subr.mxu0 0.0
        %4581 = vmatpush1.msra.mxu0 0.0
        %4582 = vmatprep.subr.mxu0 0.0
        %4583 = vmatpush1.msra.mxu0 0.0
        %4584 = vmatprep.mubr.f32.mxu0 0.0
        %4585 = vmatmul.mubr.f32.gmra.mrb[0].mxu0 %v4473
        %v4586 = vpop.f32.mrb[0].mxu0
        %v4587 = vadd.f32 0.0, %v4586
        %v4588 = vpop.f32.mrb[0].mxu0
        %4589 = vmatprep.mubr.f32.mxu0 0.0
        %4590 = vmatmul.mubr.f32.gmra.mrb[0].mxu0 %v4476
        %v4591 = vpop.f32.mrb[0].mxu0
        %v4592 = vadd.f32 0.0, %v4591
        %v4593 = vpop.f32.mrb[0].mxu0
        %4594 = vmatprep.mubr.f32.mxu0 0.0
        %4595 = vmatmul.mubr.f32.gmra.mrb[0].mxu0 %v4479
        %v4596 = vpop.f32.mrb[0].mxu0
        %v4597 = vadd.f32 0.0, %v4596
        %v4598 = vpop.f32.mrb[0].mxu0
        %4599 = vmatprep.mubr.f32.mxu0 0.0
        %4600 = vmatmul.mubr.f32.gmra.mrb[0].mxu0 %v4482
        %v4601 = vpop.f32.mrb[0].mxu0
        %v4602 = vadd.f32 0.0, %v4601
        %v4603 = vpop.f32.mrb[0].mxu0
        %4604 = vmatprep.mubr.f32.mxu0 0.0
        %4605 = vmatmul.mubr.f32.gmra.mrb[0].mxu0 %v4485
        %v4606 = vpop.f32.mrb[0].mxu0
        %v4607 = vadd.f32 0.0, %v4606
        %v4608 = vpop.f32.mrb[0].mxu0
        %4609 = vmatprep.mubr.f32.mxu0 0.0
        %4610 = vmatmul.mubr.f32.gmra.mrb[0].mxu0 %v4488
        %v4611 = vpop.f32.mrb[0].mxu0
        %v4612 = vadd.f32 0.0, %v4611
        %v4613 = vpop.f32.mrb[0].mxu0
        %4614 = vmatprep.mubr.f32.mxu0 0.0
        %4615 = vmatmul.mubr.f32.gmra.mrb[0].mxu0 %v4491
        %v4616 = vpop.f32.mrb[0].mxu0
        %v4617 = vadd.f32 0.0, %v4616
        %v4618 = vpop.f32.mrb[0].mxu0
        %4619 = vmatprep.mubr.f32.mxu0 0.0
        %4620 = vmatmul.mubr.f32.gmra.mrb[0].mxu0 %v4494
        %v4621 = vpop.f32.mrb[0].mxu0
        %v4622 = vadd.f32 0.0, %v4621
        %v4623 = vpop.f32.mrb[0].mxu0
        %4624 = vmatprep.mubr.f32.mxu0 0.0
        %4625 = vmatmul.mubr.f32.gmra.mrb[0].mxu0 %v4497
        %v4626 = vpop.f32.mrb[0].mxu0
        %v4627 = vadd.f32 0.0, %v4626
        %v4628 = vpop.f32.mrb[0].mxu0
        %4629 = vmatprep.mubr.f32.mxu0 0.0
        %4630 = vmatmul.mubr.f32.gmra.mrb[0].mxu0 %v4500
        %v4631 = vpop.f32.mrb[0].mxu0
        %v4632 = vadd.f32 0.0, %v4631
        %v4633 = vpop.f32.mrb[0].mxu0
        %4634 = vmatprep.mubr.f32.mxu0 0.0
        %4635 = vmatmul.mubr.f32.gmra.mrb[0].mxu0 %v4503
        %v4636 = vpop.f32.mrb[0].mxu0
        %v4637 = vadd.f32 0.0, %v4636
        %v4638 = vpop.f32.mrb[0].mxu0
        %4639 = vmatprep.mubr.f32.mxu0 0.0
        %4640 = vmatmul.mubr.f32.gmra.mrb[0].mxu0 %v4506
        %v4641 = vpop.f32.mrb[0].mxu0
        %v4642 = vadd.f32 0.0, %v4641
        %v4643 = vpop.f32.mrb[0].mxu0
        %4644 = vmatprep.mubr.f32.mxu0 0.0
        %4645 = vmatmul.mubr.f32.gmra.mrb[0].mxu0 %v4509
        %v4646 = vpop.f32.mrb[0].mxu0
        %v4647 = vadd.f32 0.0, %v4646
        %v4648 = vpop.f32.mrb[0].mxu0
        %4649 = vmatprep.mubr.f32.mxu0 0.0
        %4650 = vmatmul.mubr.f32.gmra.mrb[0].mxu0 %v4512
        %v4651 = vpop.f32.mrb[0].mxu0
        %v4652 = vadd.f32 0.0, %v4651
        %v4653 = vpop.f32.mrb[0].mxu0
        %4654 = vmatprep.mubr.f32.mxu0 0.0
        %4655 = vmatmul.mubr.f32.gmra.mrb[0].mxu0 %v4515
        %v4656 = vpop.f32.mrb[0].mxu0
        %v4657 = vadd.f32 0.0, %v4656
        %v4658 = vpop.f32.mrb[0].mxu0
        %4659 = vmatprep.mubr.f32.mxu0 0.0
        %4660 = vmatmul.mubr.f32.gmra.mrb[0].mxu0 %v4518
        %v4661 = vpop.f32.mrb[0].mxu0
        %v4662 = vadd.f32 0.0, %v4661
        %v4663 = vpop.f32.mrb[0].mxu0
        %4664 = vdwg.mxu0
        %v4665 = vadd.f32 %v3830, %v4587
        %v4666 = vadd.f32 %v3831, %v4592
        %v4667 = vadd.f32 %v3832, %v4597
        %v4668 = vadd.f32 %v3833, %v4602
        %v4669 = vadd.f32 %v3834, %v4607
        %v4670 = vadd.f32 %v3835, %v4612
        %v4671 = vadd.f32 %v3836, %v4617
        %v4672 = vadd.f32 %v3837, %v4622
        %v4673 = vadd.f32 %v3838, %v4627
        %v4674 = vadd.f32 %v3839, %v4632
        %v4675 = vadd.f32 %v3840, %v4637
        %v4676 = vadd.f32 %v3841, %v4642
        %v4677 = vadd.f32 %v3842, %v4647
        %v4678 = vadd.f32 %v3843, %v4652
        %v4679 = vadd.f32 %v3844, %v4657
        %v4680 = vadd.f32 %v3845, %v4662
        %4681 = vrot.lane.b32.xlu0 %v1280, 96
        %v4682 = vpop.permute.xlu0 %4681
        %4683 = vrot.lane.b32.xlu0 %v1286, 96
        %v4684 = vpop.permute.xlu0 %4683
        %4685 = vrot.lane.b32.xlu0 %v1292, 96
        %v4686 = vpop.permute.xlu0 %4685
        %4687 = vrot.lane.b32.xlu0 %v1298, 96
        %v4688 = vpop.permute.xlu0 %4687
        %4689 = vrot.lane.b32.xlu0 %v1304, 96
        %v4690 = vpop.permute.xlu0 %4689
        %4691 = vrot.lane.b32.xlu0 %v1310, 96
        %v4692 = vpop.permute.xlu0 %4691
        %4693 = vrot.lane.b32.xlu0 %v1316, 96
        %v4694 = vpop.permute.xlu0 %4693
        %4695 = vrot.lane.b32.xlu0 %v1322, 96
        %v4696 = vpop.permute.xlu0 %4695
        %4697 = vrot.lane.b32.xlu0 %v1328, 96
        %v4698 = vpop.permute.xlu0 %4697
        %4699 = vrot.lane.b32.xlu0 %v1334, 96
        %v4700 = vpop.permute.xlu0 %4699
        %4701 = vrot.lane.b32.xlu0 %v1340, 96
        %v4702 = vpop.permute.xlu0 %4701
        %4703 = vrot.lane.b32.xlu0 %v1346, 96
        %v4704 = vpop.permute.xlu0 %4703
        %4705 = vrot.lane.b32.xlu0 %v1352, 96
        %v4706 = vpop.permute.xlu0 %4705
        %4707 = vrot.lane.b32.xlu0 %v1358, 96
        %v4708 = vpop.permute.xlu0 %4707
        %4709 = vrot.lane.b32.xlu0 %v1364, 96
        %v4710 = vpop.permute.xlu0 %4709
        %4711 = vrot.lane.b32.xlu0 %v1370, 96
        %v4712 = vpop.permute.xlu0 %4711
        %4713 = vrot.lane.b32.xlu0 %v1278, 96
        %v4714 = vpop.permute.xlu0 %4713
        %4715 = vrot.lane.b32.xlu0 %v1284, 96
        %v4716 = vpop.permute.xlu0 %4715
        %4717 = vrot.lane.b32.xlu0 %v1290, 96
        %v4718 = vpop.permute.xlu0 %4717
        %4719 = vrot.lane.b32.xlu0 %v1296, 96
        %v4720 = vpop.permute.xlu0 %4719
        %4721 = vrot.lane.b32.xlu0 %v1302, 96
        %v4722 = vpop.permute.xlu0 %4721
        %4723 = vrot.lane.b32.xlu0 %v1308, 96
        %v4724 = vpop.permute.xlu0 %4723
        %4725 = vrot.lane.b32.xlu0 %v1314, 96
        %v4726 = vpop.permute.xlu0 %4725
        %4727 = vrot.lane.b32.xlu0 %v1320, 96
        %v4728 = vpop.permute.xlu0 %4727
        %4729 = vrot.lane.b32.xlu0 %v1326, 96
        %v4730 = vpop.permute.xlu0 %4729
        %4731 = vrot.lane.b32.xlu0 %v1332, 96
        %v4732 = vpop.permute.xlu0 %4731
        %4733 = vrot.lane.b32.xlu0 %v1338, 96
        %v4734 = vpop.permute.xlu0 %4733
        %4735 = vrot.lane.b32.xlu0 %v1344, 96
        %v4736 = vpop.permute.xlu0 %4735
        %4737 = vrot.lane.b32.xlu0 %v1350, 96
        %v4738 = vpop.permute.xlu0 %4737
        %4739 = vrot.lane.b32.xlu0 %v1356, 96
        %v4740 = vpop.permute.xlu0 %4739
        %4741 = vrot.lane.b32.xlu0 %v1362, 96
        %v4742 = vpop.permute.xlu0 %4741
        %4743 = vrot.lane.b32.xlu0 %v1368, 96
        %v4744 = vpop.permute.xlu0 %4743
        %v4745 = vsel %vm1372, %v4682, 0
        %v4747 = vsel %vm1372, %v4684, 0
        %v4749 = vsel %vm1372, %v4686, 0
        %v4751 = vsel %vm1372, %v4688, 0
        %v4753 = vsel %vm1372, %v4690, 0
        %v4755 = vsel %vm1372, %v4692, 0
        %v4757 = vsel %vm1372, %v4694, 0
        %v4759 = vsel %vm1372, %v4696, 0
        %v4761 = vsel %vm1372, %v4698, 0
        %v4763 = vsel %vm1372, %v4700, 0
        %v4765 = vsel %vm1372, %v4702, 0
        %v4767 = vsel %vm1372, %v4704, 0
        %v4769 = vsel %vm1372, %v4706, 0
        %v4771 = vsel %vm1372, %v4708, 0
        %v4773 = vsel %vm1372, %v4710, 0
        %v4775 = vsel %vm1372, %v4712, 0
        %v4777 = vsel %vm1372, %v4714, 0
        %v4779 = vsel %vm1372, %v4716, 0
        %v4781 = vsel %vm1372, %v4718, 0
        %v4783 = vsel %vm1372, %v4720, 0
        %v4785 = vsel %vm1372, %v4722, 0
        %v4787 = vsel %vm1372, %v4724, 0
        %v4789 = vsel %vm1372, %v4726, 0
        %v4791 = vsel %vm1372, %v4728, 0
        %v4793 = vsel %vm1372, %v4730, 0
        %v4795 = vsel %vm1372, %v4732, 0
        %v4797 = vsel %vm1372, %v4734, 0
        %v4799 = vsel %vm1372, %v4736, 0
        %v4801 = vsel %vm1372, %v4738, 0
        %v4803 = vsel %vm1372, %v4740, 0
        %v4805 = vsel %vm1372, %v4742, 0
        %v4807 = vsel %vm1372, %v4744, 0
        %4809 = vmatprep.subr.mxu0 0.0
        %4810 = vmatpush1.xpose.msra.mxu0 %v4777
        %4811 = vmatprep.subr.mxu0 0.0
        %4812 = vmatpush1.xpose.msra.mxu0 %v4779
        %4813 = vmatprep.subr.mxu0 0.0
        %4814 = vmatpush1.xpose.msra.mxu0 %v4781
        %4815 = vmatprep.subr.mxu0 0.0
        %4816 = vmatpush1.xpose.msra.mxu0 %v4783
        %4817 = vmatprep.subr.mxu0 0.0
        %4818 = vmatpush1.xpose.msra.mxu0 %v4785
        %4819 = vmatprep.subr.mxu0 0.0
        %4820 = vmatpush1.xpose.msra.mxu0 %v4787
        %4821 = vmatprep.subr.mxu0 0.0
        %4822 = vmatpush1.xpose.msra.mxu0 %v4789
        %4823 = vmatprep.subr.mxu0 0.0
        %4824 = vmatpush1.xpose.msra.mxu0 %v4791
        %4825 = vmatprep.subr.mxu0 0.0
        %4826 = vmatpush1.xpose.msra.mxu0 %v4793
        %4827 = vmatprep.subr.mxu0 0.0
        %4828 = vmatpush1.xpose.msra.mxu0 %v4795
        %4829 = vmatprep.subr.mxu0 0.0
        %4830 = vmatpush1.xpose.msra.mxu0 %v4797
        %4831 = vmatprep.subr.mxu0 0.0
        %4832 = vmatpush1.xpose.msra.mxu0 %v4799
        %4833 = vmatprep.subr.mxu0 0.0
        %4834 = vmatpush1.xpose.msra.mxu0 %v4801
        %4835 = vmatprep.subr.mxu0 0.0
        %4836 = vmatpush1.xpose.msra.mxu0 %v4803
        %4837 = vmatprep.subr.mxu0 0.0
        %4838 = vmatpush1.xpose.msra.mxu0 %v4805
        %4839 = vmatprep.subr.mxu0 0.0
        %4840 = vmatpush1.xpose.msra.mxu0 %v4807
        %4841 = vmatprep.subr.mxu0 0.0
        %4842 = vmatpush1.xpose.msra.mxu0 0.0
        %4843 = vmatprep.subr.mxu0 0.0
        %4844 = vmatpush1.xpose.msra.mxu0 0.0
        %4845 = vmatprep.subr.mxu0 0.0
        %4846 = vmatpush1.xpose.msra.mxu0 0.0
        %4847 = vmatprep.subr.mxu0 0.0
        %4848 = vmatpush1.xpose.msra.mxu0 0.0
        %4849 = vmatprep.subr.mxu0 0.0
        %4850 = vmatpush1.xpose.msra.mxu0 0.0
        %4851 = vmatprep.subr.mxu0 0.0
        %4852 = vmatpush1.xpose.msra.mxu0 0.0
        %4853 = vmatprep.subr.mxu0 0.0
        %4854 = vmatpush1.xpose.msra.mxu0 0.0
        %4855 = vmatprep.subr.mxu0 0.0
        %4856 = vmatpush1.xpose.msra.mxu0 0.0
        %4857 = vmatprep.subr.mxu0 0.0
        %4858 = vmatpush1.xpose.msra.mxu0 0.0
        %4859 = vmatprep.subr.mxu0 0.0
        %4860 = vmatpush1.xpose.msra.mxu0 0.0
        %4861 = vmatprep.subr.mxu0 0.0
        %4862 = vmatpush1.xpose.msra.mxu0 0.0
        %4863 = vmatprep.subr.mxu0 0.0
        %4864 = vmatpush1.xpose.msra.mxu0 0.0
        %4865 = vmatprep.subr.mxu0 0.0
        %4866 = vmatpush1.xpose.msra.mxu0 0.0
        %4867 = vmatprep.subr.mxu0 0.0
        %4868 = vmatpush1.xpose.msra.mxu0 0.0
        %4869 = vmatprep.subr.mxu0 0.0
        %4870 = vmatpush1.xpose.msra.mxu0 0.0
        %4871 = vmatprep.subr.mxu0 0.0
        %4872 = vmatpush1.xpose.msra.mxu0 0.0
        %4873 = vmatprep.mubr.f32.mxu0 0.0
        %4874 = vmatmul.mubr.f32.gmra.mrb[0].mxu0 %v4745
        %v4875 = vpop.f32.mrb[0].mxu0
        %v4876 = vadd.f32 0.0, %v4875
        %v4877 = vpop.f32.mrb[0].mxu0
        %4878 = vmatprep.mubr.f32.mxu0 0.0
        %4879 = vmatmul.mubr.f32.gmra.mrb[0].mxu0 %v4747
        %v4880 = vpop.f32.mrb[0].mxu0
        %v4881 = vadd.f32 0.0, %v4880
        %v4882 = vpop.f32.mrb[0].mxu0
        %4883 = vmatprep.mubr.f32.mxu0 0.0
        %4884 = vmatmul.mubr.f32.gmra.mrb[0].mxu0 %v4749
        %v4885 = vpop.f32.mrb[0].mxu0
        %v4886 = vadd.f32 0.0, %v4885
        %v4887 = vpop.f32.mrb[0].mxu0
        %4888 = vmatprep.mubr.f32.mxu0 0.0
        %4889 = vmatmul.mubr.f32.gmra.mrb[0].mxu0 %v4751
        %v4890 = vpop.f32.mrb[0].mxu0
        %v4891 = vadd.f32 0.0, %v4890
        %v4892 = vpop.f32.mrb[0].mxu0
        %4893 = vmatprep.mubr.f32.mxu0 0.0
        %4894 = vmatmul.mubr.f32.gmra.mrb[0].mxu0 %v4753
        %v4895 = vpop.f32.mrb[0].mxu0
        %v4896 = vadd.f32 0.0, %v4895
        %v4897 = vpop.f32.mrb[0].mxu0
        %4898 = vmatprep.mubr.f32.mxu0 0.0
        %4899 = vmatmul.mubr.f32.gmra.mrb[0].mxu0 %v4755
        %v4900 = vpop.f32.mrb[0].mxu0
        %v4901 = vadd.f32 0.0, %v4900
        %v4902 = vpop.f32.mrb[0].mxu0
        %4903 = vmatprep.mubr.f32.mxu0 0.0
        %4904 = vmatmul.mubr.f32.gmra.mrb[0].mxu0 %v4757
        %v4905 = vpop.f32.mrb[0].mxu0
        %v4906 = vadd.f32 0.0, %v4905
        %v4907 = vpop.f32.mrb[0].mxu0
        %4908 = vmatprep.mubr.f32.mxu0 0.0
        %4909 = vmatmul.mubr.f32.gmra.mrb[0].mxu0 %v4759
        %v4910 = vpop.f32.mrb[0].mxu0
        %v4911 = vadd.f32 0.0, %v4910
        %v4912 = vpop.f32.mrb[0].mxu0
        %4913 = vmatprep.mubr.f32.mxu0 0.0
        %4914 = vmatmul.mubr.f32.gmra.mrb[0].mxu0 %v4761
        %v4915 = vpop.f32.mrb[0].mxu0
        %v4916 = vadd.f32 0.0, %v4915
        %v4917 = vpop.f32.mrb[0].mxu0
        %4918 = vmatprep.mubr.f32.mxu0 0.0
        %4919 = vmatmul.mubr.f32.gmra.mrb[0].mxu0 %v4763
        %v4920 = vpop.f32.mrb[0].mxu0
        %v4921 = vadd.f32 0.0, %v4920
        %v4922 = vpop.f32.mrb[0].mxu0
        %4923 = vmatprep.mubr.f32.mxu0 0.0
        %4924 = vmatmul.mubr.f32.gmra.mrb[0].mxu0 %v4765
        %v4925 = vpop.f32.mrb[0].mxu0
        %v4926 = vadd.f32 0.0, %v4925
        %v4927 = vpop.f32.mrb[0].mxu0
        %4928 = vmatprep.mubr.f32.mxu0 0.0
        %4929 = vmatmul.mubr.f32.gmra.mrb[0].mxu0 %v4767
        %v4930 = vpop.f32.mrb[0].mxu0
        %v4931 = vadd.f32 0.0, %v4930
        %v4932 = vpop.f32.mrb[0].mxu0
        %4933 = vmatprep.mubr.f32.mxu0 0.0
        %4934 = vmatmul.mubr.f32.gmra.mrb[0].mxu0 %v4769
        %v4935 = vpop.f32.mrb[0].mxu0
        %v4936 = vadd.f32 0.0, %v4935
        %v4937 = vpop.f32.mrb[0].mxu0
        %4938 = vmatprep.mubr.f32.mxu0 0.0
        %4939 = vmatmul.mubr.f32.gmra.mrb[0].mxu0 %v4771
        %v4940 = vpop.f32.mrb[0].mxu0
        %v4941 = vadd.f32 0.0, %v4940
        %v4942 = vpop.f32.mrb[0].mxu0
        %4943 = vmatprep.mubr.f32.mxu0 0.0
        %4944 = vmatmul.mubr.f32.gmra.mrb[0].mxu0 %v4773
        %v4945 = vpop.f32.mrb[0].mxu0
        %v4946 = vadd.f32 0.0, %v4945
        %v4947 = vpop.f32.mrb[0].mxu0
        %4948 = vmatprep.mubr.f32.mxu0 0.0
        %4949 = vmatmul.mubr.f32.gmra.mrb[0].mxu0 %v4775
        %v4950 = vpop.f32.mrb[0].mxu0
        %v4951 = vadd.f32 0.0, %v4950
        %v4952 = vpop.f32.mrb[0].mxu0
        %4953 = vdwg.mxu0
        %v4954 = vmul.f32 %v4876, 0.35355338
        %v4955 = vmul.f32 %v4881, 0.35355338
        %v4956 = vmul.f32 %v4886, 0.35355338
        %v4957 = vmul.f32 %v4891, 0.35355338
        %v4958 = vmul.f32 %v4896, 0.35355338
        %v4959 = vmul.f32 %v4901, 0.35355338
        %v4960 = vmul.f32 %v4906, 0.35355338
        %v4961 = vmul.f32 %v4911, 0.35355338
        %v4962 = vmul.f32 %v4916, 0.35355338
        %v4963 = vmul.f32 %v4921, 0.35355338
        %v4964 = vmul.f32 %v4926, 0.35355338
        %v4965 = vmul.f32 %v4931, 0.35355338
        %v4966 = vmul.f32 %v4936, 0.35355338
        %v4967 = vmul.f32 %v4941, 0.35355338
        %v4968 = vmul.f32 %v4946, 0.35355338
        %v4969 = vmul.f32 %v4951, 0.35355338
        %4970 = vmax.xlane.f32.xlu0 %v4954
        %v4971 = vpop.xlane.xlu0 %4970
        %4972 = vmax.xlane.f32.xlu0 %v4955
        %v4973 = vpop.xlane.xlu0 %4972
        %4974 = vmax.xlane.f32.xlu0 %v4956
        %v4975 = vpop.xlane.xlu0 %4974
        %4976 = vmax.xlane.f32.xlu0 %v4957
        %v4977 = vpop.xlane.xlu0 %4976
        %4978 = vmax.xlane.f32.xlu0 %v4958
        %v4979 = vpop.xlane.xlu0 %4978
        %4980 = vmax.xlane.f32.xlu0 %v4959
        %v4981 = vpop.xlane.xlu0 %4980
        %4982 = vmax.xlane.f32.xlu0 %v4960
        %v4983 = vpop.xlane.xlu0 %4982
        %4984 = vmax.xlane.f32.xlu0 %v4961
        %v4985 = vpop.xlane.xlu0 %4984
        %4986 = vmax.xlane.f32.xlu0 %v4962
        %v4987 = vpop.xlane.xlu0 %4986
        %4988 = vmax.xlane.f32.xlu0 %v4963
        %v4989 = vpop.xlane.xlu0 %4988
        %4990 = vmax.xlane.f32.xlu0 %v4964
        %v4991 = vpop.xlane.xlu0 %4990
        %4992 = vmax.xlane.f32.xlu0 %v4965
        %v4993 = vpop.xlane.xlu0 %4992
        %4994 = vmax.xlane.f32.xlu0 %v4966
        %v4995 = vpop.xlane.xlu0 %4994
        %4996 = vmax.xlane.f32.xlu0 %v4967
        %v4997 = vpop.xlane.xlu0 %4996
        %4998 = vmax.xlane.f32.xlu0 %v4968
        %v4999 = vpop.xlane.xlu0 %4998
        %5000 = vmax.xlane.f32.xlu0 %v4969
        %v5001 = vpop.xlane.xlu0 %5000
        %v5002 = vsub.f32 %v4954, %v4971
        %v5003 = vsub.f32 %v4955, %v4973
        %v5004 = vsub.f32 %v4956, %v4975
        %v5005 = vsub.f32 %v4957, %v4977
        %v5006 = vsub.f32 %v4958, %v4979
        %v5007 = vsub.f32 %v4959, %v4981
        %v5008 = vsub.f32 %v4960, %v4983
        %v5009 = vsub.f32 %v4961, %v4985
        %v5010 = vsub.f32 %v4962, %v4987
        %v5011 = vsub.f32 %v4963, %v4989
        %v5012 = vsub.f32 %v4964, %v4991
        %v5013 = vsub.f32 %v4965, %v4993
        %v5014 = vsub.f32 %v4966, %v4995
        %v5015 = vsub.f32 %v4967, %v4997
        %v5016 = vsub.f32 %v4968, %v4999
        %v5017 = vsub.f32 %v4969, %v5001
        %v5018 = vmul.f32 %v5002, 1.442695
        %v5019 = vpow.pop %v5018
        %v5020 = vmul.f32 %v5003, 1.442695
        %v5021 = vpow.pop %v5020
        %v5022 = vmul.f32 %v5004, 1.442695
        %v5023 = vpow.pop %v5022
        %v5024 = vmul.f32 %v5005, 1.442695
        %v5025 = vpow.pop %v5024
        %v5026 = vmul.f32 %v5006, 1.442695
        %v5027 = vpow.pop %v5026
        %v5028 = vmul.f32 %v5007, 1.442695
        %v5029 = vpow.pop %v5028
        %v5030 = vmul.f32 %v5008, 1.442695
        %v5031 = vpow.pop %v5030
        %v5032 = vmul.f32 %v5009, 1.442695
        %v5033 = vpow.pop %v5032
        %v5034 = vmul.f32 %v5010, 1.442695
        %v5035 = vpow.pop %v5034
        %v5036 = vmul.f32 %v5011, 1.442695
        %v5037 = vpow.pop %v5036
        %v5038 = vmul.f32 %v5012, 1.442695
        %v5039 = vpow.pop %v5038
        %v5040 = vmul.f32 %v5013, 1.442695
        %v5041 = vpow.pop %v5040
        %v5042 = vmul.f32 %v5014, 1.442695
        %v5043 = vpow.pop %v5042
        %v5044 = vmul.f32 %v5015, 1.442695
        %v5045 = vpow.pop %v5044
        %v5046 = vmul.f32 %v5016, 1.442695
        %v5047 = vpow.pop %v5046
        %v5048 = vmul.f32 %v5017, 1.442695
        %v5049 = vpow.pop %v5048
        %5050 = vadd.xlane.f32.xlu0 %v5019
        %v5051 = vpop.xlane.xlu0 %5050
        %5052 = vadd.xlane.f32.xlu0 %v5021
        %v5053 = vpop.xlane.xlu0 %5052
        %5054 = vadd.xlane.f32.xlu0 %v5023
        %v5055 = vpop.xlane.xlu0 %5054
        %5056 = vadd.xlane.f32.xlu0 %v5025
        %v5057 = vpop.xlane.xlu0 %5056
        %5058 = vadd.xlane.f32.xlu0 %v5027
        %v5059 = vpop.xlane.xlu0 %5058
        %5060 = vadd.xlane.f32.xlu0 %v5029
        %v5061 = vpop.xlane.xlu0 %5060
        %5062 = vadd.xlane.f32.xlu0 %v5031
        %v5063 = vpop.xlane.xlu0 %5062
        %5064 = vadd.xlane.f32.xlu0 %v5033
        %v5065 = vpop.xlane.xlu0 %5064
        %5066 = vadd.xlane.f32.xlu0 %v5035
        %v5067 = vpop.xlane.xlu0 %5066
        %5068 = vadd.xlane.f32.xlu0 %v5037
        %v5069 = vpop.xlane.xlu0 %5068
        %5070 = vadd.xlane.f32.xlu0 %v5039
        %v5071 = vpop.xlane.xlu0 %5070
        %5072 = vadd.xlane.f32.xlu0 %v5041
        %v5073 = vpop.xlane.xlu0 %5072
        %5074 = vadd.xlane.f32.xlu0 %v5043
        %v5075 = vpop.xlane.xlu0 %5074
        %5076 = vadd.xlane.f32.xlu0 %v5045
        %v5077 = vpop.xlane.xlu0 %5076
        %5078 = vadd.xlane.f32.xlu0 %v5047
        %v5079 = vpop.xlane.xlu0 %5078
        %5080 = vadd.xlane.f32.xlu0 %v5049
        %v5081 = vpop.xlane.xlu0 %5080
        %v5082 = vrcp.pop %v5051
        %v5083 = vrcp.pop %v5053
        %v5084 = vrcp.pop %v5055
        %v5085 = vrcp.pop %v5057
        %v5086 = vrcp.pop %v5059
        %v5087 = vrcp.pop %v5061
        %v5088 = vrcp.pop %v5063
        %v5089 = vrcp.pop %v5065
        %v5090 = vrcp.pop %v5067
        %v5091 = vrcp.pop %v5069
        %v5092 = vrcp.pop %v5071
        %v5093 = vrcp.pop %v5073
        %v5094 = vrcp.pop %v5075
        %v5095 = vrcp.pop %v5077
        %v5096 = vrcp.pop %v5079
        %v5097 = vrcp.pop %v5081
        %v5098 = vmul.f32 %v5019, %v5082
        %v5099 = vmul.f32 %v5021, %v5083
        %v5100 = vmul.f32 %v5023, %v5084
        %v5101 = vmul.f32 %v5025, %v5085
        %v5102 = vmul.f32 %v5027, %v5086
        %v5103 = vmul.f32 %v5029, %v5087
        %v5104 = vmul.f32 %v5031, %v5088
        %v5105 = vmul.f32 %v5033, %v5089
        %v5106 = vmul.f32 %v5035, %v5090
        %v5107 = vmul.f32 %v5037, %v5091
        %v5108 = vmul.f32 %v5039, %v5092
        %v5109 = vmul.f32 %v5041, %v5093
        %v5110 = vmul.f32 %v5043, %v5094
        %v5111 = vmul.f32 %v5045, %v5095
        %v5112 = vmul.f32 %v5047, %v5096
        %v5113 = vmul.f32 %v5049, %v5097
        %5114 = vrot.lane.b32.xlu0 %v1278, 32
        %v5115 = vpop.permute.xlu0 %5114
        %5116 = vrot.lane.b32.xlu0 %v1284, 32
        %v5117 = vpop.permute.xlu0 %5116
        %5118 = vrot.lane.b32.xlu0 %v1290, 32
        %v5119 = vpop.permute.xlu0 %5118
        %5120 = vrot.lane.b32.xlu0 %v1296, 32
        %v5121 = vpop.permute.xlu0 %5120
        %5122 = vrot.lane.b32.xlu0 %v1302, 32
        %v5123 = vpop.permute.xlu0 %5122
        %5124 = vrot.lane.b32.xlu0 %v1308, 32
        %v5125 = vpop.permute.xlu0 %5124
        %5126 = vrot.lane.b32.xlu0 %v1314, 32
        %v5127 = vpop.permute.xlu0 %5126
        %5128 = vrot.lane.b32.xlu0 %v1320, 32
        %v5129 = vpop.permute.xlu0 %5128
        %5130 = vrot.lane.b32.xlu0 %v1326, 32
        %v5131 = vpop.permute.xlu0 %5130
        %5132 = vrot.lane.b32.xlu0 %v1332, 32
        %v5133 = vpop.permute.xlu0 %5132
        %5134 = vrot.lane.b32.xlu0 %v1338, 32
        %v5135 = vpop.permute.xlu0 %5134
        %5136 = vrot.lane.b32.xlu0 %v1344, 32
        %v5137 = vpop.permute.xlu0 %5136
        %5138 = vrot.lane.b32.xlu0 %v1350, 32
        %v5139 = vpop.permute.xlu0 %5138
        %5140 = vrot.lane.b32.xlu0 %v1356, 32
        %v5141 = vpop.permute.xlu0 %5140
        %5142 = vrot.lane.b32.xlu0 %v1362, 32
        %v5143 = vpop.permute.xlu0 %5142
        %5144 = vrot.lane.b32.xlu0 %v1368, 32
        %v5145 = vpop.permute.xlu0 %5144
        %5162 = vmatprep.subr.mxu0 0.0
        %5163 = vmatpush1.msra.mxu0 %v5115
        %5164 = vmatprep.subr.mxu0 0.0
        %5165 = vmatpush1.msra.mxu0 %v5117
        %5166 = vmatprep.subr.mxu0 0.0
        %5167 = vmatpush1.msra.mxu0 %v5119
        %5168 = vmatprep.subr.mxu0 0.0
        %5169 = vmatpush1.msra.mxu0 %v5121
        %5170 = vmatprep.subr.mxu0 0.0
        %5171 = vmatpush1.msra.mxu0 %v5123
        %5172 = vmatprep.subr.mxu0 0.0
        %5173 = vmatpush1.msra.mxu0 %v5125
        %5174 = vmatprep.subr.mxu0 0.0
        %5175 = vmatpush1.msra.mxu0 %v5127
        %5176 = vmatprep.subr.mxu0 0.0
        %5177 = vmatpush1.msra.mxu0 %v5129
        %5178 = vmatprep.subr.mxu0 0.0
        %5179 = vmatpush1.msra.mxu0 %v5131
        %5180 = vmatprep.subr.mxu0 0.0
        %5181 = vmatpush1.msra.mxu0 %v5133
        %5182 = vmatprep.subr.mxu0 0.0
        %5183 = vmatpush1.msra.mxu0 %v5135
        %5184 = vmatprep.subr.mxu0 0.0
        %5185 = vmatpush1.msra.mxu0 %v5137
        %5186 = vmatprep.subr.mxu0 0.0
        %5187 = vmatpush1.msra.mxu0 %v5139
        %5188 = vmatprep.subr.mxu0 0.0
        %5189 = vmatpush1.msra.mxu0 %v5141
        %5190 = vmatprep.subr.mxu0 0.0
        %5191 = vmatpush1.msra.mxu0 %v5143
        %5192 = vmatprep.subr.mxu0 0.0
        %5193 = vmatpush1.msra.mxu0 %v5145
        %5194 = vmatprep.subr.mxu0 0.0
        %5195 = vmatpush1.msra.mxu0 0.0
        %5196 = vmatprep.subr.mxu0 0.0
        %5197 = vmatpush1.msra.mxu0 0.0
        %5198 = vmatprep.subr.mxu0 0.0
        %5199 = vmatpush1.msra.mxu0 0.0
        %5200 = vmatprep.subr.mxu0 0.0
        %5201 = vmatpush1.msra.mxu0 0.0
        %5202 = vmatprep.subr.mxu0 0.0
        %5203 = vmatpush1.msra.mxu0 0.0
        %5204 = vmatprep.subr.mxu0 0.0
        %5205 = vmatpush1.msra.mxu0 0.0
        %5206 = vmatprep.subr.mxu0 0.0
        %5207 = vmatpush1.msra.mxu0 0.0
        %5208 = vmatprep.subr.mxu0 0.0
        %5209 = vmatpush1.msra.mxu0 0.0
        %5210 = vmatprep.subr.mxu0 0.0
        %5211 = vmatpush1.msra.mxu0 0.0
        %5212 = vmatprep.subr.mxu0 0.0
        %5213 = vmatpush1.msra.mxu0 0.0
        %5214 = vmatprep.subr.mxu0 0.0
        %5215 = vmatpush1.msra.mxu0 0.0
        %5216 = vmatprep.subr.mxu0 0.0
        %5217 = vmatpush1.msra.mxu0 0.0
        %5218 = vmatprep.subr.mxu0 0.0
        %5219 = vmatpush1.msra.mxu0 0.0
        %5220 = vmatprep.subr.mxu0 0.0
        %5221 = vmatpush1.msra.mxu0 0.0
        %5222 = vmatprep.subr.mxu0 0.0
        %5223 = vmatpush1.msra.mxu0 0.0
        %5224 = vmatprep.subr.mxu0 0.0
        %5225 = vmatpush1.msra.mxu0 0.0
        %5226 = vmatprep.mubr.f32.mxu0 0.0
        %5227 = vmatmul.mubr.f32.gmra.mrb[0].mxu0 %v5098
        %v5228 = vpop.f32.mrb[0].mxu0
        %v5229 = vadd.f32 0.0, %v5228
        %v5230 = vpop.f32.mrb[0].mxu0
        %5231 = vmatprep.mubr.f32.mxu0 0.0
        %5232 = vmatmul.mubr.f32.gmra.mrb[0].mxu0 %v5099
        %v5233 = vpop.f32.mrb[0].mxu0
        %v5234 = vadd.f32 0.0, %v5233
        %v5235 = vpop.f32.mrb[0].mxu0
        %5236 = vmatprep.mubr.f32.mxu0 0.0
        %5237 = vmatmul.mubr.f32.gmra.mrb[0].mxu0 %v5100
        %v5238 = vpop.f32.mrb[0].mxu0
        %v5239 = vadd.f32 0.0, %v5238
        %v5240 = vpop.f32.mrb[0].mxu0
        %5241 = vmatprep.mubr.f32.mxu0 0.0
        %5242 = vmatmul.mubr.f32.gmra.mrb[0].mxu0 %v5101
        %v5243 = vpop.f32.mrb[0].mxu0
        %v5244 = vadd.f32 0.0, %v5243
        %v5245 = vpop.f32.mrb[0].mxu0
        %5246 = vmatprep.mubr.f32.mxu0 0.0
        %5247 = vmatmul.mubr.f32.gmra.mrb[0].mxu0 %v5102
        %v5248 = vpop.f32.mrb[0].mxu0
        %v5249 = vadd.f32 0.0, %v5248
        %v5250 = vpop.f32.mrb[0].mxu0
        %5251 = vmatprep.mubr.f32.mxu0 0.0
        %5252 = vmatmul.mubr.f32.gmra.mrb[0].mxu0 %v5103
        %v5253 = vpop.f32.mrb[0].mxu0
        %v5254 = vadd.f32 0.0, %v5253
        %v5255 = vpop.f32.mrb[0].mxu0
        %5256 = vmatprep.mubr.f32.mxu0 0.0
        %5257 = vmatmul.mubr.f32.gmra.mrb[0].mxu0 %v5104
        %v5258 = vpop.f32.mrb[0].mxu0
        %v5259 = vadd.f32 0.0, %v5258
        %v5260 = vpop.f32.mrb[0].mxu0
        %5261 = vmatprep.mubr.f32.mxu0 0.0
        %5262 = vmatmul.mubr.f32.gmra.mrb[0].mxu0 %v5105
        %v5263 = vpop.f32.mrb[0].mxu0
        %v5264 = vadd.f32 0.0, %v5263
        %v5265 = vpop.f32.mrb[0].mxu0
        %5266 = vmatprep.mubr.f32.mxu0 0.0
        %5267 = vmatmul.mubr.f32.gmra.mrb[0].mxu0 %v5106
        %v5268 = vpop.f32.mrb[0].mxu0
        %v5269 = vadd.f32 0.0, %v5268
        %v5270 = vpop.f32.mrb[0].mxu0
        %5271 = vmatprep.mubr.f32.mxu0 0.0
        %5272 = vmatmul.mubr.f32.gmra.mrb[0].mxu0 %v5107
        %v5273 = vpop.f32.mrb[0].mxu0
        %v5274 = vadd.f32 0.0, %v5273
        %v5275 = vpop.f32.mrb[0].mxu0
        %5276 = vmatprep.mubr.f32.mxu0 0.0
        %5277 = vmatmul.mubr.f32.gmra.mrb[0].mxu0 %v5108
        %v5278 = vpop.f32.mrb[0].mxu0
        %v5279 = vadd.f32 0.0, %v5278
        %v5280 = vpop.f32.mrb[0].mxu0
        %5281 = vmatprep.mubr.f32.mxu0 0.0
        %5282 = vmatmul.mubr.f32.gmra.mrb[0].mxu0 %v5109
        %v5283 = vpop.f32.mrb[0].mxu0
        %v5284 = vadd.f32 0.0, %v5283
        %v5285 = vpop.f32.mrb[0].mxu0
        %5286 = vmatprep.mubr.f32.mxu0 0.0
        %5287 = vmatmul.mubr.f32.gmra.mrb[0].mxu0 %v5110
        %v5288 = vpop.f32.mrb[0].mxu0
        %v5289 = vadd.f32 0.0, %v5288
        %v5290 = vpop.f32.mrb[0].mxu0
        %5291 = vmatprep.mubr.f32.mxu0 0.0
        %5292 = vmatmul.mubr.f32.gmra.mrb[0].mxu0 %v5111
        %v5293 = vpop.f32.mrb[0].mxu0
        %v5294 = vadd.f32 0.0, %v5293
        %v5295 = vpop.f32.mrb[0].mxu0
        %5296 = vmatprep.mubr.f32.mxu0 0.0
        %5297 = vmatmul.mubr.f32.gmra.mrb[0].mxu0 %v5112
        %v5298 = vpop.f32.mrb[0].mxu0
        %v5299 = vadd.f32 0.0, %v5298
        %v5300 = vpop.f32.mrb[0].mxu0
        %5301 = vmatprep.mubr.f32.mxu0 0.0
        %5302 = vmatmul.mubr.f32.gmra.mrb[0].mxu0 %v5113
        %v5303 = vpop.f32.mrb[0].mxu0
        %v5304 = vadd.f32 0.0, %v5303
        %v5305 = vpop.f32.mrb[0].mxu0
        %5306 = vdwg.mxu0
        %v5308 = vsel %vm1372, %v5229, 0
        %v5311 = vsel %vm1372, %v5234, 0
        %v5314 = vsel %vm1372, %v5239, 0
        %v5317 = vsel %vm1372, %v5244, 0
        %v5320 = vsel %vm1372, %v5249, 0
        %v5323 = vsel %vm1372, %v5254, 0
        %v5326 = vsel %vm1372, %v5259, 0
        %v5329 = vsel %vm1372, %v5264, 0
        %v5332 = vsel %vm1372, %v5269, 0
        %v5335 = vsel %vm1372, %v5274, 0
        %v5338 = vsel %vm1372, %v5279, 0
        %v5341 = vsel %vm1372, %v5284, 0
        %v5344 = vsel %vm1372, %v5289, 0
        %v5347 = vsel %vm1372, %v5294, 0
        %v5350 = vsel %vm1372, %v5299, 0
        %v5353 = vsel %vm1372, %v5304, 0
        %5355 = vmatprep.subr.mxu0 0.0
        %5356 = vmatpush1.msra.mxu0 %v841
        %5357 = vmatprep.subr.mxu0 0.0
        %5358 = vmatpush1.msra.mxu0 0.0
        %5359 = vmatprep.subr.mxu0 0.0
        %5360 = vmatpush1.msra.mxu0 0.0
        %5361 = vmatprep.subr.mxu0 0.0
        %5362 = vmatpush1.msra.mxu0 0.0
        %5363 = vmatprep.subr.mxu0 0.0
        %5364 = vmatpush1.msra.mxu0 0.0
        %5365 = vmatprep.subr.mxu0 0.0
        %5366 = vmatpush1.msra.mxu0 0.0
        %5367 = vmatprep.subr.mxu0 0.0
        %5368 = vmatpush1.msra.mxu0 0.0
        %5369 = vmatprep.subr.mxu0 0.0
        %5370 = vmatpush1.msra.mxu0 0.0
        %5371 = vmatprep.subr.mxu0 0.0
        %5372 = vmatpush1.msra.mxu0 0.0
        %5373 = vmatprep.subr.mxu0 0.0
        %5374 = vmatpush1.msra.mxu0 0.0
        %5375 = vmatprep.subr.mxu0 0.0
        %5376 = vmatpush1.msra.mxu0 0.0
        %5377 = vmatprep.subr.mxu0 0.0
        %5378 = vmatpush1.msra.mxu0 0.0
        %5379 = vmatprep.subr.mxu0 0.0
        %5380 = vmatpush1.msra.mxu0 0.0
        %5381 = vmatprep.subr.mxu0 0.0
        %5382 = vmatpush1.msra.mxu0 0.0
        %5383 = vmatprep.subr.mxu0 0.0
        %5384 = vmatpush1.msra.mxu0 0.0
        %5385 = vmatprep.subr.mxu0 0.0
        %5386 = vmatpush1.msra.mxu0 0.0
        %5387 = vmatprep.subr.mxu0 0.0
        %5388 = vmatpush1.msra.mxu0 0.0
        %5389 = vmatprep.subr.mxu0 0.0
        %5390 = vmatpush1.msra.mxu0 0.0
        %5391 = vmatprep.subr.mxu0 0.0
        %5392 = vmatpush1.msra.mxu0 0.0
        %5393 = vmatprep.subr.mxu0 0.0
        %5394 = vmatpush1.msra.mxu0 0.0
        %5395 = vmatprep.subr.mxu0 0.0
        %5396 = vmatpush1.msra.mxu0 0.0
        %5397 = vmatprep.subr.mxu0 0.0
        %5398 = vmatpush1.msra.mxu0 0.0
        %5399 = vmatprep.subr.mxu0 0.0
        %5400 = vmatpush1.msra.mxu0 0.0
        %5401 = vmatprep.subr.mxu0 0.0
        %5402 = vmatpush1.msra.mxu0 0.0
        %5403 = vmatprep.subr.mxu0 0.0
        %5404 = vmatpush1.msra.mxu0 0.0
        %5405 = vmatprep.subr.mxu0 0.0
        %5406 = vmatpush1.msra.mxu0 0.0
        %5407 = vmatprep.subr.mxu0 0.0
        %5408 = vmatpush1.msra.mxu0 0.0
        %5409 = vmatprep.subr.mxu0 0.0
        %5410 = vmatpush1.msra.mxu0 0.0
        %5411 = vmatprep.subr.mxu0 0.0
        %5412 = vmatpush1.msra.mxu0 0.0
        %5413 = vmatprep.subr.mxu0 0.0
        %5414 = vmatpush1.msra.mxu0 0.0
        %5415 = vmatprep.subr.mxu0 0.0
        %5416 = vmatpush1.msra.mxu0 0.0
        %5417 = vmatprep.subr.mxu0 0.0
        %5418 = vmatpush1.msra.mxu0 0.0
        %5419 = vmatprep.mubr.f32.mxu0 0.0
        %5420 = vmatmul.mubr.f32.gmra.mrb[0].mxu0 %v5308
        %v5421 = vpop.f32.mrb[0].mxu0
        %v5422 = vadd.f32 0.0, %v5421
        %v5423 = vpop.f32.mrb[0].mxu0
        %5424 = vmatprep.mubr.f32.mxu0 0.0
        %5425 = vmatmul.mubr.f32.gmra.mrb[0].mxu0 %v5311
        %v5426 = vpop.f32.mrb[0].mxu0
        %v5427 = vadd.f32 0.0, %v5426
        %v5428 = vpop.f32.mrb[0].mxu0
        %5429 = vmatprep.mubr.f32.mxu0 0.0
        %5430 = vmatmul.mubr.f32.gmra.mrb[0].mxu0 %v5314
        %v5431 = vpop.f32.mrb[0].mxu0
        %v5432 = vadd.f32 0.0, %v5431
        %v5433 = vpop.f32.mrb[0].mxu0
        %5434 = vmatprep.mubr.f32.mxu0 0.0
        %5435 = vmatmul.mubr.f32.gmra.mrb[0].mxu0 %v5317
        %v5436 = vpop.f32.mrb[0].mxu0
        %v5437 = vadd.f32 0.0, %v5436
        %v5438 = vpop.f32.mrb[0].mxu0
        %5439 = vmatprep.mubr.f32.mxu0 0.0
        %5440 = vmatmul.mubr.f32.gmra.mrb[0].mxu0 %v5320
        %v5441 = vpop.f32.mrb[0].mxu0
        %v5442 = vadd.f32 0.0, %v5441
        %v5443 = vpop.f32.mrb[0].mxu0
        %5444 = vmatprep.mubr.f32.mxu0 0.0
        %5445 = vmatmul.mubr.f32.gmra.mrb[0].mxu0 %v5323
        %v5446 = vpop.f32.mrb[0].mxu0
        %v5447 = vadd.f32 0.0, %v5446
        %v5448 = vpop.f32.mrb[0].mxu0
        %5449 = vmatprep.mubr.f32.mxu0 0.0
        %5450 = vmatmul.mubr.f32.gmra.mrb[0].mxu0 %v5326
        %v5451 = vpop.f32.mrb[0].mxu0
        %v5452 = vadd.f32 0.0, %v5451
        %v5453 = vpop.f32.mrb[0].mxu0
        %5454 = vmatprep.mubr.f32.mxu0 0.0
        %5455 = vmatmul.mubr.f32.gmra.mrb[0].mxu0 %v5329
        %v5456 = vpop.f32.mrb[0].mxu0
        %v5457 = vadd.f32 0.0, %v5456
        %v5458 = vpop.f32.mrb[0].mxu0
        %5459 = vmatprep.mubr.f32.mxu0 0.0
        %5460 = vmatmul.mubr.f32.gmra.mrb[0].mxu0 %v5332
        %v5461 = vpop.f32.mrb[0].mxu0
        %v5462 = vadd.f32 0.0, %v5461
        %v5463 = vpop.f32.mrb[0].mxu0
        %5464 = vmatprep.mubr.f32.mxu0 0.0
        %5465 = vmatmul.mubr.f32.gmra.mrb[0].mxu0 %v5335
        %v5466 = vpop.f32.mrb[0].mxu0
        %v5467 = vadd.f32 0.0, %v5466
        %v5468 = vpop.f32.mrb[0].mxu0
        %5469 = vmatprep.mubr.f32.mxu0 0.0
        %5470 = vmatmul.mubr.f32.gmra.mrb[0].mxu0 %v5338
        %v5471 = vpop.f32.mrb[0].mxu0
        %v5472 = vadd.f32 0.0, %v5471
        %v5473 = vpop.f32.mrb[0].mxu0
        %5474 = vmatprep.mubr.f32.mxu0 0.0
        %5475 = vmatmul.mubr.f32.gmra.mrb[0].mxu0 %v5341
        %v5476 = vpop.f32.mrb[0].mxu0
        %v5477 = vadd.f32 0.0, %v5476
        %v5478 = vpop.f32.mrb[0].mxu0
        %5479 = vmatprep.mubr.f32.mxu0 0.0
        %5480 = vmatmul.mubr.f32.gmra.mrb[0].mxu0 %v5344
        %v5481 = vpop.f32.mrb[0].mxu0
        %v5482 = vadd.f32 0.0, %v5481
        %v5483 = vpop.f32.mrb[0].mxu0
        %5484 = vmatprep.mubr.f32.mxu0 0.0
        %5485 = vmatmul.mubr.f32.gmra.mrb[0].mxu0 %v5347
        %v5486 = vpop.f32.mrb[0].mxu0
        %v5487 = vadd.f32 0.0, %v5486
        %v5488 = vpop.f32.mrb[0].mxu0
        %5489 = vmatprep.mubr.f32.mxu0 0.0
        %5490 = vmatmul.mubr.f32.gmra.mrb[0].mxu0 %v5350
        %v5491 = vpop.f32.mrb[0].mxu0
        %v5492 = vadd.f32 0.0, %v5491
        %v5493 = vpop.f32.mrb[0].mxu0
        %5494 = vmatprep.mubr.f32.mxu0 0.0
        %5495 = vmatmul.mubr.f32.gmra.mrb[0].mxu0 %v5353
        %v5496 = vpop.f32.mrb[0].mxu0
        %v5497 = vadd.f32 0.0, %v5496
        %v5498 = vpop.f32.mrb[0].mxu0
        %5499 = vdwg.mxu0
        %v5500 = vadd.f32 %v4665, %v5422
        %v5501 = vadd.f32 %v4666, %v5427
        %v5502 = vadd.f32 %v4667, %v5432
        %v5503 = vadd.f32 %v4668, %v5437
        %v5504 = vadd.f32 %v4669, %v5442
        %v5505 = vadd.f32 %v4670, %v5447
        %v5506 = vadd.f32 %v4671, %v5452
        %v5507 = vadd.f32 %v4672, %v5457
        %v5508 = vadd.f32 %v4673, %v5462
        %v5509 = vadd.f32 %v4674, %v5467
        %v5510 = vadd.f32 %v4675, %v5472
        %v5511 = vadd.f32 %v4676, %v5477
        %v5512 = vadd.f32 %v4677, %v5482
        %v5513 = vadd.f32 %v4678, %v5487
        %v5514 = vadd.f32 %v4679, %v5492
        %v5515 = vadd.f32 %v4680, %v5497
        %5516 = vrot.lane.b32.xlu0 %v1280, 88
        %v5517 = vpop.permute.xlu0 %5516
        %5518 = vrot.lane.b32.xlu0 %v1286, 88
        %v5519 = vpop.permute.xlu0 %5518
        %5520 = vrot.lane.b32.xlu0 %v1292, 88
        %v5521 = vpop.permute.xlu0 %5520
        %5522 = vrot.lane.b32.xlu0 %v1298, 88
        %v5523 = vpop.permute.xlu0 %5522
        %5524 = vrot.lane.b32.xlu0 %v1304, 88
        %v5525 = vpop.permute.xlu0 %5524
        %5526 = vrot.lane.b32.xlu0 %v1310, 88
        %v5527 = vpop.permute.xlu0 %5526
        %5528 = vrot.lane.b32.xlu0 %v1316, 88
        %v5529 = vpop.permute.xlu0 %5528
        %5530 = vrot.lane.b32.xlu0 %v1322, 88
        %v5531 = vpop.permute.xlu0 %5530
        %5532 = vrot.lane.b32.xlu0 %v1328, 88
        %v5533 = vpop.permute.xlu0 %5532
        %5534 = vrot.lane.b32.xlu0 %v1334, 88
        %v5535 = vpop.permute.xlu0 %5534
        %5536 = vrot.lane.b32.xlu0 %v1340, 88
        %v5537 = vpop.permute.xlu0 %5536
        %5538 = vrot.lane.b32.xlu0 %v1346, 88
        %v5539 = vpop.permute.xlu0 %5538
        %5540 = vrot.lane.b32.xlu0 %v1352, 88
        %v5541 = vpop.permute.xlu0 %5540
        %5542 = vrot.lane.b32.xlu0 %v1358, 88
        %v5543 = vpop.permute.xlu0 %5542
        %5544 = vrot.lane.b32.xlu0 %v1364, 88
        %v5545 = vpop.permute.xlu0 %5544
        %5546 = vrot.lane.b32.xlu0 %v1370, 88
        %v5547 = vpop.permute.xlu0 %5546
        %5548 = vrot.lane.b32.xlu0 %v1278, 88
        %v5549 = vpop.permute.xlu0 %5548
        %5550 = vrot.lane.b32.xlu0 %v1284, 88
        %v5551 = vpop.permute.xlu0 %5550
        %5552 = vrot.lane.b32.xlu0 %v1290, 88
        %v5553 = vpop.permute.xlu0 %5552
        %5554 = vrot.lane.b32.xlu0 %v1296, 88
        %v5555 = vpop.permute.xlu0 %5554
        %5556 = vrot.lane.b32.xlu0 %v1302, 88
        %v5557 = vpop.permute.xlu0 %5556
        %5558 = vrot.lane.b32.xlu0 %v1308, 88
        %v5559 = vpop.permute.xlu0 %5558
        %5560 = vrot.lane.b32.xlu0 %v1314, 88
        %v5561 = vpop.permute.xlu0 %5560
        %5562 = vrot.lane.b32.xlu0 %v1320, 88
        %v5563 = vpop.permute.xlu0 %5562
        %5564 = vrot.lane.b32.xlu0 %v1326, 88
        %v5565 = vpop.permute.xlu0 %5564
        %5566 = vrot.lane.b32.xlu0 %v1332, 88
        %v5567 = vpop.permute.xlu0 %5566
        %5568 = vrot.lane.b32.xlu0 %v1338, 88
        %v5569 = vpop.permute.xlu0 %5568
        %5570 = vrot.lane.b32.xlu0 %v1344, 88
        %v5571 = vpop.permute.xlu0 %5570
        %5572 = vrot.lane.b32.xlu0 %v1350, 88
        %v5573 = vpop.permute.xlu0 %5572
        %5574 = vrot.lane.b32.xlu0 %v1356, 88
        %v5575 = vpop.permute.xlu0 %5574
        %5576 = vrot.lane.b32.xlu0 %v1362, 88
        %v5577 = vpop.permute.xlu0 %5576
        %5578 = vrot.lane.b32.xlu0 %v1368, 88
        %v5579 = vpop.permute.xlu0 %5578
        %v5580 = vsel %vm1372, %v5517, 0
        %v5582 = vsel %vm1372, %v5519, 0
        %v5584 = vsel %vm1372, %v5521, 0
        %v5586 = vsel %vm1372, %v5523, 0
        %v5588 = vsel %vm1372, %v5525, 0
        %v5590 = vsel %vm1372, %v5527, 0
        %v5592 = vsel %vm1372, %v5529, 0
        %v5594 = vsel %vm1372, %v5531, 0
        %v5596 = vsel %vm1372, %v5533, 0
        %v5598 = vsel %vm1372, %v5535, 0
        %v5600 = vsel %vm1372, %v5537, 0
        %v5602 = vsel %vm1372, %v5539, 0
        %v5604 = vsel %vm1372, %v5541, 0
        %v5606 = vsel %vm1372, %v5543, 0
        %v5608 = vsel %vm1372, %v5545, 0
        %v5610 = vsel %vm1372, %v5547, 0
        %v5612 = vsel %vm1372, %v5549, 0
        %v5614 = vsel %vm1372, %v5551, 0
        %v5616 = vsel %vm1372, %v5553, 0
        %v5618 = vsel %vm1372, %v5555, 0
        %v5620 = vsel %vm1372, %v5557, 0
        %v5622 = vsel %vm1372, %v5559, 0
        %v5624 = vsel %vm1372, %v5561, 0
        %v5626 = vsel %vm1372, %v5563, 0
        %v5628 = vsel %vm1372, %v5565, 0
        %v5630 = vsel %vm1372, %v5567, 0
        %v5632 = vsel %vm1372, %v5569, 0
        %v5634 = vsel %vm1372, %v5571, 0
        %v5636 = vsel %vm1372, %v5573, 0
        %v5638 = vsel %vm1372, %v5575, 0
        %v5640 = vsel %vm1372, %v5577, 0
        %v5642 = vsel %vm1372, %v5579, 0
        %5644 = vmatprep.subr.mxu0 0.0
        %5645 = vmatpush1.xpose.msra.mxu0 %v5612
        %5646 = vmatprep.subr.mxu0 0.0
        %5647 = vmatpush1.xpose.msra.mxu0 %v5614
        %5648 = vmatprep.subr.mxu0 0.0
        %5649 = vmatpush1.xpose.msra.mxu0 %v5616
        %5650 = vmatprep.subr.mxu0 0.0
        %5651 = vmatpush1.xpose.msra.mxu0 %v5618
        %5652 = vmatprep.subr.mxu0 0.0
        %5653 = vmatpush1.xpose.msra.mxu0 %v5620
        %5654 = vmatprep.subr.mxu0 0.0
        %5655 = vmatpush1.xpose.msra.mxu0 %v5622
        %5656 = vmatprep.subr.mxu0 0.0
        %5657 = vmatpush1.xpose.msra.mxu0 %v5624
        %5658 = vmatprep.subr.mxu0 0.0
        %5659 = vmatpush1.xpose.msra.mxu0 %v5626
        %5660 = vmatprep.subr.mxu0 0.0
        %5661 = vmatpush1.xpose.msra.mxu0 %v5628
        %5662 = vmatprep.subr.mxu0 0.0
        %5663 = vmatpush1.xpose.msra.mxu0 %v5630
        %5664 = vmatprep.subr.mxu0 0.0
        %5665 = vmatpush1.xpose.msra.mxu0 %v5632
        %5666 = vmatprep.subr.mxu0 0.0
        %5667 = vmatpush1.xpose.msra.mxu0 %v5634
        %5668 = vmatprep.subr.mxu0 0.0
        %5669 = vmatpush1.xpose.msra.mxu0 %v5636
        %5670 = vmatprep.subr.mxu0 0.0
        %5671 = vmatpush1.xpose.msra.mxu0 %v5638
        %5672 = vmatprep.subr.mxu0 0.0
        %5673 = vmatpush1.xpose.msra.mxu0 %v5640
        %5674 = vmatprep.subr.mxu0 0.0
        %5675 = vmatpush1.xpose.msra.mxu0 %v5642
        %5676 = vmatprep.subr.mxu0 0.0
        %5677 = vmatpush1.xpose.msra.mxu0 0.0
        %5678 = vmatprep.subr.mxu0 0.0
        %5679 = vmatpush1.xpose.msra.mxu0 0.0
        %5680 = vmatprep.subr.mxu0 0.0
        %5681 = vmatpush1.xpose.msra.mxu0 0.0
        %5682 = vmatprep.subr.mxu0 0.0
        %5683 = vmatpush1.xpose.msra.mxu0 0.0
        %5684 = vmatprep.subr.mxu0 0.0
        %5685 = vmatpush1.xpose.msra.mxu0 0.0
        %5686 = vmatprep.subr.mxu0 0.0
        %5687 = vmatpush1.xpose.msra.mxu0 0.0
        %5688 = vmatprep.subr.mxu0 0.0
        %5689 = vmatpush1.xpose.msra.mxu0 0.0
        %5690 = vmatprep.subr.mxu0 0.0
        %5691 = vmatpush1.xpose.msra.mxu0 0.0
        %5692 = vmatprep.subr.mxu0 0.0
        %5693 = vmatpush1.xpose.msra.mxu0 0.0
        %5694 = vmatprep.subr.mxu0 0.0
        %5695 = vmatpush1.xpose.msra.mxu0 0.0
        %5696 = vmatprep.subr.mxu0 0.0
        %5697 = vmatpush1.xpose.msra.mxu0 0.0
        %5698 = vmatprep.subr.mxu0 0.0
        %5699 = vmatpush1.xpose.msra.mxu0 0.0
        %5700 = vmatprep.subr.mxu0 0.0
        %5701 = vmatpush1.xpose.msra.mxu0 0.0
        %5702 = vmatprep.subr.mxu0 0.0
        %5703 = vmatpush1.xpose.msra.mxu0 0.0
        %5704 = vmatprep.subr.mxu0 0.0
        %5705 = vmatpush1.xpose.msra.mxu0 0.0
        %5706 = vmatprep.subr.mxu0 0.0
        %5707 = vmatpush1.xpose.msra.mxu0 0.0
        %5708 = vmatprep.mubr.f32.mxu0 0.0
        %5709 = vmatmul.mubr.f32.gmra.mrb[0].mxu0 %v5580
        %v5710 = vpop.f32.mrb[0].mxu0
        %v5711 = vadd.f32 0.0, %v5710
        %v5712 = vpop.f32.mrb[0].mxu0
        %5713 = vmatprep.mubr.f32.mxu0 0.0
        %5714 = vmatmul.mubr.f32.gmra.mrb[0].mxu0 %v5582
        %v5715 = vpop.f32.mrb[0].mxu0
        %v5716 = vadd.f32 0.0, %v5715
        %v5717 = vpop.f32.mrb[0].mxu0
        %5718 = vmatprep.mubr.f32.mxu0 0.0
        %5719 = vmatmul.mubr.f32.gmra.mrb[0].mxu0 %v5584
        %v5720 = vpop.f32.mrb[0].mxu0
        %v5721 = vadd.f32 0.0, %v5720
        %v5722 = vpop.f32.mrb[0].mxu0
        %5723 = vmatprep.mubr.f32.mxu0 0.0
        %5724 = vmatmul.mubr.f32.gmra.mrb[0].mxu0 %v5586
        %v5725 = vpop.f32.mrb[0].mxu0
        %v5726 = vadd.f32 0.0, %v5725
        %v5727 = vpop.f32.mrb[0].mxu0
        %5728 = vmatprep.mubr.f32.mxu0 0.0
        %5729 = vmatmul.mubr.f32.gmra.mrb[0].mxu0 %v5588
        %v5730 = vpop.f32.mrb[0].mxu0
        %v5731 = vadd.f32 0.0, %v5730
        %v5732 = vpop.f32.mrb[0].mxu0
        %5733 = vmatprep.mubr.f32.mxu0 0.0
        %5734 = vmatmul.mubr.f32.gmra.mrb[0].mxu0 %v5590
        %v5735 = vpop.f32.mrb[0].mxu0
        %v5736 = vadd.f32 0.0, %v5735
        %v5737 = vpop.f32.mrb[0].mxu0
        %5738 = vmatprep.mubr.f32.mxu0 0.0
        %5739 = vmatmul.mubr.f32.gmra.mrb[0].mxu0 %v5592
        %v5740 = vpop.f32.mrb[0].mxu0
        %v5741 = vadd.f32 0.0, %v5740
        %v5742 = vpop.f32.mrb[0].mxu0
        %5743 = vmatprep.mubr.f32.mxu0 0.0
        %5744 = vmatmul.mubr.f32.gmra.mrb[0].mxu0 %v5594
        %v5745 = vpop.f32.mrb[0].mxu0
        %v5746 = vadd.f32 0.0, %v5745
        %v5747 = vpop.f32.mrb[0].mxu0
        %5748 = vmatprep.mubr.f32.mxu0 0.0
        %5749 = vmatmul.mubr.f32.gmra.mrb[0].mxu0 %v5596
        %v5750 = vpop.f32.mrb[0].mxu0
        %v5751 = vadd.f32 0.0, %v5750
        %v5752 = vpop.f32.mrb[0].mxu0
        %5753 = vmatprep.mubr.f32.mxu0 0.0
        %5754 = vmatmul.mubr.f32.gmra.mrb[0].mxu0 %v5598
        %v5755 = vpop.f32.mrb[0].mxu0
        %v5756 = vadd.f32 0.0, %v5755
        %v5757 = vpop.f32.mrb[0].mxu0
        %5758 = vmatprep.mubr.f32.mxu0 0.0
        %5759 = vmatmul.mubr.f32.gmra.mrb[0].mxu0 %v5600
        %v5760 = vpop.f32.mrb[0].mxu0
        %v5761 = vadd.f32 0.0, %v5760
        %v5762 = vpop.f32.mrb[0].mxu0
        %5763 = vmatprep.mubr.f32.mxu0 0.0
        %5764 = vmatmul.mubr.f32.gmra.mrb[0].mxu0 %v5602
        %v5765 = vpop.f32.mrb[0].mxu0
        %v5766 = vadd.f32 0.0, %v5765
        %v5767 = vpop.f32.mrb[0].mxu0
        %5768 = vmatprep.mubr.f32.mxu0 0.0
        %5769 = vmatmul.mubr.f32.gmra.mrb[0].mxu0 %v5604
        %v5770 = vpop.f32.mrb[0].mxu0
        %v5771 = vadd.f32 0.0, %v5770
        %v5772 = vpop.f32.mrb[0].mxu0
        %5773 = vmatprep.mubr.f32.mxu0 0.0
        %5774 = vmatmul.mubr.f32.gmra.mrb[0].mxu0 %v5606
        %v5775 = vpop.f32.mrb[0].mxu0
        %v5776 = vadd.f32 0.0, %v5775
        %v5777 = vpop.f32.mrb[0].mxu0
        %5778 = vmatprep.mubr.f32.mxu0 0.0
        %5779 = vmatmul.mubr.f32.gmra.mrb[0].mxu0 %v5608
        %v5780 = vpop.f32.mrb[0].mxu0
        %v5781 = vadd.f32 0.0, %v5780
        %v5782 = vpop.f32.mrb[0].mxu0
        %5783 = vmatprep.mubr.f32.mxu0 0.0
        %5784 = vmatmul.mubr.f32.gmra.mrb[0].mxu0 %v5610
        %v5785 = vpop.f32.mrb[0].mxu0
        %v5786 = vadd.f32 0.0, %v5785
        %v5787 = vpop.f32.mrb[0].mxu0
        %5788 = vdwg.mxu0
        %v5789 = vmul.f32 %v5711, 0.35355338
        %v5790 = vmul.f32 %v5716, 0.35355338
        %v5791 = vmul.f32 %v5721, 0.35355338
        %v5792 = vmul.f32 %v5726, 0.35355338
        %v5793 = vmul.f32 %v5731, 0.35355338
        %v5794 = vmul.f32 %v5736, 0.35355338
        %v5795 = vmul.f32 %v5741, 0.35355338
        %v5796 = vmul.f32 %v5746, 0.35355338
        %v5797 = vmul.f32 %v5751, 0.35355338
        %v5798 = vmul.f32 %v5756, 0.35355338
        %v5799 = vmul.f32 %v5761, 0.35355338
        %v5800 = vmul.f32 %v5766, 0.35355338
        %v5801 = vmul.f32 %v5771, 0.35355338
        %v5802 = vmul.f32 %v5776, 0.35355338
        %v5803 = vmul.f32 %v5781, 0.35355338
        %v5804 = vmul.f32 %v5786, 0.35355338
        %5805 = vmax.xlane.f32.xlu0 %v5789
        %v5806 = vpop.xlane.xlu0 %5805
        %5807 = vmax.xlane.f32.xlu0 %v5790
        %v5808 = vpop.xlane.xlu0 %5807
        %5809 = vmax.xlane.f32.xlu0 %v5791
        %v5810 = vpop.xlane.xlu0 %5809
        %5811 = vmax.xlane.f32.xlu0 %v5792
        %v5812 = vpop.xlane.xlu0 %5811
        %5813 = vmax.xlane.f32.xlu0 %v5793
        %v5814 = vpop.xlane.xlu0 %5813
        %5815 = vmax.xlane.f32.xlu0 %v5794
        %v5816 = vpop.xlane.xlu0 %5815
        %5817 = vmax.xlane.f32.xlu0 %v5795
        %v5818 = vpop.xlane.xlu0 %5817
        %5819 = vmax.xlane.f32.xlu0 %v5796
        %v5820 = vpop.xlane.xlu0 %5819
        %5821 = vmax.xlane.f32.xlu0 %v5797
        %v5822 = vpop.xlane.xlu0 %5821
        %5823 = vmax.xlane.f32.xlu0 %v5798
        %v5824 = vpop.xlane.xlu0 %5823
        %5825 = vmax.xlane.f32.xlu0 %v5799
        %v5826 = vpop.xlane.xlu0 %5825
        %5827 = vmax.xlane.f32.xlu0 %v5800
        %v5828 = vpop.xlane.xlu0 %5827
        %5829 = vmax.xlane.f32.xlu0 %v5801
        %v5830 = vpop.xlane.xlu0 %5829
        %5831 = vmax.xlane.f32.xlu0 %v5802
        %v5832 = vpop.xlane.xlu0 %5831
        %5833 = vmax.xlane.f32.xlu0 %v5803
        %v5834 = vpop.xlane.xlu0 %5833
        %5835 = vmax.xlane.f32.xlu0 %v5804
        %v5836 = vpop.xlane.xlu0 %5835
        %v5837 = vsub.f32 %v5789, %v5806
        %v5838 = vsub.f32 %v5790, %v5808
        %v5839 = vsub.f32 %v5791, %v5810
        %v5840 = vsub.f32 %v5792, %v5812
        %v5841 = vsub.f32 %v5793, %v5814
        %v5842 = vsub.f32 %v5794, %v5816
        %v5843 = vsub.f32 %v5795, %v5818
        %v5844 = vsub.f32 %v5796, %v5820
        %v5845 = vsub.f32 %v5797, %v5822
        %v5846 = vsub.f32 %v5798, %v5824
        %v5847 = vsub.f32 %v5799, %v5826
        %v5848 = vsub.f32 %v5800, %v5828
        %v5849 = vsub.f32 %v5801, %v5830
        %v5850 = vsub.f32 %v5802, %v5832
        %v5851 = vsub.f32 %v5803, %v5834
        %v5852 = vsub.f32 %v5804, %v5836
        %v5853 = vmul.f32 %v5837, 1.442695
        %v5854 = vpow.pop %v5853
        %v5855 = vmul.f32 %v5838, 1.442695
        %v5856 = vpow.pop %v5855
        %v5857 = vmul.f32 %v5839, 1.442695
        %v5858 = vpow.pop %v5857
        %v5859 = vmul.f32 %v5840, 1.442695
        %v5860 = vpow.pop %v5859
        %v5861 = vmul.f32 %v5841, 1.442695
        %v5862 = vpow.pop %v5861
        %v5863 = vmul.f32 %v5842, 1.442695
        %v5864 = vpow.pop %v5863
        %v5865 = vmul.f32 %v5843, 1.442695
        %v5866 = vpow.pop %v5865
        %v5867 = vmul.f32 %v5844, 1.442695
        %v5868 = vpow.pop %v5867
        %v5869 = vmul.f32 %v5845, 1.442695
        %v5870 = vpow.pop %v5869
        %v5871 = vmul.f32 %v5846, 1.442695
        %v5872 = vpow.pop %v5871
        %v5873 = vmul.f32 %v5847, 1.442695
        %v5874 = vpow.pop %v5873
        %v5875 = vmul.f32 %v5848, 1.442695
        %v5876 = vpow.pop %v5875
        %v5877 = vmul.f32 %v5849, 1.442695
        %v5878 = vpow.pop %v5877
        %v5879 = vmul.f32 %v5850, 1.442695
        %v5880 = vpow.pop %v5879
        %v5881 = vmul.f32 %v5851, 1.442695
        %v5882 = vpow.pop %v5881
        %v5883 = vmul.f32 %v5852, 1.442695
        %v5884 = vpow.pop %v5883
        %5885 = vadd.xlane.f32.xlu0 %v5854
        %v5886 = vpop.xlane.xlu0 %5885
        %5887 = vadd.xlane.f32.xlu0 %v5856
        %v5888 = vpop.xlane.xlu0 %5887
        %5889 = vadd.xlane.f32.xlu0 %v5858
        %v5890 = vpop.xlane.xlu0 %5889
        %5891 = vadd.xlane.f32.xlu0 %v5860
        %v5892 = vpop.xlane.xlu0 %5891
        %5893 = vadd.xlane.f32.xlu0 %v5862
        %v5894 = vpop.xlane.xlu0 %5893
        %5895 = vadd.xlane.f32.xlu0 %v5864
        %v5896 = vpop.xlane.xlu0 %5895
        %5897 = vadd.xlane.f32.xlu0 %v5866
        %v5898 = vpop.xlane.xlu0 %5897
        %5899 = vadd.xlane.f32.xlu0 %v5868
        %v5900 = vpop.xlane.xlu0 %5899
        %5901 = vadd.xlane.f32.xlu0 %v5870
        %v5902 = vpop.xlane.xlu0 %5901
        %5903 = vadd.xlane.f32.xlu0 %v5872
        %v5904 = vpop.xlane.xlu0 %5903
        %5905 = vadd.xlane.f32.xlu0 %v5874
        %v5906 = vpop.xlane.xlu0 %5905
        %5907 = vadd.xlane.f32.xlu0 %v5876
        %v5908 = vpop.xlane.xlu0 %5907
        %5909 = vadd.xlane.f32.xlu0 %v5878
        %v5910 = vpop.xlane.xlu0 %5909
        %5911 = vadd.xlane.f32.xlu0 %v5880
        %v5912 = vpop.xlane.xlu0 %5911
        %5913 = vadd.xlane.f32.xlu0 %v5882
        %v5914 = vpop.xlane.xlu0 %5913
        %5915 = vadd.xlane.f32.xlu0 %v5884
        %v5916 = vpop.xlane.xlu0 %5915
        %v5917 = vrcp.pop %v5886
        %v5918 = vrcp.pop %v5888
        %v5919 = vrcp.pop %v5890
        %v5920 = vrcp.pop %v5892
        %v5921 = vrcp.pop %v5894
        %v5922 = vrcp.pop %v5896
        %v5923 = vrcp.pop %v5898
        %v5924 = vrcp.pop %v5900
        %v5925 = vrcp.pop %v5902
        %v5926 = vrcp.pop %v5904
        %v5927 = vrcp.pop %v5906
        %v5928 = vrcp.pop %v5908
        %v5929 = vrcp.pop %v5910
        %v5930 = vrcp.pop %v5912
        %v5931 = vrcp.pop %v5914
        %v5932 = vrcp.pop %v5916
        %v5933 = vmul.f32 %v5854, %v5917
        %v5934 = vmul.f32 %v5856, %v5918
        %v5935 = vmul.f32 %v5858, %v5919
        %v5936 = vmul.f32 %v5860, %v5920
        %v5937 = vmul.f32 %v5862, %v5921
        %v5938 = vmul.f32 %v5864, %v5922
        %v5939 = vmul.f32 %v5866, %v5923
        %v5940 = vmul.f32 %v5868, %v5924
        %v5941 = vmul.f32 %v5870, %v5925
        %v5942 = vmul.f32 %v5872, %v5926
        %v5943 = vmul.f32 %v5874, %v5927
        %v5944 = vmul.f32 %v5876, %v5928
        %v5945 = vmul.f32 %v5878, %v5929
        %v5946 = vmul.f32 %v5880, %v5930
        %v5947 = vmul.f32 %v5882, %v5931
        %v5948 = vmul.f32 %v5884, %v5932
        %5949 = vrot.lane.b32.xlu0 %v1278, 24
        %v5950 = vpop.permute.xlu0 %5949
        %5951 = vrot.lane.b32.xlu0 %v1284, 24
        %v5952 = vpop.permute.xlu0 %5951
        %5953 = vrot.lane.b32.xlu0 %v1290, 24
        %v5954 = vpop.permute.xlu0 %5953
        %5955 = vrot.lane.b32.xlu0 %v1296, 24
        %v5956 = vpop.permute.xlu0 %5955
        %5957 = vrot.lane.b32.xlu0 %v1302, 24
        %v5958 = vpop.permute.xlu0 %5957
        %5959 = vrot.lane.b32.xlu0 %v1308, 24
        %v5960 = vpop.permute.xlu0 %5959
        %5961 = vrot.lane.b32.xlu0 %v1314, 24
        %v5962 = vpop.permute.xlu0 %5961
        %5963 = vrot.lane.b32.xlu0 %v1320, 24
        %v5964 = vpop.permute.xlu0 %5963
        %5965 = vrot.lane.b32.xlu0 %v1326, 24
        %v5966 = vpop.permute.xlu0 %5965
        %5967 = vrot.lane.b32.xlu0 %v1332, 24
        %v5968 = vpop.permute.xlu0 %5967
        %5969 = vrot.lane.b32.xlu0 %v1338, 24
        %v5970 = vpop.permute.xlu0 %5969
        %5971 = vrot.lane.b32.xlu0 %v1344, 24
        %v5972 = vpop.permute.xlu0 %5971
        %5973 = vrot.lane.b32.xlu0 %v1350, 24
        %v5974 = vpop.permute.xlu0 %5973
        %5975 = vrot.lane.b32.xlu0 %v1356, 24
        %v5976 = vpop.permute.xlu0 %5975
        %5977 = vrot.lane.b32.xlu0 %v1362, 24
        %v5978 = vpop.permute.xlu0 %5977
        %5979 = vrot.lane.b32.xlu0 %v1368, 24
        %v5980 = vpop.permute.xlu0 %5979
        %5997 = vmatprep.subr.mxu0 0.0
        %5998 = vmatpush1.msra.mxu0 %v5950
        %5999 = vmatprep.subr.mxu0 0.0
        %6000 = vmatpush1.msra.mxu0 %v5952
        %6001 = vmatprep.subr.mxu0 0.0
        %6002 = vmatpush1.msra.mxu0 %v5954
        %6003 = vmatprep.subr.mxu0 0.0
        %6004 = vmatpush1.msra.mxu0 %v5956
        %6005 = vmatprep.subr.mxu0 0.0
        %6006 = vmatpush1.msra.mxu0 %v5958
        %6007 = vmatprep.subr.mxu0 0.0
        %6008 = vmatpush1.msra.mxu0 %v5960
        %6009 = vmatprep.subr.mxu0 0.0
        %6010 = vmatpush1.msra.mxu0 %v5962
        %6011 = vmatprep.subr.mxu0 0.0
        %6012 = vmatpush1.msra.mxu0 %v5964
        %6013 = vmatprep.subr.mxu0 0.0
        %6014 = vmatpush1.msra.mxu0 %v5966
        %6015 = vmatprep.subr.mxu0 0.0
        %6016 = vmatpush1.msra.mxu0 %v5968
        %6017 = vmatprep.subr.mxu0 0.0
        %6018 = vmatpush1.msra.mxu0 %v5970
        %6019 = vmatprep.subr.mxu0 0.0
        %6020 = vmatpush1.msra.mxu0 %v5972
        %6021 = vmatprep.subr.mxu0 0.0
        %6022 = vmatpush1.msra.mxu0 %v5974
        %6023 = vmatprep.subr.mxu0 0.0
        %6024 = vmatpush1.msra.mxu0 %v5976
        %6025 = vmatprep.subr.mxu0 0.0
        %6026 = vmatpush1.msra.mxu0 %v5978
        %6027 = vmatprep.subr.mxu0 0.0
        %6028 = vmatpush1.msra.mxu0 %v5980
        %6029 = vmatprep.subr.mxu0 0.0
        %6030 = vmatpush1.msra.mxu0 0.0
        %6031 = vmatprep.subr.mxu0 0.0
        %6032 = vmatpush1.msra.mxu0 0.0
        %6033 = vmatprep.subr.mxu0 0.0
        %6034 = vmatpush1.msra.mxu0 0.0
        %6035 = vmatprep.subr.mxu0 0.0
        %6036 = vmatpush1.msra.mxu0 0.0
        %6037 = vmatprep.subr.mxu0 0.0
        %6038 = vmatpush1.msra.mxu0 0.0
        %6039 = vmatprep.subr.mxu0 0.0
        %6040 = vmatpush1.msra.mxu0 0.0
        %6041 = vmatprep.subr.mxu0 0.0
        %6042 = vmatpush1.msra.mxu0 0.0
        %6043 = vmatprep.subr.mxu0 0.0
        %6044 = vmatpush1.msra.mxu0 0.0
        %6045 = vmatprep.subr.mxu0 0.0
        %6046 = vmatpush1.msra.mxu0 0.0
        %6047 = vmatprep.subr.mxu0 0.0
        %6048 = vmatpush1.msra.mxu0 0.0
        %6049 = vmatprep.subr.mxu0 0.0
        %6050 = vmatpush1.msra.mxu0 0.0
        %6051 = vmatprep.subr.mxu0 0.0
        %6052 = vmatpush1.msra.mxu0 0.0
        %6053 = vmatprep.subr.mxu0 0.0
        %6054 = vmatpush1.msra.mxu0 0.0
        %6055 = vmatprep.subr.mxu0 0.0
        %6056 = vmatpush1.msra.mxu0 0.0
        %6057 = vmatprep.subr.mxu0 0.0
        %6058 = vmatpush1.msra.mxu0 0.0
        %6059 = vmatprep.subr.mxu0 0.0
        %6060 = vmatpush1.msra.mxu0 0.0
        %6061 = vmatprep.mubr.f32.mxu0 0.0
        %6062 = vmatmul.mubr.f32.gmra.mrb[0].mxu0 %v5933
        %v6063 = vpop.f32.mrb[0].mxu0
        %v6064 = vadd.f32 0.0, %v6063
        %v6065 = vpop.f32.mrb[0].mxu0
        %6066 = vmatprep.mubr.f32.mxu0 0.0
        %6067 = vmatmul.mubr.f32.gmra.mrb[0].mxu0 %v5934
        %v6068 = vpop.f32.mrb[0].mxu0
        %v6069 = vadd.f32 0.0, %v6068
        %v6070 = vpop.f32.mrb[0].mxu0
        %6071 = vmatprep.mubr.f32.mxu0 0.0
        %6072 = vmatmul.mubr.f32.gmra.mrb[0].mxu0 %v5935
        %v6073 = vpop.f32.mrb[0].mxu0
        %v6074 = vadd.f32 0.0, %v6073
        %v6075 = vpop.f32.mrb[0].mxu0
        %6076 = vmatprep.mubr.f32.mxu0 0.0
        %6077 = vmatmul.mubr.f32.gmra.mrb[0].mxu0 %v5936
        %v6078 = vpop.f32.mrb[0].mxu0
        %v6079 = vadd.f32 0.0, %v6078
        %v6080 = vpop.f32.mrb[0].mxu0
        %6081 = vmatprep.mubr.f32.mxu0 0.0
        %6082 = vmatmul.mubr.f32.gmra.mrb[0].mxu0 %v5937
        %v6083 = vpop.f32.mrb[0].mxu0
        %v6084 = vadd.f32 0.0, %v6083
        %v6085 = vpop.f32.mrb[0].mxu0
        %6086 = vmatprep.mubr.f32.mxu0 0.0
        %6087 = vmatmul.mubr.f32.gmra.mrb[0].mxu0 %v5938
        %v6088 = vpop.f32.mrb[0].mxu0
        %v6089 = vadd.f32 0.0, %v6088
        %v6090 = vpop.f32.mrb[0].mxu0
        %6091 = vmatprep.mubr.f32.mxu0 0.0
        %6092 = vmatmul.mubr.f32.gmra.mrb[0].mxu0 %v5939
        %v6093 = vpop.f32.mrb[0].mxu0
        %v6094 = vadd.f32 0.0, %v6093
        %v6095 = vpop.f32.mrb[0].mxu0
        %6096 = vmatprep.mubr.f32.mxu0 0.0
        %6097 = vmatmul.mubr.f32.gmra.mrb[0].mxu0 %v5940
        %v6098 = vpop.f32.mrb[0].mxu0
        %v6099 = vadd.f32 0.0, %v6098
        %v6100 = vpop.f32.mrb[0].mxu0
        %6101 = vmatprep.mubr.f32.mxu0 0.0
        %6102 = vmatmul.mubr.f32.gmra.mrb[0].mxu0 %v5941
        %v6103 = vpop.f32.mrb[0].mxu0
        %v6104 = vadd.f32 0.0, %v6103
        %v6105 = vpop.f32.mrb[0].mxu0
        %6106 = vmatprep.mubr.f32.mxu0 0.0
        %6107 = vmatmul.mubr.f32.gmra.mrb[0].mxu0 %v5942
        %v6108 = vpop.f32.mrb[0].mxu0
        %v6109 = vadd.f32 0.0, %v6108
        %v6110 = vpop.f32.mrb[0].mxu0
        %6111 = vmatprep.mubr.f32.mxu0 0.0
        %6112 = vmatmul.mubr.f32.gmra.mrb[0].mxu0 %v5943
        %v6113 = vpop.f32.mrb[0].mxu0
        %v6114 = vadd.f32 0.0, %v6113
        %v6115 = vpop.f32.mrb[0].mxu0
        %6116 = vmatprep.mubr.f32.mxu0 0.0
        %6117 = vmatmul.mubr.f32.gmra.mrb[0].mxu0 %v5944
        %v6118 = vpop.f32.mrb[0].mxu0
        %v6119 = vadd.f32 0.0, %v6118
        %v6120 = vpop.f32.mrb[0].mxu0
        %6121 = vmatprep.mubr.f32.mxu0 0.0
        %6122 = vmatmul.mubr.f32.gmra.mrb[0].mxu0 %v5945
        %v6123 = vpop.f32.mrb[0].mxu0
        %v6124 = vadd.f32 0.0, %v6123
        %v6125 = vpop.f32.mrb[0].mxu0
        %6126 = vmatprep.mubr.f32.mxu0 0.0
        %6127 = vmatmul.mubr.f32.gmra.mrb[0].mxu0 %v5946
        %v6128 = vpop.f32.mrb[0].mxu0
        %v6129 = vadd.f32 0.0, %v6128
        %v6130 = vpop.f32.mrb[0].mxu0
        %6131 = vmatprep.mubr.f32.mxu0 0.0
        %6132 = vmatmul.mubr.f32.gmra.mrb[0].mxu0 %v5947
        %v6133 = vpop.f32.mrb[0].mxu0
        %v6134 = vadd.f32 0.0, %v6133
        %v6135 = vpop.f32.mrb[0].mxu0
        %6136 = vmatprep.mubr.f32.mxu0 0.0
        %6137 = vmatmul.mubr.f32.gmra.mrb[0].mxu0 %v5948
        %v6138 = vpop.f32.mrb[0].mxu0
        %v6139 = vadd.f32 0.0, %v6138
        %v6140 = vpop.f32.mrb[0].mxu0
        %6141 = vdwg.mxu0
        %v6143 = vsel %vm1372, %v6064, 0
        %v6146 = vsel %vm1372, %v6069, 0
        %v6149 = vsel %vm1372, %v6074, 0
        %v6152 = vsel %vm1372, %v6079, 0
        %v6155 = vsel %vm1372, %v6084, 0
        %v6158 = vsel %vm1372, %v6089, 0
        %v6161 = vsel %vm1372, %v6094, 0
        %v6164 = vsel %vm1372, %v6099, 0
        %v6167 = vsel %vm1372, %v6104, 0
        %v6170 = vsel %vm1372, %v6109, 0
        %v6173 = vsel %vm1372, %v6114, 0
        %v6176 = vsel %vm1372, %v6119, 0
        %v6179 = vsel %vm1372, %v6124, 0
        %v6182 = vsel %vm1372, %v6129, 0
        %v6185 = vsel %vm1372, %v6134, 0
        %v6188 = vsel %vm1372, %v6139, 0
        %6190 = vmatprep.subr.mxu0 0.0
        %6191 = vmatpush1.msra.mxu0 %v842
        %6192 = vmatprep.subr.mxu0 0.0
        %6193 = vmatpush1.msra.mxu0 0.0
        %6194 = vmatprep.subr.mxu0 0.0
        %6195 = vmatpush1.msra.mxu0 0.0
        %6196 = vmatprep.subr.mxu0 0.0
        %6197 = vmatpush1.msra.mxu0 0.0
        %6198 = vmatprep.subr.mxu0 0.0
        %6199 = vmatpush1.msra.mxu0 0.0
        %6200 = vmatprep.subr.mxu0 0.0
        %6201 = vmatpush1.msra.mxu0 0.0
        %6202 = vmatprep.subr.mxu0 0.0
        %6203 = vmatpush1.msra.mxu0 0.0
        %6204 = vmatprep.subr.mxu0 0.0
        %6205 = vmatpush1.msra.mxu0 0.0
        %6206 = vmatprep.subr.mxu0 0.0
        %6207 = vmatpush1.msra.mxu0 0.0
        %6208 = vmatprep.subr.mxu0 0.0
        %6209 = vmatpush1.msra.mxu0 0.0
        %6210 = vmatprep.subr.mxu0 0.0
        %6211 = vmatpush1.msra.mxu0 0.0
        %6212 = vmatprep.subr.mxu0 0.0
        %6213 = vmatpush1.msra.mxu0 0.0
        %6214 = vmatprep.subr.mxu0 0.0
        %6215 = vmatpush1.msra.mxu0 0.0
        %6216 = vmatprep.subr.mxu0 0.0
        %6217 = vmatpush1.msra.mxu0 0.0
        %6218 = vmatprep.subr.mxu0 0.0
        %6219 = vmatpush1.msra.mxu0 0.0
        %6220 = vmatprep.subr.mxu0 0.0
        %6221 = vmatpush1.msra.mxu0 0.0
        %6222 = vmatprep.subr.mxu0 0.0
        %6223 = vmatpush1.msra.mxu0 0.0
        %6224 = vmatprep.subr.mxu0 0.0
        %6225 = vmatpush1.msra.mxu0 0.0
        %6226 = vmatprep.subr.mxu0 0.0
        %6227 = vmatpush1.msra.mxu0 0.0
        %6228 = vmatprep.subr.mxu0 0.0
        %6229 = vmatpush1.msra.mxu0 0.0
        %6230 = vmatprep.subr.mxu0 0.0
        %6231 = vmatpush1.msra.mxu0 0.0
        %6232 = vmatprep.subr.mxu0 0.0
        %6233 = vmatpush1.msra.mxu0 0.0
        %6234 = vmatprep.subr.mxu0 0.0
        %6235 = vmatpush1.msra.mxu0 0.0
        %6236 = vmatprep.subr.mxu0 0.0
        %6237 = vmatpush1.msra.mxu0 0.0
        %6238 = vmatprep.subr.mxu0 0.0
        %6239 = vmatpush1.msra.mxu0 0.0
        %6240 = vmatprep.subr.mxu0 0.0
        %6241 = vmatpush1.msra.mxu0 0.0
        %6242 = vmatprep.subr.mxu0 0.0
        %6243 = vmatpush1.msra.mxu0 0.0
        %6244 = vmatprep.subr.mxu0 0.0
        %6245 = vmatpush1.msra.mxu0 0.0
        %6246 = vmatprep.subr.mxu0 0.0
        %6247 = vmatpush1.msra.mxu0 0.0
        %6248 = vmatprep.subr.mxu0 0.0
        %6249 = vmatpush1.msra.mxu0 0.0
        %6250 = vmatprep.subr.mxu0 0.0
        %6251 = vmatpush1.msra.mxu0 0.0
        %6252 = vmatprep.subr.mxu0 0.0
        %6253 = vmatpush1.msra.mxu0 0.0
        %6254 = vmatprep.mubr.f32.mxu0 0.0
        %6255 = vmatmul.mubr.f32.gmra.mrb[0].mxu0 %v6143
        %v6256 = vpop.f32.mrb[0].mxu0
        %v6257 = vadd.f32 0.0, %v6256
        %v6258 = vpop.f32.mrb[0].mxu0
        %6259 = vmatprep.mubr.f32.mxu0 0.0
        %6260 = vmatmul.mubr.f32.gmra.mrb[0].mxu0 %v6146
        %v6261 = vpop.f32.mrb[0].mxu0
        %v6262 = vadd.f32 0.0, %v6261
        %v6263 = vpop.f32.mrb[0].mxu0
        %6264 = vmatprep.mubr.f32.mxu0 0.0
        %6265 = vmatmul.mubr.f32.gmra.mrb[0].mxu0 %v6149
        %v6266 = vpop.f32.mrb[0].mxu0
        %v6267 = vadd.f32 0.0, %v6266
        %v6268 = vpop.f32.mrb[0].mxu0
        %6269 = vmatprep.mubr.f32.mxu0 0.0
        %6270 = vmatmul.mubr.f32.gmra.mrb[0].mxu0 %v6152
        %v6271 = vpop.f32.mrb[0].mxu0
        %v6272 = vadd.f32 0.0, %v6271
        %v6273 = vpop.f32.mrb[0].mxu0
        %6274 = vmatprep.mubr.f32.mxu0 0.0
        %6275 = vmatmul.mubr.f32.gmra.mrb[0].mxu0 %v6155
        %v6276 = vpop.f32.mrb[0].mxu0
        %v6277 = vadd.f32 0.0, %v6276
        %v6278 = vpop.f32.mrb[0].mxu0
        %6279 = vmatprep.mubr.f32.mxu0 0.0
        %6280 = vmatmul.mubr.f32.gmra.mrb[0].mxu0 %v6158
        %v6281 = vpop.f32.mrb[0].mxu0
        %v6282 = vadd.f32 0.0, %v6281
        %v6283 = vpop.f32.mrb[0].mxu0
        %6284 = vmatprep.mubr.f32.mxu0 0.0
        %6285 = vmatmul.mubr.f32.gmra.mrb[0].mxu0 %v6161
        %v6286 = vpop.f32.mrb[0].mxu0
        %v6287 = vadd.f32 0.0, %v6286
        %v6288 = vpop.f32.mrb[0].mxu0
        %6289 = vmatprep.mubr.f32.mxu0 0.0
        %6290 = vmatmul.mubr.f32.gmra.mrb[0].mxu0 %v6164
        %v6291 = vpop.f32.mrb[0].mxu0
        %v6292 = vadd.f32 0.0, %v6291
        %v6293 = vpop.f32.mrb[0].mxu0
        %6294 = vmatprep.mubr.f32.mxu0 0.0
        %6295 = vmatmul.mubr.f32.gmra.mrb[0].mxu0 %v6167
        %v6296 = vpop.f32.mrb[0].mxu0
        %v6297 = vadd.f32 0.0, %v6296
        %v6298 = vpop.f32.mrb[0].mxu0
        %6299 = vmatprep.mubr.f32.mxu0 0.0
        %6300 = vmatmul.mubr.f32.gmra.mrb[0].mxu0 %v6170
        %v6301 = vpop.f32.mrb[0].mxu0
        %v6302 = vadd.f32 0.0, %v6301
        %v6303 = vpop.f32.mrb[0].mxu0
        %6304 = vmatprep.mubr.f32.mxu0 0.0
        %6305 = vmatmul.mubr.f32.gmra.mrb[0].mxu0 %v6173
        %v6306 = vpop.f32.mrb[0].mxu0
        %v6307 = vadd.f32 0.0, %v6306
        %v6308 = vpop.f32.mrb[0].mxu0
        %6309 = vmatprep.mubr.f32.mxu0 0.0
        %6310 = vmatmul.mubr.f32.gmra.mrb[0].mxu0 %v6176
        %v6311 = vpop.f32.mrb[0].mxu0
        %v6312 = vadd.f32 0.0, %v6311
        %v6313 = vpop.f32.mrb[0].mxu0
        %6314 = vmatprep.mubr.f32.mxu0 0.0
        %6315 = vmatmul.mubr.f32.gmra.mrb[0].mxu0 %v6179
        %v6316 = vpop.f32.mrb[0].mxu0
        %v6317 = vadd.f32 0.0, %v6316
        %v6318 = vpop.f32.mrb[0].mxu0
        %6319 = vmatprep.mubr.f32.mxu0 0.0
        %6320 = vmatmul.mubr.f32.gmra.mrb[0].mxu0 %v6182
        %v6321 = vpop.f32.mrb[0].mxu0
        %v6322 = vadd.f32 0.0, %v6321
        %v6323 = vpop.f32.mrb[0].mxu0
        %6324 = vmatprep.mubr.f32.mxu0 0.0
        %6325 = vmatmul.mubr.f32.gmra.mrb[0].mxu0 %v6185
        %v6326 = vpop.f32.mrb[0].mxu0
        %v6327 = vadd.f32 0.0, %v6326
        %v6328 = vpop.f32.mrb[0].mxu0
        %6329 = vmatprep.mubr.f32.mxu0 0.0
        %6330 = vmatmul.mubr.f32.gmra.mrb[0].mxu0 %v6188
        %v6331 = vpop.f32.mrb[0].mxu0
        %v6332 = vadd.f32 0.0, %v6331
        %v6333 = vpop.f32.mrb[0].mxu0
        %6334 = vdwg.mxu0
        %v6335 = vadd.f32 %v5500, %v6257
        %v6336 = vadd.f32 %v5501, %v6262
        %v6337 = vadd.f32 %v5502, %v6267
        %v6338 = vadd.f32 %v5503, %v6272
        %v6339 = vadd.f32 %v5504, %v6277
        %v6340 = vadd.f32 %v5505, %v6282
        %v6341 = vadd.f32 %v5506, %v6287
        %v6342 = vadd.f32 %v5507, %v6292
        %v6343 = vadd.f32 %v5508, %v6297
        %v6344 = vadd.f32 %v5509, %v6302
        %v6345 = vadd.f32 %v5510, %v6307
        %v6346 = vadd.f32 %v5511, %v6312
        %v6347 = vadd.f32 %v5512, %v6317
        %v6348 = vadd.f32 %v5513, %v6322
        %v6349 = vadd.f32 %v5514, %v6327
        %v6350 = vadd.f32 %v5515, %v6332
        %6351 = vrot.lane.b32.xlu0 %v1280, 80
        %v6352 = vpop.permute.xlu0 %6351
        %6353 = vrot.lane.b32.xlu0 %v1286, 80
        %v6354 = vpop.permute.xlu0 %6353
        %6355 = vrot.lane.b32.xlu0 %v1292, 80
        %v6356 = vpop.permute.xlu0 %6355
        %6357 = vrot.lane.b32.xlu0 %v1298, 80
        %v6358 = vpop.permute.xlu0 %6357
        %6359 = vrot.lane.b32.xlu0 %v1304, 80
        %v6360 = vpop.permute.xlu0 %6359
        %6361 = vrot.lane.b32.xlu0 %v1310, 80
        %v6362 = vpop.permute.xlu0 %6361
        %6363 = vrot.lane.b32.xlu0 %v1316, 80
        %v6364 = vpop.permute.xlu0 %6363
        %6365 = vrot.lane.b32.xlu0 %v1322, 80
        %v6366 = vpop.permute.xlu0 %6365
        %6367 = vrot.lane.b32.xlu0 %v1328, 80
        %v6368 = vpop.permute.xlu0 %6367
        %6369 = vrot.lane.b32.xlu0 %v1334, 80
        %v6370 = vpop.permute.xlu0 %6369
        %6371 = vrot.lane.b32.xlu0 %v1340, 80
        %v6372 = vpop.permute.xlu0 %6371
        %6373 = vrot.lane.b32.xlu0 %v1346, 80
        %v6374 = vpop.permute.xlu0 %6373
        %6375 = vrot.lane.b32.xlu0 %v1352, 80
        %v6376 = vpop.permute.xlu0 %6375
        %6377 = vrot.lane.b32.xlu0 %v1358, 80
        %v6378 = vpop.permute.xlu0 %6377
        %6379 = vrot.lane.b32.xlu0 %v1364, 80
        %v6380 = vpop.permute.xlu0 %6379
        %6381 = vrot.lane.b32.xlu0 %v1370, 80
        %v6382 = vpop.permute.xlu0 %6381
        %6383 = vrot.lane.b32.xlu0 %v1278, 80
        %v6384 = vpop.permute.xlu0 %6383
        %6385 = vrot.lane.b32.xlu0 %v1284, 80
        %v6386 = vpop.permute.xlu0 %6385
        %6387 = vrot.lane.b32.xlu0 %v1290, 80
        %v6388 = vpop.permute.xlu0 %6387
        %6389 = vrot.lane.b32.xlu0 %v1296, 80
        %v6390 = vpop.permute.xlu0 %6389
        %6391 = vrot.lane.b32.xlu0 %v1302, 80
        %v6392 = vpop.permute.xlu0 %6391
        %6393 = vrot.lane.b32.xlu0 %v1308, 80
        %v6394 = vpop.permute.xlu0 %6393
        %6395 = vrot.lane.b32.xlu0 %v1314, 80
        %v6396 = vpop.permute.xlu0 %6395
        %6397 = vrot.lane.b32.xlu0 %v1320, 80
        %v6398 = vpop.permute.xlu0 %6397
        %6399 = vrot.lane.b32.xlu0 %v1326, 80
        %v6400 = vpop.permute.xlu0 %6399
        %6401 = vrot.lane.b32.xlu0 %v1332, 80
        %v6402 = vpop.permute.xlu0 %6401
        %6403 = vrot.lane.b32.xlu0 %v1338, 80
        %v6404 = vpop.permute.xlu0 %6403
        %6405 = vrot.lane.b32.xlu0 %v1344, 80
        %v6406 = vpop.permute.xlu0 %6405
        %6407 = vrot.lane.b32.xlu0 %v1350, 80
        %v6408 = vpop.permute.xlu0 %6407
        %6409 = vrot.lane.b32.xlu0 %v1356, 80
        %v6410 = vpop.permute.xlu0 %6409
        %6411 = vrot.lane.b32.xlu0 %v1362, 80
        %v6412 = vpop.permute.xlu0 %6411
        %6413 = vrot.lane.b32.xlu0 %v1368, 80
        %v6414 = vpop.permute.xlu0 %6413
        %v6415 = vsel %vm1372, %v6352, 0
        %v6417 = vsel %vm1372, %v6354, 0
        %v6419 = vsel %vm1372, %v6356, 0
        %v6421 = vsel %vm1372, %v6358, 0
        %v6423 = vsel %vm1372, %v6360, 0
        %v6425 = vsel %vm1372, %v6362, 0
        %v6427 = vsel %vm1372, %v6364, 0
        %v6429 = vsel %vm1372, %v6366, 0
        %v6431 = vsel %vm1372, %v6368, 0
        %v6433 = vsel %vm1372, %v6370, 0
        %v6435 = vsel %vm1372, %v6372, 0
        %v6437 = vsel %vm1372, %v6374, 0
        %v6439 = vsel %vm1372, %v6376, 0
        %v6441 = vsel %vm1372, %v6378, 0
        %v6443 = vsel %vm1372, %v6380, 0
        %v6445 = vsel %vm1372, %v6382, 0
        %v6447 = vsel %vm1372, %v6384, 0
        %v6449 = vsel %vm1372, %v6386, 0
        %v6451 = vsel %vm1372, %v6388, 0
        %v6453 = vsel %vm1372, %v6390, 0
        %v6455 = vsel %vm1372, %v6392, 0
        %v6457 = vsel %vm1372, %v6394, 0
        %v6459 = vsel %vm1372, %v6396, 0
        %v6461 = vsel %vm1372, %v6398, 0
        %v6463 = vsel %vm1372, %v6400, 0
        %v6465 = vsel %vm1372, %v6402, 0
        %v6467 = vsel %vm1372, %v6404, 0
        %v6469 = vsel %vm1372, %v6406, 0
        %v6471 = vsel %vm1372, %v6408, 0
        %v6473 = vsel %vm1372, %v6410, 0
        %v6475 = vsel %vm1372, %v6412, 0
        %v6477 = vsel %vm1372, %v6414, 0
        %6479 = vmatprep.subr.mxu0 0.0
        %6480 = vmatpush1.xpose.msra.mxu0 %v6447
        %6481 = vmatprep.subr.mxu0 0.0
        %6482 = vmatpush1.xpose.msra.mxu0 %v6449
        %6483 = vmatprep.subr.mxu0 0.0
        %6484 = vmatpush1.xpose.msra.mxu0 %v6451
        %6485 = vmatprep.subr.mxu0 0.0
        %6486 = vmatpush1.xpose.msra.mxu0 %v6453
        %6487 = vmatprep.subr.mxu0 0.0
        %6488 = vmatpush1.xpose.msra.mxu0 %v6455
        %6489 = vmatprep.subr.mxu0 0.0
        %6490 = vmatpush1.xpose.msra.mxu0 %v6457
        %6491 = vmatprep.subr.mxu0 0.0
        %6492 = vmatpush1.xpose.msra.mxu0 %v6459
        %6493 = vmatprep.subr.mxu0 0.0
        %6494 = vmatpush1.xpose.msra.mxu0 %v6461
        %6495 = vmatprep.subr.mxu0 0.0
        %6496 = vmatpush1.xpose.msra.mxu0 %v6463
        %6497 = vmatprep.subr.mxu0 0.0
        %6498 = vmatpush1.xpose.msra.mxu0 %v6465
        %6499 = vmatprep.subr.mxu0 0.0
        %6500 = vmatpush1.xpose.msra.mxu0 %v6467
        %6501 = vmatprep.subr.mxu0 0.0
        %6502 = vmatpush1.xpose.msra.mxu0 %v6469
        %6503 = vmatprep.subr.mxu0 0.0
        %6504 = vmatpush1.xpose.msra.mxu0 %v6471
        %6505 = vmatprep.subr.mxu0 0.0
        %6506 = vmatpush1.xpose.msra.mxu0 %v6473
        %6507 = vmatprep.subr.mxu0 0.0
        %6508 = vmatpush1.xpose.msra.mxu0 %v6475
        %6509 = vmatprep.subr.mxu0 0.0
        %6510 = vmatpush1.xpose.msra.mxu0 %v6477
        %6511 = vmatprep.subr.mxu0 0.0
        %6512 = vmatpush1.xpose.msra.mxu0 0.0
        %6513 = vmatprep.subr.mxu0 0.0
        %6514 = vmatpush1.xpose.msra.mxu0 0.0
        %6515 = vmatprep.subr.mxu0 0.0
        %6516 = vmatpush1.xpose.msra.mxu0 0.0
        %6517 = vmatprep.subr.mxu0 0.0
        %6518 = vmatpush1.xpose.msra.mxu0 0.0
        %6519 = vmatprep.subr.mxu0 0.0
        %6520 = vmatpush1.xpose.msra.mxu0 0.0
        %6521 = vmatprep.subr.mxu0 0.0
        %6522 = vmatpush1.xpose.msra.mxu0 0.0
        %6523 = vmatprep.subr.mxu0 0.0
        %6524 = vmatpush1.xpose.msra.mxu0 0.0
        %6525 = vmatprep.subr.mxu0 0.0
        %6526 = vmatpush1.xpose.msra.mxu0 0.0
        %6527 = vmatprep.subr.mxu0 0.0
        %6528 = vmatpush1.xpose.msra.mxu0 0.0
        %6529 = vmatprep.subr.mxu0 0.0
        %6530 = vmatpush1.xpose.msra.mxu0 0.0
        %6531 = vmatprep.subr.mxu0 0.0
        %6532 = vmatpush1.xpose.msra.mxu0 0.0
        %6533 = vmatprep.subr.mxu0 0.0
        %6534 = vmatpush1.xpose.msra.mxu0 0.0
        %6535 = vmatprep.subr.mxu0 0.0
        %6536 = vmatpush1.xpose.msra.mxu0 0.0
        %6537 = vmatprep.subr.mxu0 0.0
        %6538 = vmatpush1.xpose.msra.mxu0 0.0
        %6539 = vmatprep.subr.mxu0 0.0
        %6540 = vmatpush1.xpose.msra.mxu0 0.0
        %6541 = vmatprep.subr.mxu0 0.0
        %6542 = vmatpush1.xpose.msra.mxu0 0.0
        %6543 = vmatprep.mubr.f32.mxu0 0.0
        %6544 = vmatmul.mubr.f32.gmra.mrb[0].mxu0 %v6415
        %v6545 = vpop.f32.mrb[0].mxu0
        %v6546 = vadd.f32 0.0, %v6545
        %v6547 = vpop.f32.mrb[0].mxu0
        %6548 = vmatprep.mubr.f32.mxu0 0.0
        %6549 = vmatmul.mubr.f32.gmra.mrb[0].mxu0 %v6417
        %v6550 = vpop.f32.mrb[0].mxu0
        %v6551 = vadd.f32 0.0, %v6550
        %v6552 = vpop.f32.mrb[0].mxu0
        %6553 = vmatprep.mubr.f32.mxu0 0.0
        %6554 = vmatmul.mubr.f32.gmra.mrb[0].mxu0 %v6419
        %v6555 = vpop.f32.mrb[0].mxu0
        %v6556 = vadd.f32 0.0, %v6555
        %v6557 = vpop.f32.mrb[0].mxu0
        %6558 = vmatprep.mubr.f32.mxu0 0.0
        %6559 = vmatmul.mubr.f32.gmra.mrb[0].mxu0 %v6421
        %v6560 = vpop.f32.mrb[0].mxu0
        %v6561 = vadd.f32 0.0, %v6560
        %v6562 = vpop.f32.mrb[0].mxu0
        %6563 = vmatprep.mubr.f32.mxu0 0.0
        %6564 = vmatmul.mubr.f32.gmra.mrb[0].mxu0 %v6423
        %v6565 = vpop.f32.mrb[0].mxu0
        %v6566 = vadd.f32 0.0, %v6565
        %v6567 = vpop.f32.mrb[0].mxu0
        %6568 = vmatprep.mubr.f32.mxu0 0.0
        %6569 = vmatmul.mubr.f32.gmra.mrb[0].mxu0 %v6425
        %v6570 = vpop.f32.mrb[0].mxu0
        %v6571 = vadd.f32 0.0, %v6570
        %v6572 = vpop.f32.mrb[0].mxu0
        %6573 = vmatprep.mubr.f32.mxu0 0.0
        %6574 = vmatmul.mubr.f32.gmra.mrb[0].mxu0 %v6427
        %v6575 = vpop.f32.mrb[0].mxu0
        %v6576 = vadd.f32 0.0, %v6575
        %v6577 = vpop.f32.mrb[0].mxu0
        %6578 = vmatprep.mubr.f32.mxu0 0.0
        %6579 = vmatmul.mubr.f32.gmra.mrb[0].mxu0 %v6429
        %v6580 = vpop.f32.mrb[0].mxu0
        %v6581 = vadd.f32 0.0, %v6580
        %v6582 = vpop.f32.mrb[0].mxu0
        %6583 = vmatprep.mubr.f32.mxu0 0.0
        %6584 = vmatmul.mubr.f32.gmra.mrb[0].mxu0 %v6431
        %v6585 = vpop.f32.mrb[0].mxu0
        %v6586 = vadd.f32 0.0, %v6585
        %v6587 = vpop.f32.mrb[0].mxu0
        %6588 = vmatprep.mubr.f32.mxu0 0.0
        %6589 = vmatmul.mubr.f32.gmra.mrb[0].mxu0 %v6433
        %v6590 = vpop.f32.mrb[0].mxu0
        %v6591 = vadd.f32 0.0, %v6590
        %v6592 = vpop.f32.mrb[0].mxu0
        %6593 = vmatprep.mubr.f32.mxu0 0.0
        %6594 = vmatmul.mubr.f32.gmra.mrb[0].mxu0 %v6435
        %v6595 = vpop.f32.mrb[0].mxu0
        %v6596 = vadd.f32 0.0, %v6595
        %v6597 = vpop.f32.mrb[0].mxu0
        %6598 = vmatprep.mubr.f32.mxu0 0.0
        %6599 = vmatmul.mubr.f32.gmra.mrb[0].mxu0 %v6437
        %v6600 = vpop.f32.mrb[0].mxu0
        %v6601 = vadd.f32 0.0, %v6600
        %v6602 = vpop.f32.mrb[0].mxu0
        %6603 = vmatprep.mubr.f32.mxu0 0.0
        %6604 = vmatmul.mubr.f32.gmra.mrb[0].mxu0 %v6439
        %v6605 = vpop.f32.mrb[0].mxu0
        %v6606 = vadd.f32 0.0, %v6605
        %v6607 = vpop.f32.mrb[0].mxu0
        %6608 = vmatprep.mubr.f32.mxu0 0.0
        %6609 = vmatmul.mubr.f32.gmra.mrb[0].mxu0 %v6441
        %v6610 = vpop.f32.mrb[0].mxu0
        %v6611 = vadd.f32 0.0, %v6610
        %v6612 = vpop.f32.mrb[0].mxu0
        %6613 = vmatprep.mubr.f32.mxu0 0.0
        %6614 = vmatmul.mubr.f32.gmra.mrb[0].mxu0 %v6443
        %v6615 = vpop.f32.mrb[0].mxu0
        %v6616 = vadd.f32 0.0, %v6615
        %v6617 = vpop.f32.mrb[0].mxu0
        %6618 = vmatprep.mubr.f32.mxu0 0.0
        %6619 = vmatmul.mubr.f32.gmra.mrb[0].mxu0 %v6445
        %v6620 = vpop.f32.mrb[0].mxu0
        %v6621 = vadd.f32 0.0, %v6620
        %v6622 = vpop.f32.mrb[0].mxu0
        %6623 = vdwg.mxu0
        %v6624 = vmul.f32 %v6546, 0.35355338
        %v6625 = vmul.f32 %v6551, 0.35355338
        %v6626 = vmul.f32 %v6556, 0.35355338
        %v6627 = vmul.f32 %v6561, 0.35355338
        %v6628 = vmul.f32 %v6566, 0.35355338
        %v6629 = vmul.f32 %v6571, 0.35355338
        %v6630 = vmul.f32 %v6576, 0.35355338
        %v6631 = vmul.f32 %v6581, 0.35355338
        %v6632 = vmul.f32 %v6586, 0.35355338
        %v6633 = vmul.f32 %v6591, 0.35355338
        %v6634 = vmul.f32 %v6596, 0.35355338
        %v6635 = vmul.f32 %v6601, 0.35355338
        %v6636 = vmul.f32 %v6606, 0.35355338
        %v6637 = vmul.f32 %v6611, 0.35355338
        %v6638 = vmul.f32 %v6616, 0.35355338
        %v6639 = vmul.f32 %v6621, 0.35355338
        %6640 = vmax.xlane.f32.xlu0 %v6624
        %v6641 = vpop.xlane.xlu0 %6640
        %6642 = vmax.xlane.f32.xlu0 %v6625
        %v6643 = vpop.xlane.xlu0 %6642
        %6644 = vmax.xlane.f32.xlu0 %v6626
        %v6645 = vpop.xlane.xlu0 %6644
        %6646 = vmax.xlane.f32.xlu0 %v6627
        %v6647 = vpop.xlane.xlu0 %6646
        %6648 = vmax.xlane.f32.xlu0 %v6628
        %v6649 = vpop.xlane.xlu0 %6648
        %6650 = vmax.xlane.f32.xlu0 %v6629
        %v6651 = vpop.xlane.xlu0 %6650
        %6652 = vmax.xlane.f32.xlu0 %v6630
        %v6653 = vpop.xlane.xlu0 %6652
        %6654 = vmax.xlane.f32.xlu0 %v6631
        %v6655 = vpop.xlane.xlu0 %6654
        %6656 = vmax.xlane.f32.xlu0 %v6632
        %v6657 = vpop.xlane.xlu0 %6656
        %6658 = vmax.xlane.f32.xlu0 %v6633
        %v6659 = vpop.xlane.xlu0 %6658
        %6660 = vmax.xlane.f32.xlu0 %v6634
        %v6661 = vpop.xlane.xlu0 %6660
        %6662 = vmax.xlane.f32.xlu0 %v6635
        %v6663 = vpop.xlane.xlu0 %6662
        %6664 = vmax.xlane.f32.xlu0 %v6636
        %v6665 = vpop.xlane.xlu0 %6664
        %6666 = vmax.xlane.f32.xlu0 %v6637
        %v6667 = vpop.xlane.xlu0 %6666
        %6668 = vmax.xlane.f32.xlu0 %v6638
        %v6669 = vpop.xlane.xlu0 %6668
        %6670 = vmax.xlane.f32.xlu0 %v6639
        %v6671 = vpop.xlane.xlu0 %6670
        %v6672 = vsub.f32 %v6624, %v6641
        %v6673 = vsub.f32 %v6625, %v6643
        %v6674 = vsub.f32 %v6626, %v6645
        %v6675 = vsub.f32 %v6627, %v6647
        %v6676 = vsub.f32 %v6628, %v6649
        %v6677 = vsub.f32 %v6629, %v6651
        %v6678 = vsub.f32 %v6630, %v6653
        %v6679 = vsub.f32 %v6631, %v6655
        %v6680 = vsub.f32 %v6632, %v6657
        %v6681 = vsub.f32 %v6633, %v6659
        %v6682 = vsub.f32 %v6634, %v6661
        %v6683 = vsub.f32 %v6635, %v6663
        %v6684 = vsub.f32 %v6636, %v6665
        %v6685 = vsub.f32 %v6637, %v6667
        %v6686 = vsub.f32 %v6638, %v6669
        %v6687 = vsub.f32 %v6639, %v6671
        %v6688 = vmul.f32 %v6672, 1.442695
        %v6689 = vpow.pop %v6688
        %v6690 = vmul.f32 %v6673, 1.442695
        %v6691 = vpow.pop %v6690
        %v6692 = vmul.f32 %v6674, 1.442695
        %v6693 = vpow.pop %v6692
        %v6694 = vmul.f32 %v6675, 1.442695
        %v6695 = vpow.pop %v6694
        %v6696 = vmul.f32 %v6676, 1.442695
        %v6697 = vpow.pop %v6696
        %v6698 = vmul.f32 %v6677, 1.442695
        %v6699 = vpow.pop %v6698
        %v6700 = vmul.f32 %v6678, 1.442695
        %v6701 = vpow.pop %v6700
        %v6702 = vmul.f32 %v6679, 1.442695
        %v6703 = vpow.pop %v6702
        %v6704 = vmul.f32 %v6680, 1.442695
        %v6705 = vpow.pop %v6704
        %v6706 = vmul.f32 %v6681, 1.442695
        %v6707 = vpow.pop %v6706
        %v6708 = vmul.f32 %v6682, 1.442695
        %v6709 = vpow.pop %v6708
        %v6710 = vmul.f32 %v6683, 1.442695
        %v6711 = vpow.pop %v6710
        %v6712 = vmul.f32 %v6684, 1.442695
        %v6713 = vpow.pop %v6712
        %v6714 = vmul.f32 %v6685, 1.442695
        %v6715 = vpow.pop %v6714
        %v6716 = vmul.f32 %v6686, 1.442695
        %v6717 = vpow.pop %v6716
        %v6718 = vmul.f32 %v6687, 1.442695
        %v6719 = vpow.pop %v6718
        %6720 = vadd.xlane.f32.xlu0 %v6689
        %v6721 = vpop.xlane.xlu0 %6720
        %6722 = vadd.xlane.f32.xlu0 %v6691
        %v6723 = vpop.xlane.xlu0 %6722
        %6724 = vadd.xlane.f32.xlu0 %v6693
        %v6725 = vpop.xlane.xlu0 %6724
        %6726 = vadd.xlane.f32.xlu0 %v6695
        %v6727 = vpop.xlane.xlu0 %6726
        %6728 = vadd.xlane.f32.xlu0 %v6697
        %v6729 = vpop.xlane.xlu0 %6728
        %6730 = vadd.xlane.f32.xlu0 %v6699
        %v6731 = vpop.xlane.xlu0 %6730
        %6732 = vadd.xlane.f32.xlu0 %v6701
        %v6733 = vpop.xlane.xlu0 %6732
        %6734 = vadd.xlane.f32.xlu0 %v6703
        %v6735 = vpop.xlane.xlu0 %6734
        %6736 = vadd.xlane.f32.xlu0 %v6705
        %v6737 = vpop.xlane.xlu0 %6736
        %6738 = vadd.xlane.f32.xlu0 %v6707
        %v6739 = vpop.xlane.xlu0 %6738
        %6740 = vadd.xlane.f32.xlu0 %v6709
        %v6741 = vpop.xlane.xlu0 %6740
        %6742 = vadd.xlane.f32.xlu0 %v6711
        %v6743 = vpop.xlane.xlu0 %6742
        %6744 = vadd.xlane.f32.xlu0 %v6713
        %v6745 = vpop.xlane.xlu0 %6744
        %6746 = vadd.xlane.f32.xlu0 %v6715
        %v6747 = vpop.xlane.xlu0 %6746
        %6748 = vadd.xlane.f32.xlu0 %v6717
        %v6749 = vpop.xlane.xlu0 %6748
        %6750 = vadd.xlane.f32.xlu0 %v6719
        %v6751 = vpop.xlane.xlu0 %6750
        %v6752 = vrcp.pop %v6721
        %v6753 = vrcp.pop %v6723
        %v6754 = vrcp.pop %v6725
        %v6755 = vrcp.pop %v6727
        %v6756 = vrcp.pop %v6729
        %v6757 = vrcp.pop %v6731
        %v6758 = vrcp.pop %v6733
        %v6759 = vrcp.pop %v6735
        %v6760 = vrcp.pop %v6737
        %v6761 = vrcp.pop %v6739
        %v6762 = vrcp.pop %v6741
        %v6763 = vrcp.pop %v6743
        %v6764 = vrcp.pop %v6745
        %v6765 = vrcp.pop %v6747
        %v6766 = vrcp.pop %v6749
        %v6767 = vrcp.pop %v6751
        %v6768 = vmul.f32 %v6689, %v6752
        %v6769 = vmul.f32 %v6691, %v6753
        %v6770 = vmul.f32 %v6693, %v6754
        %v6771 = vmul.f32 %v6695, %v6755
        %v6772 = vmul.f32 %v6697, %v6756
        %v6773 = vmul.f32 %v6699, %v6757
        %v6774 = vmul.f32 %v6701, %v6758
        %v6775 = vmul.f32 %v6703, %v6759
        %v6776 = vmul.f32 %v6705, %v6760
        %v6777 = vmul.f32 %v6707, %v6761
        %v6778 = vmul.f32 %v6709, %v6762
        %v6779 = vmul.f32 %v6711, %v6763
        %v6780 = vmul.f32 %v6713, %v6764
        %v6781 = vmul.f32 %v6715, %v6765
        %v6782 = vmul.f32 %v6717, %v6766
        %v6783 = vmul.f32 %v6719, %v6767
        %6784 = vrot.lane.b32.xlu0 %v1278, 16
        %v6785 = vpop.permute.xlu0 %6784
        %6786 = vrot.lane.b32.xlu0 %v1284, 16
        %v6787 = vpop.permute.xlu0 %6786
        %6788 = vrot.lane.b32.xlu0 %v1290, 16
        %v6789 = vpop.permute.xlu0 %6788
        %6790 = vrot.lane.b32.xlu0 %v1296, 16
        %v6791 = vpop.permute.xlu0 %6790
        %6792 = vrot.lane.b32.xlu0 %v1302, 16
        %v6793 = vpop.permute.xlu0 %6792
        %6794 = vrot.lane.b32.xlu0 %v1308, 16
        %v6795 = vpop.permute.xlu0 %6794
        %6796 = vrot.lane.b32.xlu0 %v1314, 16
        %v6797 = vpop.permute.xlu0 %6796
        %6798 = vrot.lane.b32.xlu0 %v1320, 16
        %v6799 = vpop.permute.xlu0 %6798
        %6800 = vrot.lane.b32.xlu0 %v1326, 16
        %v6801 = vpop.permute.xlu0 %6800
        %6802 = vrot.lane.b32.xlu0 %v1332, 16
        %v6803 = vpop.permute.xlu0 %6802
        %6804 = vrot.lane.b32.xlu0 %v1338, 16
        %v6805 = vpop.permute.xlu0 %6804
        %6806 = vrot.lane.b32.xlu0 %v1344, 16
        %v6807 = vpop.permute.xlu0 %6806
        %6808 = vrot.lane.b32.xlu0 %v1350, 16
        %v6809 = vpop.permute.xlu0 %6808
        %6810 = vrot.lane.b32.xlu0 %v1356, 16
        %v6811 = vpop.permute.xlu0 %6810
        %6812 = vrot.lane.b32.xlu0 %v1362, 16
        %v6813 = vpop.permute.xlu0 %6812
        %6814 = vrot.lane.b32.xlu0 %v1368, 16
        %v6815 = vpop.permute.xlu0 %6814
        %6832 = vmatprep.subr.mxu0 0.0
        %6833 = vmatpush1.msra.mxu0 %v6785
        %6834 = vmatprep.subr.mxu0 0.0
        %6835 = vmatpush1.msra.mxu0 %v6787
        %6836 = vmatprep.subr.mxu0 0.0
        %6837 = vmatpush1.msra.mxu0 %v6789
        %6838 = vmatprep.subr.mxu0 0.0
        %6839 = vmatpush1.msra.mxu0 %v6791
        %6840 = vmatprep.subr.mxu0 0.0
        %6841 = vmatpush1.msra.mxu0 %v6793
        %6842 = vmatprep.subr.mxu0 0.0
        %6843 = vmatpush1.msra.mxu0 %v6795
        %6844 = vmatprep.subr.mxu0 0.0
        %6845 = vmatpush1.msra.mxu0 %v6797
        %6846 = vmatprep.subr.mxu0 0.0
        %6847 = vmatpush1.msra.mxu0 %v6799
        %6848 = vmatprep.subr.mxu0 0.0
        %6849 = vmatpush1.msra.mxu0 %v6801
        %6850 = vmatprep.subr.mxu0 0.0
        %6851 = vmatpush1.msra.mxu0 %v6803
        %6852 = vmatprep.subr.mxu0 0.0
        %6853 = vmatpush1.msra.mxu0 %v6805
        %6854 = vmatprep.subr.mxu0 0.0
        %6855 = vmatpush1.msra.mxu0 %v6807
        %6856 = vmatprep.subr.mxu0 0.0
        %6857 = vmatpush1.msra.mxu0 %v6809
        %6858 = vmatprep.subr.mxu0 0.0
        %6859 = vmatpush1.msra.mxu0 %v6811
        %6860 = vmatprep.subr.mxu0 0.0
        %6861 = vmatpush1.msra.mxu0 %v6813
        %6862 = vmatprep.subr.mxu0 0.0
        %6863 = vmatpush1.msra.mxu0 %v6815
        %6864 = vmatprep.subr.mxu0 0.0
        %6865 = vmatpush1.msra.mxu0 0.0
        %6866 = vmatprep.subr.mxu0 0.0
        %6867 = vmatpush1.msra.mxu0 0.0
        %6868 = vmatprep.subr.mxu0 0.0
        %6869 = vmatpush1.msra.mxu0 0.0
        %6870 = vmatprep.subr.mxu0 0.0
        %6871 = vmatpush1.msra.mxu0 0.0
        %6872 = vmatprep.subr.mxu0 0.0
        %6873 = vmatpush1.msra.mxu0 0.0
        %6874 = vmatprep.subr.mxu0 0.0
        %6875 = vmatpush1.msra.mxu0 0.0
        %6876 = vmatprep.subr.mxu0 0.0
        %6877 = vmatpush1.msra.mxu0 0.0
        %6878 = vmatprep.subr.mxu0 0.0
        %6879 = vmatpush1.msra.mxu0 0.0
        %6880 = vmatprep.subr.mxu0 0.0
        %6881 = vmatpush1.msra.mxu0 0.0
        %6882 = vmatprep.subr.mxu0 0.0
        %6883 = vmatpush1.msra.mxu0 0.0
        %6884 = vmatprep.subr.mxu0 0.0
        %6885 = vmatpush1.msra.mxu0 0.0
        %6886 = vmatprep.subr.mxu0 0.0
        %6887 = vmatpush1.msra.mxu0 0.0
        %6888 = vmatprep.subr.mxu0 0.0
        %6889 = vmatpush1.msra.mxu0 0.0
        %6890 = vmatprep.subr.mxu0 0.0
        %6891 = vmatpush1.msra.mxu0 0.0
        %6892 = vmatprep.subr.mxu0 0.0
        %6893 = vmatpush1.msra.mxu0 0.0
        %6894 = vmatprep.subr.mxu0 0.0
        %6895 = vmatpush1.msra.mxu0 0.0
        %6896 = vmatprep.mubr.f32.mxu0 0.0
        %6897 = vmatmul.mubr.f32.gmra.mrb[0].mxu0 %v6768
        %v6898 = vpop.f32.mrb[0].mxu0
        %v6899 = vadd.f32 0.0, %v6898
        %v6900 = vpop.f32.mrb[0].mxu0
        %6901 = vmatprep.mubr.f32.mxu0 0.0
        %6902 = vmatmul.mubr.f32.gmra.mrb[0].mxu0 %v6769
        %v6903 = vpop.f32.mrb[0].mxu0
        %v6904 = vadd.f32 0.0, %v6903
        %v6905 = vpop.f32.mrb[0].mxu0
        %6906 = vmatprep.mubr.f32.mxu0 0.0
        %6907 = vmatmul.mubr.f32.gmra.mrb[0].mxu0 %v6770
        %v6908 = vpop.f32.mrb[0].mxu0
        %v6909 = vadd.f32 0.0, %v6908
        %v6910 = vpop.f32.mrb[0].mxu0
        %6911 = vmatprep.mubr.f32.mxu0 0.0
        %6912 = vmatmul.mubr.f32.gmra.mrb[0].mxu0 %v6771
        %v6913 = vpop.f32.mrb[0].mxu0
        %v6914 = vadd.f32 0.0, %v6913
        %v6915 = vpop.f32.mrb[0].mxu0
        %6916 = vmatprep.mubr.f32.mxu0 0.0
        %6917 = vmatmul.mubr.f32.gmra.mrb[0].mxu0 %v6772
        %v6918 = vpop.f32.mrb[0].mxu0
        %v6919 = vadd.f32 0.0, %v6918
        %v6920 = vpop.f32.mrb[0].mxu0
        %6921 = vmatprep.mubr.f32.mxu0 0.0
        %6922 = vmatmul.mubr.f32.gmra.mrb[0].mxu0 %v6773
        %v6923 = vpop.f32.mrb[0].mxu0
        %v6924 = vadd.f32 0.0, %v6923
        %v6925 = vpop.f32.mrb[0].mxu0
        %6926 = vmatprep.mubr.f32.mxu0 0.0
        %6927 = vmatmul.mubr.f32.gmra.mrb[0].mxu0 %v6774
        %v6928 = vpop.f32.mrb[0].mxu0
        %v6929 = vadd.f32 0.0, %v6928
        %v6930 = vpop.f32.mrb[0].mxu0
        %6931 = vmatprep.mubr.f32.mxu0 0.0
        %6932 = vmatmul.mubr.f32.gmra.mrb[0].mxu0 %v6775
        %v6933 = vpop.f32.mrb[0].mxu0
        %v6934 = vadd.f32 0.0, %v6933
        %v6935 = vpop.f32.mrb[0].mxu0
        %6936 = vmatprep.mubr.f32.mxu0 0.0
        %6937 = vmatmul.mubr.f32.gmra.mrb[0].mxu0 %v6776
        %v6938 = vpop.f32.mrb[0].mxu0
        %v6939 = vadd.f32 0.0, %v6938
        %v6940 = vpop.f32.mrb[0].mxu0
        %6941 = vmatprep.mubr.f32.mxu0 0.0
        %6942 = vmatmul.mubr.f32.gmra.mrb[0].mxu0 %v6777
        %v6943 = vpop.f32.mrb[0].mxu0
        %v6944 = vadd.f32 0.0, %v6943
        %v6945 = vpop.f32.mrb[0].mxu0
        %6946 = vmatprep.mubr.f32.mxu0 0.0
        %6947 = vmatmul.mubr.f32.gmra.mrb[0].mxu0 %v6778
        %v6948 = vpop.f32.mrb[0].mxu0
        %v6949 = vadd.f32 0.0, %v6948
        %v6950 = vpop.f32.mrb[0].mxu0
        %6951 = vmatprep.mubr.f32.mxu0 0.0
        %6952 = vmatmul.mubr.f32.gmra.mrb[0].mxu0 %v6779
        %v6953 = vpop.f32.mrb[0].mxu0
        %v6954 = vadd.f32 0.0, %v6953
        %v6955 = vpop.f32.mrb[0].mxu0
        %6956 = vmatprep.mubr.f32.mxu0 0.0
        %6957 = vmatmul.mubr.f32.gmra.mrb[0].mxu0 %v6780
        %v6958 = vpop.f32.mrb[0].mxu0
        %v6959 = vadd.f32 0.0, %v6958
        %v6960 = vpop.f32.mrb[0].mxu0
        %6961 = vmatprep.mubr.f32.mxu0 0.0
        %6962 = vmatmul.mubr.f32.gmra.mrb[0].mxu0 %v6781
        %v6963 = vpop.f32.mrb[0].mxu0
        %v6964 = vadd.f32 0.0, %v6963
        %v6965 = vpop.f32.mrb[0].mxu0
        %6966 = vmatprep.mubr.f32.mxu0 0.0
        %6967 = vmatmul.mubr.f32.gmra.mrb[0].mxu0 %v6782
        %v6968 = vpop.f32.mrb[0].mxu0
        %v6969 = vadd.f32 0.0, %v6968
        %v6970 = vpop.f32.mrb[0].mxu0
        %6971 = vmatprep.mubr.f32.mxu0 0.0
        %6972 = vmatmul.mubr.f32.gmra.mrb[0].mxu0 %v6783
        %v6973 = vpop.f32.mrb[0].mxu0
        %v6974 = vadd.f32 0.0, %v6973
        %v6975 = vpop.f32.mrb[0].mxu0
        %6976 = vdwg.mxu0
        %v6978 = vsel %vm1372, %v6899, 0
        %v6981 = vsel %vm1372, %v6904, 0
        %v6984 = vsel %vm1372, %v6909, 0
        %v6987 = vsel %vm1372, %v6914, 0
        %v6990 = vsel %vm1372, %v6919, 0
        %v6993 = vsel %vm1372, %v6924, 0
        %v6996 = vsel %vm1372, %v6929, 0
        %v6999 = vsel %vm1372, %v6934, 0
        %v7002 = vsel %vm1372, %v6939, 0
        %v7005 = vsel %vm1372, %v6944, 0
        %v7008 = vsel %vm1372, %v6949, 0
        %v7011 = vsel %vm1372, %v6954, 0
        %v7014 = vsel %vm1372, %v6959, 0
        %v7017 = vsel %vm1372, %v6964, 0
        %v7020 = vsel %vm1372, %v6969, 0
        %v7023 = vsel %vm1372, %v6974, 0
        %7025 = vmatprep.subr.mxu0 0.0
        %7026 = vmatpush1.msra.mxu0 %v843
        %7027 = vmatprep.subr.mxu0 0.0
        %7028 = vmatpush1.msra.mxu0 0.0
        %7029 = vmatprep.subr.mxu0 0.0
        %7030 = vmatpush1.msra.mxu0 0.0
        %7031 = vmatprep.subr.mxu0 0.0
        %7032 = vmatpush1.msra.mxu0 0.0
        %7033 = vmatprep.subr.mxu0 0.0
        %7034 = vmatpush1.msra.mxu0 0.0
        %7035 = vmatprep.subr.mxu0 0.0
        %7036 = vmatpush1.msra.mxu0 0.0
        %7037 = vmatprep.subr.mxu0 0.0
        %7038 = vmatpush1.msra.mxu0 0.0
        %7039 = vmatprep.subr.mxu0 0.0
        %7040 = vmatpush1.msra.mxu0 0.0
        %7041 = vmatprep.subr.mxu0 0.0
        %7042 = vmatpush1.msra.mxu0 0.0
        %7043 = vmatprep.subr.mxu0 0.0
        %7044 = vmatpush1.msra.mxu0 0.0
        %7045 = vmatprep.subr.mxu0 0.0
        %7046 = vmatpush1.msra.mxu0 0.0
        %7047 = vmatprep.subr.mxu0 0.0
        %7048 = vmatpush1.msra.mxu0 0.0
        %7049 = vmatprep.subr.mxu0 0.0
        %7050 = vmatpush1.msra.mxu0 0.0
        %7051 = vmatprep.subr.mxu0 0.0
        %7052 = vmatpush1.msra.mxu0 0.0
        %7053 = vmatprep.subr.mxu0 0.0
        %7054 = vmatpush1.msra.mxu0 0.0
        %7055 = vmatprep.subr.mxu0 0.0
        %7056 = vmatpush1.msra.mxu0 0.0
        %7057 = vmatprep.subr.mxu0 0.0
        %7058 = vmatpush1.msra.mxu0 0.0
        %7059 = vmatprep.subr.mxu0 0.0
        %7060 = vmatpush1.msra.mxu0 0.0
        %7061 = vmatprep.subr.mxu0 0.0
        %7062 = vmatpush1.msra.mxu0 0.0
        %7063 = vmatprep.subr.mxu0 0.0
        %7064 = vmatpush1.msra.mxu0 0.0
        %7065 = vmatprep.subr.mxu0 0.0
        %7066 = vmatpush1.msra.mxu0 0.0
        %7067 = vmatprep.subr.mxu0 0.0
        %7068 = vmatpush1.msra.mxu0 0.0
        %7069 = vmatprep.subr.mxu0 0.0
        %7070 = vmatpush1.msra.mxu0 0.0
        %7071 = vmatprep.subr.mxu0 0.0
        %7072 = vmatpush1.msra.mxu0 0.0
        %7073 = vmatprep.subr.mxu0 0.0
        %7074 = vmatpush1.msra.mxu0 0.0
        %7075 = vmatprep.subr.mxu0 0.0
        %7076 = vmatpush1.msra.mxu0 0.0
        %7077 = vmatprep.subr.mxu0 0.0
        %7078 = vmatpush1.msra.mxu0 0.0
        %7079 = vmatprep.subr.mxu0 0.0
        %7080 = vmatpush1.msra.mxu0 0.0
        %7081 = vmatprep.subr.mxu0 0.0
        %7082 = vmatpush1.msra.mxu0 0.0
        %7083 = vmatprep.subr.mxu0 0.0
        %7084 = vmatpush1.msra.mxu0 0.0
        %7085 = vmatprep.subr.mxu0 0.0
        %7086 = vmatpush1.msra.mxu0 0.0
        %7087 = vmatprep.subr.mxu0 0.0
        %7088 = vmatpush1.msra.mxu0 0.0
        %7089 = vmatprep.mubr.f32.mxu0 0.0
        %7090 = vmatmul.mubr.f32.gmra.mrb[0].mxu0 %v6978
        %v7091 = vpop.f32.mrb[0].mxu0
        %v7092 = vadd.f32 0.0, %v7091
        %v7093 = vpop.f32.mrb[0].mxu0
        %7094 = vmatprep.mubr.f32.mxu0 0.0
        %7095 = vmatmul.mubr.f32.gmra.mrb[0].mxu0 %v6981
        %v7096 = vpop.f32.mrb[0].mxu0
        %v7097 = vadd.f32 0.0, %v7096
        %v7098 = vpop.f32.mrb[0].mxu0
        %7099 = vmatprep.mubr.f32.mxu0 0.0
        %7100 = vmatmul.mubr.f32.gmra.mrb[0].mxu0 %v6984
        %v7101 = vpop.f32.mrb[0].mxu0
        %v7102 = vadd.f32 0.0, %v7101
        %v7103 = vpop.f32.mrb[0].mxu0
        %7104 = vmatprep.mubr.f32.mxu0 0.0
        %7105 = vmatmul.mubr.f32.gmra.mrb[0].mxu0 %v6987
        %v7106 = vpop.f32.mrb[0].mxu0
        %v7107 = vadd.f32 0.0, %v7106
        %v7108 = vpop.f32.mrb[0].mxu0
        %7109 = vmatprep.mubr.f32.mxu0 0.0
        %7110 = vmatmul.mubr.f32.gmra.mrb[0].mxu0 %v6990
        %v7111 = vpop.f32.mrb[0].mxu0
        %v7112 = vadd.f32 0.0, %v7111
        %v7113 = vpop.f32.mrb[0].mxu0
        %7114 = vmatprep.mubr.f32.mxu0 0.0
        %7115 = vmatmul.mubr.f32.gmra.mrb[0].mxu0 %v6993
        %v7116 = vpop.f32.mrb[0].mxu0
        %v7117 = vadd.f32 0.0, %v7116
        %v7118 = vpop.f32.mrb[0].mxu0
        %7119 = vmatprep.mubr.f32.mxu0 0.0
        %7120 = vmatmul.mubr.f32.gmra.mrb[0].mxu0 %v6996
        %v7121 = vpop.f32.mrb[0].mxu0
        %v7122 = vadd.f32 0.0, %v7121
        %v7123 = vpop.f32.mrb[0].mxu0
        %7124 = vmatprep.mubr.f32.mxu0 0.0
        %7125 = vmatmul.mubr.f32.gmra.mrb[0].mxu0 %v6999
        %v7126 = vpop.f32.mrb[0].mxu0
        %v7127 = vadd.f32 0.0, %v7126
        %v7128 = vpop.f32.mrb[0].mxu0
        %7129 = vmatprep.mubr.f32.mxu0 0.0
        %7130 = vmatmul.mubr.f32.gmra.mrb[0].mxu0 %v7002
        %v7131 = vpop.f32.mrb[0].mxu0
        %v7132 = vadd.f32 0.0, %v7131
        %v7133 = vpop.f32.mrb[0].mxu0
        %7134 = vmatprep.mubr.f32.mxu0 0.0
        %7135 = vmatmul.mubr.f32.gmra.mrb[0].mxu0 %v7005
        %v7136 = vpop.f32.mrb[0].mxu0
        %v7137 = vadd.f32 0.0, %v7136
        %v7138 = vpop.f32.mrb[0].mxu0
        %7139 = vmatprep.mubr.f32.mxu0 0.0
        %7140 = vmatmul.mubr.f32.gmra.mrb[0].mxu0 %v7008
        %v7141 = vpop.f32.mrb[0].mxu0
        %v7142 = vadd.f32 0.0, %v7141
        %v7143 = vpop.f32.mrb[0].mxu0
        %7144 = vmatprep.mubr.f32.mxu0 0.0
        %7145 = vmatmul.mubr.f32.gmra.mrb[0].mxu0 %v7011
        %v7146 = vpop.f32.mrb[0].mxu0
        %v7147 = vadd.f32 0.0, %v7146
        %v7148 = vpop.f32.mrb[0].mxu0
        %7149 = vmatprep.mubr.f32.mxu0 0.0
        %7150 = vmatmul.mubr.f32.gmra.mrb[0].mxu0 %v7014
        %v7151 = vpop.f32.mrb[0].mxu0
        %v7152 = vadd.f32 0.0, %v7151
        %v7153 = vpop.f32.mrb[0].mxu0
        %7154 = vmatprep.mubr.f32.mxu0 0.0
        %7155 = vmatmul.mubr.f32.gmra.mrb[0].mxu0 %v7017
        %v7156 = vpop.f32.mrb[0].mxu0
        %v7157 = vadd.f32 0.0, %v7156
        %v7158 = vpop.f32.mrb[0].mxu0
        %7159 = vmatprep.mubr.f32.mxu0 0.0
        %7160 = vmatmul.mubr.f32.gmra.mrb[0].mxu0 %v7020
        %v7161 = vpop.f32.mrb[0].mxu0
        %v7162 = vadd.f32 0.0, %v7161
        %v7163 = vpop.f32.mrb[0].mxu0
        %7164 = vmatprep.mubr.f32.mxu0 0.0
        %7165 = vmatmul.mubr.f32.gmra.mrb[0].mxu0 %v7023
        %v7166 = vpop.f32.mrb[0].mxu0
        %v7167 = vadd.f32 0.0, %v7166
        %v7168 = vpop.f32.mrb[0].mxu0
        %7169 = vdwg.mxu0
        %v7170 = vadd.f32 %v6335, %v7092
        %v7171 = vadd.f32 %v6336, %v7097
        %v7172 = vadd.f32 %v6337, %v7102
        %v7173 = vadd.f32 %v6338, %v7107
        %v7174 = vadd.f32 %v6339, %v7112
        %v7175 = vadd.f32 %v6340, %v7117
        %v7176 = vadd.f32 %v6341, %v7122
        %v7177 = vadd.f32 %v6342, %v7127
        %v7178 = vadd.f32 %v6343, %v7132
        %v7179 = vadd.f32 %v6344, %v7137
        %v7180 = vadd.f32 %v6345, %v7142
        %v7181 = vadd.f32 %v6346, %v7147
        %v7182 = vadd.f32 %v6347, %v7152
        %v7183 = vadd.f32 %v6348, %v7157
        %v7184 = vadd.f32 %v6349, %v7162
        %v7185 = vadd.f32 %v6350, %v7167
        %7186 = vrot.lane.b32.xlu0 %v1280, 72
        %v7187 = vpop.permute.xlu0 %7186
        %7188 = vrot.lane.b32.xlu0 %v1286, 72
        %v7189 = vpop.permute.xlu0 %7188
        %7190 = vrot.lane.b32.xlu0 %v1292, 72
        %v7191 = vpop.permute.xlu0 %7190
        %7192 = vrot.lane.b32.xlu0 %v1298, 72
        %v7193 = vpop.permute.xlu0 %7192
        %7194 = vrot.lane.b32.xlu0 %v1304, 72
        %v7195 = vpop.permute.xlu0 %7194
        %7196 = vrot.lane.b32.xlu0 %v1310, 72
        %v7197 = vpop.permute.xlu0 %7196
        %7198 = vrot.lane.b32.xlu0 %v1316, 72
        %v7199 = vpop.permute.xlu0 %7198
        %7200 = vrot.lane.b32.xlu0 %v1322, 72
        %v7201 = vpop.permute.xlu0 %7200
        %7202 = vrot.lane.b32.xlu0 %v1328, 72
        %v7203 = vpop.permute.xlu0 %7202
        %7204 = vrot.lane.b32.xlu0 %v1334, 72
        %v7205 = vpop.permute.xlu0 %7204
        %7206 = vrot.lane.b32.xlu0 %v1340, 72
        %v7207 = vpop.permute.xlu0 %7206
        %7208 = vrot.lane.b32.xlu0 %v1346, 72
        %v7209 = vpop.permute.xlu0 %7208
        %7210 = vrot.lane.b32.xlu0 %v1352, 72
        %v7211 = vpop.permute.xlu0 %7210
        %7212 = vrot.lane.b32.xlu0 %v1358, 72
        %v7213 = vpop.permute.xlu0 %7212
        %7214 = vrot.lane.b32.xlu0 %v1364, 72
        %v7215 = vpop.permute.xlu0 %7214
        %7216 = vrot.lane.b32.xlu0 %v1370, 72
        %v7217 = vpop.permute.xlu0 %7216
        %7218 = vrot.lane.b32.xlu0 %v1278, 72
        %v7219 = vpop.permute.xlu0 %7218
        %7220 = vrot.lane.b32.xlu0 %v1284, 72
        %v7221 = vpop.permute.xlu0 %7220
        %7222 = vrot.lane.b32.xlu0 %v1290, 72
        %v7223 = vpop.permute.xlu0 %7222
        %7224 = vrot.lane.b32.xlu0 %v1296, 72
        %v7225 = vpop.permute.xlu0 %7224
        %7226 = vrot.lane.b32.xlu0 %v1302, 72
        %v7227 = vpop.permute.xlu0 %7226
        %7228 = vrot.lane.b32.xlu0 %v1308, 72
        %v7229 = vpop.permute.xlu0 %7228
        %7230 = vrot.lane.b32.xlu0 %v1314, 72
        %v7231 = vpop.permute.xlu0 %7230
        %7232 = vrot.lane.b32.xlu0 %v1320, 72
        %v7233 = vpop.permute.xlu0 %7232
        %7234 = vrot.lane.b32.xlu0 %v1326, 72
        %v7235 = vpop.permute.xlu0 %7234
        %7236 = vrot.lane.b32.xlu0 %v1332, 72
        %v7237 = vpop.permute.xlu0 %7236
        %7238 = vrot.lane.b32.xlu0 %v1338, 72
        %v7239 = vpop.permute.xlu0 %7238
        %7240 = vrot.lane.b32.xlu0 %v1344, 72
        %v7241 = vpop.permute.xlu0 %7240
        %7242 = vrot.lane.b32.xlu0 %v1350, 72
        %v7243 = vpop.permute.xlu0 %7242
        %7244 = vrot.lane.b32.xlu0 %v1356, 72
        %v7245 = vpop.permute.xlu0 %7244
        %7246 = vrot.lane.b32.xlu0 %v1362, 72
        %v7247 = vpop.permute.xlu0 %7246
        %7248 = vrot.lane.b32.xlu0 %v1368, 72
        %v7249 = vpop.permute.xlu0 %7248
        %v7250 = vsel %vm1372, %v7187, 0
        %v7252 = vsel %vm1372, %v7189, 0
        %v7254 = vsel %vm1372, %v7191, 0
        %v7256 = vsel %vm1372, %v7193, 0
        %v7258 = vsel %vm1372, %v7195, 0
        %v7260 = vsel %vm1372, %v7197, 0
        %v7262 = vsel %vm1372, %v7199, 0
        %v7264 = vsel %vm1372, %v7201, 0
        %v7266 = vsel %vm1372, %v7203, 0
        %v7268 = vsel %vm1372, %v7205, 0
        %v7270 = vsel %vm1372, %v7207, 0
        %v7272 = vsel %vm1372, %v7209, 0
        %v7274 = vsel %vm1372, %v7211, 0
        %v7276 = vsel %vm1372, %v7213, 0
        %v7278 = vsel %vm1372, %v7215, 0
        %v7280 = vsel %vm1372, %v7217, 0
        %v7282 = vsel %vm1372, %v7219, 0
        %v7284 = vsel %vm1372, %v7221, 0
        %v7286 = vsel %vm1372, %v7223, 0
        %v7288 = vsel %vm1372, %v7225, 0
        %v7290 = vsel %vm1372, %v7227, 0
        %v7292 = vsel %vm1372, %v7229, 0
        %v7294 = vsel %vm1372, %v7231, 0
        %v7296 = vsel %vm1372, %v7233, 0
        %v7298 = vsel %vm1372, %v7235, 0
        %v7300 = vsel %vm1372, %v7237, 0
        %v7302 = vsel %vm1372, %v7239, 0
        %v7304 = vsel %vm1372, %v7241, 0
        %v7306 = vsel %vm1372, %v7243, 0
        %v7308 = vsel %vm1372, %v7245, 0
        %v7310 = vsel %vm1372, %v7247, 0
        %v7312 = vsel %vm1372, %v7249, 0
        %7314 = vmatprep.subr.mxu0 0.0
        %7315 = vmatpush1.xpose.msra.mxu0 %v7282
        %7316 = vmatprep.subr.mxu0 0.0
        %7317 = vmatpush1.xpose.msra.mxu0 %v7284
        %7318 = vmatprep.subr.mxu0 0.0
        %7319 = vmatpush1.xpose.msra.mxu0 %v7286
        %7320 = vmatprep.subr.mxu0 0.0
        %7321 = vmatpush1.xpose.msra.mxu0 %v7288
        %7322 = vmatprep.subr.mxu0 0.0
        %7323 = vmatpush1.xpose.msra.mxu0 %v7290
        %7324 = vmatprep.subr.mxu0 0.0
        %7325 = vmatpush1.xpose.msra.mxu0 %v7292
        %7326 = vmatprep.subr.mxu0 0.0
        %7327 = vmatpush1.xpose.msra.mxu0 %v7294
        %7328 = vmatprep.subr.mxu0 0.0
        %7329 = vmatpush1.xpose.msra.mxu0 %v7296
        %7330 = vmatprep.subr.mxu0 0.0
        %7331 = vmatpush1.xpose.msra.mxu0 %v7298
        %7332 = vmatprep.subr.mxu0 0.0
        %7333 = vmatpush1.xpose.msra.mxu0 %v7300
        %7334 = vmatprep.subr.mxu0 0.0
        %7335 = vmatpush1.xpose.msra.mxu0 %v7302
        %7336 = vmatprep.subr.mxu0 0.0
        %7337 = vmatpush1.xpose.msra.mxu0 %v7304
        %7338 = vmatprep.subr.mxu0 0.0
        %7339 = vmatpush1.xpose.msra.mxu0 %v7306
        %7340 = vmatprep.subr.mxu0 0.0
        %7341 = vmatpush1.xpose.msra.mxu0 %v7308
        %7342 = vmatprep.subr.mxu0 0.0
        %7343 = vmatpush1.xpose.msra.mxu0 %v7310
        %7344 = vmatprep.subr.mxu0 0.0
        %7345 = vmatpush1.xpose.msra.mxu0 %v7312
        %7346 = vmatprep.subr.mxu0 0.0
        %7347 = vmatpush1.xpose.msra.mxu0 0.0
        %7348 = vmatprep.subr.mxu0 0.0
        %7349 = vmatpush1.xpose.msra.mxu0 0.0
        %7350 = vmatprep.subr.mxu0 0.0
        %7351 = vmatpush1.xpose.msra.mxu0 0.0
        %7352 = vmatprep.subr.mxu0 0.0
        %7353 = vmatpush1.xpose.msra.mxu0 0.0
        %7354 = vmatprep.subr.mxu0 0.0
        %7355 = vmatpush1.xpose.msra.mxu0 0.0
        %7356 = vmatprep.subr.mxu0 0.0
        %7357 = vmatpush1.xpose.msra.mxu0 0.0
        %7358 = vmatprep.subr.mxu0 0.0
        %7359 = vmatpush1.xpose.msra.mxu0 0.0
        %7360 = vmatprep.subr.mxu0 0.0
        %7361 = vmatpush1.xpose.msra.mxu0 0.0
        %7362 = vmatprep.subr.mxu0 0.0
        %7363 = vmatpush1.xpose.msra.mxu0 0.0
        %7364 = vmatprep.subr.mxu0 0.0
        %7365 = vmatpush1.xpose.msra.mxu0 0.0
        %7366 = vmatprep.subr.mxu0 0.0
        %7367 = vmatpush1.xpose.msra.mxu0 0.0
        %7368 = vmatprep.subr.mxu0 0.0
        %7369 = vmatpush1.xpose.msra.mxu0 0.0
        %7370 = vmatprep.subr.mxu0 0.0
        %7371 = vmatpush1.xpose.msra.mxu0 0.0
        %7372 = vmatprep.subr.mxu0 0.0
        %7373 = vmatpush1.xpose.msra.mxu0 0.0
        %7374 = vmatprep.subr.mxu0 0.0
        %7375 = vmatpush1.xpose.msra.mxu0 0.0
        %7376 = vmatprep.subr.mxu0 0.0
        %7377 = vmatpush1.xpose.msra.mxu0 0.0
        %7378 = vmatprep.mubr.f32.mxu0 0.0
        %7379 = vmatmul.mubr.f32.gmra.mrb[0].mxu0 %v7250
        %v7380 = vpop.f32.mrb[0].mxu0
        %v7381 = vadd.f32 0.0, %v7380
        %v7382 = vpop.f32.mrb[0].mxu0
        %7383 = vmatprep.mubr.f32.mxu0 0.0
        %7384 = vmatmul.mubr.f32.gmra.mrb[0].mxu0 %v7252
        %v7385 = vpop.f32.mrb[0].mxu0
        %v7386 = vadd.f32 0.0, %v7385
        %v7387 = vpop.f32.mrb[0].mxu0
        %7388 = vmatprep.mubr.f32.mxu0 0.0
        %7389 = vmatmul.mubr.f32.gmra.mrb[0].mxu0 %v7254
        %v7390 = vpop.f32.mrb[0].mxu0
        %v7391 = vadd.f32 0.0, %v7390
        %v7392 = vpop.f32.mrb[0].mxu0
        %7393 = vmatprep.mubr.f32.mxu0 0.0
        %7394 = vmatmul.mubr.f32.gmra.mrb[0].mxu0 %v7256
        %v7395 = vpop.f32.mrb[0].mxu0
        %v7396 = vadd.f32 0.0, %v7395
        %v7397 = vpop.f32.mrb[0].mxu0
        %7398 = vmatprep.mubr.f32.mxu0 0.0
        %7399 = vmatmul.mubr.f32.gmra.mrb[0].mxu0 %v7258
        %v7400 = vpop.f32.mrb[0].mxu0
        %v7401 = vadd.f32 0.0, %v7400
        %v7402 = vpop.f32.mrb[0].mxu0
        %7403 = vmatprep.mubr.f32.mxu0 0.0
        %7404 = vmatmul.mubr.f32.gmra.mrb[0].mxu0 %v7260
        %v7405 = vpop.f32.mrb[0].mxu0
        %v7406 = vadd.f32 0.0, %v7405
        %v7407 = vpop.f32.mrb[0].mxu0
        %7408 = vmatprep.mubr.f32.mxu0 0.0
        %7409 = vmatmul.mubr.f32.gmra.mrb[0].mxu0 %v7262
        %v7410 = vpop.f32.mrb[0].mxu0
        %v7411 = vadd.f32 0.0, %v7410
        %v7412 = vpop.f32.mrb[0].mxu0
        %7413 = vmatprep.mubr.f32.mxu0 0.0
        %7414 = vmatmul.mubr.f32.gmra.mrb[0].mxu0 %v7264
        %v7415 = vpop.f32.mrb[0].mxu0
        %v7416 = vadd.f32 0.0, %v7415
        %v7417 = vpop.f32.mrb[0].mxu0
        %7418 = vmatprep.mubr.f32.mxu0 0.0
        %7419 = vmatmul.mubr.f32.gmra.mrb[0].mxu0 %v7266
        %v7420 = vpop.f32.mrb[0].mxu0
        %v7421 = vadd.f32 0.0, %v7420
        %v7422 = vpop.f32.mrb[0].mxu0
        %7423 = vmatprep.mubr.f32.mxu0 0.0
        %7424 = vmatmul.mubr.f32.gmra.mrb[0].mxu0 %v7268
        %v7425 = vpop.f32.mrb[0].mxu0
        %v7426 = vadd.f32 0.0, %v7425
        %v7427 = vpop.f32.mrb[0].mxu0
        %7428 = vmatprep.mubr.f32.mxu0 0.0
        %7429 = vmatmul.mubr.f32.gmra.mrb[0].mxu0 %v7270
        %v7430 = vpop.f32.mrb[0].mxu0
        %v7431 = vadd.f32 0.0, %v7430
        %v7432 = vpop.f32.mrb[0].mxu0
        %7433 = vmatprep.mubr.f32.mxu0 0.0
        %7434 = vmatmul.mubr.f32.gmra.mrb[0].mxu0 %v7272
        %v7435 = vpop.f32.mrb[0].mxu0
        %v7436 = vadd.f32 0.0, %v7435
        %v7437 = vpop.f32.mrb[0].mxu0
        %7438 = vmatprep.mubr.f32.mxu0 0.0
        %7439 = vmatmul.mubr.f32.gmra.mrb[0].mxu0 %v7274
        %v7440 = vpop.f32.mrb[0].mxu0
        %v7441 = vadd.f32 0.0, %v7440
        %v7442 = vpop.f32.mrb[0].mxu0
        %7443 = vmatprep.mubr.f32.mxu0 0.0
        %7444 = vmatmul.mubr.f32.gmra.mrb[0].mxu0 %v7276
        %v7445 = vpop.f32.mrb[0].mxu0
        %v7446 = vadd.f32 0.0, %v7445
        %v7447 = vpop.f32.mrb[0].mxu0
        %7448 = vmatprep.mubr.f32.mxu0 0.0
        %7449 = vmatmul.mubr.f32.gmra.mrb[0].mxu0 %v7278
        %v7450 = vpop.f32.mrb[0].mxu0
        %v7451 = vadd.f32 0.0, %v7450
        %v7452 = vpop.f32.mrb[0].mxu0
        %7453 = vmatprep.mubr.f32.mxu0 0.0
        %7454 = vmatmul.mubr.f32.gmra.mrb[0].mxu0 %v7280
        %v7455 = vpop.f32.mrb[0].mxu0
        %v7456 = vadd.f32 0.0, %v7455
        %v7457 = vpop.f32.mrb[0].mxu0
        %7458 = vdwg.mxu0
        %v7459 = vmul.f32 %v7381, 0.35355338
        %v7460 = vmul.f32 %v7386, 0.35355338
        %v7461 = vmul.f32 %v7391, 0.35355338
        %v7462 = vmul.f32 %v7396, 0.35355338
        %v7463 = vmul.f32 %v7401, 0.35355338
        %v7464 = vmul.f32 %v7406, 0.35355338
        %v7465 = vmul.f32 %v7411, 0.35355338
        %v7466 = vmul.f32 %v7416, 0.35355338
        %v7467 = vmul.f32 %v7421, 0.35355338
        %v7468 = vmul.f32 %v7426, 0.35355338
        %v7469 = vmul.f32 %v7431, 0.35355338
        %v7470 = vmul.f32 %v7436, 0.35355338
        %v7471 = vmul.f32 %v7441, 0.35355338
        %v7472 = vmul.f32 %v7446, 0.35355338
        %v7473 = vmul.f32 %v7451, 0.35355338
        %v7474 = vmul.f32 %v7456, 0.35355338
        %7475 = vmax.xlane.f32.xlu0 %v7459
        %v7476 = vpop.xlane.xlu0 %7475
        %7477 = vmax.xlane.f32.xlu0 %v7460
        %v7478 = vpop.xlane.xlu0 %7477
        %7479 = vmax.xlane.f32.xlu0 %v7461
        %v7480 = vpop.xlane.xlu0 %7479
        %7481 = vmax.xlane.f32.xlu0 %v7462
        %v7482 = vpop.xlane.xlu0 %7481
        %7483 = vmax.xlane.f32.xlu0 %v7463
        %v7484 = vpop.xlane.xlu0 %7483
        %7485 = vmax.xlane.f32.xlu0 %v7464
        %v7486 = vpop.xlane.xlu0 %7485
        %7487 = vmax.xlane.f32.xlu0 %v7465
        %v7488 = vpop.xlane.xlu0 %7487
        %7489 = vmax.xlane.f32.xlu0 %v7466
        %v7490 = vpop.xlane.xlu0 %7489
        %7491 = vmax.xlane.f32.xlu0 %v7467
        %v7492 = vpop.xlane.xlu0 %7491
        %7493 = vmax.xlane.f32.xlu0 %v7468
        %v7494 = vpop.xlane.xlu0 %7493
        %7495 = vmax.xlane.f32.xlu0 %v7469
        %v7496 = vpop.xlane.xlu0 %7495
        %7497 = vmax.xlane.f32.xlu0 %v7470
        %v7498 = vpop.xlane.xlu0 %7497
        %7499 = vmax.xlane.f32.xlu0 %v7471
        %v7500 = vpop.xlane.xlu0 %7499
        %7501 = vmax.xlane.f32.xlu0 %v7472
        %v7502 = vpop.xlane.xlu0 %7501
        %7503 = vmax.xlane.f32.xlu0 %v7473
        %v7504 = vpop.xlane.xlu0 %7503
        %7505 = vmax.xlane.f32.xlu0 %v7474
        %v7506 = vpop.xlane.xlu0 %7505
        %v7507 = vsub.f32 %v7459, %v7476
        %v7508 = vsub.f32 %v7460, %v7478
        %v7509 = vsub.f32 %v7461, %v7480
        %v7510 = vsub.f32 %v7462, %v7482
        %v7511 = vsub.f32 %v7463, %v7484
        %v7512 = vsub.f32 %v7464, %v7486
        %v7513 = vsub.f32 %v7465, %v7488
        %v7514 = vsub.f32 %v7466, %v7490
        %v7515 = vsub.f32 %v7467, %v7492
        %v7516 = vsub.f32 %v7468, %v7494
        %v7517 = vsub.f32 %v7469, %v7496
        %v7518 = vsub.f32 %v7470, %v7498
        %v7519 = vsub.f32 %v7471, %v7500
        %v7520 = vsub.f32 %v7472, %v7502
        %v7521 = vsub.f32 %v7473, %v7504
        %v7522 = vsub.f32 %v7474, %v7506
        %v7523 = vmul.f32 %v7507, 1.442695
        %v7524 = vpow.pop %v7523
        %v7525 = vmul.f32 %v7508, 1.442695
        %v7526 = vpow.pop %v7525
        %v7527 = vmul.f32 %v7509, 1.442695
        %v7528 = vpow.pop %v7527
        %v7529 = vmul.f32 %v7510, 1.442695
        %v7530 = vpow.pop %v7529
        %v7531 = vmul.f32 %v7511, 1.442695
        %v7532 = vpow.pop %v7531
        %v7533 = vmul.f32 %v7512, 1.442695
        %v7534 = vpow.pop %v7533
        %v7535 = vmul.f32 %v7513, 1.442695
        %v7536 = vpow.pop %v7535
        %v7537 = vmul.f32 %v7514, 1.442695
        %v7538 = vpow.pop %v7537
        %v7539 = vmul.f32 %v7515, 1.442695
        %v7540 = vpow.pop %v7539
        %v7541 = vmul.f32 %v7516, 1.442695
        %v7542 = vpow.pop %v7541
        %v7543 = vmul.f32 %v7517, 1.442695
        %v7544 = vpow.pop %v7543
        %v7545 = vmul.f32 %v7518, 1.442695
        %v7546 = vpow.pop %v7545
        %v7547 = vmul.f32 %v7519, 1.442695
        %v7548 = vpow.pop %v7547
        %v7549 = vmul.f32 %v7520, 1.442695
        %v7550 = vpow.pop %v7549
        %v7551 = vmul.f32 %v7521, 1.442695
        %v7552 = vpow.pop %v7551
        %v7553 = vmul.f32 %v7522, 1.442695
        %v7554 = vpow.pop %v7553
        %7555 = vadd.xlane.f32.xlu0 %v7524
        %v7556 = vpop.xlane.xlu0 %7555
        %7557 = vadd.xlane.f32.xlu0 %v7526
        %v7558 = vpop.xlane.xlu0 %7557
        %7559 = vadd.xlane.f32.xlu0 %v7528
        %v7560 = vpop.xlane.xlu0 %7559
        %7561 = vadd.xlane.f32.xlu0 %v7530
        %v7562 = vpop.xlane.xlu0 %7561
        %7563 = vadd.xlane.f32.xlu0 %v7532
        %v7564 = vpop.xlane.xlu0 %7563
        %7565 = vadd.xlane.f32.xlu0 %v7534
        %v7566 = vpop.xlane.xlu0 %7565
        %7567 = vadd.xlane.f32.xlu0 %v7536
        %v7568 = vpop.xlane.xlu0 %7567
        %7569 = vadd.xlane.f32.xlu0 %v7538
        %v7570 = vpop.xlane.xlu0 %7569
        %7571 = vadd.xlane.f32.xlu0 %v7540
        %v7572 = vpop.xlane.xlu0 %7571
        %7573 = vadd.xlane.f32.xlu0 %v7542
        %v7574 = vpop.xlane.xlu0 %7573
        %7575 = vadd.xlane.f32.xlu0 %v7544
        %v7576 = vpop.xlane.xlu0 %7575
        %7577 = vadd.xlane.f32.xlu0 %v7546
        %v7578 = vpop.xlane.xlu0 %7577
        %7579 = vadd.xlane.f32.xlu0 %v7548
        %v7580 = vpop.xlane.xlu0 %7579
        %7581 = vadd.xlane.f32.xlu0 %v7550
        %v7582 = vpop.xlane.xlu0 %7581
        %7583 = vadd.xlane.f32.xlu0 %v7552
        %v7584 = vpop.xlane.xlu0 %7583
        %7585 = vadd.xlane.f32.xlu0 %v7554
        %v7586 = vpop.xlane.xlu0 %7585
        %v7587 = vrcp.pop %v7556
        %v7588 = vrcp.pop %v7558
        %v7589 = vrcp.pop %v7560
        %v7590 = vrcp.pop %v7562
        %v7591 = vrcp.pop %v7564
        %v7592 = vrcp.pop %v7566
        %v7593 = vrcp.pop %v7568
        %v7594 = vrcp.pop %v7570
        %v7595 = vrcp.pop %v7572
        %v7596 = vrcp.pop %v7574
        %v7597 = vrcp.pop %v7576
        %v7598 = vrcp.pop %v7578
        %v7599 = vrcp.pop %v7580
        %v7600 = vrcp.pop %v7582
        %v7601 = vrcp.pop %v7584
        %v7602 = vrcp.pop %v7586
        %v7603 = vmul.f32 %v7524, %v7587
        %v7604 = vmul.f32 %v7526, %v7588
        %v7605 = vmul.f32 %v7528, %v7589
        %v7606 = vmul.f32 %v7530, %v7590
        %v7607 = vmul.f32 %v7532, %v7591
        %v7608 = vmul.f32 %v7534, %v7592
        %v7609 = vmul.f32 %v7536, %v7593
        %v7610 = vmul.f32 %v7538, %v7594
        %v7611 = vmul.f32 %v7540, %v7595
        %v7612 = vmul.f32 %v7542, %v7596
        %v7613 = vmul.f32 %v7544, %v7597
        %v7614 = vmul.f32 %v7546, %v7598
        %v7615 = vmul.f32 %v7548, %v7599
        %v7616 = vmul.f32 %v7550, %v7600
        %v7617 = vmul.f32 %v7552, %v7601
        %v7618 = vmul.f32 %v7554, %v7602
        %7619 = vrot.lane.b32.xlu0 %v1278, 8
        %v7620 = vpop.permute.xlu0 %7619
        %7621 = vrot.lane.b32.xlu0 %v1284, 8
        %v7622 = vpop.permute.xlu0 %7621
        %7623 = vrot.lane.b32.xlu0 %v1290, 8
        %v7624 = vpop.permute.xlu0 %7623
        %7625 = vrot.lane.b32.xlu0 %v1296, 8
        %v7626 = vpop.permute.xlu0 %7625
        %7627 = vrot.lane.b32.xlu0 %v1302, 8
        %v7628 = vpop.permute.xlu0 %7627
        %7629 = vrot.lane.b32.xlu0 %v1308, 8
        %v7630 = vpop.permute.xlu0 %7629
        %7631 = vrot.lane.b32.xlu0 %v1314, 8
        %v7632 = vpop.permute.xlu0 %7631
        %7633 = vrot.lane.b32.xlu0 %v1320, 8
        %v7634 = vpop.permute.xlu0 %7633
        %7635 = vrot.lane.b32.xlu0 %v1326, 8
        %v7636 = vpop.permute.xlu0 %7635
        %7637 = vrot.lane.b32.xlu0 %v1332, 8
        %v7638 = vpop.permute.xlu0 %7637
        %7639 = vrot.lane.b32.xlu0 %v1338, 8
        %v7640 = vpop.permute.xlu0 %7639
        %7641 = vrot.lane.b32.xlu0 %v1344, 8
        %v7642 = vpop.permute.xlu0 %7641
        %7643 = vrot.lane.b32.xlu0 %v1350, 8
        %v7644 = vpop.permute.xlu0 %7643
        %7645 = vrot.lane.b32.xlu0 %v1356, 8
        %v7646 = vpop.permute.xlu0 %7645
        %7647 = vrot.lane.b32.xlu0 %v1362, 8
        %v7648 = vpop.permute.xlu0 %7647
        %7649 = vrot.lane.b32.xlu0 %v1368, 8
        %v7650 = vpop.permute.xlu0 %7649
        %7667 = vmatprep.subr.mxu0 0.0
        %7668 = vmatpush1.msra.mxu0 %v7620
        %7669 = vmatprep.subr.mxu0 0.0
        %7670 = vmatpush1.msra.mxu0 %v7622
        %7671 = vmatprep.subr.mxu0 0.0
        %7672 = vmatpush1.msra.mxu0 %v7624
        %7673 = vmatprep.subr.mxu0 0.0
        %7674 = vmatpush1.msra.mxu0 %v7626
        %7675 = vmatprep.subr.mxu0 0.0
        %7676 = vmatpush1.msra.mxu0 %v7628
        %7677 = vmatprep.subr.mxu0 0.0
        %7678 = vmatpush1.msra.mxu0 %v7630
        %7679 = vmatprep.subr.mxu0 0.0
        %7680 = vmatpush1.msra.mxu0 %v7632
        %7681 = vmatprep.subr.mxu0 0.0
        %7682 = vmatpush1.msra.mxu0 %v7634
        %7683 = vmatprep.subr.mxu0 0.0
        %7684 = vmatpush1.msra.mxu0 %v7636
        %7685 = vmatprep.subr.mxu0 0.0
        %7686 = vmatpush1.msra.mxu0 %v7638
        %7687 = vmatprep.subr.mxu0 0.0
        %7688 = vmatpush1.msra.mxu0 %v7640
        %7689 = vmatprep.subr.mxu0 0.0
        %7690 = vmatpush1.msra.mxu0 %v7642
        %7691 = vmatprep.subr.mxu0 0.0
        %7692 = vmatpush1.msra.mxu0 %v7644
        %7693 = vmatprep.subr.mxu0 0.0
        %7694 = vmatpush1.msra.mxu0 %v7646
        %7695 = vmatprep.subr.mxu0 0.0
        %7696 = vmatpush1.msra.mxu0 %v7648
        %7697 = vmatprep.subr.mxu0 0.0
        %7698 = vmatpush1.msra.mxu0 %v7650
        %7699 = vmatprep.subr.mxu0 0.0
        %7700 = vmatpush1.msra.mxu0 0.0
        %7701 = vmatprep.subr.mxu0 0.0
        %7702 = vmatpush1.msra.mxu0 0.0
        %7703 = vmatprep.subr.mxu0 0.0
        %7704 = vmatpush1.msra.mxu0 0.0
        %7705 = vmatprep.subr.mxu0 0.0
        %7706 = vmatpush1.msra.mxu0 0.0
        %7707 = vmatprep.subr.mxu0 0.0
        %7708 = vmatpush1.msra.mxu0 0.0
        %7709 = vmatprep.subr.mxu0 0.0
        %7710 = vmatpush1.msra.mxu0 0.0
        %7711 = vmatprep.subr.mxu0 0.0
        %7712 = vmatpush1.msra.mxu0 0.0
        %7713 = vmatprep.subr.mxu0 0.0
        %7714 = vmatpush1.msra.mxu0 0.0
        %7715 = vmatprep.subr.mxu0 0.0
        %7716 = vmatpush1.msra.mxu0 0.0
        %7717 = vmatprep.subr.mxu0 0.0
        %7718 = vmatpush1.msra.mxu0 0.0
        %7719 = vmatprep.subr.mxu0 0.0
        %7720 = vmatpush1.msra.mxu0 0.0
        %7721 = vmatprep.subr.mxu0 0.0
        %7722 = vmatpush1.msra.mxu0 0.0
        %7723 = vmatprep.subr.mxu0 0.0
        %7724 = vmatpush1.msra.mxu0 0.0
        %7725 = vmatprep.subr.mxu0 0.0
        %7726 = vmatpush1.msra.mxu0 0.0
        %7727 = vmatprep.subr.mxu0 0.0
        %7728 = vmatpush1.msra.mxu0 0.0
        %7729 = vmatprep.subr.mxu0 0.0
        %7730 = vmatpush1.msra.mxu0 0.0
        %7731 = vmatprep.mubr.f32.mxu0 0.0
        %7732 = vmatmul.mubr.f32.gmra.mrb[0].mxu0 %v7603
        %v7733 = vpop.f32.mrb[0].mxu0
        %v7734 = vadd.f32 0.0, %v7733
        %v7735 = vpop.f32.mrb[0].mxu0
        %7736 = vmatprep.mubr.f32.mxu0 0.0
        %7737 = vmatmul.mubr.f32.gmra.mrb[0].mxu0 %v7604
        %v7738 = vpop.f32.mrb[0].mxu0
        %v7739 = vadd.f32 0.0, %v7738
        %v7740 = vpop.f32.mrb[0].mxu0
        %7741 = vmatprep.mubr.f32.mxu0 0.0
        %7742 = vmatmul.mubr.f32.gmra.mrb[0].mxu0 %v7605
        %v7743 = vpop.f32.mrb[0].mxu0
        %v7744 = vadd.f32 0.0, %v7743
        %v7745 = vpop.f32.mrb[0].mxu0
        %7746 = vmatprep.mubr.f32.mxu0 0.0
        %7747 = vmatmul.mubr.f32.gmra.mrb[0].mxu0 %v7606
        %v7748 = vpop.f32.mrb[0].mxu0
        %v7749 = vadd.f32 0.0, %v7748
        %v7750 = vpop.f32.mrb[0].mxu0
        %7751 = vmatprep.mubr.f32.mxu0 0.0
        %7752 = vmatmul.mubr.f32.gmra.mrb[0].mxu0 %v7607
        %v7753 = vpop.f32.mrb[0].mxu0
        %v7754 = vadd.f32 0.0, %v7753
        %v7755 = vpop.f32.mrb[0].mxu0
        %7756 = vmatprep.mubr.f32.mxu0 0.0
        %7757 = vmatmul.mubr.f32.gmra.mrb[0].mxu0 %v7608
        %v7758 = vpop.f32.mrb[0].mxu0
        %v7759 = vadd.f32 0.0, %v7758
        %v7760 = vpop.f32.mrb[0].mxu0
        %7761 = vmatprep.mubr.f32.mxu0 0.0
        %7762 = vmatmul.mubr.f32.gmra.mrb[0].mxu0 %v7609
        %v7763 = vpop.f32.mrb[0].mxu0
        %v7764 = vadd.f32 0.0, %v7763
        %v7765 = vpop.f32.mrb[0].mxu0
        %7766 = vmatprep.mubr.f32.mxu0 0.0
        %7767 = vmatmul.mubr.f32.gmra.mrb[0].mxu0 %v7610
        %v7768 = vpop.f32.mrb[0].mxu0
        %v7769 = vadd.f32 0.0, %v7768
        %v7770 = vpop.f32.mrb[0].mxu0
        %7771 = vmatprep.mubr.f32.mxu0 0.0
        %7772 = vmatmul.mubr.f32.gmra.mrb[0].mxu0 %v7611
        %v7773 = vpop.f32.mrb[0].mxu0
        %v7774 = vadd.f32 0.0, %v7773
        %v7775 = vpop.f32.mrb[0].mxu0
        %7776 = vmatprep.mubr.f32.mxu0 0.0
        %7777 = vmatmul.mubr.f32.gmra.mrb[0].mxu0 %v7612
        %v7778 = vpop.f32.mrb[0].mxu0
        %v7779 = vadd.f32 0.0, %v7778
        %v7780 = vpop.f32.mrb[0].mxu0
        %7781 = vmatprep.mubr.f32.mxu0 0.0
        %7782 = vmatmul.mubr.f32.gmra.mrb[0].mxu0 %v7613
        %v7783 = vpop.f32.mrb[0].mxu0
        %v7784 = vadd.f32 0.0, %v7783
        %v7785 = vpop.f32.mrb[0].mxu0
        %7786 = vmatprep.mubr.f32.mxu0 0.0
        %7787 = vmatmul.mubr.f32.gmra.mrb[0].mxu0 %v7614
        %v7788 = vpop.f32.mrb[0].mxu0
        %v7789 = vadd.f32 0.0, %v7788
        %v7790 = vpop.f32.mrb[0].mxu0
        %7791 = vmatprep.mubr.f32.mxu0 0.0
        %7792 = vmatmul.mubr.f32.gmra.mrb[0].mxu0 %v7615
        %v7793 = vpop.f32.mrb[0].mxu0
        %v7794 = vadd.f32 0.0, %v7793
        %v7795 = vpop.f32.mrb[0].mxu0
        %7796 = vmatprep.mubr.f32.mxu0 0.0
        %7797 = vmatmul.mubr.f32.gmra.mrb[0].mxu0 %v7616
        %v7798 = vpop.f32.mrb[0].mxu0
        %v7799 = vadd.f32 0.0, %v7798
        %v7800 = vpop.f32.mrb[0].mxu0
        %7801 = vmatprep.mubr.f32.mxu0 0.0
        %7802 = vmatmul.mubr.f32.gmra.mrb[0].mxu0 %v7617
        %v7803 = vpop.f32.mrb[0].mxu0
        %v7804 = vadd.f32 0.0, %v7803
        %v7805 = vpop.f32.mrb[0].mxu0
        %7806 = vmatprep.mubr.f32.mxu0 0.0
        %7807 = vmatmul.mubr.f32.gmra.mrb[0].mxu0 %v7618
        %v7808 = vpop.f32.mrb[0].mxu0
        %v7809 = vadd.f32 0.0, %v7808
        %v7810 = vpop.f32.mrb[0].mxu0
        %7811 = vdwg.mxu0
        %v7813 = vsel %vm1372, %v7734, 0
        %v7816 = vsel %vm1372, %v7739, 0
        %v7819 = vsel %vm1372, %v7744, 0
        %v7822 = vsel %vm1372, %v7749, 0
        %v7825 = vsel %vm1372, %v7754, 0
        %v7828 = vsel %vm1372, %v7759, 0
        %v7831 = vsel %vm1372, %v7764, 0
        %v7834 = vsel %vm1372, %v7769, 0
        %v7837 = vsel %vm1372, %v7774, 0
        %v7840 = vsel %vm1372, %v7779, 0
        %v7843 = vsel %vm1372, %v7784, 0
        %v7846 = vsel %vm1372, %v7789, 0
        %v7849 = vsel %vm1372, %v7794, 0
        %v7852 = vsel %vm1372, %v7799, 0
        %v7855 = vsel %vm1372, %v7804, 0
        %v7858 = vsel %vm1372, %v7809, 0
        %7860 = vmatprep.subr.mxu0 0.0
        %7861 = vmatpush1.msra.mxu0 %v844
        %7862 = vmatprep.subr.mxu0 0.0
        %7863 = vmatpush1.msra.mxu0 0.0
        %7864 = vmatprep.subr.mxu0 0.0
        %7865 = vmatpush1.msra.mxu0 0.0
        %7866 = vmatprep.subr.mxu0 0.0
        %7867 = vmatpush1.msra.mxu0 0.0
        %7868 = vmatprep.subr.mxu0 0.0
        %7869 = vmatpush1.msra.mxu0 0.0
        %7870 = vmatprep.subr.mxu0 0.0
        %7871 = vmatpush1.msra.mxu0 0.0
        %7872 = vmatprep.subr.mxu0 0.0
        %7873 = vmatpush1.msra.mxu0 0.0
        %7874 = vmatprep.subr.mxu0 0.0
        %7875 = vmatpush1.msra.mxu0 0.0
        %7876 = vmatprep.subr.mxu0 0.0
        %7877 = vmatpush1.msra.mxu0 0.0
        %7878 = vmatprep.subr.mxu0 0.0
        %7879 = vmatpush1.msra.mxu0 0.0
        %7880 = vmatprep.subr.mxu0 0.0
        %7881 = vmatpush1.msra.mxu0 0.0
        %7882 = vmatprep.subr.mxu0 0.0
        %7883 = vmatpush1.msra.mxu0 0.0
        %7884 = vmatprep.subr.mxu0 0.0
        %7885 = vmatpush1.msra.mxu0 0.0
        %7886 = vmatprep.subr.mxu0 0.0
        %7887 = vmatpush1.msra.mxu0 0.0
        %7888 = vmatprep.subr.mxu0 0.0
        %7889 = vmatpush1.msra.mxu0 0.0
        %7890 = vmatprep.subr.mxu0 0.0
        %7891 = vmatpush1.msra.mxu0 0.0
        %7892 = vmatprep.subr.mxu0 0.0
        %7893 = vmatpush1.msra.mxu0 0.0
        %7894 = vmatprep.subr.mxu0 0.0
        %7895 = vmatpush1.msra.mxu0 0.0
        %7896 = vmatprep.subr.mxu0 0.0
        %7897 = vmatpush1.msra.mxu0 0.0
        %7898 = vmatprep.subr.mxu0 0.0
        %7899 = vmatpush1.msra.mxu0 0.0
        %7900 = vmatprep.subr.mxu0 0.0
        %7901 = vmatpush1.msra.mxu0 0.0
        %7902 = vmatprep.subr.mxu0 0.0
        %7903 = vmatpush1.msra.mxu0 0.0
        %7904 = vmatprep.subr.mxu0 0.0
        %7905 = vmatpush1.msra.mxu0 0.0
        %7906 = vmatprep.subr.mxu0 0.0
        %7907 = vmatpush1.msra.mxu0 0.0
        %7908 = vmatprep.subr.mxu0 0.0
        %7909 = vmatpush1.msra.mxu0 0.0
        %7910 = vmatprep.subr.mxu0 0.0
        %7911 = vmatpush1.msra.mxu0 0.0
        %7912 = vmatprep.subr.mxu0 0.0
        %7913 = vmatpush1.msra.mxu0 0.0
        %7914 = vmatprep.subr.mxu0 0.0
        %7915 = vmatpush1.msra.mxu0 0.0
        %7916 = vmatprep.subr.mxu0 0.0
        %7917 = vmatpush1.msra.mxu0 0.0
        %7918 = vmatprep.subr.mxu0 0.0
        %7919 = vmatpush1.msra.mxu0 0.0
        %7920 = vmatprep.subr.mxu0 0.0
        %7921 = vmatpush1.msra.mxu0 0.0
        %7922 = vmatprep.subr.mxu0 0.0
        %7923 = vmatpush1.msra.mxu0 0.0
        %7924 = vmatprep.mubr.f32.mxu0 0.0
        %7925 = vmatmul.mubr.f32.gmra.mrb[0].mxu0 %v7813
        %v7926 = vpop.f32.mrb[0].mxu0
        %v7927 = vadd.f32 0.0, %v7926
        %v7928 = vpop.f32.mrb[0].mxu0
        %7929 = vmatprep.mubr.f32.mxu0 0.0
        %7930 = vmatmul.mubr.f32.gmra.mrb[0].mxu0 %v7816
        %v7931 = vpop.f32.mrb[0].mxu0
        %v7932 = vadd.f32 0.0, %v7931
        %v7933 = vpop.f32.mrb[0].mxu0
        %7934 = vmatprep.mubr.f32.mxu0 0.0
        %7935 = vmatmul.mubr.f32.gmra.mrb[0].mxu0 %v7819
        %v7936 = vpop.f32.mrb[0].mxu0
        %v7937 = vadd.f32 0.0, %v7936
        %v7938 = vpop.f32.mrb[0].mxu0
        %7939 = vmatprep.mubr.f32.mxu0 0.0
        %7940 = vmatmul.mubr.f32.gmra.mrb[0].mxu0 %v7822
        %v7941 = vpop.f32.mrb[0].mxu0
        %v7942 = vadd.f32 0.0, %v7941
        %v7943 = vpop.f32.mrb[0].mxu0
        %7944 = vmatprep.mubr.f32.mxu0 0.0
        %7945 = vmatmul.mubr.f32.gmra.mrb[0].mxu0 %v7825
        %v7946 = vpop.f32.mrb[0].mxu0
        %v7947 = vadd.f32 0.0, %v7946
        %v7948 = vpop.f32.mrb[0].mxu0
        %7949 = vmatprep.mubr.f32.mxu0 0.0
        %7950 = vmatmul.mubr.f32.gmra.mrb[0].mxu0 %v7828
        %v7951 = vpop.f32.mrb[0].mxu0
        %v7952 = vadd.f32 0.0, %v7951
        %v7953 = vpop.f32.mrb[0].mxu0
        %7954 = vmatprep.mubr.f32.mxu0 0.0
        %7955 = vmatmul.mubr.f32.gmra.mrb[0].mxu0 %v7831
        %v7956 = vpop.f32.mrb[0].mxu0
        %v7957 = vadd.f32 0.0, %v7956
        %v7958 = vpop.f32.mrb[0].mxu0
        %7959 = vmatprep.mubr.f32.mxu0 0.0
        %7960 = vmatmul.mubr.f32.gmra.mrb[0].mxu0 %v7834
        %v7961 = vpop.f32.mrb[0].mxu0
        %v7962 = vadd.f32 0.0, %v7961
        %v7963 = vpop.f32.mrb[0].mxu0
        %7964 = vmatprep.mubr.f32.mxu0 0.0
        %7965 = vmatmul.mubr.f32.gmra.mrb[0].mxu0 %v7837
        %v7966 = vpop.f32.mrb[0].mxu0
        %v7967 = vadd.f32 0.0, %v7966
        %v7968 = vpop.f32.mrb[0].mxu0
        %7969 = vmatprep.mubr.f32.mxu0 0.0
        %7970 = vmatmul.mubr.f32.gmra.mrb[0].mxu0 %v7840
        %v7971 = vpop.f32.mrb[0].mxu0
        %v7972 = vadd.f32 0.0, %v7971
        %v7973 = vpop.f32.mrb[0].mxu0
        %7974 = vmatprep.mubr.f32.mxu0 0.0
        %7975 = vmatmul.mubr.f32.gmra.mrb[0].mxu0 %v7843
        %v7976 = vpop.f32.mrb[0].mxu0
        %v7977 = vadd.f32 0.0, %v7976
        %v7978 = vpop.f32.mrb[0].mxu0
        %7979 = vmatprep.mubr.f32.mxu0 0.0
        %7980 = vmatmul.mubr.f32.gmra.mrb[0].mxu0 %v7846
        %v7981 = vpop.f32.mrb[0].mxu0
        %v7982 = vadd.f32 0.0, %v7981
        %v7983 = vpop.f32.mrb[0].mxu0
        %7984 = vmatprep.mubr.f32.mxu0 0.0
        %7985 = vmatmul.mubr.f32.gmra.mrb[0].mxu0 %v7849
        %v7986 = vpop.f32.mrb[0].mxu0
        %v7987 = vadd.f32 0.0, %v7986
        %v7988 = vpop.f32.mrb[0].mxu0
        %7989 = vmatprep.mubr.f32.mxu0 0.0
        %7990 = vmatmul.mubr.f32.gmra.mrb[0].mxu0 %v7852
        %v7991 = vpop.f32.mrb[0].mxu0
        %v7992 = vadd.f32 0.0, %v7991
        %v7993 = vpop.f32.mrb[0].mxu0
        %7994 = vmatprep.mubr.f32.mxu0 0.0
        %7995 = vmatmul.mubr.f32.gmra.mrb[0].mxu0 %v7855
        %v7996 = vpop.f32.mrb[0].mxu0
        %v7997 = vadd.f32 0.0, %v7996
        %v7998 = vpop.f32.mrb[0].mxu0
        %7999 = vmatprep.mubr.f32.mxu0 0.0
        %8000 = vmatmul.mubr.f32.gmra.mrb[0].mxu0 %v7858
        %v8001 = vpop.f32.mrb[0].mxu0
        %v8002 = vadd.f32 0.0, %v8001
        %v8003 = vpop.f32.mrb[0].mxu0
        %8004 = vdwg.mxu0
        %v8005 = vadd.f32 %v7170, %v7927
        %v8006 = vadd.f32 %v7171, %v7932
        %v8007 = vadd.f32 %v7172, %v7937
        %v8008 = vadd.f32 %v7173, %v7942
        %v8009 = vadd.f32 %v7174, %v7947
        %v8010 = vadd.f32 %v7175, %v7952
        %v8011 = vadd.f32 %v7176, %v7957
        %v8012 = vadd.f32 %v7177, %v7962
        %v8013 = vadd.f32 %v7178, %v7967
        %v8014 = vadd.f32 %v7179, %v7972
        %v8015 = vadd.f32 %v7180, %v7977
        %v8016 = vadd.f32 %v7181, %v7982
        %v8017 = vadd.f32 %v7182, %v7987
        %v8018 = vadd.f32 %v7183, %v7992
        %v8019 = vadd.f32 %v7184, %v7997
        %v8020 = vadd.f32 %v7185, %v8002
        %v8021 = vlaneseq
        %v8022 = vshrl.u32 %v8021, 7
        %v8023 = vsub.s32 2, %v8022
        %v8024 = vrot.slane %v901, %v8023
        %v8025 = vadd.f32 %v8005, %v8024
        %v8026 = vadd.f32 %v8006, %v8024
        %v8027 = vadd.f32 %v8007, %v8024
        %v8028 = vadd.f32 %v8008, %v8024
        %v8029 = vadd.f32 %v8009, %v8024
        %v8030 = vadd.f32 %v8010, %v8024
        %v8031 = vadd.f32 %v8011, %v8024
        %v8032 = vadd.f32 %v8012, %v8024
        %v8033 = vadd.f32 %v8013, %v8024
        %v8034 = vadd.f32 %v8014, %v8024
        %v8035 = vadd.f32 %v8015, %v8024
        %v8036 = vadd.f32 %v8016, %v8024
        %v8037 = vadd.f32 %v8017, %v8024
        %v8038 = vadd.f32 %v8018, %v8024
        %v8039 = vadd.f32 %v8019, %v8024
        %v8040 = vadd.f32 %v8020, %v8024
        %v8041 = vsel %vm902, %v8025, 0.0
        %8042 = vadd.xlane.f32.xlu0 %v8041
        %v8043 = vpop.xlane.xlu0 %8042
        %v8044 = vsel %vm902, %v8026, 0.0
        %8045 = vadd.xlane.f32.xlu0 %v8044
        %v8046 = vpop.xlane.xlu0 %8045
        %v8047 = vsel %vm902, %v8027, 0.0
        %8048 = vadd.xlane.f32.xlu0 %v8047
        %v8049 = vpop.xlane.xlu0 %8048
        %v8050 = vsel %vm902, %v8028, 0.0
        %8051 = vadd.xlane.f32.xlu0 %v8050
        %v8052 = vpop.xlane.xlu0 %8051
        %v8053 = vsel %vm902, %v8029, 0.0
        %8054 = vadd.xlane.f32.xlu0 %v8053
        %v8055 = vpop.xlane.xlu0 %8054
        %v8056 = vsel %vm902, %v8030, 0.0
        %8057 = vadd.xlane.f32.xlu0 %v8056
        %v8058 = vpop.xlane.xlu0 %8057
        %v8059 = vsel %vm902, %v8031, 0.0
        %8060 = vadd.xlane.f32.xlu0 %v8059
        %v8061 = vpop.xlane.xlu0 %8060
        %v8062 = vsel %vm902, %v8032, 0.0
        %8063 = vadd.xlane.f32.xlu0 %v8062
        %v8064 = vpop.xlane.xlu0 %8063
        %v8065 = vsel %vm902, %v8033, 0.0
        %8066 = vadd.xlane.f32.xlu0 %v8065
        %v8067 = vpop.xlane.xlu0 %8066
        %v8068 = vsel %vm902, %v8034, 0.0
        %8069 = vadd.xlane.f32.xlu0 %v8068
        %v8070 = vpop.xlane.xlu0 %8069
        %v8071 = vsel %vm902, %v8035, 0.0
        %8072 = vadd.xlane.f32.xlu0 %v8071
        %v8073 = vpop.xlane.xlu0 %8072
        %v8074 = vsel %vm902, %v8036, 0.0
        %8075 = vadd.xlane.f32.xlu0 %v8074
        %v8076 = vpop.xlane.xlu0 %8075
        %v8077 = vsel %vm902, %v8037, 0.0
        %8078 = vadd.xlane.f32.xlu0 %v8077
        %v8079 = vpop.xlane.xlu0 %8078
        %v8080 = vsel %vm902, %v8038, 0.0
        %8081 = vadd.xlane.f32.xlu0 %v8080
        %v8082 = vpop.xlane.xlu0 %8081
        %v8083 = vsel %vm902, %v8039, 0.0
        %8084 = vadd.xlane.f32.xlu0 %v8083
        %v8085 = vpop.xlane.xlu0 %8084
        %v8086 = vsel %vm902, %v8040, 0.0
        %8087 = vadd.xlane.f32.xlu0 %v8086
        %v8088 = vpop.xlane.xlu0 %8087
        %v8089 = vmul.f32 %v8043, %v951
        %v8090 = vmul.f32 %v8046, %v951
        %v8091 = vmul.f32 %v8049, %v951
        %v8092 = vmul.f32 %v8052, %v951
        %v8093 = vmul.f32 %v8055, %v951
        %v8094 = vmul.f32 %v8058, %v951
        %v8095 = vmul.f32 %v8061, %v951
        %v8096 = vmul.f32 %v8064, %v951
        %v8097 = vmul.f32 %v8067, %v951
        %v8098 = vmul.f32 %v8070, %v951
        %v8099 = vmul.f32 %v8073, %v951
        %v8100 = vmul.f32 %v8076, %v951
        %v8101 = vmul.f32 %v8079, %v951
        %v8102 = vmul.f32 %v8082, %v951
        %v8103 = vmul.f32 %v8085, %v951
        %v8104 = vmul.f32 %v8088, %v951
        %v8105 = vsub.f32 %v8025, %v8089
        %v8106 = vsub.f32 %v8026, %v8090
        %v8107 = vsub.f32 %v8027, %v8091
        %v8108 = vsub.f32 %v8028, %v8092
        %v8109 = vsub.f32 %v8029, %v8093
        %v8110 = vsub.f32 %v8030, %v8094
        %v8111 = vsub.f32 %v8031, %v8095
        %v8112 = vsub.f32 %v8032, %v8096
        %v8113 = vsub.f32 %v8033, %v8097
        %v8114 = vsub.f32 %v8034, %v8098
        %v8115 = vsub.f32 %v8035, %v8099
        %v8116 = vsub.f32 %v8036, %v8100
        %v8117 = vsub.f32 %v8037, %v8101
        %v8118 = vsub.f32 %v8038, %v8102
        %v8119 = vsub.f32 %v8039, %v8103
        %v8120 = vsub.f32 %v8040, %v8104
        %v8121 = vmul.f32 %v8105, %v8105
        %v8122 = vmul.f32 %v8106, %v8106
        %v8123 = vmul.f32 %v8107, %v8107
        %v8124 = vmul.f32 %v8108, %v8108
        %v8125 = vmul.f32 %v8109, %v8109
        %v8126 = vmul.f32 %v8110, %v8110
        %v8127 = vmul.f32 %v8111, %v8111
        %v8128 = vmul.f32 %v8112, %v8112
        %v8129 = vmul.f32 %v8113, %v8113
        %v8130 = vmul.f32 %v8114, %v8114
        %v8131 = vmul.f32 %v8115, %v8115
        %v8132 = vmul.f32 %v8116, %v8116
        %v8133 = vmul.f32 %v8117, %v8117
        %v8134 = vmul.f32 %v8118, %v8118
        %v8135 = vmul.f32 %v8119, %v8119
        %v8136 = vmul.f32 %v8120, %v8120
        %v8137 = vsel %vm902, %v8121, 0.0
        %8138 = vadd.xlane.f32.xlu0 %v8137
        %v8139 = vpop.xlane.xlu0 %8138
        %v8140 = vsel %vm902, %v8122, 0.0
        %8141 = vadd.xlane.f32.xlu0 %v8140
        %v8142 = vpop.xlane.xlu0 %8141
        %v8143 = vsel %vm902, %v8123, 0.0
        %8144 = vadd.xlane.f32.xlu0 %v8143
        %v8145 = vpop.xlane.xlu0 %8144
        %v8146 = vsel %vm902, %v8124, 0.0
        %8147 = vadd.xlane.f32.xlu0 %v8146
        %v8148 = vpop.xlane.xlu0 %8147
        %v8149 = vsel %vm902, %v8125, 0.0
        %8150 = vadd.xlane.f32.xlu0 %v8149
        %v8151 = vpop.xlane.xlu0 %8150
        %v8152 = vsel %vm902, %v8126, 0.0
        %8153 = vadd.xlane.f32.xlu0 %v8152
        %v8154 = vpop.xlane.xlu0 %8153
        %v8155 = vsel %vm902, %v8127, 0.0
        %8156 = vadd.xlane.f32.xlu0 %v8155
        %v8157 = vpop.xlane.xlu0 %8156
        %v8158 = vsel %vm902, %v8128, 0.0
        %8159 = vadd.xlane.f32.xlu0 %v8158
        %v8160 = vpop.xlane.xlu0 %8159
        %v8161 = vsel %vm902, %v8129, 0.0
        %8162 = vadd.xlane.f32.xlu0 %v8161
        %v8163 = vpop.xlane.xlu0 %8162
        %v8164 = vsel %vm902, %v8130, 0.0
        %8165 = vadd.xlane.f32.xlu0 %v8164
        %v8166 = vpop.xlane.xlu0 %8165
        %v8167 = vsel %vm902, %v8131, 0.0
        %8168 = vadd.xlane.f32.xlu0 %v8167
        %v8169 = vpop.xlane.xlu0 %8168
        %v8170 = vsel %vm902, %v8132, 0.0
        %8171 = vadd.xlane.f32.xlu0 %v8170
        %v8172 = vpop.xlane.xlu0 %8171
        %v8173 = vsel %vm902, %v8133, 0.0
        %8174 = vadd.xlane.f32.xlu0 %v8173
        %v8175 = vpop.xlane.xlu0 %8174
        %v8176 = vsel %vm902, %v8134, 0.0
        %8177 = vadd.xlane.f32.xlu0 %v8176
        %v8178 = vpop.xlane.xlu0 %8177
        %v8179 = vsel %vm902, %v8135, 0.0
        %8180 = vadd.xlane.f32.xlu0 %v8179
        %v8181 = vpop.xlane.xlu0 %8180
        %v8182 = vsel %vm902, %v8136, 0.0
        %8183 = vadd.xlane.f32.xlu0 %v8182
        %v8184 = vpop.xlane.xlu0 %8183
        %v8185 = vmul.f32 %v8139, %v951
        %v8186 = vmul.f32 %v8142, %v951
        %v8187 = vmul.f32 %v8145, %v951
        %v8188 = vmul.f32 %v8148, %v951
        %v8189 = vmul.f32 %v8151, %v951
        %v8190 = vmul.f32 %v8154, %v951
        %v8191 = vmul.f32 %v8157, %v951
        %v8192 = vmul.f32 %v8160, %v951
        %v8193 = vmul.f32 %v8163, %v951
        %v8194 = vmul.f32 %v8166, %v951
        %v8195 = vmul.f32 %v8169, %v951
        %v8196 = vmul.f32 %v8172, %v951
        %v8197 = vmul.f32 %v8175, %v951
        %v8198 = vmul.f32 %v8178, %v951
        %v8199 = vmul.f32 %v8181, %v951
        %v8200 = vmul.f32 %v8184, %v951
        %v8201 = vadd.f32 %v8185, 1e-05
        %v8202 = vadd.f32 %v8186, 1e-05
        %v8203 = vadd.f32 %v8187, 1e-05
        %v8204 = vadd.f32 %v8188, 1e-05
        %v8205 = vadd.f32 %v8189, 1e-05
        %v8206 = vadd.f32 %v8190, 1e-05
        %v8207 = vadd.f32 %v8191, 1e-05
        %v8208 = vadd.f32 %v8192, 1e-05
        %v8209 = vadd.f32 %v8193, 1e-05
        %v8210 = vadd.f32 %v8194, 1e-05
        %v8211 = vadd.f32 %v8195, 1e-05
        %v8212 = vadd.f32 %v8196, 1e-05
        %v8213 = vadd.f32 %v8197, 1e-05
        %v8214 = vadd.f32 %v8198, 1e-05
        %v8215 = vadd.f32 %v8199, 1e-05
        %v8216 = vadd.f32 %v8200, 1e-05
        %v8217 = vrsqrt.pop %v8201
        %v8218 = vrsqrt.pop %v8202
        %v8219 = vrsqrt.pop %v8203
        %v8220 = vrsqrt.pop %v8204
        %v8221 = vrsqrt.pop %v8205
        %v8222 = vrsqrt.pop %v8206
        %v8223 = vrsqrt.pop %v8207
        %v8224 = vrsqrt.pop %v8208
        %v8225 = vrsqrt.pop %v8209
        %v8226 = vrsqrt.pop %v8210
        %v8227 = vrsqrt.pop %v8211
        %v8228 = vrsqrt.pop %v8212
        %v8229 = vrsqrt.pop %v8213
        %v8230 = vrsqrt.pop %v8214
        %v8231 = vrsqrt.pop %v8215
        %v8232 = vrsqrt.pop %v8216
        %v8233 = vmul.f32 %v8105, %v8217
        %v8234 = vmul.f32 %v8106, %v8218
        %v8235 = vmul.f32 %v8107, %v8219
        %v8236 = vmul.f32 %v8108, %v8220
        %v8237 = vmul.f32 %v8109, %v8221
        %v8238 = vmul.f32 %v8110, %v8222
        %v8239 = vmul.f32 %v8111, %v8223
        %v8240 = vmul.f32 %v8112, %v8224
        %v8241 = vmul.f32 %v8113, %v8225
        %v8242 = vmul.f32 %v8114, %v8226
        %v8243 = vmul.f32 %v8115, %v8227
        %v8244 = vmul.f32 %v8116, %v8228
        %v8245 = vmul.f32 %v8117, %v8229
        %v8246 = vmul.f32 %v8118, %v8230
        %v8247 = vmul.f32 %v8119, %v8231
        %v8248 = vmul.f32 %v8120, %v8232
        %v8249 = vlaneseq
        %v8250 = vshrl.u32 %v8249, 7
        %v8251 = vsub.s32 3, %v8250
        %v8252 = vrot.slane %v901, %v8251
        %v8253 = vmul.f32 %v8233, %v8252
        %v8254 = vmul.f32 %v8234, %v8252
        %v8255 = vmul.f32 %v8235, %v8252
        %v8256 = vmul.f32 %v8236, %v8252
        %v8257 = vmul.f32 %v8237, %v8252
        %v8258 = vmul.f32 %v8238, %v8252
        %v8259 = vmul.f32 %v8239, %v8252
        %v8260 = vmul.f32 %v8240, %v8252
        %v8261 = vmul.f32 %v8241, %v8252
        %v8262 = vmul.f32 %v8242, %v8252
        %v8263 = vmul.f32 %v8243, %v8252
        %v8264 = vmul.f32 %v8244, %v8252
        %v8265 = vmul.f32 %v8245, %v8252
        %v8266 = vmul.f32 %v8246, %v8252
        %v8267 = vmul.f32 %v8247, %v8252
        %v8268 = vmul.f32 %v8248, %v8252
        %v8269 = vlaneseq
        %v8270 = vshrl.u32 %v8269, 7
        %v8271 = vsub.s32 4, %v8270
        %v8272 = vrot.slane %v901, %v8271
        %v8273 = vadd.f32 %v8253, %v8272
        %v8274 = vadd.f32 %v8254, %v8272
        %v8275 = vadd.f32 %v8255, %v8272
        %v8276 = vadd.f32 %v8256, %v8272
        %v8277 = vadd.f32 %v8257, %v8272
        %v8278 = vadd.f32 %v8258, %v8272
        %v8279 = vadd.f32 %v8259, %v8272
        %v8280 = vadd.f32 %v8260, %v8272
        %v8281 = vadd.f32 %v8261, %v8272
        %v8282 = vadd.f32 %v8262, %v8272
        %v8283 = vadd.f32 %v8263, %v8272
        %v8284 = vadd.f32 %v8264, %v8272
        %v8285 = vadd.f32 %v8265, %v8272
        %v8286 = vadd.f32 %v8266, %v8272
        %v8287 = vadd.f32 %v8267, %v8272
        %v8288 = vadd.f32 %v8268, %v8272
        %v8290 = vlaneseq
        %v8291 = vshrl.u32 %v8290, 7
        %v8292 = vsub.s32 0, %v8291
        %v8293 = vrot.slane %v864, %v8292
        %v8294 = vlaneseq
        %v8295 = vshrl.u32 %v8294, 7
        %v8296 = vsub.s32 1, %v8295
        %v8297 = vrot.slane %v864, %v8296
        %v8301 = vsel %vm902, %v8273, 0
        %v8304 = vsel %vm902, %v8274, 0
        %v8307 = vsel %vm902, %v8275, 0
        %v8310 = vsel %vm902, %v8276, 0
        %v8313 = vsel %vm902, %v8277, 0
        %v8316 = vsel %vm902, %v8278, 0
        %v8319 = vsel %vm902, %v8279, 0
        %v8322 = vsel %vm902, %v8280, 0
        %v8325 = vsel %vm902, %v8281, 0
        %v8328 = vsel %vm902, %v8282, 0
        %v8331 = vsel %vm902, %v8283, 0
        %v8334 = vsel %vm902, %v8284, 0
        %v8337 = vsel %vm902, %v8285, 0
        %v8340 = vsel %vm902, %v8286, 0
        %v8343 = vsel %vm902, %v8287, 0
        %v8346 = vsel %vm902, %v8288, 0
        %8348 = vmatprep.subr.mxu0 %v848
        %8349 = vmatpush1.msra.mxu0 %v847
        %8350 = vmatprep.subr.mxu0 %v850
        %8351 = vmatpush1.msra.mxu0 %v849
        %8352 = vmatprep.subr.mxu0 %v852
        %8353 = vmatpush1.msra.mxu0 %v851
        %8354 = vmatprep.subr.mxu0 %v854
        %8355 = vmatpush1.msra.mxu0 %v853
        %8356 = vmatprep.subr.mxu0 %v856
        %8357 = vmatpush1.msra.mxu0 %v855
        %8358 = vmatprep.subr.mxu0 %v858
        %8359 = vmatpush1.msra.mxu0 %v857
        %8360 = vmatprep.subr.mxu0 %v860
        %8361 = vmatpush1.msra.mxu0 %v859
        %8362 = vmatprep.subr.mxu0 %v862
        %8363 = vmatpush1.msra.mxu0 %v861
        %8364 = vmatprep.subr.mxu0 0.0
        %8365 = vmatpush1.msra.mxu0 0.0
        %8366 = vmatprep.subr.mxu0 0.0
        %8367 = vmatpush1.msra.mxu0 0.0
        %8368 = vmatprep.subr.mxu0 0.0
        %8369 = vmatpush1.msra.mxu0 0.0
        %8370 = vmatprep.subr.mxu0 0.0
        %8371 = vmatpush1.msra.mxu0 0.0
        %8372 = vmatprep.subr.mxu0 0.0
        %8373 = vmatpush1.msra.mxu0 0.0
        %8374 = vmatprep.subr.mxu0 0.0
        %8375 = vmatpush1.msra.mxu0 0.0
        %8376 = vmatprep.subr.mxu0 0.0
        %8377 = vmatpush1.msra.mxu0 0.0
        %8378 = vmatprep.subr.mxu0 0.0
        %8379 = vmatpush1.msra.mxu0 0.0
        %8380 = vmatprep.subr.mxu0 0.0
        %8381 = vmatpush1.msra.mxu0 0.0
        %8382 = vmatprep.subr.mxu0 0.0
        %8383 = vmatpush1.msra.mxu0 0.0
        %8384 = vmatprep.subr.mxu0 0.0
        %8385 = vmatpush1.msra.mxu0 0.0
        %8386 = vmatprep.subr.mxu0 0.0
        %8387 = vmatpush1.msra.mxu0 0.0
        %8388 = vmatprep.subr.mxu0 0.0
        %8389 = vmatpush1.msra.mxu0 0.0
        %8390 = vmatprep.subr.mxu0 0.0
        %8391 = vmatpush1.msra.mxu0 0.0
        %8392 = vmatprep.subr.mxu0 0.0
        %8393 = vmatpush1.msra.mxu0 0.0
        %8394 = vmatprep.subr.mxu0 0.0
        %8395 = vmatpush1.msra.mxu0 0.0
        %8396 = vmatprep.subr.mxu0 0.0
        %8397 = vmatpush1.msra.mxu0 0.0
        %8398 = vmatprep.subr.mxu0 0.0
        %8399 = vmatpush1.msra.mxu0 0.0
        %8400 = vmatprep.subr.mxu0 0.0
        %8401 = vmatpush1.msra.mxu0 0.0
        %8402 = vmatprep.subr.mxu0 0.0
        %8403 = vmatpush1.msra.mxu0 0.0
        %8404 = vmatprep.subr.mxu0 0.0
        %8405 = vmatpush1.msra.mxu0 0.0
        %8406 = vmatprep.subr.mxu0 0.0
        %8407 = vmatpush1.msra.mxu0 0.0
        %8408 = vmatprep.subr.mxu0 0.0
        %8409 = vmatpush1.msra.mxu0 0.0
        %8410 = vmatprep.subr.mxu0 0.0
        %8411 = vmatpush1.msra.mxu0 0.0
        %8412 = vmatprep.mubr.f32.mxu0 0.0
        %8413 = vmatmul.mubr.f32.gmra.mrb[0].mxu0 %v8301
        %v8414 = vpop.f32.mrb[0].mxu0
        %v8415 = vadd.f32 %v8293, %v8414
        %v8416 = vpop.f32.mrb[0].mxu0
        %v8417 = vadd.f32 %v8297, %v8416
        %8418 = vmatprep.mubr.f32.mxu0 0.0
        %8419 = vmatmul.mubr.f32.gmra.mrb[0].mxu0 %v8304
        %v8420 = vpop.f32.mrb[0].mxu0
        %v8421 = vadd.f32 %v8293, %v8420
        %v8422 = vpop.f32.mrb[0].mxu0
        %v8423 = vadd.f32 %v8297, %v8422
        %8424 = vmatprep.mubr.f32.mxu0 0.0
        %8425 = vmatmul.mubr.f32.gmra.mrb[0].mxu0 %v8307
        %v8426 = vpop.f32.mrb[0].mxu0
        %v8427 = vadd.f32 %v8293, %v8426
        %v8428 = vpop.f32.mrb[0].mxu0
        %v8429 = vadd.f32 %v8297, %v8428
        %8430 = vmatprep.mubr.f32.mxu0 0.0
        %8431 = vmatmul.mubr.f32.gmra.mrb[0].mxu0 %v8310
        %v8432 = vpop.f32.mrb[0].mxu0
        %v8433 = vadd.f32 %v8293, %v8432
        %v8434 = vpop.f32.mrb[0].mxu0
        %v8435 = vadd.f32 %v8297, %v8434
        %8436 = vmatprep.mubr.f32.mxu0 0.0
        %8437 = vmatmul.mubr.f32.gmra.mrb[0].mxu0 %v8313
        %v8438 = vpop.f32.mrb[0].mxu0
        %v8439 = vadd.f32 %v8293, %v8438
        %v8440 = vpop.f32.mrb[0].mxu0
        %v8441 = vadd.f32 %v8297, %v8440
        %8442 = vmatprep.mubr.f32.mxu0 0.0
        %8443 = vmatmul.mubr.f32.gmra.mrb[0].mxu0 %v8316
        %v8444 = vpop.f32.mrb[0].mxu0
        %v8445 = vadd.f32 %v8293, %v8444
        %v8446 = vpop.f32.mrb[0].mxu0
        %v8447 = vadd.f32 %v8297, %v8446
        %8448 = vmatprep.mubr.f32.mxu0 0.0
        %8449 = vmatmul.mubr.f32.gmra.mrb[0].mxu0 %v8319
        %v8450 = vpop.f32.mrb[0].mxu0
        %v8451 = vadd.f32 %v8293, %v8450
        %v8452 = vpop.f32.mrb[0].mxu0
        %v8453 = vadd.f32 %v8297, %v8452
        %8454 = vmatprep.mubr.f32.mxu0 0.0
        %8455 = vmatmul.mubr.f32.gmra.mrb[0].mxu0 %v8322
        %v8456 = vpop.f32.mrb[0].mxu0
        %v8457 = vadd.f32 %v8293, %v8456
        %v8458 = vpop.f32.mrb[0].mxu0
        %v8459 = vadd.f32 %v8297, %v8458
        %8460 = vmatprep.mubr.f32.mxu0 0.0
        %8461 = vmatmul.mubr.f32.gmra.mrb[0].mxu0 %v8325
        %v8462 = vpop.f32.mrb[0].mxu0
        %v8463 = vadd.f32 %v8293, %v8462
        %v8464 = vpop.f32.mrb[0].mxu0
        %v8465 = vadd.f32 %v8297, %v8464
        %8466 = vmatprep.mubr.f32.mxu0 0.0
        %8467 = vmatmul.mubr.f32.gmra.mrb[0].mxu0 %v8328
        %v8468 = vpop.f32.mrb[0].mxu0
        %v8469 = vadd.f32 %v8293, %v8468
        %v8470 = vpop.f32.mrb[0].mxu0
        %v8471 = vadd.f32 %v8297, %v8470
        %8472 = vmatprep.mubr.f32.mxu0 0.0
        %8473 = vmatmul.mubr.f32.gmra.mrb[0].mxu0 %v8331
        %v8474 = vpop.f32.mrb[0].mxu0
        %v8475 = vadd.f32 %v8293, %v8474
        %v8476 = vpop.f32.mrb[0].mxu0
        %v8477 = vadd.f32 %v8297, %v8476
        %8478 = vmatprep.mubr.f32.mxu0 0.0
        %8479 = vmatmul.mubr.f32.gmra.mrb[0].mxu0 %v8334
        %v8480 = vpop.f32.mrb[0].mxu0
        %v8481 = vadd.f32 %v8293, %v8480
        %v8482 = vpop.f32.mrb[0].mxu0
        %v8483 = vadd.f32 %v8297, %v8482
        %8484 = vmatprep.mubr.f32.mxu0 0.0
        %8485 = vmatmul.mubr.f32.gmra.mrb[0].mxu0 %v8337
        %v8486 = vpop.f32.mrb[0].mxu0
        %v8487 = vadd.f32 %v8293, %v8486
        %v8488 = vpop.f32.mrb[0].mxu0
        %v8489 = vadd.f32 %v8297, %v8488
        %8490 = vmatprep.mubr.f32.mxu0 0.0
        %8491 = vmatmul.mubr.f32.gmra.mrb[0].mxu0 %v8340
        %v8492 = vpop.f32.mrb[0].mxu0
        %v8493 = vadd.f32 %v8293, %v8492
        %v8494 = vpop.f32.mrb[0].mxu0
        %v8495 = vadd.f32 %v8297, %v8494
        %8496 = vmatprep.mubr.f32.mxu0 0.0
        %8497 = vmatmul.mubr.f32.gmra.mrb[0].mxu0 %v8343
        %v8498 = vpop.f32.mrb[0].mxu0
        %v8499 = vadd.f32 %v8293, %v8498
        %v8500 = vpop.f32.mrb[0].mxu0
        %v8501 = vadd.f32 %v8297, %v8500
        %8502 = vmatprep.mubr.f32.mxu0 0.0
        %8503 = vmatmul.mubr.f32.gmra.mrb[0].mxu0 %v8346
        %v8504 = vpop.f32.mrb[0].mxu0
        %v8505 = vadd.f32 %v8293, %v8504
        %v8506 = vpop.f32.mrb[0].mxu0
        %v8507 = vadd.f32 %v8297, %v8506
        %8508 = vdwg.mxu0
        %v8509 = vmul.f32 %v8415, 0.5
        %v8510 = vmul.f32 %v8417, 0.5
        %v8511 = vmul.f32 %v8421, 0.5
        %v8512 = vmul.f32 %v8423, 0.5
        %v8513 = vmul.f32 %v8427, 0.5
        %v8514 = vmul.f32 %v8429, 0.5
        %v8515 = vmul.f32 %v8433, 0.5
        %v8516 = vmul.f32 %v8435, 0.5
        %v8517 = vmul.f32 %v8439, 0.5
        %v8518 = vmul.f32 %v8441, 0.5
        %v8519 = vmul.f32 %v8445, 0.5
        %v8520 = vmul.f32 %v8447, 0.5
        %v8521 = vmul.f32 %v8451, 0.5
        %v8522 = vmul.f32 %v8453, 0.5
        %v8523 = vmul.f32 %v8457, 0.5
        %v8524 = vmul.f32 %v8459, 0.5
        %v8525 = vmul.f32 %v8463, 0.5
        %v8526 = vmul.f32 %v8465, 0.5
        %v8527 = vmul.f32 %v8469, 0.5
        %v8528 = vmul.f32 %v8471, 0.5
        %v8529 = vmul.f32 %v8475, 0.5
        %v8530 = vmul.f32 %v8477, 0.5
        %v8531 = vmul.f32 %v8481, 0.5
        %v8532 = vmul.f32 %v8483, 0.5
        %v8533 = vmul.f32 %v8487, 0.5
        %v8534 = vmul.f32 %v8489, 0.5
        %v8535 = vmul.f32 %v8493, 0.5
        %v8536 = vmul.f32 %v8495, 0.5
        %v8537 = vmul.f32 %v8499, 0.5
        %v8538 = vmul.f32 %v8501, 0.5
        %v8539 = vmul.f32 %v8505, 0.5
        %v8540 = vmul.f32 %v8507, 0.5
        %v8541 = vmul.f32 %v8415, 0.044715
        %v8542 = vmul.f32 %v8417, 0.044715
        %v8543 = vmul.f32 %v8421, 0.044715
        %v8544 = vmul.f32 %v8423, 0.044715
        %v8545 = vmul.f32 %v8427, 0.044715
        %v8546 = vmul.f32 %v8429, 0.044715
        %v8547 = vmul.f32 %v8433, 0.044715
        %v8548 = vmul.f32 %v8435, 0.044715
        %v8549 = vmul.f32 %v8439, 0.044715
        %v8550 = vmul.f32 %v8441, 0.044715
        %v8551 = vmul.f32 %v8445, 0.044715
        %v8552 = vmul.f32 %v8447, 0.044715
        %v8553 = vmul.f32 %v8451, 0.044715
        %v8554 = vmul.f32 %v8453, 0.044715
        %v8555 = vmul.f32 %v8457, 0.044715
        %v8556 = vmul.f32 %v8459, 0.044715
        %v8557 = vmul.f32 %v8463, 0.044715
        %v8558 = vmul.f32 %v8465, 0.044715
        %v8559 = vmul.f32 %v8469, 0.044715
        %v8560 = vmul.f32 %v8471, 0.044715
        %v8561 = vmul.f32 %v8475, 0.044715
        %v8562 = vmul.f32 %v8477, 0.044715
        %v8563 = vmul.f32 %v8481, 0.044715
        %v8564 = vmul.f32 %v8483, 0.044715
        %v8565 = vmul.f32 %v8487, 0.044715
        %v8566 = vmul.f32 %v8489, 0.044715
        %v8567 = vmul.f32 %v8493, 0.044715
        %v8568 = vmul.f32 %v8495, 0.044715
        %v8569 = vmul.f32 %v8499, 0.044715
        %v8570 = vmul.f32 %v8501, 0.044715
        %v8571 = vmul.f32 %v8505, 0.044715
        %v8572 = vmul.f32 %v8507, 0.044715
        %v8573 = vmul.f32 %v8541, %v8415
        %v8574 = vmul.f32 %v8542, %v8417
        %v8575 = vmul.f32 %v8543, %v8421
        %v8576 = vmul.f32 %v8544, %v8423
        %v8577 = vmul.f32 %v8545, %v8427
        %v8578 = vmul.f32 %v8546, %v8429
        %v8579 = vmul.f32 %v8547, %v8433
        %v8580 = vmul.f32 %v8548, %v8435
        %v8581 = vmul.f32 %v8549, %v8439
        %v8582 = vmul.f32 %v8550, %v8441
        %v8583 = vmul.f32 %v8551, %v8445
        %v8584 = vmul.f32 %v8552, %v8447
        %v8585 = vmul.f32 %v8553, %v8451
        %v8586 = vmul.f32 %v8554, %v8453
        %v8587 = vmul.f32 %v8555, %v8457
        %v8588 = vmul.f32 %v8556, %v8459
        %v8589 = vmul.f32 %v8557, %v8463
        %v8590 = vmul.f32 %v8558, %v8465
        %v8591 = vmul.f32 %v8559, %v8469
        %v8592 = vmul.f32 %v8560, %v8471
        %v8593 = vmul.f32 %v8561, %v8475
        %v8594 = vmul.f32 %v8562, %v8477
        %v8595 = vmul.f32 %v8563, %v8481
        %v8596 = vmul.f32 %v8564, %v8483
        %v8597 = vmul.f32 %v8565, %v8487
        %v8598 = vmul.f32 %v8566, %v8489
        %v8599 = vmul.f32 %v8567, %v8493
        %v8600 = vmul.f32 %v8568, %v8495
        %v8601 = vmul.f32 %v8569, %v8499
        %v8602 = vmul.f32 %v8570, %v8501
        %v8603 = vmul.f32 %v8571, %v8505
        %v8604 = vmul.f32 %v8572, %v8507
        %v8605 = vmul.f32 %v8573, %v8415
        %v8606 = vmul.f32 %v8574, %v8417
        %v8607 = vmul.f32 %v8575, %v8421
        %v8608 = vmul.f32 %v8576, %v8423
        %v8609 = vmul.f32 %v8577, %v8427
        %v8610 = vmul.f32 %v8578, %v8429
        %v8611 = vmul.f32 %v8579, %v8433
        %v8612 = vmul.f32 %v8580, %v8435
        %v8613 = vmul.f32 %v8581, %v8439
        %v8614 = vmul.f32 %v8582, %v8441
        %v8615 = vmul.f32 %v8583, %v8445
        %v8616 = vmul.f32 %v8584, %v8447
        %v8617 = vmul.f32 %v8585, %v8451
        %v8618 = vmul.f32 %v8586, %v8453
        %v8619 = vmul.f32 %v8587, %v8457
        %v8620 = vmul.f32 %v8588, %v8459
        %v8621 = vmul.f32 %v8589, %v8463
        %v8622 = vmul.f32 %v8590, %v8465
        %v8623 = vmul.f32 %v8591, %v8469
        %v8624 = vmul.f32 %v8592, %v8471
        %v8625 = vmul.f32 %v8593, %v8475
        %v8626 = vmul.f32 %v8594, %v8477
        %v8627 = vmul.f32 %v8595, %v8481
        %v8628 = vmul.f32 %v8596, %v8483
        %v8629 = vmul.f32 %v8597, %v8487
        %v8630 = vmul.f32 %v8598, %v8489
        %v8631 = vmul.f32 %v8599, %v8493
        %v8632 = vmul.f32 %v8600, %v8495
        %v8633 = vmul.f32 %v8601, %v8499
        %v8634 = vmul.f32 %v8602, %v8501
        %v8635 = vmul.f32 %v8603, %v8505
        %v8636 = vmul.f32 %v8604, %v8507
        %v8637 = vadd.f32 %v8415, %v8605
        %v8638 = vadd.f32 %v8417, %v8606
        %v8639 = vadd.f32 %v8421, %v8607
        %v8640 = vadd.f32 %v8423, %v8608
        %v8641 = vadd.f32 %v8427, %v8609
        %v8642 = vadd.f32 %v8429, %v8610
        %v8643 = vadd.f32 %v8433, %v8611
        %v8644 = vadd.f32 %v8435, %v8612
        %v8645 = vadd.f32 %v8439, %v8613
        %v8646 = vadd.f32 %v8441, %v8614
        %v8647 = vadd.f32 %v8445, %v8615
        %v8648 = vadd.f32 %v8447, %v8616
        %v8649 = vadd.f32 %v8451, %v8617
        %v8650 = vadd.f32 %v8453, %v8618
        %v8651 = vadd.f32 %v8457, %v8619
        %v8652 = vadd.f32 %v8459, %v8620
        %v8653 = vadd.f32 %v8463, %v8621
        %v8654 = vadd.f32 %v8465, %v8622
        %v8655 = vadd.f32 %v8469, %v8623
        %v8656 = vadd.f32 %v8471, %v8624
        %v8657 = vadd.f32 %v8475, %v8625
        %v8658 = vadd.f32 %v8477, %v8626
        %v8659 = vadd.f32 %v8481, %v8627
        %v8660 = vadd.f32 %v8483, %v8628
        %v8661 = vadd.f32 %v8487, %v8629
        %v8662 = vadd.f32 %v8489, %v8630
        %v8663 = vadd.f32 %v8493, %v8631
        %v8664 = vadd.f32 %v8495, %v8632
        %v8665 = vadd.f32 %v8499, %v8633
        %v8666 = vadd.f32 %v8501, %v8634
        %v8667 = vadd.f32 %v8505, %v8635
        %v8668 = vadd.f32 %v8507, %v8636
        %v8669 = vmul.f32 %v8637, 0.7978846
        %v8670 = vmul.f32 %v8638, 0.7978846
        %v8671 = vmul.f32 %v8639, 0.7978846
        %v8672 = vmul.f32 %v8640, 0.7978846
        %v8673 = vmul.f32 %v8641, 0.7978846
        %v8674 = vmul.f32 %v8642, 0.7978846
        %v8675 = vmul.f32 %v8643, 0.7978846
        %v8676 = vmul.f32 %v8644, 0.7978846
        %v8677 = vmul.f32 %v8645, 0.7978846
        %v8678 = vmul.f32 %v8646, 0.7978846
        %v8679 = vmul.f32 %v8647, 0.7978846
        %v8680 = vmul.f32 %v8648, 0.7978846
        %v8681 = vmul.f32 %v8649, 0.7978846
        %v8682 = vmul.f32 %v8650, 0.7978846
        %v8683 = vmul.f32 %v8651, 0.7978846
        %v8684 = vmul.f32 %v8652, 0.7978846
        %v8685 = vmul.f32 %v8653, 0.7978846
        %v8686 = vmul.f32 %v8654, 0.7978846
        %v8687 = vmul.f32 %v8655, 0.7978846
        %v8688 = vmul.f32 %v8656, 0.7978846
        %v8689 = vmul.f32 %v8657, 0.7978846
        %v8690 = vmul.f32 %v8658, 0.7978846
        %v8691 = vmul.f32 %v8659, 0.7978846
        %v8692 = vmul.f32 %v8660, 0.7978846
        %v8693 = vmul.f32 %v8661, 0.7978846
        %v8694 = vmul.f32 %v8662, 0.7978846
        %v8695 = vmul.f32 %v8663, 0.7978846
        %v8696 = vmul.f32 %v8664, 0.7978846
        %v8697 = vmul.f32 %v8665, 0.7978846
        %v8698 = vmul.f32 %v8666, 0.7978846
        %v8699 = vmul.f32 %v8667, 0.7978846
        %v8700 = vmul.f32 %v8668, 0.7978846
        %v8701 = vtanh.pop %v8669
        %v8702 = vtanh.pop %v8670
        %v8703 = vtanh.pop %v8671
        %v8704 = vtanh.pop %v8672
        %v8705 = vtanh.pop %v8673
        %v8706 = vtanh.pop %v8674
        %v8707 = vtanh.pop %v8675
        %v8708 = vtanh.pop %v8676
        %v8709 = vtanh.pop %v8677
        %v8710 = vtanh.pop %v8678
        %v8711 = vtanh.pop %v8679
        %v8712 = vtanh.pop %v8680
        %v8713 = vtanh.pop %v8681
        %v8714 = vtanh.pop %v8682
        %v8715 = vtanh.pop %v8683
        %v8716 = vtanh.pop %v8684
        %v8717 = vtanh.pop %v8685
        %v8718 = vtanh.pop %v8686
        %v8719 = vtanh.pop %v8687
        %v8720 = vtanh.pop %v8688
        %v8721 = vtanh.pop %v8689
        %v8722 = vtanh.pop %v8690
        %v8723 = vtanh.pop %v8691
        %v8724 = vtanh.pop %v8692
        %v8725 = vtanh.pop %v8693
        %v8726 = vtanh.pop %v8694
        %v8727 = vtanh.pop %v8695
        %v8728 = vtanh.pop %v8696
        %v8729 = vtanh.pop %v8697
        %v8730 = vtanh.pop %v8698
        %v8731 = vtanh.pop %v8699
        %v8732 = vtanh.pop %v8700
        %v8733 = vadd.f32 %v8701, 1.0
        %v8734 = vadd.f32 %v8702, 1.0
        %v8735 = vadd.f32 %v8703, 1.0
        %v8736 = vadd.f32 %v8704, 1.0
        %v8737 = vadd.f32 %v8705, 1.0
        %v8738 = vadd.f32 %v8706, 1.0
        %v8739 = vadd.f32 %v8707, 1.0
        %v8740 = vadd.f32 %v8708, 1.0
        %v8741 = vadd.f32 %v8709, 1.0
        %v8742 = vadd.f32 %v8710, 1.0
        %v8743 = vadd.f32 %v8711, 1.0
        %v8744 = vadd.f32 %v8712, 1.0
        %v8745 = vadd.f32 %v8713, 1.0
        %v8746 = vadd.f32 %v8714, 1.0
        %v8747 = vadd.f32 %v8715, 1.0
        %v8748 = vadd.f32 %v8716, 1.0
        %v8749 = vadd.f32 %v8717, 1.0
        %v8750 = vadd.f32 %v8718, 1.0
        %v8751 = vadd.f32 %v8719, 1.0
        %v8752 = vadd.f32 %v8720, 1.0
        %v8753 = vadd.f32 %v8721, 1.0
        %v8754 = vadd.f32 %v8722, 1.0
        %v8755 = vadd.f32 %v8723, 1.0
        %v8756 = vadd.f32 %v8724, 1.0
        %v8757 = vadd.f32 %v8725, 1.0
        %v8758 = vadd.f32 %v8726, 1.0
        %v8759 = vadd.f32 %v8727, 1.0
        %v8760 = vadd.f32 %v8728, 1.0
        %v8761 = vadd.f32 %v8729, 1.0
        %v8762 = vadd.f32 %v8730, 1.0
        %v8763 = vadd.f32 %v8731, 1.0
        %v8764 = vadd.f32 %v8732, 1.0
        %v8765 = vmul.f32 %v8509, %v8733
        %v8766 = vmul.f32 %v8510, %v8734
        %v8767 = vmul.f32 %v8511, %v8735
        %v8768 = vmul.f32 %v8512, %v8736
        %v8769 = vmul.f32 %v8513, %v8737
        %v8770 = vmul.f32 %v8514, %v8738
        %v8771 = vmul.f32 %v8515, %v8739
        %v8772 = vmul.f32 %v8516, %v8740
        %v8773 = vmul.f32 %v8517, %v8741
        %v8774 = vmul.f32 %v8518, %v8742
        %v8775 = vmul.f32 %v8519, %v8743
        %v8776 = vmul.f32 %v8520, %v8744
        %v8777 = vmul.f32 %v8521, %v8745
        %v8778 = vmul.f32 %v8522, %v8746
        %v8779 = vmul.f32 %v8523, %v8747
        %v8780 = vmul.f32 %v8524, %v8748
        %v8781 = vmul.f32 %v8525, %v8749
        %v8782 = vmul.f32 %v8526, %v8750
        %v8783 = vmul.f32 %v8527, %v8751
        %v8784 = vmul.f32 %v8528, %v8752
        %v8785 = vmul.f32 %v8529, %v8753
        %v8786 = vmul.f32 %v8530, %v8754
        %v8787 = vmul.f32 %v8531, %v8755
        %v8788 = vmul.f32 %v8532, %v8756
        %v8789 = vmul.f32 %v8533, %v8757
        %v8790 = vmul.f32 %v8534, %v8758
        %v8791 = vmul.f32 %v8535, %v8759
        %v8792 = vmul.f32 %v8536, %v8760
        %v8793 = vmul.f32 %v8537, %v8761
        %v8794 = vmul.f32 %v8538, %v8762
        %v8795 = vmul.f32 %v8539, %v8763
        %v8796 = vmul.f32 %v8540, %v8764
        %v8797 = vlaneseq
        %v8798 = vshrl.u32 %v8797, 7
        %v8799 = vsub.s32 5, %v8798
        %v8800 = vrot.slane %v901, %v8799
        %8801 = vmatprep.subr.mxu0 0.0
        %8802 = vmatpush1.msra.mxu0 %v867
        %8803 = vmatprep.subr.mxu0 0.0
        %8804 = vmatpush1.msra.mxu0 %v868
        %8805 = vmatprep.subr.mxu0 0.0
        %8806 = vmatpush1.msra.mxu0 %v869
        %8807 = vmatprep.subr.mxu0 0.0
        %8808 = vmatpush1.msra.mxu0 %v870
        %8809 = vmatprep.subr.mxu0 0.0
        %8810 = vmatpush1.msra.mxu0 %v871
        %8811 = vmatprep.subr.mxu0 0.0
        %8812 = vmatpush1.msra.mxu0 %v872
        %8813 = vmatprep.subr.mxu0 0.0
        %8814 = vmatpush1.msra.mxu0 %v873
        %8815 = vmatprep.subr.mxu0 0.0
        %8816 = vmatpush1.msra.mxu0 %v874
        %8817 = vmatprep.subr.mxu0 0.0
        %8818 = vmatpush1.msra.mxu0 %v875
        %8819 = vmatprep.subr.mxu0 0.0
        %8820 = vmatpush1.msra.mxu0 %v876
        %8821 = vmatprep.subr.mxu0 0.0
        %8822 = vmatpush1.msra.mxu0 %v877
        %8823 = vmatprep.subr.mxu0 0.0
        %8824 = vmatpush1.msra.mxu0 %v878
        %8825 = vmatprep.subr.mxu0 0.0
        %8826 = vmatpush1.msra.mxu0 %v879
        %8827 = vmatprep.subr.mxu0 0.0
        %8828 = vmatpush1.msra.mxu0 %v880
        %8829 = vmatprep.subr.mxu0 0.0
        %8830 = vmatpush1.msra.mxu0 %v881
        %8831 = vmatprep.subr.mxu0 0.0
        %8832 = vmatpush1.msra.mxu0 %v882
        %8833 = vmatprep.subr.mxu0 0.0
        %8834 = vmatpush1.msra.mxu0 %v883
        %8835 = vmatprep.subr.mxu0 0.0
        %8836 = vmatpush1.msra.mxu0 %v884
        %8837 = vmatprep.subr.mxu0 0.0
        %8838 = vmatpush1.msra.mxu0 %v885
        %8839 = vmatprep.subr.mxu0 0.0
        %8840 = vmatpush1.msra.mxu0 %v886
        %8841 = vmatprep.subr.mxu0 0.0
        %8842 = vmatpush1.msra.mxu0 %v887
        %8843 = vmatprep.subr.mxu0 0.0
        %8844 = vmatpush1.msra.mxu0 %v888
        %8845 = vmatprep.subr.mxu0 0.0
        %8846 = vmatpush1.msra.mxu0 %v889
        %8847 = vmatprep.subr.mxu0 0.0
        %8848 = vmatpush1.msra.mxu0 %v890
        %8849 = vmatprep.subr.mxu0 0.0
        %8850 = vmatpush1.msra.mxu0 %v891
        %8851 = vmatprep.subr.mxu0 0.0
        %8852 = vmatpush1.msra.mxu0 %v892
        %8853 = vmatprep.subr.mxu0 0.0
        %8854 = vmatpush1.msra.mxu0 %v893
        %8855 = vmatprep.subr.mxu0 0.0
        %8856 = vmatpush1.msra.mxu0 %v894
        %8857 = vmatprep.subr.mxu0 0.0
        %8858 = vmatpush1.msra.mxu0 %v895
        %8859 = vmatprep.subr.mxu0 0.0
        %8860 = vmatpush1.msra.mxu0 %v896
        %8861 = vmatprep.subr.mxu0 0.0
        %8862 = vmatpush1.msra.mxu0 %v897
        %8863 = vmatprep.subr.mxu0 0.0
        %8864 = vmatpush1.msra.mxu0 %v898
        %8865 = vmatprep.mubr.f32.mxu0 %v8766
        %8866 = vmatmul.mubr.f32.gmra.mrb[0].mxu0 %v8765
        %v8867 = vpop.f32.mrb[0].mxu0
        %v8868 = vadd.f32 %v8800, %v8867
        %v8869 = vpop.f32.mrb[0].mxu0
        %8870 = vmatprep.mubr.f32.mxu0 %v8768
        %8871 = vmatmul.mubr.f32.gmra.mrb[0].mxu0 %v8767
        %v8872 = vpop.f32.mrb[0].mxu0
        %v8873 = vadd.f32 %v8800, %v8872
        %v8874 = vpop.f32.mrb[0].mxu0
        %8875 = vmatprep.mubr.f32.mxu0 %v8770
        %8876 = vmatmul.mubr.f32.gmra.mrb[0].mxu0 %v8769
        %v8877 = vpop.f32.mrb[0].mxu0
        %v8878 = vadd.f32 %v8800, %v8877
        %v8879 = vpop.f32.mrb[0].mxu0
        %8880 = vmatprep.mubr.f32.mxu0 %v8772
        %8881 = vmatmul.mubr.f32.gmra.mrb[0].mxu0 %v8771
        %v8882 = vpop.f32.mrb[0].mxu0
        %v8883 = vadd.f32 %v8800, %v8882
        %v8884 = vpop.f32.mrb[0].mxu0
        %8885 = vmatprep.mubr.f32.mxu0 %v8774
        %8886 = vmatmul.mubr.f32.gmra.mrb[0].mxu0 %v8773
        %v8887 = vpop.f32.mrb[0].mxu0
        %v8888 = vadd.f32 %v8800, %v8887
        %v8889 = vpop.f32.mrb[0].mxu0
        %8890 = vmatprep.mubr.f32.mxu0 %v8776
        %8891 = vmatmul.mubr.f32.gmra.mrb[0].mxu0 %v8775
        %v8892 = vpop.f32.mrb[0].mxu0
        %v8893 = vadd.f32 %v8800, %v8892
        %v8894 = vpop.f32.mrb[0].mxu0
        %8895 = vmatprep.mubr.f32.mxu0 %v8778
        %8896 = vmatmul.mubr.f32.gmra.mrb[0].mxu0 %v8777
        %v8897 = vpop.f32.mrb[0].mxu0
        %v8898 = vadd.f32 %v8800, %v8897
        %v8899 = vpop.f32.mrb[0].mxu0
        %8900 = vmatprep.mubr.f32.mxu0 %v8780
        %8901 = vmatmul.mubr.f32.gmra.mrb[0].mxu0 %v8779
        %v8902 = vpop.f32.mrb[0].mxu0
        %v8903 = vadd.f32 %v8800, %v8902
        %v8904 = vpop.f32.mrb[0].mxu0
        %8905 = vmatprep.mubr.f32.mxu0 %v8782
        %8906 = vmatmul.mubr.f32.gmra.mrb[0].mxu0 %v8781
        %v8907 = vpop.f32.mrb[0].mxu0
        %v8908 = vadd.f32 %v8800, %v8907
        %v8909 = vpop.f32.mrb[0].mxu0
        %8910 = vmatprep.mubr.f32.mxu0 %v8784
        %8911 = vmatmul.mubr.f32.gmra.mrb[0].mxu0 %v8783
        %v8912 = vpop.f32.mrb[0].mxu0
        %v8913 = vadd.f32 %v8800, %v8912
        %v8914 = vpop.f32.mrb[0].mxu0
        %8915 = vmatprep.mubr.f32.mxu0 %v8786
        %8916 = vmatmul.mubr.f32.gmra.mrb[0].mxu0 %v8785
        %v8917 = vpop.f32.mrb[0].mxu0
        %v8918 = vadd.f32 %v8800, %v8917
        %v8919 = vpop.f32.mrb[0].mxu0
        %8920 = vmatprep.mubr.f32.mxu0 %v8788
        %8921 = vmatmul.mubr.f32.gmra.mrb[0].mxu0 %v8787
        %v8922 = vpop.f32.mrb[0].mxu0
        %v8923 = vadd.f32 %v8800, %v8922
        %v8924 = vpop.f32.mrb[0].mxu0
        %8925 = vmatprep.mubr.f32.mxu0 %v8790
        %8926 = vmatmul.mubr.f32.gmra.mrb[0].mxu0 %v8789
        %v8927 = vpop.f32.mrb[0].mxu0
        %v8928 = vadd.f32 %v8800, %v8927
        %v8929 = vpop.f32.mrb[0].mxu0
        %8930 = vmatprep.mubr.f32.mxu0 %v8792
        %8931 = vmatmul.mubr.f32.gmra.mrb[0].mxu0 %v8791
        %v8932 = vpop.f32.mrb[0].mxu0
        %v8933 = vadd.f32 %v8800, %v8932
        %v8934 = vpop.f32.mrb[0].mxu0
        %8935 = vmatprep.mubr.f32.mxu0 %v8794
        %8936 = vmatmul.mubr.f32.gmra.mrb[0].mxu0 %v8793
        %v8937 = vpop.f32.mrb[0].mxu0
        %v8938 = vadd.f32 %v8800, %v8937
        %v8939 = vpop.f32.mrb[0].mxu0
        %8940 = vmatprep.mubr.f32.mxu0 %v8796
        %8941 = vmatmul.mubr.f32.gmra.mrb[0].mxu0 %v8795
        %v8942 = vpop.f32.mrb[0].mxu0
        %v8943 = vadd.f32 %v8800, %v8942
        %v8944 = vpop.f32.mrb[0].mxu0
        %8945 = vdwg.mxu0
        %v8946 = vadd.f32 %v8025, %v8868
        %v8947 = vadd.f32 %v8026, %v8873
        %v8948 = vadd.f32 %v8027, %v8878
        %v8949 = vadd.f32 %v8028, %v8883
        %v8950 = vadd.f32 %v8029, %v8888
        %v8951 = vadd.f32 %v8030, %v8893
        %v8952 = vadd.f32 %v8031, %v8898
        %v8953 = vadd.f32 %v8032, %v8903
        %v8954 = vadd.f32 %v8033, %v8908
        %v8955 = vadd.f32 %v8034, %v8913
        %v8956 = vadd.f32 %v8035, %v8918
        %v8957 = vadd.f32 %v8036, %v8923
        %v8958 = vadd.f32 %v8037, %v8928
        %v8959 = vadd.f32 %v8038, %v8933
        %v8960 = vadd.f32 %v8039, %v8938
        %v8961 = vadd.f32 %v8040, %v8943
      $region77: #{gpt_forward.1} parent=71 // loop_footer
        %s796 = sadd.s32 1, %s792
      $region78: #{gpt_forward.1} parent=71 // loop_footer_branch
        %791 = sbr.rel target = $region74
      $region79: #{gpt_forward.1} parent=71 // loop_exit
        _
      %v8962 = vld [vmem:[%s11] sm:$0x3]
      %vm8963 = vcmask 523264
      %v8964 = vsel %vm8963, %v797, 0.0
      %8965 = vadd.xlane.f32.xlu0 %v8964
      %v8966 = vpop.xlane.xlu0 %8965
      %v8967 = vsel %vm8963, %v798, 0.0
      %8968 = vadd.xlane.f32.xlu0 %v8967
      %v8969 = vpop.xlane.xlu0 %8968
      %v8970 = vsel %vm8963, %v799, 0.0
      %8971 = vadd.xlane.f32.xlu0 %v8970
      %v8972 = vpop.xlane.xlu0 %8971
      %v8973 = vsel %vm8963, %v800, 0.0
      %8974 = vadd.xlane.f32.xlu0 %v8973
      %v8975 = vpop.xlane.xlu0 %8974
      %v8976 = vsel %vm8963, %v801, 0.0
      %8977 = vadd.xlane.f32.xlu0 %v8976
      %v8978 = vpop.xlane.xlu0 %8977
      %v8979 = vsel %vm8963, %v802, 0.0
      %8980 = vadd.xlane.f32.xlu0 %v8979
      %v8981 = vpop.xlane.xlu0 %8980
      %v8982 = vsel %vm8963, %v803, 0.0
      %8983 = vadd.xlane.f32.xlu0 %v8982
      %v8984 = vpop.xlane.xlu0 %8983
      %v8985 = vsel %vm8963, %v804, 0.0
      %8986 = vadd.xlane.f32.xlu0 %v8985
      %v8987 = vpop.xlane.xlu0 %8986
      %v8988 = vsel %vm8963, %v805, 0.0
      %8989 = vadd.xlane.f32.xlu0 %v8988
      %v8990 = vpop.xlane.xlu0 %8989
      %v8991 = vsel %vm8963, %v806, 0.0
      %8992 = vadd.xlane.f32.xlu0 %v8991
      %v8993 = vpop.xlane.xlu0 %8992
      %v8994 = vsel %vm8963, %v807, 0.0
      %8995 = vadd.xlane.f32.xlu0 %v8994
      %v8996 = vpop.xlane.xlu0 %8995
      %v8997 = vsel %vm8963, %v808, 0.0
      %8998 = vadd.xlane.f32.xlu0 %v8997
      %v8999 = vpop.xlane.xlu0 %8998
      %v9000 = vsel %vm8963, %v809, 0.0
      %9001 = vadd.xlane.f32.xlu0 %v9000
      %v9002 = vpop.xlane.xlu0 %9001
      %v9003 = vsel %vm8963, %v810, 0.0
      %9004 = vadd.xlane.f32.xlu0 %v9003
      %v9005 = vpop.xlane.xlu0 %9004
      %v9006 = vsel %vm8963, %v811, 0.0
      %9007 = vadd.xlane.f32.xlu0 %v9006
      %v9008 = vpop.xlane.xlu0 %9007
      %v9009 = vsel %vm8963, %v812, 0.0
      %9010 = vadd.xlane.f32.xlu0 %v9009
      %v9011 = vpop.xlane.xlu0 %9010
      %v9012 = vrcp.pop 64.0
      %v9013 = vmul.f32 %v8966, %v9012
      %v9014 = vmul.f32 %v8969, %v9012
      %v9015 = vmul.f32 %v8972, %v9012
      %v9016 = vmul.f32 %v8975, %v9012
      %v9017 = vmul.f32 %v8978, %v9012
      %v9018 = vmul.f32 %v8981, %v9012
      %v9019 = vmul.f32 %v8984, %v9012
      %v9020 = vmul.f32 %v8987, %v9012
      %v9021 = vmul.f32 %v8990, %v9012
      %v9022 = vmul.f32 %v8993, %v9012
      %v9023 = vmul.f32 %v8996, %v9012
      %v9024 = vmul.f32 %v8999, %v9012
      %v9025 = vmul.f32 %v9002, %v9012
      %v9026 = vmul.f32 %v9005, %v9012
      %v9027 = vmul.f32 %v9008, %v9012
      %v9028 = vmul.f32 %v9011, %v9012
      %v9029 = vsub.f32 %v797, %v9013
      %v9030 = vsub.f32 %v798, %v9014
      %v9031 = vsub.f32 %v799, %v9015
      %v9032 = vsub.f32 %v800, %v9016
      %v9033 = vsub.f32 %v801, %v9017
      %v9034 = vsub.f32 %v802, %v9018
      %v9035 = vsub.f32 %v803, %v9019
      %v9036 = vsub.f32 %v804, %v9020
      %v9037 = vsub.f32 %v805, %v9021
      %v9038 = vsub.f32 %v806, %v9022
      %v9039 = vsub.f32 %v807, %v9023
      %v9040 = vsub.f32 %v808, %v9024
      %v9041 = vsub.f32 %v809, %v9025
      %v9042 = vsub.f32 %v810, %v9026
      %v9043 = vsub.f32 %v811, %v9027
      %v9044 = vsub.f32 %v812, %v9028
      %v9045 = vmul.f32 %v9029, %v9029
      %v9046 = vmul.f32 %v9030, %v9030
      %v9047 = vmul.f32 %v9031, %v9031
      %v9048 = vmul.f32 %v9032, %v9032
      %v9049 = vmul.f32 %v9033, %v9033
      %v9050 = vmul.f32 %v9034, %v9034
      %v9051 = vmul.f32 %v9035, %v9035
      %v9052 = vmul.f32 %v9036, %v9036
      %v9053 = vmul.f32 %v9037, %v9037
      %v9054 = vmul.f32 %v9038, %v9038
      %v9055 = vmul.f32 %v9039, %v9039
      %v9056 = vmul.f32 %v9040, %v9040
      %v9057 = vmul.f32 %v9041, %v9041
      %v9058 = vmul.f32 %v9042, %v9042
      %v9059 = vmul.f32 %v9043, %v9043
      %v9060 = vmul.f32 %v9044, %v9044
      %v9061 = vsel %vm8963, %v9045, 0.0
      %9062 = vadd.xlane.f32.xlu0 %v9061
      %v9063 = vpop.xlane.xlu0 %9062
      %v9064 = vsel %vm8963, %v9046, 0.0
      %9065 = vadd.xlane.f32.xlu0 %v9064
      %v9066 = vpop.xlane.xlu0 %9065
      %v9067 = vsel %vm8963, %v9047, 0.0
      %9068 = vadd.xlane.f32.xlu0 %v9067
      %v9069 = vpop.xlane.xlu0 %9068
      %v9070 = vsel %vm8963, %v9048, 0.0
      %9071 = vadd.xlane.f32.xlu0 %v9070
      %v9072 = vpop.xlane.xlu0 %9071
      %v9073 = vsel %vm8963, %v9049, 0.0
      %9074 = vadd.xlane.f32.xlu0 %v9073
      %v9075 = vpop.xlane.xlu0 %9074
      %v9076 = vsel %vm8963, %v9050, 0.0
      %9077 = vadd.xlane.f32.xlu0 %v9076
      %v9078 = vpop.xlane.xlu0 %9077
      %v9079 = vsel %vm8963, %v9051, 0.0
      %9080 = vadd.xlane.f32.xlu0 %v9079
      %v9081 = vpop.xlane.xlu0 %9080
      %v9082 = vsel %vm8963, %v9052, 0.0
      %9083 = vadd.xlane.f32.xlu0 %v9082
      %v9084 = vpop.xlane.xlu0 %9083
      %v9085 = vsel %vm8963, %v9053, 0.0
      %9086 = vadd.xlane.f32.xlu0 %v9085
      %v9087 = vpop.xlane.xlu0 %9086
      %v9088 = vsel %vm8963, %v9054, 0.0
      %9089 = vadd.xlane.f32.xlu0 %v9088
      %v9090 = vpop.xlane.xlu0 %9089
      %v9091 = vsel %vm8963, %v9055, 0.0
      %9092 = vadd.xlane.f32.xlu0 %v9091
      %v9093 = vpop.xlane.xlu0 %9092
      %v9094 = vsel %vm8963, %v9056, 0.0
      %9095 = vadd.xlane.f32.xlu0 %v9094
      %v9096 = vpop.xlane.xlu0 %9095
      %v9097 = vsel %vm8963, %v9057, 0.0
      %9098 = vadd.xlane.f32.xlu0 %v9097
      %v9099 = vpop.xlane.xlu0 %9098
      %v9100 = vsel %vm8963, %v9058, 0.0
      %9101 = vadd.xlane.f32.xlu0 %v9100
      %v9102 = vpop.xlane.xlu0 %9101
      %v9103 = vsel %vm8963, %v9059, 0.0
      %9104 = vadd.xlane.f32.xlu0 %v9103
      %v9105 = vpop.xlane.xlu0 %9104
      %v9106 = vsel %vm8963, %v9060, 0.0
      %9107 = vadd.xlane.f32.xlu0 %v9106
      %v9108 = vpop.xlane.xlu0 %9107
      %v9109 = vmul.f32 %v9063, %v9012
      %v9110 = vmul.f32 %v9066, %v9012
      %v9111 = vmul.f32 %v9069, %v9012
      %v9112 = vmul.f32 %v9072, %v9012
      %v9113 = vmul.f32 %v9075, %v9012
      %v9114 = vmul.f32 %v9078, %v9012
      %v9115 = vmul.f32 %v9081, %v9012
      %v9116 = vmul.f32 %v9084, %v9012
      %v9117 = vmul.f32 %v9087, %v9012
      %v9118 = vmul.f32 %v9090, %v9012
      %v9119 = vmul.f32 %v9093, %v9012
      %v9120 = vmul.f32 %v9096, %v9012
      %v9121 = vmul.f32 %v9099, %v9012
      %v9122 = vmul.f32 %v9102, %v9012
      %v9123 = vmul.f32 %v9105, %v9012
      %v9124 = vmul.f32 %v9108, %v9012
      %v9125 = vadd.f32 %v9109, 1e-05
      %v9126 = vadd.f32 %v9110, 1e-05
      %v9127 = vadd.f32 %v9111, 1e-05
      %v9128 = vadd.f32 %v9112, 1e-05
      %v9129 = vadd.f32 %v9113, 1e-05
      %v9130 = vadd.f32 %v9114, 1e-05
      %v9131 = vadd.f32 %v9115, 1e-05
      %v9132 = vadd.f32 %v9116, 1e-05
      %v9133 = vadd.f32 %v9117, 1e-05
      %v9134 = vadd.f32 %v9118, 1e-05
      %v9135 = vadd.f32 %v9119, 1e-05
      %v9136 = vadd.f32 %v9120, 1e-05
      %v9137 = vadd.f32 %v9121, 1e-05
      %v9138 = vadd.f32 %v9122, 1e-05
      %v9139 = vadd.f32 %v9123, 1e-05
      %v9140 = vadd.f32 %v9124, 1e-05
      %v9141 = vrsqrt.pop %v9125
      %v9142 = vrsqrt.pop %v9126
      %v9143 = vrsqrt.pop %v9127
      %v9144 = vrsqrt.pop %v9128
      %v9145 = vrsqrt.pop %v9129
      %v9146 = vrsqrt.pop %v9130
      %v9147 = vrsqrt.pop %v9131
      %v9148 = vrsqrt.pop %v9132
      %v9149 = vrsqrt.pop %v9133
      %v9150 = vrsqrt.pop %v9134
      %v9151 = vrsqrt.pop %v9135
      %v9152 = vrsqrt.pop %v9136
      %v9153 = vrsqrt.pop %v9137
      %v9154 = vrsqrt.pop %v9138
      %v9155 = vrsqrt.pop %v9139
      %v9156 = vrsqrt.pop %v9140
      %v9157 = vmul.f32 %v9029, %v9141
      %v9158 = vmul.f32 %v9030, %v9142
      %v9159 = vmul.f32 %v9031, %v9143
      %v9160 = vmul.f32 %v9032, %v9144
      %v9161 = vmul.f32 %v9033, %v9145
      %v9162 = vmul.f32 %v9034, %v9146
      %v9163 = vmul.f32 %v9035, %v9147
      %v9164 = vmul.f32 %v9036, %v9148
      %v9165 = vmul.f32 %v9037, %v9149
      %v9166 = vmul.f32 %v9038, %v9150
      %v9167 = vmul.f32 %v9039, %v9151
      %v9168 = vmul.f32 %v9040, %v9152
      %v9169 = vmul.f32 %v9041, %v9153
      %v9170 = vmul.f32 %v9042, %v9154
      %v9171 = vmul.f32 %v9043, %v9155
      %v9172 = vmul.f32 %v9044, %v9156
      %v9173 = vlaneseq
      %v9174 = vshrl.u32 %v9173, 7
      %v9175 = vsub.s32 0, %v9174
      %v9176 = vrot.slane %v8962, %v9175
      %v9177 = vmul.f32 %v9157, %v9176
      %v9178 = vmul.f32 %v9158, %v9176
      %v9179 = vmul.f32 %v9159, %v9176
      %v9180 = vmul.f32 %v9160, %v9176
      %v9181 = vmul.f32 %v9161, %v9176
      %v9182 = vmul.f32 %v9162, %v9176
      %v9183 = vmul.f32 %v9163, %v9176
      %v9184 = vmul.f32 %v9164, %v9176
      %v9185 = vmul.f32 %v9165, %v9176
      %v9186 = vmul.f32 %v9166, %v9176
      %v9187 = vmul.f32 %v9167, %v9176
      %v9188 = vmul.f32 %v9168, %v9176
      %v9189 = vmul.f32 %v9169, %v9176
      %v9190 = vmul.f32 %v9170, %v9176
      %v9191 = vmul.f32 %v9171, %v9176
      %v9192 = vmul.f32 %v9172, %v9176
      %v9193 = vlaneseq
      %v9194 = vshrl.u32 %v9193, 7
      %v9195 = vsub.s32 1, %v9194
      %v9196 = vrot.slane %v8962, %v9195
      %v9197 = vadd.f32 %v9177, %v9196
      %v9198 = vadd.f32 %v9178, %v9196
      %v9199 = vadd.f32 %v9179, %v9196
      %v9200 = vadd.f32 %v9180, %v9196
      %v9201 = vadd.f32 %v9181, %v9196
      %v9202 = vadd.f32 %v9182, %v9196
      %v9203 = vadd.f32 %v9183, %v9196
      %v9204 = vadd.f32 %v9184, %v9196
      %v9205 = vadd.f32 %v9185, %v9196
      %v9206 = vadd.f32 %v9186, %v9196
      %v9207 = vadd.f32 %v9187, %v9196
      %v9208 = vadd.f32 %v9188, %v9196
      %v9209 = vadd.f32 %v9189, %v9196
      %v9210 = vadd.f32 %v9190, %v9196
      %v9211 = vadd.f32 %v9191, %v9196
      %v9212 = vadd.f32 %v9192, %v9196
      %9221 = vrot.lane.b32.xlu0 %v9205, 64
      %v9222 = vpop.permute.xlu0 %9221
      %9223 = vrot.lane.b32.xlu0 %v9206, 64
      %v9224 = vpop.permute.xlu0 %9223
      %9225 = vrot.lane.b32.xlu0 %v9207, 64
      %v9226 = vpop.permute.xlu0 %9225
      %9227 = vrot.lane.b32.xlu0 %v9208, 64
      %v9228 = vpop.permute.xlu0 %9227
      %9229 = vrot.lane.b32.xlu0 %v9209, 64
      %v9230 = vpop.permute.xlu0 %9229
      %9231 = vrot.lane.b32.xlu0 %v9210, 64
      %v9232 = vpop.permute.xlu0 %9231
      %9233 = vrot.lane.b32.xlu0 %v9211, 64
      %v9234 = vpop.permute.xlu0 %9233
      %9235 = vrot.lane.b32.xlu0 %v9212, 64
      %v9236 = vpop.permute.xlu0 %9235
      %v9245 = vsel %vm8963, %v9197, %v9222
      %v9246 = vsel %vm8963, %v9198, %v9224
      %v9247 = vsel %vm8963, %v9199, %v9226
      %v9248 = vsel %vm8963, %v9200, %v9228
      %v9249 = vsel %vm8963, %v9201, %v9230
      %v9250 = vsel %vm8963, %v9202, %v9232
      %v9251 = vsel %vm8963, %v9203, %v9234
      %v9252 = vsel %vm8963, %v9204, %v9236
      %v9253 = vld [vmem:[%s12] sm:$0xff]
      %v9254 = vld [vmem:[%s12 + $0x8] sm:$0xff]
      %v9255 = vld [vmem:[%s12 + $0x10] sm:$0xff]
      %v9256 = vld [vmem:[%s12 + $0x18] sm:$0xff]
      %v9257 = vld [vmem:[%s12 + $0x20] sm:$0xff]
      %v9258 = vld [vmem:[%s12 + $0x28] sm:$0xff]
      %v9259 = vld [vmem:[%s12 + $0x30] sm:$0xff]
      %v9260 = vld [vmem:[%s12 + $0x38] sm:$0xff]
      %v9261 = vld [vmem:[%s12 + $0x40] sm:$0xff]
      %v9262 = vld [vmem:[%s12 + $0x48] sm:$0xff]
      %v9263 = vld [vmem:[%s12 + $0x50] sm:$0xff]
      %v9264 = vld [vmem:[%s12 + $0x58] sm:$0xff]
      %v9265 = vld [vmem:[%s12 + $0x60] sm:$0xff]
      %v9266 = vld [vmem:[%s12 + $0x68] sm:$0xff]
      %v9267 = vld [vmem:[%s12 + $0x70] sm:$0xff]
      %v9268 = vld [vmem:[%s12 + $0x78] sm:$0xff]
      %9269 = vxpose.xlu0.b32.start [1/16] %v9245, 128
      %9270 = vxpose.xlu0.b32.cont [2/16] %v9246, 128
      %9271 = vxpose.xlu0.b32.cont [3/16] %v9247, 128
      %9272 = vxpose.xlu0.b32.cont [4/16] %v9248, 128
      %9273 = vxpose.xlu0.b32.cont [5/16] %v9249, 128
      %9274 = vxpose.xlu0.b32.cont [6/16] %v9250, 128
      %9275 = vxpose.xlu0.b32.cont [7/16] %v9251, 128
      %9276 = vxpose.xlu0.b32.cont [8/16] %v9252, 128
      %9277 = vxpose.xlu0.b32.cont [9/16] 0.0, 128
      %9278 = vxpose.xlu0.b32.cont [10/16] 0.0, 128
      %9279 = vxpose.xlu0.b32.cont [11/16] 0.0, 128
      %9280 = vxpose.xlu0.b32.cont [12/16] 0.0, 128
      %9281 = vxpose.xlu0.b32.cont [13/16] 0.0, 128
      %9282 = vxpose.xlu0.b32.cont [14/16] 0.0, 128
      %9283 = vxpose.xlu0.b32.cont [15/16] 0.0, 128
      %9284 = vxpose.xlu0.b32.end [16/16] 0.0, 128
      %v9285 = vpop.trf.xlu0
      %v9286 = vpop.trf.xlu0
      %v9287 = vpop.trf.xlu0
      %v9288 = vpop.trf.xlu0
      %v9289 = vpop.trf.xlu0
      %v9290 = vpop.trf.xlu0
      %v9291 = vpop.trf.xlu0
      %v9292 = vpop.trf.xlu0
      %v9293 = vpop.trf.xlu0
      %v9294 = vpop.trf.xlu0
      %v9295 = vpop.trf.xlu0
      %v9296 = vpop.trf.xlu0
      %v9297 = vpop.trf.xlu0
      %v9298 = vpop.trf.xlu0
      %v9299 = vpop.trf.xlu0
      %v9300 = vpop.trf.xlu0
      %v9302 = vsel %vm8963, %v9285, 0
      %v9305 = vsel %vm8963, %v9286, 0
      %v9308 = vsel %vm8963, %v9287, 0
      %v9311 = vsel %vm8963, %v9288, 0
      %v9314 = vsel %vm8963, %v9289, 0
      %v9317 = vsel %vm8963, %v9290, 0
      %v9320 = vsel %vm8963, %v9291, 0
      %v9323 = vsel %vm8963, %v9292, 0
      %v9326 = vsel %vm8963, %v9293, 0
      %v9329 = vsel %vm8963, %v9294, 0
      %v9332 = vsel %vm8963, %v9295, 0
      %v9335 = vsel %vm8963, %v9296, 0
      %v9338 = vsel %vm8963, %v9297, 0
      %v9341 = vsel %vm8963, %v9298, 0
      %v9344 = vsel %vm8963, %v9299, 0
      %v9347 = vsel %vm8963, %v9300, 0
      %9349 = vmatprep.subr.mxu0 %v9254
      %9350 = vmatpush1.msra.mxu0 %v9253
      %9351 = vmatprep.subr.mxu0 %v9256
      %9352 = vmatpush1.msra.mxu0 %v9255
      %9353 = vmatprep.subr.mxu0 %v9258
      %9354 = vmatpush1.msra.mxu0 %v9257
      %9355 = vmatprep.subr.mxu0 %v9260
      %9356 = vmatpush1.msra.mxu0 %v9259
      %9357 = vmatprep.subr.mxu0 %v9262
      %9358 = vmatpush1.msra.mxu0 %v9261
      %9359 = vmatprep.subr.mxu0 %v9264
      %9360 = vmatpush1.msra.mxu0 %v9263
      %9361 = vmatprep.subr.mxu0 %v9266
      %9362 = vmatpush1.msra.mxu0 %v9265
      %9363 = vmatprep.subr.mxu0 %v9268
      %9364 = vmatpush1.msra.mxu0 %v9267
      %9365 = vmatprep.subr.mxu0 0.0
      %9366 = vmatpush1.msra.mxu0 0.0
      %9367 = vmatprep.subr.mxu0 0.0
      %9368 = vmatpush1.msra.mxu0 0.0
      %9369 = vmatprep.subr.mxu0 0.0
      %9370 = vmatpush1.msra.mxu0 0.0
      %9371 = vmatprep.subr.mxu0 0.0
      %9372 = vmatpush1.msra.mxu0 0.0
      %9373 = vmatprep.subr.mxu0 0.0
      %9374 = vmatpush1.msra.mxu0 0.0
      %9375 = vmatprep.subr.mxu0 0.0
      %9376 = vmatpush1.msra.mxu0 0.0
      %9377 = vmatprep.subr.mxu0 0.0
      %9378 = vmatpush1.msra.mxu0 0.0
      %9379 = vmatprep.subr.mxu0 0.0
      %9380 = vmatpush1.msra.mxu0 0.0
      %9381 = vmatprep.subr.mxu0 0.0
      %9382 = vmatpush1.msra.mxu0 0.0
      %9383 = vmatprep.subr.mxu0 0.0
      %9384 = vmatpush1.msra.mxu0 0.0
      %9385 = vmatprep.subr.mxu0 0.0
      %9386 = vmatpush1.msra.mxu0 0.0
      %9387 = vmatprep.subr.mxu0 0.0
      %9388 = vmatpush1.msra.mxu0 0.0
      %9389 = vmatprep.subr.mxu0 0.0
      %9390 = vmatpush1.msra.mxu0 0.0
      %9391 = vmatprep.subr.mxu0 0.0
      %9392 = vmatpush1.msra.mxu0 0.0
      %9393 = vmatprep.subr.mxu0 0.0
      %9394 = vmatpush1.msra.mxu0 0.0
      %9395 = vmatprep.subr.mxu0 0.0
      %9396 = vmatpush1.msra.mxu0 0.0
      %9397 = vmatprep.subr.mxu0 0.0
      %9398 = vmatpush1.msra.mxu0 0.0
      %9399 = vmatprep.subr.mxu0 0.0
      %9400 = vmatpush1.msra.mxu0 0.0
      %9401 = vmatprep.subr.mxu0 0.0
      %9402 = vmatpush1.msra.mxu0 0.0
      %9403 = vmatprep.subr.mxu0 0.0
      %9404 = vmatpush1.msra.mxu0 0.0
      %9405 = vmatprep.subr.mxu0 0.0
      %9406 = vmatpush1.msra.mxu0 0.0
      %9407 = vmatprep.subr.mxu0 0.0
      %9408 = vmatpush1.msra.mxu0 0.0
      %9409 = vmatprep.subr.mxu0 0.0
      %9410 = vmatpush1.msra.mxu0 0.0
      %9411 = vmatprep.subr.mxu0 0.0
      %9412 = vmatpush1.msra.mxu0 0.0
      %9413 = vmatprep.mubr.f32.mxu0 0.0
      %9414 = vmatmul.mubr.f32.gmra.mrb[0].mxu0 %v9302
      %v9415 = vpop.f32.mrb[0].mxu0
      %v9416 = vadd.f32 0.0, %v9415
      %v9417 = vpop.f32.mrb[0].mxu0
      %v9418 = vadd.f32 0.0, %v9417
      %9419 = vmatprep.mubr.f32.mxu0 0.0
      %9420 = vmatmul.mubr.f32.gmra.mrb[0].mxu0 %v9305
      %v9421 = vpop.f32.mrb[0].mxu0
      %v9422 = vadd.f32 0.0, %v9421
      %v9423 = vpop.f32.mrb[0].mxu0
      %v9424 = vadd.f32 0.0, %v9423
      %9425 = vmatprep.mubr.f32.mxu0 0.0
      %9426 = vmatmul.mubr.f32.gmra.mrb[0].mxu0 %v9308
      %v9427 = vpop.f32.mrb[0].mxu0
      %v9428 = vadd.f32 0.0, %v9427
      %v9429 = vpop.f32.mrb[0].mxu0
      %v9430 = vadd.f32 0.0, %v9429
      %9431 = vmatprep.mubr.f32.mxu0 0.0
      %9432 = vmatmul.mubr.f32.gmra.mrb[0].mxu0 %v9311
      %v9433 = vpop.f32.mrb[0].mxu0
      %v9434 = vadd.f32 0.0, %v9433
      %v9435 = vpop.f32.mrb[0].mxu0
      %v9436 = vadd.f32 0.0, %v9435
      %9437 = vmatprep.mubr.f32.mxu0 0.0
      %9438 = vmatmul.mubr.f32.gmra.mrb[0].mxu0 %v9314
      %v9439 = vpop.f32.mrb[0].mxu0
      %v9440 = vadd.f32 0.0, %v9439
      %v9441 = vpop.f32.mrb[0].mxu0
      %v9442 = vadd.f32 0.0, %v9441
      %9443 = vmatprep.mubr.f32.mxu0 0.0
      %9444 = vmatmul.mubr.f32.gmra.mrb[0].mxu0 %v9317
      %v9445 = vpop.f32.mrb[0].mxu0
      %v9446 = vadd.f32 0.0, %v9445
      %v9447 = vpop.f32.mrb[0].mxu0
      %v9448 = vadd.f32 0.0, %v9447
      %9449 = vmatprep.mubr.f32.mxu0 0.0
      %9450 = vmatmul.mubr.f32.gmra.mrb[0].mxu0 %v9320
      %v9451 = vpop.f32.mrb[0].mxu0
      %v9452 = vadd.f32 0.0, %v9451
      %v9453 = vpop.f32.mrb[0].mxu0
      %v9454 = vadd.f32 0.0, %v9453
      %9455 = vmatprep.mubr.f32.mxu0 0.0
      %9456 = vmatmul.mubr.f32.gmra.mrb[0].mxu0 %v9323
      %v9457 = vpop.f32.mrb[0].mxu0
      %v9458 = vadd.f32 0.0, %v9457
      %v9459 = vpop.f32.mrb[0].mxu0
      %v9460 = vadd.f32 0.0, %v9459
      %9461 = vmatprep.mubr.f32.mxu0 0.0
      %9462 = vmatmul.mubr.f32.gmra.mrb[0].mxu0 %v9326
      %v9463 = vpop.f32.mrb[0].mxu0
      %v9464 = vadd.f32 0.0, %v9463
      %v9465 = vpop.f32.mrb[0].mxu0
      %v9466 = vadd.f32 0.0, %v9465
      %9467 = vmatprep.mubr.f32.mxu0 0.0
      %9468 = vmatmul.mubr.f32.gmra.mrb[0].mxu0 %v9329
      %v9469 = vpop.f32.mrb[0].mxu0
      %v9470 = vadd.f32 0.0, %v9469
      %v9471 = vpop.f32.mrb[0].mxu0
      %v9472 = vadd.f32 0.0, %v9471
      %9473 = vmatprep.mubr.f32.mxu0 0.0
      %9474 = vmatmul.mubr.f32.gmra.mrb[0].mxu0 %v9332
      %v9475 = vpop.f32.mrb[0].mxu0
      %v9476 = vadd.f32 0.0, %v9475
      %v9477 = vpop.f32.mrb[0].mxu0
      %v9478 = vadd.f32 0.0, %v9477
      %9479 = vmatprep.mubr.f32.mxu0 0.0
      %9480 = vmatmul.mubr.f32.gmra.mrb[0].mxu0 %v9335
      %v9481 = vpop.f32.mrb[0].mxu0
      %v9482 = vadd.f32 0.0, %v9481
      %v9483 = vpop.f32.mrb[0].mxu0
      %v9484 = vadd.f32 0.0, %v9483
      %9485 = vmatprep.mubr.f32.mxu0 0.0
      %9486 = vmatmul.mubr.f32.gmra.mrb[0].mxu0 %v9338
      %v9487 = vpop.f32.mrb[0].mxu0
      %v9488 = vadd.f32 0.0, %v9487
      %v9489 = vpop.f32.mrb[0].mxu0
      %v9490 = vadd.f32 0.0, %v9489
      %9491 = vmatprep.mubr.f32.mxu0 0.0
      %9492 = vmatmul.mubr.f32.gmra.mrb[0].mxu0 %v9341
      %v9493 = vpop.f32.mrb[0].mxu0
      %v9494 = vadd.f32 0.0, %v9493
      %v9495 = vpop.f32.mrb[0].mxu0
      %v9496 = vadd.f32 0.0, %v9495
      %9497 = vmatprep.mubr.f32.mxu0 0.0
      %9498 = vmatmul.mubr.f32.gmra.mrb[0].mxu0 %v9344
      %v9499 = vpop.f32.mrb[0].mxu0
      %v9500 = vadd.f32 0.0, %v9499
      %v9501 = vpop.f32.mrb[0].mxu0
      %v9502 = vadd.f32 0.0, %v9501
      %9503 = vmatprep.mubr.f32.mxu0 0.0
      %9504 = vmatmul.mubr.f32.gmra.mrb[0].mxu0 %v9347
      %v9505 = vpop.f32.mrb[0].mxu0
      %v9506 = vadd.f32 0.0, %v9505
      %v9507 = vpop.f32.mrb[0].mxu0
      %v9508 = vadd.f32 0.0, %v9507
      %9509 = vdwg.mxu0
      %9510 = vst [vmem:[%s495] sm:$0xff] %v9416
      %9511 = vst [vmem:[%s495 + $0x8] sm:$0xff] %v9418
      %9512 = vst [vmem:[%s495 + $0x10] sm:$0xff] %v9422
      %9513 = vst [vmem:[%s495 + $0x18] sm:$0xff] %v9424
      %9514 = vst [vmem:[%s495 + $0x20] sm:$0xff] %v9428
      %9515 = vst [vmem:[%s495 + $0x28] sm:$0xff] %v9430
      %9516 = vst [vmem:[%s495 + $0x30] sm:$0xff] %v9434
      %9517 = vst [vmem:[%s495 + $0x38] sm:$0xff] %v9436
      %9518 = vst [vmem:[%s495 + $0x40] sm:$0xff] %v9440
      %9519 = vst [vmem:[%s495 + $0x48] sm:$0xff] %v9442
      %9520 = vst [vmem:[%s495 + $0x50] sm:$0xff] %v9446
      %9521 = vst [vmem:[%s495 + $0x58] sm:$0xff] %v9448
      %9522 = vst [vmem:[%s495 + $0x60] sm:$0xff] %v9452
      %9523 = vst [vmem:[%s495 + $0x68] sm:$0xff] %v9454
      %9524 = vst [vmem:[%s495 + $0x70] sm:$0xff] %v9458
      %9525 = vst [vmem:[%s495 + $0x78] sm:$0xff] %v9460
      %9526 = vst [vmem:[%s500] sm:$0xff] %v9464
      %9527 = vst [vmem:[%s500 + $0x8] sm:$0xff] %v9466
      %9528 = vst [vmem:[%s500 + $0x10] sm:$0xff] %v9470
      %9529 = vst [vmem:[%s500 + $0x18] sm:$0xff] %v9472
      %9530 = vst [vmem:[%s500 + $0x20] sm:$0xff] %v9476
      %9531 = vst [vmem:[%s500 + $0x28] sm:$0xff] %v9478
      %9532 = vst [vmem:[%s500 + $0x30] sm:$0xff] %v9482
      %9533 = vst [vmem:[%s500 + $0x38] sm:$0xff] %v9484
      %9534 = vst [vmem:[%s500 + $0x40] sm:$0xff] %v9488
      %9535 = vst [vmem:[%s500 + $0x48] sm:$0xff] %v9490
      %9536 = vst [vmem:[%s500 + $0x50] sm:$0xff] %v9494
      %9537 = vst [vmem:[%s500 + $0x58] sm:$0xff] %v9496
      %9538 = vst [vmem:[%s500 + $0x60] sm:$0xff] %v9500
      %9539 = vst [vmem:[%s500 + $0x68] sm:$0xff] %v9502
      %9540 = vst [vmem:[%s500 + $0x70] sm:$0xff] %v9506
      %9541 = vst [vmem:[%s500 + $0x78] sm:$0xff] %v9508
      %p9542 = scmp.lt.s32.totalorder %s26, 1
      %s9543 = scalar_select %p9542, %s26, 1
      %s9544 = smul.addr %s9543, 16
      %s9545 = smul.addr %s9544, 8
      %s9546 = scalar_lea.vmem %s13, %s9545
      %p9547 = scmp.lt.s32.totalorder %s26, 1
      %s9548 = scalar_select %p9547, %s26, 1
      %s9549 = smul.addr %s9548, 16
      %s9550 = smul.addr %s9549, 8
      %s9551 = scalar_lea.vmem %s14, %s9550
      // Predicated region
      $region80: #{gpt_forward.1} parent=71 // pred_check
        %p9552 = pneg %p327
      $region81: #{gpt_forward.1} parent=71 // pred_check_branch
        %9554 = sbr.rel (%p9552) target = $region83
      $region82: #{gpt_forward.1} parent=71 // pred_region
        _
      $region83: #{gpt_forward.1} parent=71 // pred_fallthru
        _
      // Predicated region
      $region84: #{gpt_forward.1} parent=71 // pred_check
        %p9555 = pneg %p353
      $region85: #{gpt_forward.1} parent=71 // pred_check_branch
        %9557 = sbr.rel (%p9555) target = $region87
      $region86: #{gpt_forward.1} parent=71 // pred_region
        _
      $region87: #{gpt_forward.1} parent=71 // pred_fallthru
        _
    $region72: #{gpt_forward.1} parent=5 // pred_fallthru
      _
    %p9558 = scmp.le.s32.totalorder 2, %s21
    // Predicated region
    $region88: #{gpt_forward.1} parent=5 // pred_check
      %p9559 = pneg %p9558
    $region89: #{gpt_forward.1} parent=5 // pred_check_branch
      %9561 = sbr.rel (%p9559) target = $region91
    $region90: #{gpt_forward.1} parent=5 // pred_region
      %s9562 = ssub.s32 %s21, 2
      // Predicated region
      $region92: #{gpt_forward.1} parent=90 // pred_check
        %p9563 = pneg %p333
      $region93: #{gpt_forward.1} parent=90 // pred_check_branch
        %9565 = sbr.rel (%p9563) target = $region95
      $region94: #{gpt_forward.1} parent=90 // pred_region
        %p9566 = scmp.lt.s32.totalorder %s27, 1
        %s9567 = scalar_select %p9566, %s27, 1
        %s9568 = smul.addr %s9567, 16
        %s9569 = smul.addr %s9568, 8
        %s9570 = scalar_lea.vmem %s13, %s9569
      $region95: #{gpt_forward.1} parent=90 // pred_fallthru
        _
      // Predicated region
      $region96: #{gpt_forward.1} parent=90 // pred_check
        %p9571 = pneg %p359
      $region97: #{gpt_forward.1} parent=90 // pred_check_branch
        %9573 = sbr.rel (%p9571) target = $region99
      $region98: #{gpt_forward.1} parent=90 // pred_region
        %p9574 = scmp.lt.s32.totalorder %s27, 1
        %s9575 = scalar_select %p9574, %s27, 1
        %s9576 = smul.addr %s9575, 16
        %s9577 = smul.addr %s9576, 8
        %s9578 = scalar_lea.vmem %s14, %s9577
      $region99: #{gpt_forward.1} parent=90 // pred_fallthru
        _
    $region91: #{gpt_forward.1} parent=5 // pred_fallthru
      _
  $region6: #{gpt_forward.1} parent=0 // loop_footer
    %s25 = sadd.s32 1, %s21
  $region7: #{gpt_forward.1} parent=0 // loop_footer_branch
    %20 = sbr.rel target = $region3
  $region8: #{gpt_forward.1} parent=0 // loop_exit
    _

</llo_original>
